<compile_context>
chip_gen: v7x
topology: tpu7x:2x2x1
jax: 0.10.0
libtpu: 0.0.40
codegen_flags: <defaults>
</compile_context>

<pallas_src>
import functools

import jax
import jax.numpy as jnp
from jax.experimental import pallas as pl
from jax.experimental.pallas import tpu as pltpu

LEAKY_SLOPE = 0.2                      # net_utils.activation_func('leaky_relu')
N_FILTERS = [16, 32, 64, 128, 256, 256, 256]
KERNEL_SIZES = [7, 5, 3, 3, 3, 3, 3]   # stride=2, padding=k//2, bias=False, no BN

_VMEM_TILE_BUDGET = 8 << 20            # per-tile working-set target (xcat + acc + buffers)
_VMEM_LIMIT = None


def _cdiv(a, b):
    return -(-a // b)


def _round_up(a, b):
    return _cdiv(a, b) * b


def _vmem_limit_bytes():
    """~3/4 of physical VMEM (96 MiB on v5e/v6e, 48 MiB on v7x), cached."""
    global _VMEM_LIMIT
    if _VMEM_LIMIT is None:
        try:
            cap = pltpu.get_tpu_info().vmem_capacity_bytes
        except Exception:
            cap = 64 << 20
        _VMEM_LIMIT = int(min(96 << 20, max(32 << 20, (cap * 3) // 4)))
    return _VMEM_LIMIT


def _choose_tm(m_valid, bytes_per_row):
    """Output-tile rows: multiples of 128 (16 for tiny layers), VMEM-budgeted."""
    tm_max = (_VMEM_TILE_BUDGET // max(1, bytes_per_row)) // 128 * 128
    tm_max = max(128, min(1024, tm_max))
    if m_valid < 128:
        return _round_up(m_valid, 16)          # single tiny tile; don't split a serial loop
    if m_valid <= tm_max:
        if m_valid >= 512:                     # 2 tiles (>=256 rows each) -> both v7x TCs busy
            return _round_up(_cdiv(m_valid, 2), 128)
        return _round_up(m_valid, 128)
    n_tiles = _cdiv(m_valid, tm_max)
    return _round_up(_cdiv(m_valid, n_tiles), 128)


# -------- Pallas kernel: halo DMA + K-concatenated single MXU dot + fused LeakyReLU --------
def _conv_s2d_kernel(x_hbm, w_ref, o_ref, xbuf, sem, *, shifts, tm):
    """One output row-tile of the stride-1 conv in space-to-depth coordinates.

    x_hbm : (Mi, C4)        bf16   flattened s2d activation, left in HBM (pl.ANY)
    w_ref : (T*C4, Cout_p)  bf16   K-packed tap weights (VMEM, constant block)
    o_ref : (TM, Cout_p)    bf16   lane-dense output tile
    xbuf  : (TM+halo, C4)   bf16   VMEM scratch for this tile's halo window
    """
    rows = xbuf.shape[0]
    start = pl.multiple_of(pl.program_id(0) * tm, 16)       # tm is a multiple of 16
    cp = pltpu.make_async_copy(x_hbm.at[pl.ds(start, rows)], xbuf, sem.at[0])
    cp.start()
    cp.wait()

    # In-VMEM "im2col": static tap slices concatenated along K -> one MXU dot.
    parts = [xbuf[pl.ds(s, tm), :] for s in shifts]
    xcat = parts[0] if len(parts) == 1 else jnp.concatenate(parts, axis=-1)
    acc = jnp.dot(xcat, w_ref[...], preferred_element_type=jnp.float32)

    # LeakyReLU on the fp32 accumulator, single bf16 cast on the (full-lane) store.
    o_ref[...] = jnp.where(acc >= 0, acc, LEAKY_SLOPE * acc).astype(o_ref.dtype)


def conv2d_stride2_lrelu(x, w_packed, *, r, cout):
    """Conv2d(k=2r-1, stride=2, pad=k//2, bias=False) + LeakyReLU(0.2); NHWC bf16 in/out."""
    n, h, w_, c = x.shape
    kdim, cout_pad = w_packed.shape
    assert kdim == r * r * 4 * c, (kdim, r, c)
    p = r - 1                                      # k = 2r-1 (odd), padding = k//2 = r-1

    hg = (h + 2 * p + 1) // 2
    wg = (w_ + 2 * p + 1) // 2
    wg_pad = _round_up(wg, 8)                      # 8-aligned s2d row pitch
    hout, wout = -(-h // 2), -(-w_ // 2)           # conv output spatial dims

    # pad + space-to-depth(2): stride-2 KxK conv -> stride-1 RxR conv over 4*Cin channels.
    xp = jnp.pad(x, ((0, 0), (p, 2 * hg - h - p), (p, 2 * wg_pad - w_ - p), (0, 0)))
    c4 = 4 * c
    xs = (xp.reshape(n, hg, 2, wg_pad, 2, c)
            .transpose(0, 1, 3, 2, 4, 5)
            .reshape(n * hg * wg_pad, c4))

    m_valid = n * hg * wg_pad
    bytes_per_row = 2 * kdim + 4 * cout_pad + 2 * cout_pad + 2 * c4
    tm = _choose_tm(m_valid, bytes_per_row)
    n_tiles = _cdiv(m_valid, tm)
    halo = (r - 1) * wg_pad + (r - 1)
    rows_buf = _round_up(tm + halo, 8)
    mi = (n_tiles - 1) * tm + rows_buf             # every tile's halo window stays in bounds
    xs = jnp.pad(xs, ((0, mi - m_valid), (0, 0)))

    shifts = tuple(ah * wg_pad + aw for ah in range(r) for aw in range(r))
    kernel = functools.partial(_conv_s2d_kernel, shifts=shifts, tm=tm)

    out = pl.pallas_call(
        kernel,
        out_shape=jax.ShapeDtypeStruct((n_tiles * tm, cout_pad), jnp.bfloat16),
        grid=(n_tiles,),
        in_specs=[
            pl.BlockSpec(memory_space=pl.ANY),                   # s2d activation stays in HBM
            pl.BlockSpec((kdim, cout_pad), lambda i: (0, 0)),    # K-packed tap weights
        ],
        out_specs=pl.BlockSpec((tm, cout_pad), lambda i: (i, 0)),
        scratch_shapes=[
            pltpu.VMEM((rows_buf, c4), jnp.bfloat16),            # halo window buffer
            pltpu.SemaphoreType.DMA((1,)),
        ],
        compiler_params=pltpu.CompilerParams(
            dimension_semantics=("parallel",),
            vmem_limit_bytes=_vmem_limit_bytes(),
        ),
    )(xs, w_packed)

    # Discard the padded rows/columns/channels (keep this slice: rows with j >= wout or
    # i >= hout read wrapped/garbage halo data by design, and channels >= cout are zeros).
    out = out[:m_valid].reshape(n, hg, wg_pad, cout_pad)
    return out[:, :hout, :wout, :cout]


# ----------------- params: init + one-time relayout -----------------
def init_pose_encoder_params(key, input_channels=6):
    """Deterministic kaiming_uniform-style init (synthetic weights, OIHW, fp32)."""
    params = []
    cin = input_channels
    for cout, k in zip(N_FILTERS, KERNEL_SIZES):
        key, sub = jax.random.split(key)
        fan_in = cin * k * k
        gain = (2.0 / (1.0 + LEAKY_SLOPE ** 2)) ** 0.5
        bound = gain * (3.0 / fan_in) ** 0.5
        w = jax.random.uniform(sub, (cout, cin, k, k), jnp.float32, -bound, bound)
        params.append(w)
        cin = cout
    return params


def prep_pose_encoder_params(params_oihw):
    """One-time relayout: OIHW -> K-packed (R*R*4*Cin, Cout_pad(128)) bf16 matrices."""
    weights, metas = [], []
    for w in params_oihw:
        cout, cin, k, _ = w.shape
        r = (k + 1) // 2
        cout_pad = _round_up(cout, 128)
        whw = jnp.transpose(w, (2, 3, 1, 0))                          # (K, K, Cin, Cout)
        wpad = jnp.pad(whw, ((0, 2 * r - k), (0, 2 * r - k), (0, 0), (0, 0)))
        wt = wpad.reshape(r, 2, r, 2, cin, cout).transpose(0, 2, 1, 3, 4, 5)
        wt = wt.reshape(r * r * 4 * cin, cout)                        # (t, ph, pw, ci) rows
        wt = jnp.pad(wt, ((0, 0), (0, cout_pad - cout))).astype(jnp.bfloat16)
        weights.append(wt)
        metas.append((r, cout))
    return weights, tuple(metas)


# ----------------- PoseEncoder forward -----------------
def pose_encoder_forward(x_nchw, weights, metas):
    """Matches PoseEncoder.forward: returns (latent, None)."""
    x = jnp.transpose(x_nchw, (0, 2, 3, 1)).astype(jnp.bfloat16)      # NCHW -> NHWC, bf16
    for w_packed, (r, cout) in zip(weights, metas):
        x = conv2d_stride2_lrelu(x, w_packed, r=r, cout=cout)
    latent = jnp.transpose(x, (0, 3, 1, 2)).astype(jnp.float32)       # NHWC -> NCHW
    return latent, None                                               # skips: None (as in PyTorch)


# ----------------- reference (bf16-matched lax.conv) for correctness check -----------------
def _reference_forward(x_nchw, params_oihw):
    x = x_nchw.astype(jnp.bfloat16).astype(jnp.float32)
    for w in params_oihw:
        k = w.shape[-1]
        p = k // 2
        wf = w.astype(jnp.bfloat16).astype(jnp.float32)
        x = jax.lax.conv_general_dilated(
            x, wf, window_strides=(2, 2), padding=[(p, p), (p, p)],
            dimension_numbers=("NCHW", "OIHW", "NCHW"),
            precision=jax.lax.Precision.HIGHEST)
        x = jnp.where(x >= 0, x, LEAKY_SLOPE * x)
        x = x.astype(jnp.bfloat16).astype(jnp.float32)
    return x


if __name__ == "__main__":
    key = jax.random.PRNGKey(0)
    kx, kp = jax.random.split(key)

    # N x 6 x H x W input (small spatial: 16)
    x = jax.random.normal(kx, (2, 6, 16, 16), dtype=jnp.float32)
    params = init_pose_encoder_params(kp, input_channels=6)
    weights, metas = prep_pose_encoder_params(params)

    fwd = jax.jit(functools.partial(pose_encoder_forward, metas=metas))
    latent, skips = fwd(x, weights)
    latent = jax.block_until_ready(latent)

    assert latent.shape == (2, 256, 1, 1), latent.shape
    assert skips is None

    ref = _reference_forward(x, params)
    max_err = float(jnp.max(jnp.abs(latent - ref)))
    assert jnp.allclose(latent, ref, atol=5e-2, rtol=5e-2), f"mismatch vs reference: {max_err}"

    print("KERNEL_OK")
</pallas_src>

<mosaic_0001>
module attributes {stable_mosaic.version = 11 : i64} {
  func.func @_conv_s2d_kernel(%arg0: i32, %arg1: memref<440x24xbf16, #tpu.memory_space<any>>, %arg2: memref<384x128xbf16, #tpu.memory_space<vmem>>, %arg3: memref<384x128xbf16, #tpu.memory_space<vmem>>, %arg4: memref<440x24xbf16, #tpu.memory_space<vmem>>, %arg5: memref<1x!tpu.dma_semaphore, #tpu.memory_space<semaphore_mem>>) attributes {dimension_semantics = [#tpu.dimension_semantics<parallel>], iteration_bounds = array<i64: 1>, scalar_prefetch = 0 : i64, scratch_operands = 2 : i64, tpu.core_type = #tpu.core_type<tc>, window_params = [{}, {pipeline_mode = #tpu.pipeline_mode<synchronous>, transform_indices = @transform_1, window_bounds = array<i64: 384, 128>}, {transform_indices = @transform_2, window_bounds = array<i64: 384, 128>}]} {
    %c384_i32 = arith.constant 384 : i32
    %0 = arith.muli %arg0, %c384_i32 : i32
    %1 = tpu.assume_multiple %0, 16 : i32
    %c0_i32 = arith.constant 0 : i32
    %c0_i32_0 = arith.constant 0 : i32
    %2 = tpu.memref_slice %arg1[%1, %c0_i32_0] : memref<440x24xbf16, #tpu.memory_space<any>> -> memref<440x24xbf16, #tpu.memory_space<any>>
    %3 = tpu.memref_slice %arg5[%c0_i32] : memref<1x!tpu.dma_semaphore, #tpu.memory_space<semaphore_mem>> -> memref<1x!tpu.dma_semaphore, #tpu.memory_space<semaphore_mem>>
    %4 = tpu.memref_squeeze %3 : memref<1x!tpu.dma_semaphore, #tpu.memory_space<semaphore_mem>> -> memref<!tpu.dma_semaphore, #tpu.memory_space<semaphore_mem>>
    tpu.enqueue_dma source(%2 : memref<440x24xbf16, #tpu.memory_space<any>>) target(%arg4 : memref<440x24xbf16, #tpu.memory_space<vmem>>) target_semaphore(%4 : memref<!tpu.dma_semaphore, #tpu.memory_space<semaphore_mem>>)
    %c0_i32_1 = arith.constant 0 : i32
    %c0_i32_2 = arith.constant 0 : i32
    %5 = tpu.memref_slice %arg1[%1, %c0_i32_2] : memref<440x24xbf16, #tpu.memory_space<any>> -> memref<440x24xbf16, #tpu.memory_space<any>>
    %6 = tpu.memref_slice %arg5[%c0_i32_1] : memref<1x!tpu.dma_semaphore, #tpu.memory_space<semaphore_mem>> -> memref<1x!tpu.dma_semaphore, #tpu.memory_space<semaphore_mem>>
    %7 = tpu.memref_squeeze %6 : memref<1x!tpu.dma_semaphore, #tpu.memory_space<semaphore_mem>> -> memref<!tpu.dma_semaphore, #tpu.memory_space<semaphore_mem>>
    tpu.wait_dma2 semaphore(%7 : memref<!tpu.dma_semaphore, #tpu.memory_space<semaphore_mem>>) src(%5 : memref<440x24xbf16, #tpu.memory_space<any>>) dst(%arg4 : memref<440x24xbf16, #tpu.memory_space<vmem>>)
    %c0 = arith.constant 0 : index
    %c0_3 = arith.constant 0 : index
    %8 = vector.load %arg4[%c0, %c0_3] : memref<440x24xbf16, #tpu.memory_space<vmem>>, vector<384x24xbf16>
    %c1 = arith.constant 1 : index
    %c0_4 = arith.constant 0 : index
    %9 = vector.load %arg4[%c1, %c0_4] : memref<440x24xbf16, #tpu.memory_space<vmem>>, vector<384x24xbf16>
    %c2 = arith.constant 2 : index
    %c0_5 = arith.constant 0 : index
    %10 = vector.load %arg4[%c2, %c0_5] : memref<440x24xbf16, #tpu.memory_space<vmem>>, vector<384x24xbf16>
    %c3 = arith.constant 3 : index
    %c0_6 = arith.constant 0 : index
    %11 = vector.load %arg4[%c3, %c0_6] : memref<440x24xbf16, #tpu.memory_space<vmem>>, vector<384x24xbf16>
    %c16 = arith.constant 16 : index
    %c0_7 = arith.constant 0 : index
    %12 = vector.load %arg4[%c16, %c0_7] : memref<440x24xbf16, #tpu.memory_space<vmem>>, vector<384x24xbf16>
    %c17 = arith.constant 17 : index
    %c0_8 = arith.constant 0 : index
    %13 = vector.load %arg4[%c17, %c0_8] : memref<440x24xbf16, #tpu.memory_space<vmem>>, vector<384x24xbf16>
    %c18 = arith.constant 18 : index
    %c0_9 = arith.constant 0 : index
    %14 = vector.load %arg4[%c18, %c0_9] : memref<440x24xbf16, #tpu.memory_space<vmem>>, vector<384x24xbf16>
    %c19 = arith.constant 19 : index
    %c0_10 = arith.constant 0 : index
    %15 = vector.load %arg4[%c19, %c0_10] : memref<440x24xbf16, #tpu.memory_space<vmem>>, vector<384x24xbf16>
    %c32 = arith.constant 32 : index
    %c0_11 = arith.constant 0 : index
    %16 = vector.load %arg4[%c32, %c0_11] : memref<440x24xbf16, #tpu.memory_space<vmem>>, vector<384x24xbf16>
    %c33 = arith.constant 33 : index
    %c0_12 = arith.constant 0 : index
    %17 = vector.load %arg4[%c33, %c0_12] : memref<440x24xbf16, #tpu.memory_space<vmem>>, vector<384x24xbf16>
    %c34 = arith.constant 34 : index
    %c0_13 = arith.constant 0 : index
    %18 = vector.load %arg4[%c34, %c0_13] : memref<440x24xbf16, #tpu.memory_space<vmem>>, vector<384x24xbf16>
    %c35 = arith.constant 35 : index
    %c0_14 = arith.constant 0 : index
    %19 = vector.load %arg4[%c35, %c0_14] : memref<440x24xbf16, #tpu.memory_space<vmem>>, vector<384x24xbf16>
    %c48 = arith.constant 48 : index
    %c0_15 = arith.constant 0 : index
    %20 = vector.load %arg4[%c48, %c0_15] : memref<440x24xbf16, #tpu.memory_space<vmem>>, vector<384x24xbf16>
    %c49 = arith.constant 49 : index
    %c0_16 = arith.constant 0 : index
    %21 = vector.load %arg4[%c49, %c0_16] : memref<440x24xbf16, #tpu.memory_space<vmem>>, vector<384x24xbf16>
    %c50 = arith.constant 50 : index
    %c0_17 = arith.constant 0 : index
    %22 = vector.load %arg4[%c50, %c0_17] : memref<440x24xbf16, #tpu.memory_space<vmem>>, vector<384x24xbf16>
    %c51 = arith.constant 51 : index
    %c0_18 = arith.constant 0 : index
    %23 = vector.load %arg4[%c51, %c0_18] : memref<440x24xbf16, #tpu.memory_space<vmem>>, vector<384x24xbf16>
    %24 = tpu.concatenate %8, %9, %10, %11, %12, %13, %14, %15, %16, %17, %18, %19, %20, %21, %22, %23 in 1 : vector<384x24xbf16>, vector<384x24xbf16>, vector<384x24xbf16>, vector<384x24xbf16>, vector<384x24xbf16>, vector<384x24xbf16>, vector<384x24xbf16>, vector<384x24xbf16>, vector<384x24xbf16>, vector<384x24xbf16>, vector<384x24xbf16>, vector<384x24xbf16>, vector<384x24xbf16>, vector<384x24xbf16>, vector<384x24xbf16>, vector<384x24xbf16> -> vector<384x384xbf16>
    %c0_19 = arith.constant 0 : index
    %c0_20 = arith.constant 0 : index
    %25 = vector.load %arg2[%c0_19, %c0_20] : memref<384x128xbf16, #tpu.memory_space<vmem>>, vector<384x128xbf16>
    %cst = arith.constant dense<0.000000e+00> : vector<384x128xf32>
    %26 = tpu.matmul %24, %25, %cst {dimension_numbers = #tpu.dot_dimension_numbers<[1], [0], [0], [1], [0, 0, 1, 1], [], []>} : vector<384x384xbf16>, vector<384x128xbf16>, vector<384x128xf32> -> vector<384x128xf32>
    %cst_21 = arith.constant 0.000000e+00 : f32
    %27 = vector.broadcast %cst_21 : f32 to vector<384x128xf32>
    %28 = arith.cmpf oge, %26, %27 : vector<384x128xf32>
    %cst_22 = arith.constant 2.000000e-01 : f32
    %29 = vector.broadcast %cst_22 : f32 to vector<384x128xf32>
    %30 = arith.mulf %29, %26 : vector<384x128xf32>
    %31 = arith.select %28, %26, %30 : vector<384x128xi1>, vector<384x128xf32>
    %32 = arith.truncf %31 : vector<384x128xf32> to vector<384x128xbf16>
    %c0_23 = arith.constant 0 : index
    %c0_24 = arith.constant 0 : index
    %33 = vector.load %arg3[%c0_23, %c0_24] : memref<384x128xbf16, #tpu.memory_space<vmem>>, vector<384x128xbf16>
    tpu.vector_store %arg3[%c0_23, %c0_24], %32 {strides = array<i32>} : memref<384x128xbf16, #tpu.memory_space<vmem>>, vector<384x128xbf16>,
    return
  }
  func.func @transform_1(%arg0: i32) -> (i32, i32) {
    %c0_i32 = arith.constant 0 : i32
    %c0_i32_0 = arith.constant 0 : i32
    %c0_i32_1 = arith.constant 0 : i32
    return %c0_i32, %c0_i32_0 : i32, i32
  }
  func.func @transform_2(%arg0: i32) -> (i32, i32) {
    %c0_i32 = arith.constant 0 : i32
    %c0_i32_0 = arith.constant 0 : i32
    return %arg0, %c0_i32 : i32, i32
  }
}

module attributes {stable_mosaic.version = 11 : i64} {
  func.func @_conv_s2d_kernel(%arg0: i32, %arg1: memref<120x64xbf16, #tpu.memory_space<any>>, %arg2: memref<576x128xbf16, #tpu.memory_space<vmem>>, %arg3: memref<96x128xbf16, #tpu.memory_space<vmem>>, %arg4: memref<120x64xbf16, #tpu.memory_space<vmem>>, %arg5: memref<1x!tpu.dma_semaphore, #tpu.memory_space<semaphore_mem>>) attributes {dimension_semantics = [#tpu.dimension_semantics<parallel>], iteration_bounds = array<i64: 1>, scalar_prefetch = 0 : i64, scratch_operands = 2 : i64, tpu.core_type = #tpu.core_type<tc>, window_params = [{}, {pipeline_mode = #tpu.pipeline_mode<synchronous>, transform_indices = @transform_1, window_bounds = array<i64: 576, 128>}, {transform_indices = @transform_2, window_bounds = array<i64: 96, 128>}]} {
    %c96_i32 = arith.constant 96 : i32
    %0 = arith.muli %arg0, %c96_i32 : i32
    %1 = tpu.assume_multiple %0, 16 : i32
    %c0_i32 = arith.constant 0 : i32
    %c0_i32_0 = arith.constant 0 : i32
    %2 = tpu.memref_slice %arg1[%1, %c0_i32_0] : memref<120x64xbf16, #tpu.memory_space<any>> -> memref<120x64xbf16, #tpu.memory_space<any>>
    %3 = tpu.memref_slice %arg5[%c0_i32] : memref<1x!tpu.dma_semaphore, #tpu.memory_space<semaphore_mem>> -> memref<1x!tpu.dma_semaphore, #tpu.memory_space<semaphore_mem>>
    %4 = tpu.memref_squeeze %3 : memref<1x!tpu.dma_semaphore, #tpu.memory_space<semaphore_mem>> -> memref<!tpu.dma_semaphore, #tpu.memory_space<semaphore_mem>>
    tpu.enqueue_dma source(%2 : memref<120x64xbf16, #tpu.memory_space<any>>) target(%arg4 : memref<120x64xbf16, #tpu.memory_space<vmem>>) target_semaphore(%4 : memref<!tpu.dma_semaphore, #tpu.memory_space<semaphore_mem>>)
    %c0_i32_1 = arith.constant 0 : i32
    %c0_i32_2 = arith.constant 0 : i32
    %5 = tpu.memref_slice %arg1[%1, %c0_i32_2] : memref<120x64xbf16, #tpu.memory_space<any>> -> memref<120x64xbf16, #tpu.memory_space<any>>
    %6 = tpu.memref_slice %arg5[%c0_i32_1] : memref<1x!tpu.dma_semaphore, #tpu.memory_space<semaphore_mem>> -> memref<1x!tpu.dma_semaphore, #tpu.memory_space<semaphore_mem>>
    %7 = tpu.memref_squeeze %6 : memref<1x!tpu.dma_semaphore, #tpu.memory_space<semaphore_mem>> -> memref<!tpu.dma_semaphore, #tpu.memory_space<semaphore_mem>>
    tpu.wait_dma2 semaphore(%7 : memref<!tpu.dma_semaphore, #tpu.memory_space<semaphore_mem>>) src(%5 : memref<120x64xbf16, #tpu.memory_space<any>>) dst(%arg4 : memref<120x64xbf16, #tpu.memory_space<vmem>>)
    %c0 = arith.constant 0 : index
    %c0_3 = arith.constant 0 : index
    %8 = vector.load %arg4[%c0, %c0_3] : memref<120x64xbf16, #tpu.memory_space<vmem>>, vector<96x64xbf16>
    %c1 = arith.constant 1 : index
    %c0_4 = arith.constant 0 : index
    %9 = vector.load %arg4[%c1, %c0_4] : memref<120x64xbf16, #tpu.memory_space<vmem>>, vector<96x64xbf16>
    %c2 = arith.constant 2 : index
    %c0_5 = arith.constant 0 : index
    %10 = vector.load %arg4[%c2, %c0_5] : memref<120x64xbf16, #tpu.memory_space<vmem>>, vector<96x64xbf16>
    %c8 = arith.constant 8 : index
    %c0_6 = arith.constant 0 : index
    %11 = vector.load %arg4[%c8, %c0_6] : memref<120x64xbf16, #tpu.memory_space<vmem>>, vector<96x64xbf16>
    %c9 = arith.constant 9 : index
    %c0_7 = arith.constant 0 : index
    %12 = vector.load %arg4[%c9, %c0_7] : memref<120x64xbf16, #tpu.memory_space<vmem>>, vector<96x64xbf16>
    %c10 = arith.constant 10 : index
    %c0_8 = arith.constant 0 : index
    %13 = vector.load %arg4[%c10, %c0_8] : memref<120x64xbf16, #tpu.memory_space<vmem>>, vector<96x64xbf16>
    %c16 = arith.constant 16 : index
    %c0_9 = arith.constant 0 : index
    %14 = vector.load %arg4[%c16, %c0_9] : memref<120x64xbf16, #tpu.memory_space<vmem>>, vector<96x64xbf16>
    %c17 = arith.constant 17 : index
    %c0_10 = arith.constant 0 : index
    %15 = vector.load %arg4[%c17, %c0_10] : memref<120x64xbf16, #tpu.memory_space<vmem>>, vector<96x64xbf16>
    %c18 = arith.constant 18 : index
    %c0_11 = arith.constant 0 : index
    %16 = vector.load %arg4[%c18, %c0_11] : memref<120x64xbf16, #tpu.memory_space<vmem>>, vector<96x64xbf16>
    %17 = tpu.concatenate %8, %9, %10, %11, %12, %13, %14, %15, %16 in 1 : vector<96x64xbf16>, vector<96x64xbf16>, vector<96x64xbf16>, vector<96x64xbf16>, vector<96x64xbf16>, vector<96x64xbf16>, vector<96x64xbf16>, vector<96x64xbf16>, vector<96x64xbf16> -> vector<96x576xbf16>
    %c0_12 = arith.constant 0 : index
    %c0_13 = arith.constant 0 : index
    %18 = vector.load %arg2[%c0_12, %c0_13] : memref<576x128xbf16, #tpu.memory_space<vmem>>, vector<576x128xbf16>
    %cst = arith.constant dense<0.000000e+00> : vector<96x128xf32>
    %19 = tpu.matmul %17, %18, %cst {dimension_numbers = #tpu.dot_dimension_numbers<[1], [0], [0], [1], [0, 0, 1, 1], [], []>} : vector<96x576xbf16>, vector<576x128xbf16>, vector<96x128xf32> -> vector<96x128xf32>
    %cst_14 = arith.constant 0.000000e+00 : f32
    %20 = vector.broadcast %cst_14 : f32 to vector<96x128xf32>
    %21 = arith.cmpf oge, %19, %20 : vector<96x128xf32>
    %cst_15 = arith.constant 2.000000e-01 : f32
    %22 = vector.broadcast %cst_15 : f32 to vector<96x128xf32>
    %23 = arith.mulf %22, %19 : vector<96x128xf32>
    %24 = arith.select %21, %19, %23 : vector<96x128xi1>, vector<96x128xf32>
    %25 = arith.truncf %24 : vector<96x128xf32> to vector<96x128xbf16>
    %c0_16 = arith.constant 0 : index
    %c0_17 = arith.constant 0 : index
    %26 = vector.load %arg3[%c0_16, %c0_17] : memref<96x128xbf16, #tpu.memory_space<vmem>>, vector<96x128xbf16>
    tpu.vector_store %arg3[%c0_16, %c0_17], %25 {strides = array<i32>} : memref<96x128xbf16, #tpu.memory_space<vmem>>, vector<96x128xbf16>,
    return
  }
  func.func @transform_1(%arg0: i32) -> (i32, i32) {
    %c0_i32 = arith.constant 0 : i32
    %c0_i32_0 = arith.constant 0 : i32
    %c0_i32_1 = arith.constant 0 : i32
    return %c0_i32, %c0_i32_0 : i32, i32
  }
  func.func @transform_2(%arg0: i32) -> (i32, i32) {
    %c0_i32 = arith.constant 0 : i32
    %c0_i32_0 = arith.constant 0 : i32
    return %arg0, %c0_i32 : i32, i32
  }
}

module attributes {stable_mosaic.version = 11 : i64} {
  func.func @_conv_s2d_kernel(%arg0: i32, %arg1: memref<64x128xbf16, #tpu.memory_space<any>>, %arg2: memref<512x128xbf16, #tpu.memory_space<vmem>>, %arg3: memref<48x128xbf16, #tpu.memory_space<vmem>>, %arg4: memref<64x128xbf16, #tpu.memory_space<vmem>>, %arg5: memref<1x!tpu.dma_semaphore, #tpu.memory_space<semaphore_mem>>) attributes {dimension_semantics = [#tpu.dimension_semantics<parallel>], iteration_bounds = array<i64: 1>, scalar_prefetch = 0 : i64, scratch_operands = 2 : i64, tpu.core_type = #tpu.core_type<tc>, window_params = [{}, {pipeline_mode = #tpu.pipeline_mode<synchronous>, transform_indices = @transform_1, window_bounds = array<i64: 512, 128>}, {transform_indices = @transform_2, window_bounds = array<i64: 48, 128>}]} {
    %c48_i32 = arith.constant 48 : i32
    %0 = arith.muli %arg0, %c48_i32 : i32
    %1 = tpu.assume_multiple %0, 16 : i32
    %c0_i32 = arith.constant 0 : i32
    %c0_i32_0 = arith.constant 0 : i32
    %2 = tpu.memref_slice %arg1[%1, %c0_i32_0] : memref<64x128xbf16, #tpu.memory_space<any>> -> memref<64x128xbf16, #tpu.memory_space<any>>
    %3 = tpu.memref_slice %arg5[%c0_i32] : memref<1x!tpu.dma_semaphore, #tpu.memory_space<semaphore_mem>> -> memref<1x!tpu.dma_semaphore, #tpu.memory_space<semaphore_mem>>
    %4 = tpu.memref_squeeze %3 : memref<1x!tpu.dma_semaphore, #tpu.memory_space<semaphore_mem>> -> memref<!tpu.dma_semaphore, #tpu.memory_space<semaphore_mem>>
    tpu.enqueue_dma source(%2 : memref<64x128xbf16, #tpu.memory_space<any>>) target(%arg4 : memref<64x128xbf16, #tpu.memory_space<vmem>>) target_semaphore(%4 : memref<!tpu.dma_semaphore, #tpu.memory_space<semaphore_mem>>)
    %c0_i32_1 = arith.constant 0 : i32
    %c0_i32_2 = arith.constant 0 : i32
    %5 = tpu.memref_slice %arg1[%1, %c0_i32_2] : memref<64x128xbf16, #tpu.memory_space<any>> -> memref<64x128xbf16, #tpu.memory_space<any>>
    %6 = tpu.memref_slice %arg5[%c0_i32_1] : memref<1x!tpu.dma_semaphore, #tpu.memory_space<semaphore_mem>> -> memref<1x!tpu.dma_semaphore, #tpu.memory_space<semaphore_mem>>
    %7 = tpu.memref_squeeze %6 : memref<1x!tpu.dma_semaphore, #tpu.memory_space<semaphore_mem>> -> memref<!tpu.dma_semaphore, #tpu.memory_space<semaphore_mem>>
    tpu.wait_dma2 semaphore(%7 : memref<!tpu.dma_semaphore, #tpu.memory_space<semaphore_mem>>) src(%5 : memref<64x128xbf16, #tpu.memory_space<any>>) dst(%arg4 : memref<64x128xbf16, #tpu.memory_space<vmem>>)
    %c0 = arith.constant 0 : index
    %c0_3 = arith.constant 0 : index
    %8 = vector.load %arg4[%c0, %c0_3] : memref<64x128xbf16, #tpu.memory_space<vmem>>, vector<48x128xbf16>
    %c1 = arith.constant 1 : index
    %c0_4 = arith.constant 0 : index
    %9 = vector.load %arg4[%c1, %c0_4] : memref<64x128xbf16, #tpu.memory_space<vmem>>, vector<48x128xbf16>
    %c8 = arith.constant 8 : index
    %c0_5 = arith.constant 0 : index
    %10 = vector.load %arg4[%c8, %c0_5] : memref<64x128xbf16, #tpu.memory_space<vmem>>, vector<48x128xbf16>
    %c9 = arith.constant 9 : index
    %c0_6 = arith.constant 0 : index
    %11 = vector.load %arg4[%c9, %c0_6] : memref<64x128xbf16, #tpu.memory_space<vmem>>, vector<48x128xbf16>
    %12 = tpu.concatenate %8, %9, %10, %11 in 1 : vector<48x128xbf16>, vector<48x128xbf16>, vector<48x128xbf16>, vector<48x128xbf16> -> vector<48x512xbf16>
    %c0_7 = arith.constant 0 : index
    %c0_8 = arith.constant 0 : index
    %13 = vector.load %arg2[%c0_7, %c0_8] : memref<512x128xbf16, #tpu.memory_space<vmem>>, vector<512x128xbf16>
    %cst = arith.constant dense<0.000000e+00> : vector<48x128xf32>
    %14 = tpu.matmul %12, %13, %cst {dimension_numbers = #tpu.dot_dimension_numbers<[1], [0], [0], [1], [0, 0, 1, 1], [], []>} : vector<48x512xbf16>, vector<512x128xbf16>, vector<48x128xf32> -> vector<48x128xf32>
    %cst_9 = arith.constant 0.000000e+00 : f32
    %15 = vector.broadcast %cst_9 : f32 to vector<48x128xf32>
    %16 = arith.cmpf oge, %14, %15 : vector<48x128xf32>
    %cst_10 = arith.constant 2.000000e-01 : f32
    %17 = vector.broadcast %cst_10 : f32 to vector<48x128xf32>
    %18 = arith.mulf %17, %14 : vector<48x128xf32>
    %19 = arith.select %16, %14, %18 : vector<48x128xi1>, vector<48x128xf32>
    %20 = arith.truncf %19 : vector<48x128xf32> to vector<48x128xbf16>
    %c0_11 = arith.constant 0 : index
    %c0_12 = arith.constant 0 : index
    %21 = vector.load %arg3[%c0_11, %c0_12] : memref<48x128xbf16, #tpu.memory_space<vmem>>, vector<48x128xbf16>
    tpu.vector_store %arg3[%c0_11, %c0_12], %20 {strides = array<i32>} : memref<48x128xbf16, #tpu.memory_space<vmem>>, vector<48x128xbf16>,
    return
  }
  func.func @transform_1(%arg0: i32) -> (i32, i32) {
    %c0_i32 = arith.constant 0 : i32
    %c0_i32_0 = arith.constant 0 : i32
    %c0_i32_1 = arith.constant 0 : i32
    return %c0_i32, %c0_i32_0 : i32, i32
  }
  func.func @transform_2(%arg0: i32) -> (i32, i32) {
    %c0_i32 = arith.constant 0 : i32
    %c0_i32_0 = arith.constant 0 : i32
    return %arg0, %c0_i32 : i32, i32
  }
}

module attributes {stable_mosaic.version = 11 : i64} {
  func.func @_conv_s2d_kernel(%arg0: i32, %arg1: memref<48x256xbf16, #tpu.memory_space<any>>, %arg2: memref<1024x128xbf16, #tpu.memory_space<vmem>>, %arg3: memref<32x128xbf16, #tpu.memory_space<vmem>>, %arg4: memref<48x256xbf16, #tpu.memory_space<vmem>>, %arg5: memref<1x!tpu.dma_semaphore, #tpu.memory_space<semaphore_mem>>) attributes {dimension_semantics = [#tpu.dimension_semantics<parallel>], iteration_bounds = array<i64: 1>, scalar_prefetch = 0 : i64, scratch_operands = 2 : i64, tpu.core_type = #tpu.core_type<tc>, window_params = [{}, {pipeline_mode = #tpu.pipeline_mode<synchronous>, transform_indices = @transform_1, window_bounds = array<i64: 1024, 128>}, {transform_indices = @transform_2, window_bounds = array<i64: 32, 128>}]} {
    %c32_i32 = arith.constant 32 : i32
    %0 = arith.muli %arg0, %c32_i32 : i32
    %1 = tpu.assume_multiple %0, 16 : i32
    %c0_i32 = arith.constant 0 : i32
    %c0_i32_0 = arith.constant 0 : i32
    %2 = tpu.memref_slice %arg1[%1, %c0_i32_0] : memref<48x256xbf16, #tpu.memory_space<any>> -> memref<48x256xbf16, #tpu.memory_space<any>>
    %3 = tpu.memref_slice %arg5[%c0_i32] : memref<1x!tpu.dma_semaphore, #tpu.memory_space<semaphore_mem>> -> memref<1x!tpu.dma_semaphore, #tpu.memory_space<semaphore_mem>>
    %4 = tpu.memref_squeeze %3 : memref<1x!tpu.dma_semaphore, #tpu.memory_space<semaphore_mem>> -> memref<!tpu.dma_semaphore, #tpu.memory_space<semaphore_mem>>
    tpu.enqueue_dma source(%2 : memref<48x256xbf16, #tpu.memory_space<any>>) target(%arg4 : memref<48x256xbf16, #tpu.memory_space<vmem>>) target_semaphore(%4 : memref<!tpu.dma_semaphore, #tpu.memory_space<semaphore_mem>>)
    %c0_i32_1 = arith.constant 0 : i32
    %c0_i32_2 = arith.constant 0 : i32
    %5 = tpu.memref_slice %arg1[%1, %c0_i32_2] : memref<48x256xbf16, #tpu.memory_space<any>> -> memref<48x256xbf16, #tpu.memory_space<any>>
    %6 = tpu.memref_slice %arg5[%c0_i32_1] : memref<1x!tpu.dma_semaphore, #tpu.memory_space<semaphore_mem>> -> memref<1x!tpu.dma_semaphore, #tpu.memory_space<semaphore_mem>>
    %7 = tpu.memref_squeeze %6 : memref<1x!tpu.dma_semaphore, #tpu.memory_space<semaphore_mem>> -> memref<!tpu.dma_semaphore, #tpu.memory_space<semaphore_mem>>
    tpu.wait_dma2 semaphore(%7 : memref<!tpu.dma_semaphore, #tpu.memory_space<semaphore_mem>>) src(%5 : memref<48x256xbf16, #tpu.memory_space<any>>) dst(%arg4 : memref<48x256xbf16, #tpu.memory_space<vmem>>)
    %c0 = arith.constant 0 : index
    %c0_3 = arith.constant 0 : index
    %8 = vector.load %arg4[%c0, %c0_3] : memref<48x256xbf16, #tpu.memory_space<vmem>>, vector<32x256xbf16>
    %c1 = arith.constant 1 : index
    %c0_4 = arith.constant 0 : index
    %9 = vector.load %arg4[%c1, %c0_4] : memref<48x256xbf16, #tpu.memory_space<vmem>>, vector<32x256xbf16>
    %c8 = arith.constant 8 : index
    %c0_5 = arith.constant 0 : index
    %10 = vector.load %arg4[%c8, %c0_5] : memref<48x256xbf16, #tpu.memory_space<vmem>>, vector<32x256xbf16>
    %c9 = arith.constant 9 : index
    %c0_6 = arith.constant 0 : index
    %11 = vector.load %arg4[%c9, %c0_6] : memref<48x256xbf16, #tpu.memory_space<vmem>>, vector<32x256xbf16>
    %12 = tpu.concatenate %8, %9, %10, %11 in 1 : vector<32x256xbf16>, vector<32x256xbf16>, vector<32x256xbf16>, vector<32x256xbf16> -> vector<32x1024xbf16>
    %c0_7 = arith.constant 0 : index
    %c0_8 = arith.constant 0 : index
    %13 = vector.load %arg2[%c0_7, %c0_8] : memref<1024x128xbf16, #tpu.memory_space<vmem>>, vector<1024x128xbf16>
    %cst = arith.constant dense<0.000000e+00> : vector<32x128xf32>
    %14 = tpu.matmul %12, %13, %cst {dimension_numbers = #tpu.dot_dimension_numbers<[1], [0], [0], [1], [0, 0, 1, 1], [], []>} : vector<32x1024xbf16>, vector<1024x128xbf16>, vector<32x128xf32> -> vector<32x128xf32>
    %cst_9 = arith.constant 0.000000e+00 : f32
    %15 = vector.broadcast %cst_9 : f32 to vector<32x128xf32>
    %16 = arith.cmpf oge, %14, %15 : vector<32x128xf32>
    %cst_10 = arith.constant 2.000000e-01 : f32
    %17 = vector.broadcast %cst_10 : f32 to vector<32x128xf32>
    %18 = arith.mulf %17, %14 : vector<32x128xf32>
    %19 = arith.select %16, %14, %18 : vector<32x128xi1>, vector<32x128xf32>
    %20 = arith.truncf %19 : vector<32x128xf32> to vector<32x128xbf16>
    %c0_11 = arith.constant 0 : index
    %c0_12 = arith.constant 0 : index
    %21 = vector.load %arg3[%c0_11, %c0_12] : memref<32x128xbf16, #tpu.memory_space<vmem>>, vector<32x128xbf16>
    tpu.vector_store %arg3[%c0_11, %c0_12], %20 {strides = array<i32>} : memref<32x128xbf16, #tpu.memory_space<vmem>>, vector<32x128xbf16>,
    return
  }
  func.func @transform_1(%arg0: i32) -> (i32, i32) {
    %c0_i32 = arith.constant 0 : i32
    %c0_i32_0 = arith.constant 0 : i32
    %c0_i32_1 = arith.constant 0 : i32
    return %c0_i32, %c0_i32_0 : i32, i32
  }
  func.func @transform_2(%arg0: i32) -> (i32, i32) {
    %c0_i32 = arith.constant 0 : i32
    %c0_i32_0 = arith.constant 0 : i32
    return %arg0, %c0_i32 : i32, i32
  }
}

module attributes {stable_mosaic.version = 11 : i64} {
  func.func @_conv_s2d_kernel(%arg0: i32, %arg1: memref<48x512xbf16, #tpu.memory_space<any>>, %arg2: memref<2048x256xbf16, #tpu.memory_space<vmem>>, %arg3: memref<32x256xbf16, #tpu.memory_space<vmem>>, %arg4: memref<48x512xbf16, #tpu.memory_space<vmem>>, %arg5: memref<1x!tpu.dma_semaphore, #tpu.memory_space<semaphore_mem>>) attributes {dimension_semantics = [#tpu.dimension_semantics<parallel>], iteration_bounds = array<i64: 1>, scalar_prefetch = 0 : i64, scratch_operands = 2 : i64, tpu.core_type = #tpu.core_type<tc>, window_params = [{}, {pipeline_mode = #tpu.pipeline_mode<synchronous>, transform_indices = @transform_1, window_bounds = array<i64: 2048, 256>}, {transform_indices = @transform_2, window_bounds = array<i64: 32, 256>}]} {
    %c32_i32 = arith.constant 32 : i32
    %0 = arith.muli %arg0, %c32_i32 : i32
    %1 = tpu.assume_multiple %0, 16 : i32
    %c0_i32 = arith.constant 0 : i32
    %c0_i32_0 = arith.constant 0 : i32
    %2 = tpu.memref_slice %arg1[%1, %c0_i32_0] : memref<48x512xbf16, #tpu.memory_space<any>> -> memref<48x512xbf16, #tpu.memory_space<any>>
    %3 = tpu.memref_slice %arg5[%c0_i32] : memref<1x!tpu.dma_semaphore, #tpu.memory_space<semaphore_mem>> -> memref<1x!tpu.dma_semaphore, #tpu.memory_space<semaphore_mem>>
    %4 = tpu.memref_squeeze %3 : memref<1x!tpu.dma_semaphore, #tpu.memory_space<semaphore_mem>> -> memref<!tpu.dma_semaphore, #tpu.memory_space<semaphore_mem>>
    tpu.enqueue_dma source(%2 : memref<48x512xbf16, #tpu.memory_space<any>>) target(%arg4 : memref<48x512xbf16, #tpu.memory_space<vmem>>) target_semaphore(%4 : memref<!tpu.dma_semaphore, #tpu.memory_space<semaphore_mem>>)
    %c0_i32_1 = arith.constant 0 : i32
    %c0_i32_2 = arith.constant 0 : i32
    %5 = tpu.memref_slice %arg1[%1, %c0_i32_2] : memref<48x512xbf16, #tpu.memory_space<any>> -> memref<48x512xbf16, #tpu.memory_space<any>>
    %6 = tpu.memref_slice %arg5[%c0_i32_1] : memref<1x!tpu.dma_semaphore, #tpu.memory_space<semaphore_mem>> -> memref<1x!tpu.dma_semaphore, #tpu.memory_space<semaphore_mem>>
    %7 = tpu.memref_squeeze %6 : memref<1x!tpu.dma_semaphore, #tpu.memory_space<semaphore_mem>> -> memref<!tpu.dma_semaphore, #tpu.memory_space<semaphore_mem>>
    tpu.wait_dma2 semaphore(%7 : memref<!tpu.dma_semaphore, #tpu.memory_space<semaphore_mem>>) src(%5 : memref<48x512xbf16, #tpu.memory_space<any>>) dst(%arg4 : memref<48x512xbf16, #tpu.memory_space<vmem>>)
    %c0 = arith.constant 0 : index
    %c0_3 = arith.constant 0 : index
    %8 = vector.load %arg4[%c0, %c0_3] : memref<48x512xbf16, #tpu.memory_space<vmem>>, vector<32x512xbf16>
    %c1 = arith.constant 1 : index
    %c0_4 = arith.constant 0 : index
    %9 = vector.load %arg4[%c1, %c0_4] : memref<48x512xbf16, #tpu.memory_space<vmem>>, vector<32x512xbf16>
    %c8 = arith.constant 8 : index
    %c0_5 = arith.constant 0 : index
    %10 = vector.load %arg4[%c8, %c0_5] : memref<48x512xbf16, #tpu.memory_space<vmem>>, vector<32x512xbf16>
    %c9 = arith.constant 9 : index
    %c0_6 = arith.constant 0 : index
    %11 = vector.load %arg4[%c9, %c0_6] : memref<48x512xbf16, #tpu.memory_space<vmem>>, vector<32x512xbf16>
    %12 = tpu.concatenate %8, %9, %10, %11 in 1 : vector<32x512xbf16>, vector<32x512xbf16>, vector<32x512xbf16>, vector<32x512xbf16> -> vector<32x2048xbf16>
    %c0_7 = arith.constant 0 : index
    %c0_8 = arith.constant 0 : index
    %13 = vector.load %arg2[%c0_7, %c0_8] : memref<2048x256xbf16, #tpu.memory_space<vmem>>, vector<2048x256xbf16>
    %cst = arith.constant dense<0.000000e+00> : vector<32x256xf32>
    %14 = tpu.matmul %12, %13, %cst {dimension_numbers = #tpu.dot_dimension_numbers<[1], [0], [0], [1], [0, 0, 1, 1], [], []>} : vector<32x2048xbf16>, vector<2048x256xbf16>, vector<32x256xf32> -> vector<32x256xf32>
    %cst_9 = arith.constant 0.000000e+00 : f32
    %15 = vector.broadcast %cst_9 : f32 to vector<32x256xf32>
    %16 = arith.cmpf oge, %14, %15 : vector<32x256xf32>
    %cst_10 = arith.constant 2.000000e-01 : f32
    %17 = vector.broadcast %cst_10 : f32 to vector<32x256xf32>
    %18 = arith.mulf %17, %14 : vector<32x256xf32>
    %19 = arith.select %16, %14, %18 : vector<32x256xi1>, vector<32x256xf32>
    %20 = arith.truncf %19 : vector<32x256xf32> to vector<32x256xbf16>
    %c0_11 = arith.constant 0 : index
    %c0_12 = arith.constant 0 : index
    %21 = vector.load %arg3[%c0_11, %c0_12] : memref<32x256xbf16, #tpu.memory_space<vmem>>, vector<32x256xbf16>
    tpu.vector_store %arg3[%c0_11, %c0_12], %20 {strides = array<i32>} : memref<32x256xbf16, #tpu.memory_space<vmem>>, vector<32x256xbf16>,
    return
  }
  func.func @transform_1(%arg0: i32) -> (i32, i32) {
    %c0_i32 = arith.constant 0 : i32
    %c0_i32_0 = arith.constant 0 : i32
    %c0_i32_1 = arith.constant 0 : i32
    return %c0_i32, %c0_i32_0 : i32, i32
  }
  func.func @transform_2(%arg0: i32) -> (i32, i32) {
    %c0_i32 = arith.constant 0 : i32
    %c0_i32_0 = arith.constant 0 : i32
    return %arg0, %c0_i32 : i32, i32
  }
}

module attributes {stable_mosaic.version = 11 : i64} {
  func.func @_conv_s2d_kernel(%arg0: i32, %arg1: memref<48x1024xbf16, #tpu.memory_space<any>>, %arg2: memref<4096x256xbf16, #tpu.memory_space<vmem>>, %arg3: memref<32x256xbf16, #tpu.memory_space<vmem>>, %arg4: memref<48x1024xbf16, #tpu.memory_space<vmem>>, %arg5: memref<1x!tpu.dma_semaphore, #tpu.memory_space<semaphore_mem>>) attributes {dimension_semantics = [#tpu.dimension_semantics<parallel>], iteration_bounds = array<i64: 1>, scalar_prefetch = 0 : i64, scratch_operands = 2 : i64, tpu.core_type = #tpu.core_type<tc>, window_params = [{}, {pipeline_mode = #tpu.pipeline_mode<synchronous>, transform_indices = @transform_1, window_bounds = array<i64: 4096, 256>}, {transform_indices = @transform_2, window_bounds = array<i64: 32, 256>}]} {
    %c32_i32 = arith.constant 32 : i32
    %0 = arith.muli %arg0, %c32_i32 : i32
    %1 = tpu.assume_multiple %0, 16 : i32
    %c0_i32 = arith.constant 0 : i32
    %c0_i32_0 = arith.constant 0 : i32
    %2 = tpu.memref_slice %arg1[%1, %c0_i32_0] : memref<48x1024xbf16, #tpu.memory_space<any>> -> memref<48x1024xbf16, #tpu.memory_space<any>>
    %3 = tpu.memref_slice %arg5[%c0_i32] : memref<1x!tpu.dma_semaphore, #tpu.memory_space<semaphore_mem>> -> memref<1x!tpu.dma_semaphore, #tpu.memory_space<semaphore_mem>>
    %4 = tpu.memref_squeeze %3 : memref<1x!tpu.dma_semaphore, #tpu.memory_space<semaphore_mem>> -> memref<!tpu.dma_semaphore, #tpu.memory_space<semaphore_mem>>
    tpu.enqueue_dma source(%2 : memref<48x1024xbf16, #tpu.memory_space<any>>) target(%arg4 : memref<48x1024xbf16, #tpu.memory_space<vmem>>) target_semaphore(%4 : memref<!tpu.dma_semaphore, #tpu.memory_space<semaphore_mem>>)
    %c0_i32_1 = arith.constant 0 : i32
    %c0_i32_2 = arith.constant 0 : i32
    %5 = tpu.memref_slice %arg1[%1, %c0_i32_2] : memref<48x1024xbf16, #tpu.memory_space<any>> -> memref<48x1024xbf16, #tpu.memory_space<any>>
    %6 = tpu.memref_slice %arg5[%c0_i32_1] : memref<1x!tpu.dma_semaphore, #tpu.memory_space<semaphore_mem>> -> memref<1x!tpu.dma_semaphore, #tpu.memory_space<semaphore_mem>>
    %7 = tpu.memref_squeeze %6 : memref<1x!tpu.dma_semaphore, #tpu.memory_space<semaphore_mem>> -> memref<!tpu.dma_semaphore, #tpu.memory_space<semaphore_mem>>
    tpu.wait_dma2 semaphore(%7 : memref<!tpu.dma_semaphore, #tpu.memory_space<semaphore_mem>>) src(%5 : memref<48x1024xbf16, #tpu.memory_space<any>>) dst(%arg4 : memref<48x1024xbf16, #tpu.memory_space<vmem>>)
    %c0 = arith.constant 0 : index
    %c0_3 = arith.constant 0 : index
    %8 = vector.load %arg4[%c0, %c0_3] : memref<48x1024xbf16, #tpu.memory_space<vmem>>, vector<32x1024xbf16>
    %c1 = arith.constant 1 : index
    %c0_4 = arith.constant 0 : index
    %9 = vector.load %arg4[%c1, %c0_4] : memref<48x1024xbf16, #tpu.memory_space<vmem>>, vector<32x1024xbf16>
    %c8 = arith.constant 8 : index
    %c0_5 = arith.constant 0 : index
    %10 = vector.load %arg4[%c8, %c0_5] : memref<48x1024xbf16, #tpu.memory_space<vmem>>, vector<32x1024xbf16>
    %c9 = arith.constant 9 : index
    %c0_6 = arith.constant 0 : index
    %11 = vector.load %arg4[%c9, %c0_6] : memref<48x1024xbf16, #tpu.memory_space<vmem>>, vector<32x1024xbf16>
    %12 = tpu.concatenate %8, %9, %10, %11 in 1 : vector<32x1024xbf16>, vector<32x1024xbf16>, vector<32x1024xbf16>, vector<32x1024xbf16> -> vector<32x4096xbf16>
    %c0_7 = arith.constant 0 : index
    %c0_8 = arith.constant 0 : index
    %13 = vector.load %arg2[%c0_7, %c0_8] : memref<4096x256xbf16, #tpu.memory_space<vmem>>, vector<4096x256xbf16>
    %cst = arith.constant dense<0.000000e+00> : vector<32x256xf32>
    %14 = tpu.matmul %12, %13, %cst {dimension_numbers = #tpu.dot_dimension_numbers<[1], [0], [0], [1], [0, 0, 1, 1], [], []>} : vector<32x4096xbf16>, vector<4096x256xbf16>, vector<32x256xf32> -> vector<32x256xf32>
    %cst_9 = arith.constant 0.000000e+00 : f32
    %15 = vector.broadcast %cst_9 : f32 to vector<32x256xf32>
    %16 = arith.cmpf oge, %14, %15 : vector<32x256xf32>
    %cst_10 = arith.constant 2.000000e-01 : f32
    %17 = vector.broadcast %cst_10 : f32 to vector<32x256xf32>
    %18 = arith.mulf %17, %14 : vector<32x256xf32>
    %19 = arith.select %16, %14, %18 : vector<32x256xi1>, vector<32x256xf32>
    %20 = arith.truncf %19 : vector<32x256xf32> to vector<32x256xbf16>
    %c0_11 = arith.constant 0 : index
    %c0_12 = arith.constant 0 : index
    %21 = vector.load %arg3[%c0_11, %c0_12] : memref<32x256xbf16, #tpu.memory_space<vmem>>, vector<32x256xbf16>
    tpu.vector_store %arg3[%c0_11, %c0_12], %20 {strides = array<i32>} : memref<32x256xbf16, #tpu.memory_space<vmem>>, vector<32x256xbf16>,
    return
  }
  func.func @transform_1(%arg0: i32) -> (i32, i32) {
    %c0_i32 = arith.constant 0 : i32
    %c0_i32_0 = arith.constant 0 : i32
    %c0_i32_1 = arith.constant 0 : i32
    return %c0_i32, %c0_i32_0 : i32, i32
  }
  func.func @transform_2(%arg0: i32) -> (i32, i32) {
    %c0_i32 = arith.constant 0 : i32
    %c0_i32_0 = arith.constant 0 : i32
    return %arg0, %c0_i32 : i32, i32
  }
}

</mosaic_0001>

<llo_original>
// kernel: pose_encoder_forward.8
$region0: #{pose_encoder_forward.8}
  #allocation0 [shape = 'u32[]', space=smem, size = 0x4, offset = 0x4, fixed_abs, tag = 'smem constant byte address 0x4 - core index']
  #allocation1 [shape = 'u32[144,128]{1,0:T(1,128)}', space=vmem, size = 0x12000, scoped, tag = 'internal scratch']
  #allocation2 [shape = 'bf16[120,64]{1,0:T(8,128)(2,1)}', space=vmem, size = 0x7800, scoped, tag = 'scratch operand']
  #allocation3 [shape = 's32[1]{0}', space=sflag, size = 0x4, scoped, tag = 'scratch operand']
  #allocation4 [shape = 's32[]', space=sflag, size = 0x4, offset = 0, fixed_abs, tag = 'sflag constant byte address 0x0 - dummy sync flag']
  %s0 = inlined_call_operand.vmem [shape: bf16[120,64], index: 0, kind: input, shape index: {}]
  %s1 = inlined_call_operand.vmem [shape: bf16[576,128], index: 1, kind: input, shape index: {}]
  %s2 = inlined_call_operand.vmem [shape: bf16[96,128], index: 2, kind: output, shape index: {}]
  %s3 = sld [smem:[#allocation0]]
  $region51: #{pose_encoder_forward.8} parent=0
    _
  %s5 = ssub.s32 1, %s3
  %s6 = scalar_select 0, %s5, %s3
  // Predicated region
  $region2: #{pose_encoder_forward.8} parent=0 // pred_check
    _
  $region3: #{pose_encoder_forward.8} parent=0 // pred_check_branch
    %8 = sbr.rel (0) target = $region5
  $region4: #{pose_encoder_forward.8} parent=0 // pred_region
    _
  $region5: #{pose_encoder_forward.8} parent=0 // pred_fallthru
    _
  %s10 = smul.u32 0, 96
  %s11 = sshra.s32 %s10, 3
  %s12 = sand.u32 %s10, 7
  %s13 = smul.addr %s11, 4
  %s14 = scalar_lea.vmem %s0, %s13
  %p16 = scmp.lt.u32.totalorder 60, 8
  %p17 = pneg %p16
  // Predicated region
  $region6: #{pose_encoder_forward.8} parent=0 // pred_check
    _
  $region7: #{pose_encoder_forward.8} parent=0 // pred_check_branch
    %19 = sbr.rel (%p16) target = $region9
  $region8: #{pose_encoder_forward.8} parent=0 // pred_region
    %s34 = sand.u32 60, 7
    %p35 = scmp.eq.s32.totalorder %s34, 0
    %p36 = pneg %p35
    // Predicated region
    $region21: #{pose_encoder_forward.8} parent=8 // pred_check
      _
    $region22: #{pose_encoder_forward.8} parent=8 // pred_check_branch
      %38 = sbr.rel (%p35) target = $region24
    $region23: #{pose_encoder_forward.8} parent=8 // pred_region
      %s39 = sand.u32 60, 7
      %s40 = ssub.s32 60, %s39
      %s41 = scalar_lea.vmem %s14, %s40
      %s42 = ssub.s32 60, %s39
      %s43 = scalar_lea.vmem [#allocation2], %s42
      loop: start=0, step=1, limit=1
      $region25: #{pose_encoder_forward.8} parent=23 // loop_pre_header
        _
      $region26: #{pose_encoder_forward.8} parent=23 // loop_header
        %s45 = sphi 0, %s49
        %p46 = scmp.ge.s32.totalorder %s45, 1
        %s50 = sphi %s14, %s14
        %s51 = sphi [#allocation2], [#allocation2]
      $region27: #{pose_encoder_forward.8} parent=23 // loop_header_branch
        %48 = sbr.rel (%p46) target = $region31
      $region28: #{pose_encoder_forward.8} parent=23 // loop_body
        %v52 = vld [vmem:[%s50] sm:$0xff]
        %53 = vst [vmem:[%s51] sm:$0xff] %v52
        %v54 = vld [vmem:[%s50 + $0x8] sm:$0xff]
        %55 = vst [vmem:[%s51 + $0x8] sm:$0xff] %v54
        %v56 = vld [vmem:[%s50 + $0x10] sm:$0xff]
        %57 = vst [vmem:[%s51 + $0x10] sm:$0xff] %v56
        %v58 = vld [vmem:[%s50 + $0x18] sm:$0xff]
        %59 = vst [vmem:[%s51 + $0x18] sm:$0xff] %v58
        %v60 = vld [vmem:[%s50 + $0x20] sm:$0xff]
        %61 = vst [vmem:[%s51 + $0x20] sm:$0xff] %v60
        %v62 = vld [vmem:[%s50 + $0x28] sm:$0xff]
        %63 = vst [vmem:[%s51 + $0x28] sm:$0xff] %v62
        %v64 = vld [vmem:[%s50 + $0x30] sm:$0xff]
        %65 = vst [vmem:[%s51 + $0x30] sm:$0xff] %v64
      $region29: #{pose_encoder_forward.8} parent=23 // loop_footer
        %s49 = sadd.s32 1, %s45
      $region30: #{pose_encoder_forward.8} parent=23 // loop_footer_branch
        %44 = sbr.rel target = $region26
      $region31: #{pose_encoder_forward.8} parent=23 // loop_exit
        _
      %s66 = sshllo.u32 0, %s39
      loop: start=0, step=1, limit=1
      $region32: #{pose_encoder_forward.8} parent=23 // loop_pre_header
        _
      $region33: #{pose_encoder_forward.8} parent=23 // loop_header
        %s68 = sphi 0, %s72
        %p69 = scmp.ge.s32.totalorder %s68, 1
        %s73 = sphi %s41, %s41
        %s74 = sphi %s43, %s43
      $region34: #{pose_encoder_forward.8} parent=23 // loop_header_branch
        %71 = sbr.rel (%p69) target = $region38
      $region35: #{pose_encoder_forward.8} parent=23 // loop_body
        %v75 = vld [vmem:[%s73] sm:%s66]
        %76 = vst [vmem:[%s74] sm:%s66] %v75
      $region36: #{pose_encoder_forward.8} parent=23 // loop_footer
        %s72 = sadd.s32 1, %s68
      $region37: #{pose_encoder_forward.8} parent=23 // loop_footer_branch
        %67 = sbr.rel target = $region33
      $region38: #{pose_encoder_forward.8} parent=23 // loop_exit
        _
    $region24: #{pose_encoder_forward.8} parent=8 // pred_fallthru
      _
  $region9: #{pose_encoder_forward.8} parent=0 // pred_fallthru
    _
  // Predicated region
  $region10: #{pose_encoder_forward.8} parent=0 // pred_check
    %p20 = pneg %p16
  $region11: #{pose_encoder_forward.8} parent=0 // pred_check_branch
    %22 = sbr.rel (%p20) target = $region13
  $region12: #{pose_encoder_forward.8} parent=0 // pred_region
    %s23 = sshllo.u32 0, 60
    loop: start=0, step=1, limit=1
    $region14: #{pose_encoder_forward.8} parent=12 // loop_pre_header
      _
    $region15: #{pose_encoder_forward.8} parent=12 // loop_header
      %s25 = sphi 0, %s29
      %p26 = scmp.ge.s32.totalorder %s25, 1
      %s30 = sphi %s14, %s14
      %s31 = sphi [#allocation2], [#allocation2]
    $region16: #{pose_encoder_forward.8} parent=12 // loop_header_branch
      %28 = sbr.rel (%p26) target = $region20
    $region17: #{pose_encoder_forward.8} parent=12 // loop_body
      %v32 = vld [vmem:[%s30] sm:%s23]
      %33 = vst [vmem:[%s31] sm:%s23] %v32
    $region18: #{pose_encoder_forward.8} parent=12 // loop_footer
      %s29 = sadd.s32 1, %s25
    $region19: #{pose_encoder_forward.8} parent=12 // loop_footer_branch
      %24 = sbr.rel target = $region15
    $region20: #{pose_encoder_forward.8} parent=12 // loop_exit
      _
  $region13: #{pose_encoder_forward.8} parent=0 // pred_fallthru
    _
  // Predicated region
  $region39: #{pose_encoder_forward.8} parent=0 // pred_check
    _
  $region40: #{pose_encoder_forward.8} parent=0 // pred_check_branch
    %79 = sbr.rel (0) target = $region42
  $region41: #{pose_encoder_forward.8} parent=0 // pred_region
    %80 = vsyncadd [#allocation3], 960
  $region42: #{pose_encoder_forward.8} parent=0 // pred_fallthru
    _
  %s81 = smul.u32 4, 15
  %s82 = smul.u32 %s81, 1
  %s83 = sshll.u32 %s82, 4
  %84 = dma.done [#allocation3], %s83
  %v85 = vld [vmem:[#allocation2] sm:$0xf]
  %v86 = vld [vmem:[#allocation2 + $0x4] sm:$0xf]
  %v87 = vld [vmem:[#allocation2 + $0x8] sm:$0xf]
  %v88 = vld [vmem:[#allocation2 + $0xc] sm:$0xf]
  %v89 = vld [vmem:[#allocation2 + $0x10] sm:$0xf]
  %v90 = vld [vmem:[#allocation2 + $0x14] sm:$0xf]
  %v91 = vld [vmem:[#allocation2 + $0x18] sm:$0xf]
  %v92 = vld [vmem:[#allocation2 + $0x1c] sm:$0xf]
  %v93 = vld [vmem:[#allocation2 + $0x20] sm:$0xf]
  %v94 = vld [vmem:[#allocation2 + $0x24] sm:$0xf]
  %v95 = vld [vmem:[#allocation2 + $0x28] sm:$0xf]
  %v96 = vld [vmem:[#allocation2 + $0x2c] sm:$0xf]
  %v97 = vld [vmem:[#allocation2 + $0x30] sm:$0x1]
  %v98 = vld [vmem:[#allocation2] sm:$0xe]
  %v99 = vld [vmem:[#allocation2 + $0x30] sm:$0xf]
  %v100 = vld [vmem:[#allocation2 + $0x34] sm:$0x1]
  %v101 = vld [vmem:[#allocation2 + $0x4] sm:$0xe]
  %v102 = vld [vmem:[#allocation2 + $0x34] sm:$0xf]
  %v103 = vld [vmem:[#allocation2 + $0x38] sm:$0x1]
  %v104 = vld [vmem:[#allocation2 + $0x8] sm:$0xe]
  %v117 = vunpack.c.l.b16 %v85
  %v118 = vunpack.c.l.b16 %v86
  %v119 = vunpack.c.l.b16 %v87
  %v120 = vunpack.c.l.b16 %v88
  %v121 = vunpack.c.l.b16 %v89
  %v122 = vunpack.c.l.b16 %v90
  %v123 = vunpack.c.l.b16 %v91
  %v124 = vunpack.c.l.b16 %v92
  %v125 = vunpack.c.l.b16 %v93
  %v126 = vunpack.c.l.b16 %v94
  %v127 = vunpack.c.l.b16 %v95
  %v128 = vunpack.c.l.b16 %v96
  %v129 = vpack.c.b16 %v118, %v117
  %v130 = vpack.c.b16 %v120, %v119
  %v131 = vpack.c.b16 %v122, %v121
  %v132 = vpack.c.b16 %v124, %v123
  %v133 = vpack.c.b16 %v126, %v125
  %v134 = vpack.c.b16 %v128, %v127
  %v136 = vunpack.c.l.b16 %v97
  %v137 = vpack.c.b16 %v136, %v136
  %vm138 = vsmask.f32 7424
  %v140 = vshrl.u32 %v129, 16
  %v142 = vshll.u32 %v129, 16
  %v144 = vrot.slane %v142, 1
  %v145 = vor.u32 %v140, %v144
  %v147 = vshll.u32 %v130, 16
  %v149 = vrot.slane %v147, 1
  %v150 = vsel %vm138, %v145, %v149
  %v151 = vshrl.u32 %v130, 16
  %v153 = vor.u32 %v151, %v149
  %v155 = vshll.u32 %v131, 16
  %v157 = vrot.slane %v155, 1
  %v158 = vsel %vm138, %v153, %v157
  %v159 = vshrl.u32 %v131, 16
  %v161 = vor.u32 %v159, %v157
  %v163 = vshll.u32 %v132, 16
  %v165 = vrot.slane %v163, 1
  %v166 = vsel %vm138, %v161, %v165
  %v167 = vshrl.u32 %v132, 16
  %v169 = vor.u32 %v167, %v165
  %v171 = vshll.u32 %v133, 16
  %v173 = vrot.slane %v171, 1
  %v174 = vsel %vm138, %v169, %v173
  %v175 = vshrl.u32 %v133, 16
  %v177 = vor.u32 %v175, %v173
  %v179 = vshll.u32 %v134, 16
  %v181 = vrot.slane %v179, 1
  %v182 = vsel %vm138, %v177, %v181
  %v183 = vshrl.u32 %v134, 16
  %v185 = vor.u32 %v183, %v181
  %v187 = vshll.u32 %v137, 16
  %v189 = vrot.slane %v187, 1
  %v190 = vsel %vm138, %v185, %v189
  %191 = vrot.lane.b32.xlu0 %v150, 64
  %v192 = vpop.permute.xlu0 %191
  %193 = vrot.lane.b32.xlu0 %v158, 64
  %v194 = vpop.permute.xlu0 %193
  %195 = vrot.lane.b32.xlu0 %v166, 64
  %v196 = vpop.permute.xlu0 %195
  %197 = vrot.lane.b32.xlu0 %v174, 64
  %v198 = vpop.permute.xlu0 %197
  %199 = vrot.lane.b32.xlu0 %v182, 64
  %v200 = vpop.permute.xlu0 %199
  %201 = vrot.lane.b32.xlu0 %v190, 64
  %v202 = vpop.permute.xlu0 %201
  %v204 = vunpack.c.l.b16 %v98
  %v205 = vpack.c.b16 %v118, %v204
  %vm206 = vcmask 1046528
  %v207 = vrot.slane %v205, 1
  %v208 = vrot.slane %v130, 1
  %v209 = vsel %vm206, %v207, %v208
  %v210 = vrot.slane %v131, 1
  %v211 = vsel %vm206, %v208, %v210
  %v212 = vrot.slane %v132, 1
  %v213 = vsel %vm206, %v210, %v212
  %v214 = vrot.slane %v133, 1
  %v215 = vsel %vm206, %v212, %v214
  %v216 = vrot.slane %v134, 1
  %v217 = vsel %vm206, %v214, %v216
  %v218 = vrot.slane %v137, 1
  %v219 = vsel %vm206, %v216, %v218
  %v221 = vunpack.c.l.b16 %v99
  %v222 = vpack.c.b16 %v119, %v118
  %v223 = vpack.c.b16 %v121, %v120
  %v224 = vpack.c.b16 %v123, %v122
  %v225 = vpack.c.b16 %v125, %v124
  %v226 = vpack.c.b16 %v127, %v126
  %v227 = vpack.c.b16 %v221, %v128
  %228 = vrot.lane.b32.xlu0 %v222, 64
  %v229 = vpop.permute.xlu0 %228
  %230 = vrot.lane.b32.xlu0 %v223, 64
  %v231 = vpop.permute.xlu0 %230
  %232 = vrot.lane.b32.xlu0 %v224, 64
  %v233 = vpop.permute.xlu0 %232
  %234 = vrot.lane.b32.xlu0 %v225, 64
  %v235 = vpop.permute.xlu0 %234
  %236 = vrot.lane.b32.xlu0 %v226, 64
  %v237 = vpop.permute.xlu0 %236
  %238 = vrot.lane.b32.xlu0 %v227, 64
  %v239 = vpop.permute.xlu0 %238
  %v241 = vunpack.c.l.b16 %v100
  %v242 = vpack.c.b16 %v241, %v241
  %v244 = vshrl.u32 %v222, 16
  %v246 = vshll.u32 %v222, 16
  %v248 = vrot.slane %v246, 1
  %v249 = vor.u32 %v244, %v248
  %v251 = vshll.u32 %v223, 16
  %v253 = vrot.slane %v251, 1
  %v254 = vsel %vm138, %v249, %v253
  %v255 = vshrl.u32 %v223, 16
  %v257 = vor.u32 %v255, %v253
  %v259 = vshll.u32 %v224, 16
  %v261 = vrot.slane %v259, 1
  %v262 = vsel %vm138, %v257, %v261
  %v263 = vshrl.u32 %v224, 16
  %v265 = vor.u32 %v263, %v261
  %v267 = vshll.u32 %v225, 16
  %v269 = vrot.slane %v267, 1
  %v270 = vsel %vm138, %v265, %v269
  %v271 = vshrl.u32 %v225, 16
  %v273 = vor.u32 %v271, %v269
  %v275 = vshll.u32 %v226, 16
  %v277 = vrot.slane %v275, 1
  %v278 = vsel %vm138, %v273, %v277
  %v279 = vshrl.u32 %v226, 16
  %v281 = vor.u32 %v279, %v277
  %v283 = vshll.u32 %v227, 16
  %v285 = vrot.slane %v283, 1
  %v286 = vsel %vm138, %v281, %v285
  %v287 = vshrl.u32 %v227, 16
  %v289 = vor.u32 %v287, %v285
  %v291 = vshll.u32 %v242, 16
  %v293 = vrot.slane %v291, 1
  %v294 = vsel %vm138, %v289, %v293
  %v296 = vunpack.c.l.b16 %v101
  %v297 = vpack.c.b16 %v119, %v296
  %v298 = vrot.slane %v297, 1
  %v299 = vrot.slane %v223, 1
  %v300 = vsel %vm206, %v298, %v299
  %v301 = vrot.slane %v224, 1
  %v302 = vsel %vm206, %v299, %v301
  %v303 = vrot.slane %v225, 1
  %v304 = vsel %vm206, %v301, %v303
  %v305 = vrot.slane %v226, 1
  %v306 = vsel %vm206, %v303, %v305
  %v307 = vrot.slane %v227, 1
  %v308 = vsel %vm206, %v305, %v307
  %v309 = vrot.slane %v242, 1
  %v310 = vsel %vm206, %v307, %v309
  %311 = vrot.lane.b32.xlu0 %v300, 64
  %v312 = vpop.permute.xlu0 %311
  %313 = vrot.lane.b32.xlu0 %v302, 64
  %v314 = vpop.permute.xlu0 %313
  %315 = vrot.lane.b32.xlu0 %v304, 64
  %v316 = vpop.permute.xlu0 %315
  %317 = vrot.lane.b32.xlu0 %v306, 64
  %v318 = vpop.permute.xlu0 %317
  %319 = vrot.lane.b32.xlu0 %v308, 64
  %v320 = vpop.permute.xlu0 %319
  %321 = vrot.lane.b32.xlu0 %v310, 64
  %v322 = vpop.permute.xlu0 %321
  %v324 = vunpack.c.l.b16 %v102
  %v325 = vpack.c.b16 %v324, %v221
  %v327 = vunpack.c.l.b16 %v103
  %v328 = vpack.c.b16 %v327, %v327
  %v330 = vshll.u32 %v325, 16
  %v332 = vrot.slane %v330, 1
  %v333 = vsel %vm138, %v185, %v332
  %v334 = vshrl.u32 %v325, 16
  %v336 = vor.u32 %v334, %v332
  %v338 = vshll.u32 %v328, 16
  %v340 = vrot.slane %v338, 1
  %v341 = vsel %vm138, %v336, %v340
  %342 = vrot.lane.b32.xlu0 %v333, 64
  %v343 = vpop.permute.xlu0 %342
  %344 = vrot.lane.b32.xlu0 %v341, 64
  %v345 = vpop.permute.xlu0 %344
  %v347 = vunpack.c.l.b16 %v104
  %v348 = vpack.c.b16 %v120, %v347
  %v349 = vrot.slane %v348, 1
  %v350 = vsel %vm206, %v349, %v210
  %v351 = vrot.slane %v325, 1
  %v352 = vsel %vm206, %v216, %v351
  %v353 = vrot.slane %v328, 1
  %v354 = vsel %vm206, %v351, %v353
  %vm355 = vcmask 523264
  %v357 = vsel %vm355, %v129, %v192
  %v360 = vsel %vm355, %v130, %v194
  %v363 = vsel %vm355, %v131, %v196
  %v366 = vsel %vm355, %v132, %v198
  %v369 = vsel %vm355, %v133, %v200
  %v372 = vsel %vm355, %v134, %v202
  %v376 = vsel %vm355, %v209, %v229
  %v380 = vsel %vm355, %v211, %v231
  %v384 = vsel %vm355, %v213, %v233
  %v388 = vsel %vm355, %v215, %v235
  %v392 = vsel %vm355, %v217, %v237
  %v396 = vsel %vm355, %v219, %v239
  %v400 = vsel %vm355, %v254, %v312
  %v404 = vsel %vm355, %v262, %v314
  %v408 = vsel %vm355, %v270, %v316
  %v412 = vsel %vm355, %v278, %v318
  %v416 = vsel %vm355, %v286, %v320
  %v420 = vsel %vm355, %v294, %v322
  %v423 = vsel %vm355, %v134, %v343
  %v426 = vsel %vm355, %v325, %v345
  %v428 = vld [vmem:[%s1] sm:$0xf]
  %v429 = vld [vmem:[%s1 + $0x4] sm:$0xf]
  %v430 = vld [vmem:[%s1 + $0x8] sm:$0xf]
  %v431 = vld [vmem:[%s1 + $0xc] sm:$0xf]
  %v432 = vld [vmem:[%s1 + $0x10] sm:$0xf]
  %v433 = vld [vmem:[%s1 + $0x14] sm:$0xf]
  %v434 = vld [vmem:[%s1 + $0x18] sm:$0xf]
  %v435 = vld [vmem:[%s1 + $0x1c] sm:$0xf]
  %v436 = vld [vmem:[%s1 + $0x20] sm:$0xf]
  %v437 = vld [vmem:[%s1 + $0x24] sm:$0xf]
  %v438 = vld [vmem:[%s1 + $0x28] sm:$0xf]
  %v439 = vld [vmem:[%s1 + $0x2c] sm:$0xf]
  %v440 = vld [vmem:[%s1 + $0x30] sm:$0xf]
  %v441 = vld [vmem:[%s1 + $0x34] sm:$0xf]
  %v442 = vld [vmem:[%s1 + $0x38] sm:$0xf]
  %v443 = vld [vmem:[%s1 + $0x3c] sm:$0xf]
  %v444 = vld [vmem:[%s1 + $0x40] sm:$0xf]
  %v445 = vld [vmem:[%s1 + $0x44] sm:$0xf]
  %v446 = vld [vmem:[%s1 + $0x48] sm:$0xf]
  %v447 = vld [vmem:[%s1 + $0x4c] sm:$0xf]
  %v448 = vld [vmem:[%s1 + $0x50] sm:$0xf]
  %v449 = vld [vmem:[%s1 + $0x54] sm:$0xf]
  %v450 = vld [vmem:[%s1 + $0x58] sm:$0xf]
  %v451 = vld [vmem:[%s1 + $0x5c] sm:$0xf]
  %v452 = vld [vmem:[%s1 + $0x60] sm:$0xf]
  %v453 = vld [vmem:[%s1 + $0x64] sm:$0xf]
  %v454 = vld [vmem:[%s1 + $0x68] sm:$0xf]
  %v455 = vld [vmem:[%s1 + $0x6c] sm:$0xf]
  %v456 = vld [vmem:[%s1 + $0x70] sm:$0xf]
  %v457 = vld [vmem:[%s1 + $0x74] sm:$0xf]
  %v458 = vld [vmem:[%s1 + $0x78] sm:$0xf]
  %v459 = vld [vmem:[%s1 + $0x7c] sm:$0xf]
  %v460 = vld [vmem:[%s1 + $0x80] sm:$0xf]
  %v461 = vld [vmem:[%s1 + $0x84] sm:$0xf]
  %v462 = vld [vmem:[%s1 + $0x88] sm:$0xf]
  %v463 = vld [vmem:[%s1 + $0x8c] sm:$0xf]
  %v464 = vld [vmem:[%s1 + $0x90] sm:$0xf]
  %v465 = vld [vmem:[%s1 + $0x94] sm:$0xf]
  %v466 = vld [vmem:[%s1 + $0x98] sm:$0xf]
  %v467 = vld [vmem:[%s1 + $0x9c] sm:$0xf]
  %v468 = vld [vmem:[%s1 + $0xa0] sm:$0xf]
  %v469 = vld [vmem:[%s1 + $0xa4] sm:$0xf]
  %v470 = vld [vmem:[%s1 + $0xa8] sm:$0xf]
  %v471 = vld [vmem:[%s1 + $0xac] sm:$0xf]
  %v472 = vld [vmem:[%s1 + $0xb0] sm:$0xf]
  %v473 = vld [vmem:[%s1 + $0xb4] sm:$0xf]
  %v474 = vld [vmem:[%s1 + $0xb8] sm:$0xf]
  %v475 = vld [vmem:[%s1 + $0xbc] sm:$0xf]
  %v476 = vld [vmem:[%s1 + $0xc0] sm:$0xf]
  %v477 = vld [vmem:[%s1 + $0xc4] sm:$0xf]
  %v478 = vld [vmem:[%s1 + $0xc8] sm:$0xf]
  %v479 = vld [vmem:[%s1 + $0xcc] sm:$0xf]
  %v480 = vld [vmem:[%s1 + $0xd0] sm:$0xf]
  %v481 = vld [vmem:[%s1 + $0xd4] sm:$0xf]
  %v482 = vld [vmem:[%s1 + $0xd8] sm:$0xf]
  %v483 = vld [vmem:[%s1 + $0xdc] sm:$0xf]
  %v484 = vld [vmem:[%s1 + $0xe0] sm:$0xf]
  %v485 = vld [vmem:[%s1 + $0xe4] sm:$0xf]
  %v486 = vld [vmem:[%s1 + $0xe8] sm:$0xf]
  %v487 = vld [vmem:[%s1 + $0xec] sm:$0xf]
  %v488 = vld [vmem:[%s1 + $0xf0] sm:$0xf]
  %v489 = vld [vmem:[%s1 + $0xf4] sm:$0xf]
  %v490 = vld [vmem:[%s1 + $0xf8] sm:$0xf]
  %v491 = vld [vmem:[%s1 + $0xfc] sm:$0xf]
  %v492 = vld [vmem:[%s1 + $0x100] sm:$0xf]
  %v493 = vld [vmem:[%s1 + $0x104] sm:$0xf]
  %v494 = vld [vmem:[%s1 + $0x108] sm:$0xf]
  %v495 = vld [vmem:[%s1 + $0x10c] sm:$0xf]
  %v496 = vld [vmem:[%s1 + $0x110] sm:$0xf]
  %v497 = vld [vmem:[%s1 + $0x114] sm:$0xf]
  %v498 = vld [vmem:[%s1 + $0x118] sm:$0xf]
  %v499 = vld [vmem:[%s1 + $0x11c] sm:$0xf]
  %v572 = vunpack.c.l.b16 %v428
  %v573 = vunpack.c.l.b16 %v429
  %v574 = vunpack.c.l.b16 %v430
  %v575 = vunpack.c.l.b16 %v431
  %v576 = vunpack.c.l.b16 %v432
  %v577 = vunpack.c.l.b16 %v433
  %v578 = vunpack.c.l.b16 %v434
  %v579 = vunpack.c.l.b16 %v435
  %v580 = vunpack.c.l.b16 %v436
  %v581 = vunpack.c.l.b16 %v437
  %v582 = vunpack.c.l.b16 %v438
  %v583 = vunpack.c.l.b16 %v439
  %v584 = vunpack.c.l.b16 %v440
  %v585 = vunpack.c.l.b16 %v441
  %v586 = vunpack.c.l.b16 %v442
  %v587 = vunpack.c.l.b16 %v443
  %v588 = vunpack.c.l.b16 %v444
  %v589 = vunpack.c.l.b16 %v445
  %v590 = vunpack.c.l.b16 %v446
  %v591 = vunpack.c.l.b16 %v447
  %v592 = vunpack.c.l.b16 %v448
  %v593 = vunpack.c.l.b16 %v449
  %v594 = vunpack.c.l.b16 %v450
  %v595 = vunpack.c.l.b16 %v451
  %v596 = vunpack.c.l.b16 %v452
  %v597 = vunpack.c.l.b16 %v453
  %v598 = vunpack.c.l.b16 %v454
  %v599 = vunpack.c.l.b16 %v455
  %v600 = vunpack.c.l.b16 %v456
  %v601 = vunpack.c.l.b16 %v457
  %v602 = vunpack.c.l.b16 %v458
  %v603 = vunpack.c.l.b16 %v459
  %v604 = vunpack.c.l.b16 %v460
  %v605 = vunpack.c.l.b16 %v461
  %v606 = vunpack.c.l.b16 %v462
  %v607 = vunpack.c.l.b16 %v463
  %v608 = vunpack.c.l.b16 %v464
  %v609 = vunpack.c.l.b16 %v465
  %v610 = vunpack.c.l.b16 %v466
  %v611 = vunpack.c.l.b16 %v467
  %v612 = vunpack.c.l.b16 %v468
  %v613 = vunpack.c.l.b16 %v469
  %v614 = vunpack.c.l.b16 %v470
  %v615 = vunpack.c.l.b16 %v471
  %v616 = vunpack.c.l.b16 %v472
  %v617 = vunpack.c.l.b16 %v473
  %v618 = vunpack.c.l.b16 %v474
  %v619 = vunpack.c.l.b16 %v475
  %v620 = vunpack.c.l.b16 %v476
  %v621 = vunpack.c.l.b16 %v477
  %v622 = vunpack.c.l.b16 %v478
  %v623 = vunpack.c.l.b16 %v479
  %v624 = vunpack.c.l.b16 %v480
  %v625 = vunpack.c.l.b16 %v481
  %v626 = vunpack.c.l.b16 %v482
  %v627 = vunpack.c.l.b16 %v483
  %v628 = vunpack.c.l.b16 %v484
  %v629 = vunpack.c.l.b16 %v485
  %v630 = vunpack.c.l.b16 %v486
  %v631 = vunpack.c.l.b16 %v487
  %v632 = vunpack.c.l.b16 %v488
  %v633 = vunpack.c.l.b16 %v489
  %v634 = vunpack.c.l.b16 %v490
  %v635 = vunpack.c.l.b16 %v491
  %v636 = vunpack.c.l.b16 %v492
  %v637 = vunpack.c.l.b16 %v493
  %v638 = vunpack.c.l.b16 %v494
  %v639 = vunpack.c.l.b16 %v495
  %v640 = vunpack.c.l.b16 %v496
  %v641 = vunpack.c.l.b16 %v497
  %v642 = vunpack.c.l.b16 %v498
  %v643 = vunpack.c.l.b16 %v499
  %v644 = vpack.c.b16 %v573, %v572
  %v645 = vpack.c.b16 %v575, %v574
  %v646 = vpack.c.b16 %v577, %v576
  %v647 = vpack.c.b16 %v579, %v578
  %v648 = vpack.c.b16 %v581, %v580
  %v649 = vpack.c.b16 %v583, %v582
  %v650 = vpack.c.b16 %v585, %v584
  %v651 = vpack.c.b16 %v587, %v586
  %v652 = vpack.c.b16 %v589, %v588
  %v653 = vpack.c.b16 %v591, %v590
  %v654 = vpack.c.b16 %v593, %v592
  %v655 = vpack.c.b16 %v595, %v594
  %v656 = vpack.c.b16 %v597, %v596
  %v657 = vpack.c.b16 %v599, %v598
  %v658 = vpack.c.b16 %v601, %v600
  %v659 = vpack.c.b16 %v603, %v602
  %v660 = vpack.c.b16 %v605, %v604
  %v661 = vpack.c.b16 %v607, %v606
  %v662 = vpack.c.b16 %v609, %v608
  %v663 = vpack.c.b16 %v611, %v610
  %v664 = vpack.c.b16 %v613, %v612
  %v665 = vpack.c.b16 %v615, %v614
  %v666 = vpack.c.b16 %v617, %v616
  %v667 = vpack.c.b16 %v619, %v618
  %v668 = vpack.c.b16 %v621, %v620
  %v669 = vpack.c.b16 %v623, %v622
  %v670 = vpack.c.b16 %v625, %v624
  %v671 = vpack.c.b16 %v627, %v626
  %v672 = vpack.c.b16 %v629, %v628
  %v673 = vpack.c.b16 %v631, %v630
  %v674 = vpack.c.b16 %v633, %v632
  %v675 = vpack.c.b16 %v635, %v634
  %v676 = vpack.c.b16 %v637, %v636
  %v677 = vpack.c.b16 %v639, %v638
  %v678 = vpack.c.b16 %v641, %v640
  %v679 = vpack.c.b16 %v643, %v642
  %v717 = vsel %vm355, %v350, 0
  %v719 = vsel %vm355, %v213, 0
  %v721 = vsel %vm355, %v215, 0
  %v723 = vsel %vm355, %v217, 0
  %v726 = vsel %vm355, %v352, 0
  %v729 = vsel %vm355, %v354, 0
  %731 = vmatprep.subr.bf16.mxu0 0
  %732 = vmatpush1.bf16.msra.mxu0 %v644
  %733 = vmatprep.subr.bf16.mxu0 0
  %734 = vmatpush1.bf16.msra.mxu0 %v645
  %735 = vmatprep.subr.bf16.mxu0 0
  %736 = vmatpush1.bf16.msra.mxu0 %v646
  %737 = vmatprep.subr.bf16.mxu0 0
  %738 = vmatpush1.bf16.msra.mxu0 %v647
  %739 = vmatprep.subr.bf16.mxu0 0
  %740 = vmatpush1.bf16.msra.mxu0 %v648
  %741 = vmatprep.subr.bf16.mxu0 0
  %742 = vmatpush1.bf16.msra.mxu0 %v649
  %743 = vmatprep.subr.bf16.mxu0 0
  %744 = vmatpush1.bf16.msra.mxu0 %v650
  %745 = vmatprep.subr.bf16.mxu0 0
  %746 = vmatpush1.bf16.msra.mxu0 %v651
  %747 = vmatprep.subr.bf16.mxu0 0
  %748 = vmatpush1.bf16.msra.mxu0 %v652
  %749 = vmatprep.subr.bf16.mxu0 0
  %750 = vmatpush1.bf16.msra.mxu0 %v653
  %751 = vmatprep.subr.bf16.mxu0 0
  %752 = vmatpush1.bf16.msra.mxu0 %v654
  %753 = vmatprep.subr.bf16.mxu0 0
  %754 = vmatpush1.bf16.msra.mxu0 %v655
  %755 = vmatprep.subr.bf16.mxu0 0
  %756 = vmatpush1.bf16.msra.mxu0 %v656
  %757 = vmatprep.subr.bf16.mxu0 0
  %758 = vmatpush1.bf16.msra.mxu0 %v657
  %759 = vmatprep.subr.bf16.mxu0 0
  %760 = vmatpush1.bf16.msra.mxu0 %v658
  %761 = vmatprep.subr.bf16.mxu0 0
  %762 = vmatpush1.bf16.msra.mxu0 %v659
  %763 = vmatprep.mubr.bf16.mxu0 %v376
  %764 = vmatmul.mubr.bf16.gmra.mrb[0].mxu0 %v357
  %v765 = vpop.f32.mrb[0].mxu0
  %v766 = vadd.f32 0.0, %v765
  %v767 = vpop.f32.mrb[0].mxu0
  %v768 = vpop.f32.mrb[0].mxu0
  %v769 = vadd.f32 0.0, %v768
  %v770 = vpop.f32.mrb[0].mxu0
  %771 = vmatprep.mubr.bf16.mxu0 %v380
  %772 = vmatmul.mubr.bf16.gmra.mrb[0].mxu0 %v360
  %v773 = vpop.f32.mrb[0].mxu0
  %v774 = vadd.f32 0.0, %v773
  %v775 = vpop.f32.mrb[0].mxu0
  %v776 = vpop.f32.mrb[0].mxu0
  %v777 = vadd.f32 0.0, %v776
  %v778 = vpop.f32.mrb[0].mxu0
  %779 = vmatprep.mubr.bf16.mxu0 %v384
  %780 = vmatmul.mubr.bf16.gmra.mrb[0].mxu0 %v363
  %v781 = vpop.f32.mrb[0].mxu0
  %v782 = vadd.f32 0.0, %v781
  %v783 = vpop.f32.mrb[0].mxu0
  %v784 = vpop.f32.mrb[0].mxu0
  %v785 = vadd.f32 0.0, %v784
  %v786 = vpop.f32.mrb[0].mxu0
  %787 = vmatprep.mubr.bf16.mxu0 %v388
  %788 = vmatmul.mubr.bf16.gmra.mrb[0].mxu0 %v366
  %v789 = vpop.f32.mrb[0].mxu0
  %v790 = vadd.f32 0.0, %v789
  %v791 = vpop.f32.mrb[0].mxu0
  %v792 = vpop.f32.mrb[0].mxu0
  %v793 = vadd.f32 0.0, %v792
  %v794 = vpop.f32.mrb[0].mxu0
  %795 = vmatprep.mubr.bf16.mxu0 %v392
  %796 = vmatmul.mubr.bf16.gmra.mrb[0].mxu0 %v369
  %v797 = vpop.f32.mrb[0].mxu0
  %v798 = vadd.f32 0.0, %v797
  %v799 = vpop.f32.mrb[0].mxu0
  %v800 = vpop.f32.mrb[0].mxu0
  %v801 = vadd.f32 0.0, %v800
  %v802 = vpop.f32.mrb[0].mxu0
  %803 = vmatprep.mubr.bf16.mxu0 %v396
  %804 = vmatmul.mubr.bf16.gmra.mrb[0].mxu0 %v372
  %v805 = vpop.f32.mrb[0].mxu0
  %v806 = vadd.f32 0.0, %v805
  %v807 = vpop.f32.mrb[0].mxu0
  %v808 = vpop.f32.mrb[0].mxu0
  %v809 = vadd.f32 0.0, %v808
  %v810 = vpop.f32.mrb[0].mxu0
  %811 = vdwg.mxu0
  %812 = vmatprep.subr.bf16.mxu0 0
  %813 = vmatpush1.bf16.msra.mxu0 %v660
  %814 = vmatprep.subr.bf16.mxu0 0
  %815 = vmatpush1.bf16.msra.mxu0 %v661
  %816 = vmatprep.subr.bf16.mxu0 0
  %817 = vmatpush1.bf16.msra.mxu0 %v662
  %818 = vmatprep.subr.bf16.mxu0 0
  %819 = vmatpush1.bf16.msra.mxu0 %v663
  %820 = vmatprep.subr.bf16.mxu0 0
  %821 = vmatpush1.bf16.msra.mxu0 %v664
  %822 = vmatprep.subr.bf16.mxu0 0
  %823 = vmatpush1.bf16.msra.mxu0 %v665
  %824 = vmatprep.subr.bf16.mxu0 0
  %825 = vmatpush1.bf16.msra.mxu0 %v666
  %826 = vmatprep.subr.bf16.mxu0 0
  %827 = vmatpush1.bf16.msra.mxu0 %v667
  %828 = vmatprep.subr.bf16.mxu0 0
  %829 = vmatpush1.bf16.msra.mxu0 %v668
  %830 = vmatprep.subr.bf16.mxu0 0
  %831 = vmatpush1.bf16.msra.mxu0 %v669
  %832 = vmatprep.subr.bf16.mxu0 0
  %833 = vmatpush1.bf16.msra.mxu0 %v670
  %834 = vmatprep.subr.bf16.mxu0 0
  %835 = vmatpush1.bf16.msra.mxu0 %v671
  %836 = vmatprep.subr.bf16.mxu0 0
  %837 = vmatpush1.bf16.msra.mxu0 %v672
  %838 = vmatprep.subr.bf16.mxu0 0
  %839 = vmatpush1.bf16.msra.mxu0 %v673
  %840 = vmatprep.subr.bf16.mxu0 0
  %841 = vmatpush1.bf16.msra.mxu0 %v674
  %842 = vmatprep.subr.bf16.mxu0 0
  %843 = vmatpush1.bf16.msra.mxu0 %v675
  %844 = vmatprep.mubr.bf16.mxu0 %v360
  %845 = vmatmul.mubr.bf16.gmra.mrb[0].mxu0 %v400
  %v846 = vpop.f32.mrb[0].mxu0
  %v847 = vadd.f32 %v766, %v846
  %v848 = vpop.f32.mrb[0].mxu0
  %v849 = vpop.f32.mrb[0].mxu0
  %v850 = vadd.f32 %v769, %v849
  %v851 = vpop.f32.mrb[0].mxu0
  %852 = vmatprep.mubr.bf16.mxu0 %v363
  %853 = vmatmul.mubr.bf16.gmra.mrb[0].mxu0 %v404
  %v854 = vpop.f32.mrb[0].mxu0
  %v855 = vadd.f32 %v774, %v854
  %v856 = vpop.f32.mrb[0].mxu0
  %v857 = vpop.f32.mrb[0].mxu0
  %v858 = vadd.f32 %v777, %v857
  %v859 = vpop.f32.mrb[0].mxu0
  %860 = vmatprep.mubr.bf16.mxu0 %v366
  %861 = vmatmul.mubr.bf16.gmra.mrb[0].mxu0 %v408
  %v862 = vpop.f32.mrb[0].mxu0
  %v863 = vadd.f32 %v782, %v862
  %v864 = vpop.f32.mrb[0].mxu0
  %v865 = vpop.f32.mrb[0].mxu0
  %v866 = vadd.f32 %v785, %v865
  %v867 = vpop.f32.mrb[0].mxu0
  %868 = vmatprep.mubr.bf16.mxu0 %v369
  %869 = vmatmul.mubr.bf16.gmra.mrb[0].mxu0 %v412
  %v870 = vpop.f32.mrb[0].mxu0
  %v871 = vadd.f32 %v790, %v870
  %v872 = vpop.f32.mrb[0].mxu0
  %v873 = vpop.f32.mrb[0].mxu0
  %v874 = vadd.f32 %v793, %v873
  %v875 = vpop.f32.mrb[0].mxu0
  %876 = vmatprep.mubr.bf16.mxu0 %v423
  %877 = vmatmul.mubr.bf16.gmra.mrb[0].mxu0 %v416
  %v878 = vpop.f32.mrb[0].mxu0
  %v879 = vadd.f32 %v798, %v878
  %v880 = vpop.f32.mrb[0].mxu0
  %v881 = vpop.f32.mrb[0].mxu0
  %v882 = vadd.f32 %v801, %v881
  %v883 = vpop.f32.mrb[0].mxu0
  %884 = vmatprep.mubr.bf16.mxu0 %v426
  %885 = vmatmul.mubr.bf16.gmra.mrb[0].mxu0 %v420
  %v886 = vpop.f32.mrb[0].mxu0
  %v887 = vadd.f32 %v806, %v886
  %v888 = vpop.f32.mrb[0].mxu0
  %v889 = vpop.f32.mrb[0].mxu0
  %v890 = vadd.f32 %v809, %v889
  %v891 = vpop.f32.mrb[0].mxu0
  %892 = vdwg.mxu0
  %893 = vmatprep.subr.bf16.mxu0 0
  %894 = vmatpush1.bf16.msra.mxu0 %v676
  %895 = vmatprep.subr.bf16.mxu0 0
  %896 = vmatpush1.bf16.msra.mxu0 %v677
  %897 = vmatprep.subr.bf16.mxu0 0
  %898 = vmatpush1.bf16.msra.mxu0 %v678
  %899 = vmatprep.subr.bf16.mxu0 0
  %900 = vmatpush1.bf16.msra.mxu0 %v679
  %901 = vmatprep.subr.bf16.mxu0 0
  %902 = vmatpush1.bf16.msra.mxu0 0
  %903 = vmatprep.subr.bf16.mxu0 0
  %904 = vmatpush1.bf16.msra.mxu0 0
  %905 = vmatprep.subr.bf16.mxu0 0
  %906 = vmatpush1.bf16.msra.mxu0 0
  %907 = vmatprep.subr.bf16.mxu0 0
  %908 = vmatpush1.bf16.msra.mxu0 0
  %909 = vmatprep.subr.bf16.mxu0 0
  %910 = vmatpush1.bf16.msra.mxu0 0
  %911 = vmatprep.subr.bf16.mxu0 0
  %912 = vmatpush1.bf16.msra.mxu0 0
  %913 = vmatprep.subr.bf16.mxu0 0
  %914 = vmatpush1.bf16.msra.mxu0 0
  %915 = vmatprep.subr.bf16.mxu0 0
  %916 = vmatpush1.bf16.msra.mxu0 0
  %917 = vmatprep.subr.bf16.mxu0 0
  %918 = vmatpush1.bf16.msra.mxu0 0
  %919 = vmatprep.subr.bf16.mxu0 0
  %920 = vmatpush1.bf16.msra.mxu0 0
  %921 = vmatprep.subr.bf16.mxu0 0
  %922 = vmatpush1.bf16.msra.mxu0 0
  %923 = vmatprep.subr.bf16.mxu0 0
  %924 = vmatpush1.bf16.msra.mxu0 0
  %925 = vmatprep.mubr.bf16.mxu0 0
  %926 = vmatmul.mubr.bf16.gmra.mrb[0].mxu0 %v717
  %v927 = vpop.f32.mrb[0].mxu0
  %v928 = vadd.f32 %v847, %v927
  %v929 = vpop.f32.mrb[0].mxu0
  %v930 = vpop.f32.mrb[0].mxu0
  %v931 = vadd.f32 %v850, %v930
  %v932 = vpop.f32.mrb[0].mxu0
  %933 = vmatprep.mubr.bf16.mxu0 0
  %934 = vmatmul.mubr.bf16.gmra.mrb[0].mxu0 %v719
  %v935 = vpop.f32.mrb[0].mxu0
  %v936 = vadd.f32 %v855, %v935
  %v937 = vpop.f32.mrb[0].mxu0
  %v938 = vpop.f32.mrb[0].mxu0
  %v939 = vadd.f32 %v858, %v938
  %v940 = vpop.f32.mrb[0].mxu0
  %941 = vmatprep.mubr.bf16.mxu0 0
  %942 = vmatmul.mubr.bf16.gmra.mrb[0].mxu0 %v721
  %v943 = vpop.f32.mrb[0].mxu0
  %v944 = vadd.f32 %v863, %v943
  %v945 = vpop.f32.mrb[0].mxu0
  %v946 = vpop.f32.mrb[0].mxu0
  %v947 = vadd.f32 %v866, %v946
  %v948 = vpop.f32.mrb[0].mxu0
  %949 = vmatprep.mubr.bf16.mxu0 0
  %950 = vmatmul.mubr.bf16.gmra.mrb[0].mxu0 %v723
  %v951 = vpop.f32.mrb[0].mxu0
  %v952 = vadd.f32 %v871, %v951
  %v953 = vpop.f32.mrb[0].mxu0
  %v954 = vpop.f32.mrb[0].mxu0
  %v955 = vadd.f32 %v874, %v954
  %v956 = vpop.f32.mrb[0].mxu0
  %957 = vmatprep.mubr.bf16.mxu0 0
  %958 = vmatmul.mubr.bf16.gmra.mrb[0].mxu0 %v726
  %v959 = vpop.f32.mrb[0].mxu0
  %v960 = vadd.f32 %v879, %v959
  %v961 = vpop.f32.mrb[0].mxu0
  %v962 = vpop.f32.mrb[0].mxu0
  %v963 = vadd.f32 %v882, %v962
  %v964 = vpop.f32.mrb[0].mxu0
  %965 = vmatprep.mubr.bf16.mxu0 0
  %966 = vmatmul.mubr.bf16.gmra.mrb[0].mxu0 %v729
  %v967 = vpop.f32.mrb[0].mxu0
  %v968 = vadd.f32 %v887, %v967
  %v969 = vpop.f32.mrb[0].mxu0
  %v970 = vpop.f32.mrb[0].mxu0
  %v971 = vadd.f32 %v890, %v970
  %v972 = vpop.f32.mrb[0].mxu0
  %973 = vdwg.mxu0
  %vm974 = vcmp.ge.f32.partialorder %v928, 0.0
  %vm975 = vcmp.ge.f32.partialorder %v931, 0.0
  %vm976 = vcmp.ge.f32.partialorder %v936, 0.0
  %vm977 = vcmp.ge.f32.partialorder %v939, 0.0
  %vm978 = vcmp.ge.f32.partialorder %v944, 0.0
  %vm979 = vcmp.ge.f32.partialorder %v947, 0.0
  %vm980 = vcmp.ge.f32.partialorder %v952, 0.0
  %vm981 = vcmp.ge.f32.partialorder %v955, 0.0
  %vm982 = vcmp.ge.f32.partialorder %v960, 0.0
  %vm983 = vcmp.ge.f32.partialorder %v963, 0.0
  %vm984 = vcmp.ge.f32.partialorder %v968, 0.0
  %vm985 = vcmp.ge.f32.partialorder %v971, 0.0
  %v986 = vmul.f32 %v928, 0.2
  %v987 = vmul.f32 %v931, 0.2
  %v988 = vmul.f32 %v936, 0.2
  %v989 = vmul.f32 %v939, 0.2
  %v990 = vmul.f32 %v944, 0.2
  %v991 = vmul.f32 %v947, 0.2
  %v992 = vmul.f32 %v952, 0.2
  %v993 = vmul.f32 %v955, 0.2
  %v994 = vmul.f32 %v960, 0.2
  %v995 = vmul.f32 %v963, 0.2
  %v996 = vmul.f32 %v968, 0.2
  %v997 = vmul.f32 %v971, 0.2
  %v998 = vsel %vm974, %v928, %v986
  %v999 = vsel %vm975, %v931, %v987
  %v1000 = vsel %vm976, %v936, %v988
  %v1001 = vsel %vm977, %v939, %v989
  %v1002 = vsel %vm978, %v944, %v990
  %v1003 = vsel %vm979, %v947, %v991
  %v1004 = vsel %vm980, %v952, %v992
  %v1005 = vsel %vm981, %v955, %v993
  %v1006 = vsel %vm982, %v960, %v994
  %v1007 = vsel %vm983, %v963, %v995
  %v1008 = vsel %vm984, %v968, %v996
  %v1009 = vsel %vm985, %v971, %v997
  %v1010 = vpack.c.bf16 %v999, %v998
  %v1011 = vpack.c.bf16 %v1001, %v1000
  %v1012 = vpack.c.bf16 %v1003, %v1002
  %v1013 = vpack.c.bf16 %v1005, %v1004
  %v1014 = vpack.c.bf16 %v1007, %v1006
  %v1015 = vpack.c.bf16 %v1009, %v1008
  %v1022 = vunpack.c.l.b16 %v1010
  %v1023 = vunpack.c.h.b16 %v1010
  %v1024 = vunpack.c.l.b16 %v1011
  %v1025 = vunpack.c.h.b16 %v1011
  %v1026 = vunpack.c.l.b16 %v1012
  %v1027 = vunpack.c.h.b16 %v1012
  %v1028 = vunpack.c.l.b16 %v1013
  %v1029 = vunpack.c.h.b16 %v1013
  %v1030 = vunpack.c.l.b16 %v1014
  %v1031 = vunpack.c.h.b16 %v1014
  %v1032 = vunpack.c.l.b16 %v1015
  %v1033 = vunpack.c.h.b16 %v1015
  %v1034 = vpack.c.b16 %v1022, %v1022
  %v1035 = vpack.c.b16 %v1023, %v1023
  %v1036 = vpack.c.b16 %v1024, %v1024
  %v1037 = vpack.c.b16 %v1025, %v1025
  %v1038 = vpack.c.b16 %v1026, %v1026
  %v1039 = vpack.c.b16 %v1027, %v1027
  %v1040 = vpack.c.b16 %v1028, %v1028
  %v1041 = vpack.c.b16 %v1029, %v1029
  %v1042 = vpack.c.b16 %v1030, %v1030
  %v1043 = vpack.c.b16 %v1031, %v1031
  %v1044 = vpack.c.b16 %v1032, %v1032
  %v1045 = vpack.c.b16 %v1033, %v1033
  %1058 = vst [vmem:[%s2] sm:$0xf] %v1034
  %1059 = vst [vmem:[%s2 + $0x4] sm:$0xf] %v1035
  %1060 = vst [vmem:[%s2 + $0x8] sm:$0xf] %v1036
  %1061 = vst [vmem:[%s2 + $0xc] sm:$0xf] %v1037
  %1062 = vst [vmem:[%s2 + $0x10] sm:$0xf] %v1038
  %1063 = vst [vmem:[%s2 + $0x14] sm:$0xf] %v1039
  %1064 = vst [vmem:[%s2 + $0x18] sm:$0xf] %v1040
  %1065 = vst [vmem:[%s2 + $0x1c] sm:$0xf] %v1041
  %1066 = vst [vmem:[%s2 + $0x20] sm:$0xf] %v1042
  %1067 = vst [vmem:[%s2 + $0x24] sm:$0xf] %v1043
  %1068 = vst [vmem:[%s2 + $0x28] sm:$0xf] %v1044
  %1069 = vst [vmem:[%s2 + $0x2c] sm:$0xf] %v1045
  // Predicated region
  $region43: #{pose_encoder_forward.8} parent=0 // pred_check
    _
  $region44: #{pose_encoder_forward.8} parent=0 // pred_check_branch
    %1071 = sbr.rel (0) target = $region46
  $region45: #{pose_encoder_forward.8} parent=0 // pred_region
    _
  $region46: #{pose_encoder_forward.8} parent=0 // pred_fallthru
    _
  // Predicated region
  $region47: #{pose_encoder_forward.8} parent=0 // pred_check
    _
  $region48: #{pose_encoder_forward.8} parent=0 // pred_check_branch
    %1073 = sbr.rel (0) target = $region50
  $region49: #{pose_encoder_forward.8} parent=0 // pred_region
    _
  $region50: #{pose_encoder_forward.8} parent=0 // pred_fallthru
    _
  %1074 = vsyncmov [#allocation3]
  %s1075 = vpop.sfrf %1074
  %p1076 = scmp.eq.s32.totalorder %s1075, 0
  %p1077 = pneg %p1076
  %1079 = shalt.err (%p1077)

// kernel: pose_encoder_forward.9
$region0: #{pose_encoder_forward.9}
  #allocation0 [shape = 'u32[]', space=smem, size = 0x4, offset = 0x4, fixed_abs, tag = 'smem constant byte address 0x4 - core index']
  #allocation1 [shape = 'u32[144,128]{1,0:T(1,128)}', space=vmem, size = 0x12000, scoped, tag = 'internal scratch']
  #allocation2 [shape = 'bf16[64,128]{1,0:T(16,128)(2,1)}', space=vmem, size = 0x4000, scoped, tag = 'scratch operand']
  #allocation3 [shape = 's32[1]{0}', space=sflag, size = 0x4, scoped, tag = 'scratch operand']
  #allocation4 [shape = 's32[]', space=sflag, size = 0x4, offset = 0, fixed_abs, tag = 'sflag constant byte address 0x0 - dummy sync flag']
  %s0 = inlined_call_operand.vmem [shape: bf16[64,128], index: 0, kind: input, shape index: {}]
  %s1 = inlined_call_operand.vmem [shape: bf16[512,128], index: 1, kind: input, shape index: {}]
  %s2 = inlined_call_operand.vmem [shape: bf16[48,128], index: 2, kind: output, shape index: {}]
  %s3 = sld [smem:[#allocation0]]
  $region48: #{pose_encoder_forward.9} parent=0
    _
  %s5 = ssub.s32 1, %s3
  %s6 = scalar_select 0, %s5, %s3
  // Predicated region
  $region2: #{pose_encoder_forward.9} parent=0 // pred_check
    _
  $region3: #{pose_encoder_forward.9} parent=0 // pred_check_branch
    %8 = sbr.rel (0) target = $region5
  $region4: #{pose_encoder_forward.9} parent=0 // pred_region
    _
  $region5: #{pose_encoder_forward.9} parent=0 // pred_fallthru
    _
  %s10 = smul.u32 0, 48
  %s11 = sshra.s32 %s10, 3
  %s12 = sand.u32 %s10, 7
  %s13 = smul.addr %s11, 4
  %s14 = scalar_lea.vmem %s0, %s13
  %p16 = scmp.lt.u32.totalorder 32, 8
  %p17 = pneg %p16
  // Predicated region
  $region6: #{pose_encoder_forward.9} parent=0 // pred_check
    _
  $region7: #{pose_encoder_forward.9} parent=0 // pred_check_branch
    %19 = sbr.rel (%p16) target = $region9
  $region8: #{pose_encoder_forward.9} parent=0 // pred_region
    %s34 = sand.u32 32, 7
    %p35 = scmp.eq.s32.totalorder %s34, 0
    // Predicated region
    $region21: #{pose_encoder_forward.9} parent=8 // pred_check
      %p36 = pneg %p35
    $region22: #{pose_encoder_forward.9} parent=8 // pred_check_branch
      %38 = sbr.rel (%p36) target = $region24
    $region23: #{pose_encoder_forward.9} parent=8 // pred_region
      loop: start=0, step=1, limit=1
      $region25: #{pose_encoder_forward.9} parent=23 // loop_pre_header
        _
      $region26: #{pose_encoder_forward.9} parent=23 // loop_header
        %s40 = sphi 0, %s44
        %p41 = scmp.ge.s32.totalorder %s40, 1
        %s45 = sphi %s14, %s14
        %s46 = sphi [#allocation2], [#allocation2]
      $region27: #{pose_encoder_forward.9} parent=23 // loop_header_branch
        %43 = sbr.rel (%p41) target = $region31
      $region28: #{pose_encoder_forward.9} parent=23 // loop_body
        %v47 = vld [vmem:[%s45] sm:$0xff]
        %48 = vst [vmem:[%s46] sm:$0xff] %v47
        %v49 = vld [vmem:[%s45 + $0x8] sm:$0xff]
        %50 = vst [vmem:[%s46 + $0x8] sm:$0xff] %v49
        %v51 = vld [vmem:[%s45 + $0x10] sm:$0xff]
        %52 = vst [vmem:[%s46 + $0x10] sm:$0xff] %v51
        %v53 = vld [vmem:[%s45 + $0x18] sm:$0xff]
        %54 = vst [vmem:[%s46 + $0x18] sm:$0xff] %v53
      $region29: #{pose_encoder_forward.9} parent=23 // loop_footer
        %s44 = sadd.s32 1, %s40
      $region30: #{pose_encoder_forward.9} parent=23 // loop_footer_branch
        %39 = sbr.rel target = $region26
      $region31: #{pose_encoder_forward.9} parent=23 // loop_exit
        _
    $region24: #{pose_encoder_forward.9} parent=8 // pred_fallthru
      _
    %p55 = pneg %p35
    // Predicated region
    $region32: #{pose_encoder_forward.9} parent=8 // pred_check
      _
    $region33: #{pose_encoder_forward.9} parent=8 // pred_check_branch
      %57 = sbr.rel (%p35) target = $region35
    $region34: #{pose_encoder_forward.9} parent=8 // pred_region
      %s58 = sand.u32 32, 7
    $region35: #{pose_encoder_forward.9} parent=8 // pred_fallthru
      _
  $region9: #{pose_encoder_forward.9} parent=0 // pred_fallthru
    _
  // Predicated region
  $region10: #{pose_encoder_forward.9} parent=0 // pred_check
    %p20 = pneg %p16
  $region11: #{pose_encoder_forward.9} parent=0 // pred_check_branch
    %22 = sbr.rel (%p20) target = $region13
  $region12: #{pose_encoder_forward.9} parent=0 // pred_region
    %s23 = sshllo.u32 0, 32
    loop: start=0, step=1, limit=1
    $region14: #{pose_encoder_forward.9} parent=12 // loop_pre_header
      _
    $region15: #{pose_encoder_forward.9} parent=12 // loop_header
      %s25 = sphi 0, %s29
      %p26 = scmp.ge.s32.totalorder %s25, 1
      %s30 = sphi %s14, %s14
      %s31 = sphi [#allocation2], [#allocation2]
    $region16: #{pose_encoder_forward.9} parent=12 // loop_header_branch
      %28 = sbr.rel (%p26) target = $region20
    $region17: #{pose_encoder_forward.9} parent=12 // loop_body
      %v32 = vld [vmem:[%s30] sm:%s23]
      %33 = vst [vmem:[%s31] sm:%s23] %v32
    $region18: #{pose_encoder_forward.9} parent=12 // loop_footer
      %s29 = sadd.s32 1, %s25
    $region19: #{pose_encoder_forward.9} parent=12 // loop_footer_branch
      %24 = sbr.rel target = $region15
    $region20: #{pose_encoder_forward.9} parent=12 // loop_exit
      _
  $region13: #{pose_encoder_forward.9} parent=0 // pred_fallthru
    _
  // Predicated region
  $region36: #{pose_encoder_forward.9} parent=0 // pred_check
    _
  $region37: #{pose_encoder_forward.9} parent=0 // pred_check_branch
    %61 = sbr.rel (0) target = $region39
  $region38: #{pose_encoder_forward.9} parent=0 // pred_region
    %62 = vsyncadd [#allocation3], 512
  $region39: #{pose_encoder_forward.9} parent=0 // pred_fallthru
    _
  %s63 = smul.u32 4, 8
  %s64 = smul.u32 %s63, 1
  %s65 = sshll.u32 %s64, 4
  %66 = dma.done [#allocation3], %s65
  %v67 = vld [vmem:[#allocation2] sm:$0xff]
  %v68 = vld [vmem:[#allocation2 + $0x8] sm:$0xff]
  %v69 = vld [vmem:[#allocation2 + $0x10] sm:$0xff]
  %v70 = vld [vmem:[#allocation2] sm:$0xff]
  %v71 = vld [vmem:[#allocation2 + $0x8] sm:$0xff]
  %v72 = vld [vmem:[#allocation2 + $0x10] sm:$0xff]
  %v73 = vld [vmem:[#allocation2 + $0x18] sm:$0x1]
  %v74 = vld [vmem:[#allocation2] sm:$0xf0]
  %v75 = vld [vmem:[#allocation2 + $0x18] sm:$0xf]
  %v76 = vld [vmem:[#allocation2 + $0x18] sm:$0x1f]
  %vm77 = vsmask.f32 7424
  %v79 = vshrl.u32 %v70, 16
  %v81 = vshll.u32 %v70, 16
  %v83 = vrot.slane %v81, 1
  %v84 = vor.u32 %v79, %v83
  %v86 = vshll.u32 %v71, 16
  %v88 = vrot.slane %v86, 1
  %v89 = vsel %vm77, %v84, %v88
  %v90 = vshrl.u32 %v71, 16
  %v92 = vor.u32 %v90, %v88
  %v94 = vshll.u32 %v72, 16
  %v96 = vrot.slane %v94, 1
  %v97 = vsel %vm77, %v92, %v96
  %v98 = vshrl.u32 %v72, 16
  %v100 = vor.u32 %v98, %v96
  %v102 = vshll.u32 %v73, 16
  %v104 = vrot.slane %v102, 1
  %v105 = vsel %vm77, %v100, %v104
  %vm113 = vcmask 1043456
  %v114 = vrot.slane %v74, 4
  %v115 = vrot.slane %v71, 4
  %v116 = vsel %vm113, %v114, %v115
  %v117 = vrot.slane %v72, 4
  %v118 = vsel %vm113, %v115, %v117
  %v119 = vrot.slane %v75, 4
  %v120 = vsel %vm113, %v117, %v119
  %vm124 = vsmask.f32 3328
  %v126 = vshrl.u32 %v74, 16
  %v128 = vrot.slane %v126, 4
  %v129 = vshll.u32 %v74, 16
  %v131 = vrot.slane %v129, 5
  %v132 = vor.u32 %v128, %v131
  %v133 = vrot.slane %v90, 4
  %v134 = vrot.slane %v86, 5
  %v135 = vor.u32 %v133, %v134
  %v136 = vsel %vm124, %v132, %v135
  %v137 = vrot.slane %v98, 4
  %v138 = vrot.slane %v94, 5
  %v139 = vor.u32 %v137, %v138
  %v140 = vsel %vm124, %v135, %v139
  %v142 = vshrl.u32 %v76, 16
  %v144 = vrot.slane %v142, 4
  %v145 = vshll.u32 %v76, 16
  %v147 = vrot.slane %v145, 5
  %v148 = vor.u32 %v144, %v147
  %v149 = vsel %vm124, %v139, %v148
  %v153 = vld [vmem:[%s1] sm:$0xf]
  %v154 = vld [vmem:[%s1 + $0x4] sm:$0xf]
  %v155 = vld [vmem:[%s1 + $0x8] sm:$0xf]
  %v156 = vld [vmem:[%s1 + $0xc] sm:$0xf]
  %v157 = vld [vmem:[%s1 + $0x10] sm:$0xf]
  %v158 = vld [vmem:[%s1 + $0x14] sm:$0xf]
  %v159 = vld [vmem:[%s1 + $0x18] sm:$0xf]
  %v160 = vld [vmem:[%s1 + $0x1c] sm:$0xf]
  %v161 = vld [vmem:[%s1 + $0x20] sm:$0xf]
  %v162 = vld [vmem:[%s1 + $0x24] sm:$0xf]
  %v163 = vld [vmem:[%s1 + $0x28] sm:$0xf]
  %v164 = vld [vmem:[%s1 + $0x2c] sm:$0xf]
  %v165 = vld [vmem:[%s1 + $0x30] sm:$0xf]
  %v166 = vld [vmem:[%s1 + $0x34] sm:$0xf]
  %v167 = vld [vmem:[%s1 + $0x38] sm:$0xf]
  %v168 = vld [vmem:[%s1 + $0x3c] sm:$0xf]
  %v169 = vld [vmem:[%s1 + $0x40] sm:$0xf]
  %v170 = vld [vmem:[%s1 + $0x44] sm:$0xf]
  %v171 = vld [vmem:[%s1 + $0x48] sm:$0xf]
  %v172 = vld [vmem:[%s1 + $0x4c] sm:$0xf]
  %v173 = vld [vmem:[%s1 + $0x50] sm:$0xf]
  %v174 = vld [vmem:[%s1 + $0x54] sm:$0xf]
  %v175 = vld [vmem:[%s1 + $0x58] sm:$0xf]
  %v176 = vld [vmem:[%s1 + $0x5c] sm:$0xf]
  %v177 = vld [vmem:[%s1 + $0x60] sm:$0xf]
  %v178 = vld [vmem:[%s1 + $0x64] sm:$0xf]
  %v179 = vld [vmem:[%s1 + $0x68] sm:$0xf]
  %v180 = vld [vmem:[%s1 + $0x6c] sm:$0xf]
  %v181 = vld [vmem:[%s1 + $0x70] sm:$0xf]
  %v182 = vld [vmem:[%s1 + $0x74] sm:$0xf]
  %v183 = vld [vmem:[%s1 + $0x78] sm:$0xf]
  %v184 = vld [vmem:[%s1 + $0x7c] sm:$0xf]
  %v185 = vld [vmem:[%s1 + $0x80] sm:$0xf]
  %v186 = vld [vmem:[%s1 + $0x84] sm:$0xf]
  %v187 = vld [vmem:[%s1 + $0x88] sm:$0xf]
  %v188 = vld [vmem:[%s1 + $0x8c] sm:$0xf]
  %v189 = vld [vmem:[%s1 + $0x90] sm:$0xf]
  %v190 = vld [vmem:[%s1 + $0x94] sm:$0xf]
  %v191 = vld [vmem:[%s1 + $0x98] sm:$0xf]
  %v192 = vld [vmem:[%s1 + $0x9c] sm:$0xf]
  %v193 = vld [vmem:[%s1 + $0xa0] sm:$0xf]
  %v194 = vld [vmem:[%s1 + $0xa4] sm:$0xf]
  %v195 = vld [vmem:[%s1 + $0xa8] sm:$0xf]
  %v196 = vld [vmem:[%s1 + $0xac] sm:$0xf]
  %v197 = vld [vmem:[%s1 + $0xb0] sm:$0xf]
  %v198 = vld [vmem:[%s1 + $0xb4] sm:$0xf]
  %v199 = vld [vmem:[%s1 + $0xb8] sm:$0xf]
  %v200 = vld [vmem:[%s1 + $0xbc] sm:$0xf]
  %v201 = vld [vmem:[%s1 + $0xc0] sm:$0xf]
  %v202 = vld [vmem:[%s1 + $0xc4] sm:$0xf]
  %v203 = vld [vmem:[%s1 + $0xc8] sm:$0xf]
  %v204 = vld [vmem:[%s1 + $0xcc] sm:$0xf]
  %v205 = vld [vmem:[%s1 + $0xd0] sm:$0xf]
  %v206 = vld [vmem:[%s1 + $0xd4] sm:$0xf]
  %v207 = vld [vmem:[%s1 + $0xd8] sm:$0xf]
  %v208 = vld [vmem:[%s1 + $0xdc] sm:$0xf]
  %v209 = vld [vmem:[%s1 + $0xe0] sm:$0xf]
  %v210 = vld [vmem:[%s1 + $0xe4] sm:$0xf]
  %v211 = vld [vmem:[%s1 + $0xe8] sm:$0xf]
  %v212 = vld [vmem:[%s1 + $0xec] sm:$0xf]
  %v213 = vld [vmem:[%s1 + $0xf0] sm:$0xf]
  %v214 = vld [vmem:[%s1 + $0xf4] sm:$0xf]
  %v215 = vld [vmem:[%s1 + $0xf8] sm:$0xf]
  %v216 = vld [vmem:[%s1 + $0xfc] sm:$0xf]
  %v281 = vunpack.c.l.b16 %v153
  %v282 = vunpack.c.l.b16 %v154
  %v283 = vunpack.c.l.b16 %v155
  %v284 = vunpack.c.l.b16 %v156
  %v285 = vunpack.c.l.b16 %v157
  %v286 = vunpack.c.l.b16 %v158
  %v287 = vunpack.c.l.b16 %v159
  %v288 = vunpack.c.l.b16 %v160
  %v289 = vunpack.c.l.b16 %v161
  %v290 = vunpack.c.l.b16 %v162
  %v291 = vunpack.c.l.b16 %v163
  %v292 = vunpack.c.l.b16 %v164
  %v293 = vunpack.c.l.b16 %v165
  %v294 = vunpack.c.l.b16 %v166
  %v295 = vunpack.c.l.b16 %v167
  %v296 = vunpack.c.l.b16 %v168
  %v297 = vunpack.c.l.b16 %v169
  %v298 = vunpack.c.l.b16 %v170
  %v299 = vunpack.c.l.b16 %v171
  %v300 = vunpack.c.l.b16 %v172
  %v301 = vunpack.c.l.b16 %v173
  %v302 = vunpack.c.l.b16 %v174
  %v303 = vunpack.c.l.b16 %v175
  %v304 = vunpack.c.l.b16 %v176
  %v305 = vunpack.c.l.b16 %v177
  %v306 = vunpack.c.l.b16 %v178
  %v307 = vunpack.c.l.b16 %v179
  %v308 = vunpack.c.l.b16 %v180
  %v309 = vunpack.c.l.b16 %v181
  %v310 = vunpack.c.l.b16 %v182
  %v311 = vunpack.c.l.b16 %v183
  %v312 = vunpack.c.l.b16 %v184
  %v313 = vunpack.c.l.b16 %v185
  %v314 = vunpack.c.l.b16 %v186
  %v315 = vunpack.c.l.b16 %v187
  %v316 = vunpack.c.l.b16 %v188
  %v317 = vunpack.c.l.b16 %v189
  %v318 = vunpack.c.l.b16 %v190
  %v319 = vunpack.c.l.b16 %v191
  %v320 = vunpack.c.l.b16 %v192
  %v321 = vunpack.c.l.b16 %v193
  %v322 = vunpack.c.l.b16 %v194
  %v323 = vunpack.c.l.b16 %v195
  %v324 = vunpack.c.l.b16 %v196
  %v325 = vunpack.c.l.b16 %v197
  %v326 = vunpack.c.l.b16 %v198
  %v327 = vunpack.c.l.b16 %v199
  %v328 = vunpack.c.l.b16 %v200
  %v329 = vunpack.c.l.b16 %v201
  %v330 = vunpack.c.l.b16 %v202
  %v331 = vunpack.c.l.b16 %v203
  %v332 = vunpack.c.l.b16 %v204
  %v333 = vunpack.c.l.b16 %v205
  %v334 = vunpack.c.l.b16 %v206
  %v335 = vunpack.c.l.b16 %v207
  %v336 = vunpack.c.l.b16 %v208
  %v337 = vunpack.c.l.b16 %v209
  %v338 = vunpack.c.l.b16 %v210
  %v339 = vunpack.c.l.b16 %v211
  %v340 = vunpack.c.l.b16 %v212
  %v341 = vunpack.c.l.b16 %v213
  %v342 = vunpack.c.l.b16 %v214
  %v343 = vunpack.c.l.b16 %v215
  %v344 = vunpack.c.l.b16 %v216
  %v345 = vpack.c.b16 %v282, %v281
  %v346 = vpack.c.b16 %v284, %v283
  %v347 = vpack.c.b16 %v286, %v285
  %v348 = vpack.c.b16 %v288, %v287
  %v349 = vpack.c.b16 %v290, %v289
  %v350 = vpack.c.b16 %v292, %v291
  %v351 = vpack.c.b16 %v294, %v293
  %v352 = vpack.c.b16 %v296, %v295
  %v353 = vpack.c.b16 %v298, %v297
  %v354 = vpack.c.b16 %v300, %v299
  %v355 = vpack.c.b16 %v302, %v301
  %v356 = vpack.c.b16 %v304, %v303
  %v357 = vpack.c.b16 %v306, %v305
  %v358 = vpack.c.b16 %v308, %v307
  %v359 = vpack.c.b16 %v310, %v309
  %v360 = vpack.c.b16 %v312, %v311
  %v361 = vpack.c.b16 %v314, %v313
  %v362 = vpack.c.b16 %v316, %v315
  %v363 = vpack.c.b16 %v318, %v317
  %v364 = vpack.c.b16 %v320, %v319
  %v365 = vpack.c.b16 %v322, %v321
  %v366 = vpack.c.b16 %v324, %v323
  %v367 = vpack.c.b16 %v326, %v325
  %v368 = vpack.c.b16 %v328, %v327
  %v369 = vpack.c.b16 %v330, %v329
  %v370 = vpack.c.b16 %v332, %v331
  %v371 = vpack.c.b16 %v334, %v333
  %v372 = vpack.c.b16 %v336, %v335
  %v373 = vpack.c.b16 %v338, %v337
  %v374 = vpack.c.b16 %v340, %v339
  %v375 = vpack.c.b16 %v342, %v341
  %v376 = vpack.c.b16 %v344, %v343
  %409 = vmatprep.subr.bf16.mxu0 0
  %410 = vmatpush1.bf16.msra.mxu0 %v345
  %411 = vmatprep.subr.bf16.mxu0 0
  %412 = vmatpush1.bf16.msra.mxu0 %v346
  %413 = vmatprep.subr.bf16.mxu0 0
  %414 = vmatpush1.bf16.msra.mxu0 %v347
  %415 = vmatprep.subr.bf16.mxu0 0
  %416 = vmatpush1.bf16.msra.mxu0 %v348
  %417 = vmatprep.subr.bf16.mxu0 0
  %418 = vmatpush1.bf16.msra.mxu0 %v349
  %419 = vmatprep.subr.bf16.mxu0 0
  %420 = vmatpush1.bf16.msra.mxu0 %v350
  %421 = vmatprep.subr.bf16.mxu0 0
  %422 = vmatpush1.bf16.msra.mxu0 %v351
  %423 = vmatprep.subr.bf16.mxu0 0
  %424 = vmatpush1.bf16.msra.mxu0 %v352
  %425 = vmatprep.subr.bf16.mxu0 0
  %426 = vmatpush1.bf16.msra.mxu0 %v353
  %427 = vmatprep.subr.bf16.mxu0 0
  %428 = vmatpush1.bf16.msra.mxu0 %v354
  %429 = vmatprep.subr.bf16.mxu0 0
  %430 = vmatpush1.bf16.msra.mxu0 %v355
  %431 = vmatprep.subr.bf16.mxu0 0
  %432 = vmatpush1.bf16.msra.mxu0 %v356
  %433 = vmatprep.subr.bf16.mxu0 0
  %434 = vmatpush1.bf16.msra.mxu0 %v357
  %435 = vmatprep.subr.bf16.mxu0 0
  %436 = vmatpush1.bf16.msra.mxu0 %v358
  %437 = vmatprep.subr.bf16.mxu0 0
  %438 = vmatpush1.bf16.msra.mxu0 %v359
  %439 = vmatprep.subr.bf16.mxu0 0
  %440 = vmatpush1.bf16.msra.mxu0 %v360
  %441 = vmatprep.mubr.bf16.mxu0 %v89
  %442 = vmatmul.mubr.bf16.gmra.mrb[0].mxu0 %v67
  %v443 = vpop.f32.mrb[0].mxu0
  %v444 = vadd.f32 0.0, %v443
  %v445 = vpop.f32.mrb[0].mxu0
  %v446 = vpop.f32.mrb[0].mxu0
  %v447 = vadd.f32 0.0, %v446
  %v448 = vpop.f32.mrb[0].mxu0
  %449 = vmatprep.mubr.bf16.mxu0 %v97
  %450 = vmatmul.mubr.bf16.gmra.mrb[0].mxu0 %v68
  %v451 = vpop.f32.mrb[0].mxu0
  %v452 = vadd.f32 0.0, %v451
  %v453 = vpop.f32.mrb[0].mxu0
  %v454 = vpop.f32.mrb[0].mxu0
  %v455 = vadd.f32 0.0, %v454
  %v456 = vpop.f32.mrb[0].mxu0
  %457 = vmatprep.mubr.bf16.mxu0 %v105
  %458 = vmatmul.mubr.bf16.gmra.mrb[0].mxu0 %v69
  %v459 = vpop.f32.mrb[0].mxu0
  %v460 = vadd.f32 0.0, %v459
  %v461 = vpop.f32.mrb[0].mxu0
  %v462 = vpop.f32.mrb[0].mxu0
  %v463 = vadd.f32 0.0, %v462
  %v464 = vpop.f32.mrb[0].mxu0
  %465 = vdwg.mxu0
  %466 = vmatprep.subr.bf16.mxu0 0
  %467 = vmatpush1.bf16.msra.mxu0 %v361
  %468 = vmatprep.subr.bf16.mxu0 0
  %469 = vmatpush1.bf16.msra.mxu0 %v362
  %470 = vmatprep.subr.bf16.mxu0 0
  %471 = vmatpush1.bf16.msra.mxu0 %v363
  %472 = vmatprep.subr.bf16.mxu0 0
  %473 = vmatpush1.bf16.msra.mxu0 %v364
  %474 = vmatprep.subr.bf16.mxu0 0
  %475 = vmatpush1.bf16.msra.mxu0 %v365
  %476 = vmatprep.subr.bf16.mxu0 0
  %477 = vmatpush1.bf16.msra.mxu0 %v366
  %478 = vmatprep.subr.bf16.mxu0 0
  %479 = vmatpush1.bf16.msra.mxu0 %v367
  %480 = vmatprep.subr.bf16.mxu0 0
  %481 = vmatpush1.bf16.msra.mxu0 %v368
  %482 = vmatprep.subr.bf16.mxu0 0
  %483 = vmatpush1.bf16.msra.mxu0 %v369
  %484 = vmatprep.subr.bf16.mxu0 0
  %485 = vmatpush1.bf16.msra.mxu0 %v370
  %486 = vmatprep.subr.bf16.mxu0 0
  %487 = vmatpush1.bf16.msra.mxu0 %v371
  %488 = vmatprep.subr.bf16.mxu0 0
  %489 = vmatpush1.bf16.msra.mxu0 %v372
  %490 = vmatprep.subr.bf16.mxu0 0
  %491 = vmatpush1.bf16.msra.mxu0 %v373
  %492 = vmatprep.subr.bf16.mxu0 0
  %493 = vmatpush1.bf16.msra.mxu0 %v374
  %494 = vmatprep.subr.bf16.mxu0 0
  %495 = vmatpush1.bf16.msra.mxu0 %v375
  %496 = vmatprep.subr.bf16.mxu0 0
  %497 = vmatpush1.bf16.msra.mxu0 %v376
  %498 = vmatprep.mubr.bf16.mxu0 %v136
  %499 = vmatmul.mubr.bf16.gmra.mrb[0].mxu0 %v116
  %v500 = vpop.f32.mrb[0].mxu0
  %v501 = vadd.f32 %v444, %v500
  %v502 = vpop.f32.mrb[0].mxu0
  %v503 = vpop.f32.mrb[0].mxu0
  %v504 = vadd.f32 %v447, %v503
  %v505 = vpop.f32.mrb[0].mxu0
  %506 = vmatprep.mubr.bf16.mxu0 %v140
  %507 = vmatmul.mubr.bf16.gmra.mrb[0].mxu0 %v118
  %v508 = vpop.f32.mrb[0].mxu0
  %v509 = vadd.f32 %v452, %v508
  %v510 = vpop.f32.mrb[0].mxu0
  %v511 = vpop.f32.mrb[0].mxu0
  %v512 = vadd.f32 %v455, %v511
  %v513 = vpop.f32.mrb[0].mxu0
  %514 = vmatprep.mubr.bf16.mxu0 %v149
  %515 = vmatmul.mubr.bf16.gmra.mrb[0].mxu0 %v120
  %v516 = vpop.f32.mrb[0].mxu0
  %v517 = vadd.f32 %v460, %v516
  %v518 = vpop.f32.mrb[0].mxu0
  %v519 = vpop.f32.mrb[0].mxu0
  %v520 = vadd.f32 %v463, %v519
  %v521 = vpop.f32.mrb[0].mxu0
  %522 = vdwg.mxu0
  %vm523 = vcmp.ge.f32.partialorder %v501, 0.0
  %vm524 = vcmp.ge.f32.partialorder %v504, 0.0
  %vm525 = vcmp.ge.f32.partialorder %v509, 0.0
  %vm526 = vcmp.ge.f32.partialorder %v512, 0.0
  %vm527 = vcmp.ge.f32.partialorder %v517, 0.0
  %vm528 = vcmp.ge.f32.partialorder %v520, 0.0
  %v529 = vmul.f32 %v501, 0.2
  %v530 = vmul.f32 %v504, 0.2
  %v531 = vmul.f32 %v509, 0.2
  %v532 = vmul.f32 %v512, 0.2
  %v533 = vmul.f32 %v517, 0.2
  %v534 = vmul.f32 %v520, 0.2
  %v535 = vsel %vm523, %v501, %v529
  %v536 = vsel %vm524, %v504, %v530
  %v537 = vsel %vm525, %v509, %v531
  %v538 = vsel %vm526, %v512, %v532
  %v539 = vsel %vm527, %v517, %v533
  %v540 = vsel %vm528, %v520, %v534
  %v541 = vpack.c.bf16 %v536, %v535
  %v542 = vpack.c.bf16 %v538, %v537
  %v543 = vpack.c.bf16 %v540, %v539
  %v547 = vunpack.c.l.b16 %v541
  %v548 = vunpack.c.h.b16 %v541
  %v549 = vunpack.c.l.b16 %v542
  %v550 = vunpack.c.h.b16 %v542
  %v551 = vunpack.c.l.b16 %v543
  %v552 = vunpack.c.h.b16 %v543
  %v553 = vpack.c.b16 %v547, %v547
  %v554 = vpack.c.b16 %v548, %v548
  %v555 = vpack.c.b16 %v549, %v549
  %v556 = vpack.c.b16 %v550, %v550
  %v557 = vpack.c.b16 %v551, %v551
  %v558 = vpack.c.b16 %v552, %v552
  %565 = vst [vmem:[%s2] sm:$0xf] %v553
  %566 = vst [vmem:[%s2 + $0x4] sm:$0xf] %v554
  %567 = vst [vmem:[%s2 + $0x8] sm:$0xf] %v555
  %568 = vst [vmem:[%s2 + $0xc] sm:$0xf] %v556
  %569 = vst [vmem:[%s2 + $0x10] sm:$0xf] %v557
  %570 = vst [vmem:[%s2 + $0x14] sm:$0xf] %v558
  // Predicated region
  $region40: #{pose_encoder_forward.9} parent=0 // pred_check
    _
  $region41: #{pose_encoder_forward.9} parent=0 // pred_check_branch
    %572 = sbr.rel (0) target = $region43
  $region42: #{pose_encoder_forward.9} parent=0 // pred_region
    _
  $region43: #{pose_encoder_forward.9} parent=0 // pred_fallthru
    _
  // Predicated region
  $region44: #{pose_encoder_forward.9} parent=0 // pred_check
    _
  $region45: #{pose_encoder_forward.9} parent=0 // pred_check_branch
    %574 = sbr.rel (0) target = $region47
  $region46: #{pose_encoder_forward.9} parent=0 // pred_region
    _
  $region47: #{pose_encoder_forward.9} parent=0 // pred_fallthru
    _
  %575 = vsyncmov [#allocation3]
  %s576 = vpop.sfrf %575
  %p577 = scmp.eq.s32.totalorder %s576, 0
  %p578 = pneg %p577
  %580 = shalt.err (%p578)

// kernel: pose_encoder_forward.10
$region0: #{pose_encoder_forward.10}
  #allocation0 [shape = 'u32[]', space=smem, size = 0x4, offset = 0x4, fixed_abs, tag = 'smem constant byte address 0x4 - core index']
  #allocation1 [shape = 'u32[144,128]{1,0:T(1,128)}', space=vmem, size = 0x12000, scoped, tag = 'internal scratch']
  #allocation2 [shape = 'bf16[48,256]{1,0:T(16,128)(2,1)}', space=vmem, size = 0x6000, scoped, tag = 'scratch operand']
  #allocation3 [shape = 's32[1]{0}', space=sflag, size = 0x4, scoped, tag = 'scratch operand']
  #allocation4 [shape = 's32[]', space=sflag, size = 0x4, offset = 0, fixed_abs, tag = 'sflag constant byte address 0x0 - dummy sync flag']
  %s0 = inlined_call_operand.vmem [shape: bf16[48,256], index: 0, kind: input, shape index: {}]
  %s1 = inlined_call_operand.vmem [shape: bf16[1024,128], index: 1, kind: input, shape index: {}]
  %s2 = inlined_call_operand.vmem [shape: bf16[32,128], index: 2, kind: output, shape index: {}]
  %s3 = sld [smem:[#allocation0]]
  $region51: #{pose_encoder_forward.10} parent=0
    _
  %s5 = ssub.s32 1, %s3
  %s6 = scalar_select 0, %s5, %s3
  // Predicated region
  $region2: #{pose_encoder_forward.10} parent=0 // pred_check
    _
  $region3: #{pose_encoder_forward.10} parent=0 // pred_check_branch
    %8 = sbr.rel (0) target = $region5
  $region4: #{pose_encoder_forward.10} parent=0 // pred_region
    _
  $region5: #{pose_encoder_forward.10} parent=0 // pred_fallthru
    _
  %s10 = smul.u32 0, 32
  %s11 = sshra.s32 %s10, 3
  %s12 = sand.u32 %s10, 7
  %s13 = smul.u32 %s11, 2
  %s14 = smul.addr %s13, 4
  %s15 = scalar_lea.vmem %s0, %s14
  %p17 = scmp.lt.u32.totalorder 4, 8
  %p18 = pneg %p17
  // Predicated region
  $region6: #{pose_encoder_forward.10} parent=0 // pred_check
    _
  $region7: #{pose_encoder_forward.10} parent=0 // pred_check_branch
    %20 = sbr.rel (%p17) target = $region9
  $region8: #{pose_encoder_forward.10} parent=0 // pred_region
    %s57 = sand.u32 4, 7
    %p58 = scmp.eq.s32.totalorder %s57, 0
    %p59 = pneg %p58
    // Predicated region
    $region21: #{pose_encoder_forward.10} parent=8 // pred_check
      _
    $region22: #{pose_encoder_forward.10} parent=8 // pred_check_branch
      %61 = sbr.rel (%p58) target = $region24
    $region23: #{pose_encoder_forward.10} parent=8 // pred_region
      %s62 = sand.u32 4, 7
      %s63 = ssub.s32 4, %s62
      %s64 = scalar_lea.vmem %s15, %s63
      %s65 = ssub.s32 4, %s62
      %s66 = scalar_lea.vmem [#allocation2], %s65
      loop: start=0, step=1, limit=1
      $region25: #{pose_encoder_forward.10} parent=23 // loop_pre_header
        _
      $region26: #{pose_encoder_forward.10} parent=23 // loop_header
        %s68 = sphi 0, %s72
        %p69 = scmp.ge.s32.totalorder %s68, 1
        %s73 = sphi %s15, %s15
        %s74 = sphi [#allocation2], [#allocation2]
      $region27: #{pose_encoder_forward.10} parent=23 // loop_header_branch
        %71 = sbr.rel (%p69) target = $region31
      $region28: #{pose_encoder_forward.10} parent=23 // loop_body
        _
      $region29: #{pose_encoder_forward.10} parent=23 // loop_footer
        %s72 = sadd.s32 1, %s68
      $region30: #{pose_encoder_forward.10} parent=23 // loop_footer_branch
        %67 = sbr.rel target = $region26
      $region31: #{pose_encoder_forward.10} parent=23 // loop_exit
        _
      %s75 = sshllo.u32 0, %s62
      loop: start=0, step=1, limit=1
      $region32: #{pose_encoder_forward.10} parent=23 // loop_pre_header
        _
      $region33: #{pose_encoder_forward.10} parent=23 // loop_header
        %s77 = sphi 0, %s81
        %p78 = scmp.ge.s32.totalorder %s77, 1
        %s82 = sphi %s64, %s64
        %s83 = sphi %s66, %s66
      $region34: #{pose_encoder_forward.10} parent=23 // loop_header_branch
        %80 = sbr.rel (%p78) target = $region38
      $region35: #{pose_encoder_forward.10} parent=23 // loop_body
        %v84 = vld [vmem:[%s82] sm:%s75]
        %85 = vst [vmem:[%s83] sm:%s75] %v84
        %v86 = vld [vmem:[%s82 + $0x8] sm:%s75]
        %87 = vst [vmem:[%s83 + $0x4] sm:%s75] %v86
        %v88 = vld [vmem:[%s82 + $0x4] sm:%s75]
        %89 = vst [vmem:[%s83 + $0x8] sm:%s75] %v88
        %v90 = vld [vmem:[%s82 + $0xc] sm:%s75]
        %91 = vst [vmem:[%s83 + $0xc] sm:%s75] %v90
        %v92 = vld [vmem:[%s82 + $0x10] sm:%s75]
        %93 = vst [vmem:[%s83 + $0x10] sm:%s75] %v92
        %v94 = vld [vmem:[%s82 + $0x18] sm:%s75]
        %95 = vst [vmem:[%s83 + $0x14] sm:%s75] %v94
        %v96 = vld [vmem:[%s82 + $0x14] sm:%s75]
        %97 = vst [vmem:[%s83 + $0x18] sm:%s75] %v96
        %v98 = vld [vmem:[%s82 + $0x1c] sm:%s75]
        %99 = vst [vmem:[%s83 + $0x1c] sm:%s75] %v98
        %v100 = vld [vmem:[%s82 + $0x20] sm:%s75]
        %101 = vst [vmem:[%s83 + $0x20] sm:%s75] %v100
        %v102 = vld [vmem:[%s82 + $0x28] sm:%s75]
        %103 = vst [vmem:[%s83 + $0x24] sm:%s75] %v102
        %v104 = vld [vmem:[%s82 + $0x24] sm:%s75]
        %105 = vst [vmem:[%s83 + $0x28] sm:%s75] %v104
        %v106 = vld [vmem:[%s82 + $0x2c] sm:%s75]
        %107 = vst [vmem:[%s83 + $0x2c] sm:%s75] %v106
      $region36: #{pose_encoder_forward.10} parent=23 // loop_footer
        %s81 = sadd.s32 1, %s77
      $region37: #{pose_encoder_forward.10} parent=23 // loop_footer_branch
        %76 = sbr.rel target = $region33
      $region38: #{pose_encoder_forward.10} parent=23 // loop_exit
        _
    $region24: #{pose_encoder_forward.10} parent=8 // pred_fallthru
      _
  $region9: #{pose_encoder_forward.10} parent=0 // pred_fallthru
    _
  // Predicated region
  $region10: #{pose_encoder_forward.10} parent=0 // pred_check
    %p21 = pneg %p17
  $region11: #{pose_encoder_forward.10} parent=0 // pred_check_branch
    %23 = sbr.rel (%p21) target = $region13
  $region12: #{pose_encoder_forward.10} parent=0 // pred_region
    %s24 = sshllo.u32 0, 4
    loop: start=0, step=1, limit=1
    $region14: #{pose_encoder_forward.10} parent=12 // loop_pre_header
      _
    $region15: #{pose_encoder_forward.10} parent=12 // loop_header
      %s26 = sphi 0, %s30
      %p27 = scmp.ge.s32.totalorder %s26, 1
      %s31 = sphi %s15, %s15
      %s32 = sphi [#allocation2], [#allocation2]
    $region16: #{pose_encoder_forward.10} parent=12 // loop_header_branch
      %29 = sbr.rel (%p27) target = $region20
    $region17: #{pose_encoder_forward.10} parent=12 // loop_body
      %v33 = vld [vmem:[%s31] sm:%s24]
      %34 = vst [vmem:[%s32] sm:%s24] %v33
      %v35 = vld [vmem:[%s31 + $0x8] sm:%s24]
      %36 = vst [vmem:[%s32 + $0x4] sm:%s24] %v35
      %v37 = vld [vmem:[%s31 + $0x4] sm:%s24]
      %38 = vst [vmem:[%s32 + $0x8] sm:%s24] %v37
      %v39 = vld [vmem:[%s31 + $0xc] sm:%s24]
      %40 = vst [vmem:[%s32 + $0xc] sm:%s24] %v39
      %v41 = vld [vmem:[%s31 + $0x10] sm:%s24]
      %42 = vst [vmem:[%s32 + $0x10] sm:%s24] %v41
      %v43 = vld [vmem:[%s31 + $0x18] sm:%s24]
      %44 = vst [vmem:[%s32 + $0x14] sm:%s24] %v43
      %v45 = vld [vmem:[%s31 + $0x14] sm:%s24]
      %46 = vst [vmem:[%s32 + $0x18] sm:%s24] %v45
      %v47 = vld [vmem:[%s31 + $0x1c] sm:%s24]
      %48 = vst [vmem:[%s32 + $0x1c] sm:%s24] %v47
      %v49 = vld [vmem:[%s31 + $0x20] sm:%s24]
      %50 = vst [vmem:[%s32 + $0x20] sm:%s24] %v49
      %v51 = vld [vmem:[%s31 + $0x28] sm:%s24]
      %52 = vst [vmem:[%s32 + $0x24] sm:%s24] %v51
      %v53 = vld [vmem:[%s31 + $0x24] sm:%s24]
      %54 = vst [vmem:[%s32 + $0x28] sm:%s24] %v53
      %v55 = vld [vmem:[%s31 + $0x2c] sm:%s24]
      %56 = vst [vmem:[%s32 + $0x2c] sm:%s24] %v55
    $region18: #{pose_encoder_forward.10} parent=12 // loop_footer
      %s30 = sadd.s32 1, %s26
    $region19: #{pose_encoder_forward.10} parent=12 // loop_footer_branch
      %25 = sbr.rel target = $region15
    $region20: #{pose_encoder_forward.10} parent=12 // loop_exit
      _
  $region13: #{pose_encoder_forward.10} parent=0 // pred_fallthru
    _
  // Predicated region
  $region39: #{pose_encoder_forward.10} parent=0 // pred_check
    _
  $region40: #{pose_encoder_forward.10} parent=0 // pred_check_branch
    %110 = sbr.rel (0) target = $region42
  $region41: #{pose_encoder_forward.10} parent=0 // pred_region
    %111 = vsyncadd [#allocation3], 768
  $region42: #{pose_encoder_forward.10} parent=0 // pred_fallthru
    _
  %s112 = smul.u32 4, 6
  %s113 = smul.u32 %s112, 2
  %s114 = sshll.u32 %s113, 4
  %115 = dma.done [#allocation3], %s114
  %v116 = vld [vmem:[#allocation2] sm:$0xff]
  %v117 = vld [vmem:[#allocation2 + $0x8] sm:$0xff]
  %v118 = vld [vmem:[#allocation2 + $0x10] sm:$0xff]
  %v119 = vld [vmem:[#allocation2 + $0x18] sm:$0xff]
  %v120 = vld [vmem:[#allocation2] sm:$0xff]
  %v121 = vld [vmem:[#allocation2 + $0x8] sm:$0xff]
  %v122 = vld [vmem:[#allocation2 + $0x10] sm:$0xff]
  %v123 = vld [vmem:[#allocation2 + $0x18] sm:$0xff]
  %v124 = vld [vmem:[#allocation2 + $0x20] sm:$0x1]
  %v125 = vld [vmem:[#allocation2 + $0x28] sm:$0x1]
  %v126 = vld [vmem:[#allocation2] sm:$0xf0]
  %v127 = vld [vmem:[#allocation2 + $0x8] sm:$0xf0]
  %v128 = vld [vmem:[#allocation2 + $0x20] sm:$0xf]
  %v129 = vld [vmem:[#allocation2 + $0x28] sm:$0xf]
  %v130 = vld [vmem:[#allocation2 + $0x20] sm:$0x1f]
  %v131 = vld [vmem:[#allocation2 + $0x28] sm:$0x1f]
  %vm132 = vsmask.f32 7424
  %v134 = vshrl.u32 %v120, 16
  %v136 = vshll.u32 %v120, 16
  %v138 = vrot.slane %v136, 1
  %v139 = vor.u32 %v134, %v138
  %v141 = vshll.u32 %v122, 16
  %v143 = vrot.slane %v141, 1
  %v144 = vsel %vm132, %v139, %v143
  %v146 = vshrl.u32 %v121, 16
  %v148 = vshll.u32 %v121, 16
  %v150 = vrot.slane %v148, 1
  %v151 = vor.u32 %v146, %v150
  %v153 = vshll.u32 %v123, 16
  %v155 = vrot.slane %v153, 1
  %v156 = vsel %vm132, %v151, %v155
  %v157 = vshrl.u32 %v122, 16
  %v159 = vor.u32 %v157, %v143
  %v161 = vshll.u32 %v124, 16
  %v163 = vrot.slane %v161, 1
  %v164 = vsel %vm132, %v159, %v163
  %v165 = vshrl.u32 %v123, 16
  %v167 = vor.u32 %v165, %v155
  %v169 = vshll.u32 %v125, 16
  %v171 = vrot.slane %v169, 1
  %v172 = vsel %vm132, %v167, %v171
  %vm183 = vcmask 1043456
  %v184 = vrot.slane %v126, 4
  %v185 = vrot.slane %v122, 4
  %v186 = vsel %vm183, %v184, %v185
  %v187 = vrot.slane %v127, 4
  %v188 = vrot.slane %v123, 4
  %v189 = vsel %vm183, %v187, %v188
  %v190 = vrot.slane %v128, 4
  %v191 = vsel %vm183, %v185, %v190
  %v192 = vrot.slane %v129, 4
  %v193 = vsel %vm183, %v188, %v192
  %vm198 = vsmask.f32 3328
  %v200 = vshrl.u32 %v126, 16
  %v202 = vrot.slane %v200, 4
  %v203 = vshll.u32 %v126, 16
  %v205 = vrot.slane %v203, 5
  %v206 = vor.u32 %v202, %v205
  %v207 = vrot.slane %v157, 4
  %v208 = vrot.slane %v141, 5
  %v209 = vor.u32 %v207, %v208
  %v210 = vsel %vm198, %v206, %v209
  %v212 = vshrl.u32 %v127, 16
  %v214 = vrot.slane %v212, 4
  %v215 = vshll.u32 %v127, 16
  %v217 = vrot.slane %v215, 5
  %v218 = vor.u32 %v214, %v217
  %v219 = vrot.slane %v165, 4
  %v220 = vrot.slane %v153, 5
  %v221 = vor.u32 %v219, %v220
  %v222 = vsel %vm198, %v218, %v221
  %v224 = vshrl.u32 %v130, 16
  %v226 = vrot.slane %v224, 4
  %v227 = vshll.u32 %v130, 16
  %v229 = vrot.slane %v227, 5
  %v230 = vor.u32 %v226, %v229
  %v231 = vsel %vm198, %v209, %v230
  %v233 = vshrl.u32 %v131, 16
  %v235 = vrot.slane %v233, 4
  %v236 = vshll.u32 %v131, 16
  %v238 = vrot.slane %v236, 5
  %v239 = vor.u32 %v235, %v238
  %v240 = vsel %vm198, %v221, %v239
  %v245 = vld [vmem:[%s1] sm:$0xf]
  %v246 = vld [vmem:[%s1 + $0x4] sm:$0xf]
  %v247 = vld [vmem:[%s1 + $0x8] sm:$0xf]
  %v248 = vld [vmem:[%s1 + $0xc] sm:$0xf]
  %v249 = vld [vmem:[%s1 + $0x10] sm:$0xf]
  %v250 = vld [vmem:[%s1 + $0x14] sm:$0xf]
  %v251 = vld [vmem:[%s1 + $0x18] sm:$0xf]
  %v252 = vld [vmem:[%s1 + $0x1c] sm:$0xf]
  %v253 = vld [vmem:[%s1 + $0x20] sm:$0xf]
  %v254 = vld [vmem:[%s1 + $0x24] sm:$0xf]
  %v255 = vld [vmem:[%s1 + $0x28] sm:$0xf]
  %v256 = vld [vmem:[%s1 + $0x2c] sm:$0xf]
  %v257 = vld [vmem:[%s1 + $0x30] sm:$0xf]
  %v258 = vld [vmem:[%s1 + $0x34] sm:$0xf]
  %v259 = vld [vmem:[%s1 + $0x38] sm:$0xf]
  %v260 = vld [vmem:[%s1 + $0x3c] sm:$0xf]
  %v261 = vld [vmem:[%s1 + $0x40] sm:$0xf]
  %v262 = vld [vmem:[%s1 + $0x44] sm:$0xf]
  %v263 = vld [vmem:[%s1 + $0x48] sm:$0xf]
  %v264 = vld [vmem:[%s1 + $0x4c] sm:$0xf]
  %v265 = vld [vmem:[%s1 + $0x50] sm:$0xf]
  %v266 = vld [vmem:[%s1 + $0x54] sm:$0xf]
  %v267 = vld [vmem:[%s1 + $0x58] sm:$0xf]
  %v268 = vld [vmem:[%s1 + $0x5c] sm:$0xf]
  %v269 = vld [vmem:[%s1 + $0x60] sm:$0xf]
  %v270 = vld [vmem:[%s1 + $0x64] sm:$0xf]
  %v271 = vld [vmem:[%s1 + $0x68] sm:$0xf]
  %v272 = vld [vmem:[%s1 + $0x6c] sm:$0xf]
  %v273 = vld [vmem:[%s1 + $0x70] sm:$0xf]
  %v274 = vld [vmem:[%s1 + $0x74] sm:$0xf]
  %v275 = vld [vmem:[%s1 + $0x78] sm:$0xf]
  %v276 = vld [vmem:[%s1 + $0x7c] sm:$0xf]
  %v277 = vld [vmem:[%s1 + $0x80] sm:$0xf]
  %v278 = vld [vmem:[%s1 + $0x84] sm:$0xf]
  %v279 = vld [vmem:[%s1 + $0x88] sm:$0xf]
  %v280 = vld [vmem:[%s1 + $0x8c] sm:$0xf]
  %v281 = vld [vmem:[%s1 + $0x90] sm:$0xf]
  %v282 = vld [vmem:[%s1 + $0x94] sm:$0xf]
  %v283 = vld [vmem:[%s1 + $0x98] sm:$0xf]
  %v284 = vld [vmem:[%s1 + $0x9c] sm:$0xf]
  %v285 = vld [vmem:[%s1 + $0xa0] sm:$0xf]
  %v286 = vld [vmem:[%s1 + $0xa4] sm:$0xf]
  %v287 = vld [vmem:[%s1 + $0xa8] sm:$0xf]
  %v288 = vld [vmem:[%s1 + $0xac] sm:$0xf]
  %v289 = vld [vmem:[%s1 + $0xb0] sm:$0xf]
  %v290 = vld [vmem:[%s1 + $0xb4] sm:$0xf]
  %v291 = vld [vmem:[%s1 + $0xb8] sm:$0xf]
  %v292 = vld [vmem:[%s1 + $0xbc] sm:$0xf]
  %v293 = vld [vmem:[%s1 + $0xc0] sm:$0xf]
  %v294 = vld [vmem:[%s1 + $0xc4] sm:$0xf]
  %v295 = vld [vmem:[%s1 + $0xc8] sm:$0xf]
  %v296 = vld [vmem:[%s1 + $0xcc] sm:$0xf]
  %v297 = vld [vmem:[%s1 + $0xd0] sm:$0xf]
  %v298 = vld [vmem:[%s1 + $0xd4] sm:$0xf]
  %v299 = vld [vmem:[%s1 + $0xd8] sm:$0xf]
  %v300 = vld [vmem:[%s1 + $0xdc] sm:$0xf]
  %v301 = vld [vmem:[%s1 + $0xe0] sm:$0xf]
  %v302 = vld [vmem:[%s1 + $0xe4] sm:$0xf]
  %v303 = vld [vmem:[%s1 + $0xe8] sm:$0xf]
  %v304 = vld [vmem:[%s1 + $0xec] sm:$0xf]
  %v305 = vld [vmem:[%s1 + $0xf0] sm:$0xf]
  %v306 = vld [vmem:[%s1 + $0xf4] sm:$0xf]
  %v307 = vld [vmem:[%s1 + $0xf8] sm:$0xf]
  %v308 = vld [vmem:[%s1 + $0xfc] sm:$0xf]
  %v309 = vld [vmem:[%s1 + $0x100] sm:$0xf]
  %v310 = vld [vmem:[%s1 + $0x104] sm:$0xf]
  %v311 = vld [vmem:[%s1 + $0x108] sm:$0xf]
  %v312 = vld [vmem:[%s1 + $0x10c] sm:$0xf]
  %v313 = vld [vmem:[%s1 + $0x110] sm:$0xf]
  %v314 = vld [vmem:[%s1 + $0x114] sm:$0xf]
  %v315 = vld [vmem:[%s1 + $0x118] sm:$0xf]
  %v316 = vld [vmem:[%s1 + $0x11c] sm:$0xf]
  %v317 = vld [vmem:[%s1 + $0x120] sm:$0xf]
  %v318 = vld [vmem:[%s1 + $0x124] sm:$0xf]
  %v319 = vld [vmem:[%s1 + $0x128] sm:$0xf]
  %v320 = vld [vmem:[%s1 + $0x12c] sm:$0xf]
  %v321 = vld [vmem:[%s1 + $0x130] sm:$0xf]
  %v322 = vld [vmem:[%s1 + $0x134] sm:$0xf]
  %v323 = vld [vmem:[%s1 + $0x138] sm:$0xf]
  %v324 = vld [vmem:[%s1 + $0x13c] sm:$0xf]
  %v325 = vld [vmem:[%s1 + $0x140] sm:$0xf]
  %v326 = vld [vmem:[%s1 + $0x144] sm:$0xf]
  %v327 = vld [vmem:[%s1 + $0x148] sm:$0xf]
  %v328 = vld [vmem:[%s1 + $0x14c] sm:$0xf]
  %v329 = vld [vmem:[%s1 + $0x150] sm:$0xf]
  %v330 = vld [vmem:[%s1 + $0x154] sm:$0xf]
  %v331 = vld [vmem:[%s1 + $0x158] sm:$0xf]
  %v332 = vld [vmem:[%s1 + $0x15c] sm:$0xf]
  %v333 = vld [vmem:[%s1 + $0x160] sm:$0xf]
  %v334 = vld [vmem:[%s1 + $0x164] sm:$0xf]
  %v335 = vld [vmem:[%s1 + $0x168] sm:$0xf]
  %v336 = vld [vmem:[%s1 + $0x16c] sm:$0xf]
  %v337 = vld [vmem:[%s1 + $0x170] sm:$0xf]
  %v338 = vld [vmem:[%s1 + $0x174] sm:$0xf]
  %v339 = vld [vmem:[%s1 + $0x178] sm:$0xf]
  %v340 = vld [vmem:[%s1 + $0x17c] sm:$0xf]
  %v341 = vld [vmem:[%s1 + $0x180] sm:$0xf]
  %v342 = vld [vmem:[%s1 + $0x184] sm:$0xf]
  %v343 = vld [vmem:[%s1 + $0x188] sm:$0xf]
  %v344 = vld [vmem:[%s1 + $0x18c] sm:$0xf]
  %v345 = vld [vmem:[%s1 + $0x190] sm:$0xf]
  %v346 = vld [vmem:[%s1 + $0x194] sm:$0xf]
  %v347 = vld [vmem:[%s1 + $0x198] sm:$0xf]
  %v348 = vld [vmem:[%s1 + $0x19c] sm:$0xf]
  %v349 = vld [vmem:[%s1 + $0x1a0] sm:$0xf]
  %v350 = vld [vmem:[%s1 + $0x1a4] sm:$0xf]
  %v351 = vld [vmem:[%s1 + $0x1a8] sm:$0xf]
  %v352 = vld [vmem:[%s1 + $0x1ac] sm:$0xf]
  %v353 = vld [vmem:[%s1 + $0x1b0] sm:$0xf]
  %v354 = vld [vmem:[%s1 + $0x1b4] sm:$0xf]
  %v355 = vld [vmem:[%s1 + $0x1b8] sm:$0xf]
  %v356 = vld [vmem:[%s1 + $0x1bc] sm:$0xf]
  %v357 = vld [vmem:[%s1 + $0x1c0] sm:$0xf]
  %v358 = vld [vmem:[%s1 + $0x1c4] sm:$0xf]
  %v359 = vld [vmem:[%s1 + $0x1c8] sm:$0xf]
  %v360 = vld [vmem:[%s1 + $0x1cc] sm:$0xf]
  %v361 = vld [vmem:[%s1 + $0x1d0] sm:$0xf]
  %v362 = vld [vmem:[%s1 + $0x1d4] sm:$0xf]
  %v363 = vld [vmem:[%s1 + $0x1d8] sm:$0xf]
  %v364 = vld [vmem:[%s1 + $0x1dc] sm:$0xf]
  %v365 = vld [vmem:[%s1 + $0x1e0] sm:$0xf]
  %v366 = vld [vmem:[%s1 + $0x1e4] sm:$0xf]
  %v367 = vld [vmem:[%s1 + $0x1e8] sm:$0xf]
  %v368 = vld [vmem:[%s1 + $0x1ec] sm:$0xf]
  %v369 = vld [vmem:[%s1 + $0x1f0] sm:$0xf]
  %v370 = vld [vmem:[%s1 + $0x1f4] sm:$0xf]
  %v371 = vld [vmem:[%s1 + $0x1f8] sm:$0xf]
  %v372 = vld [vmem:[%s1 + $0x1fc] sm:$0xf]
  %v501 = vunpack.c.l.b16 %v245
  %v502 = vunpack.c.l.b16 %v246
  %v503 = vunpack.c.l.b16 %v247
  %v504 = vunpack.c.l.b16 %v248
  %v505 = vunpack.c.l.b16 %v249
  %v506 = vunpack.c.l.b16 %v250
  %v507 = vunpack.c.l.b16 %v251
  %v508 = vunpack.c.l.b16 %v252
  %v509 = vunpack.c.l.b16 %v253
  %v510 = vunpack.c.l.b16 %v254
  %v511 = vunpack.c.l.b16 %v255
  %v512 = vunpack.c.l.b16 %v256
  %v513 = vunpack.c.l.b16 %v257
  %v514 = vunpack.c.l.b16 %v258
  %v515 = vunpack.c.l.b16 %v259
  %v516 = vunpack.c.l.b16 %v260
  %v517 = vunpack.c.l.b16 %v261
  %v518 = vunpack.c.l.b16 %v262
  %v519 = vunpack.c.l.b16 %v263
  %v520 = vunpack.c.l.b16 %v264
  %v521 = vunpack.c.l.b16 %v265
  %v522 = vunpack.c.l.b16 %v266
  %v523 = vunpack.c.l.b16 %v267
  %v524 = vunpack.c.l.b16 %v268
  %v525 = vunpack.c.l.b16 %v269
  %v526 = vunpack.c.l.b16 %v270
  %v527 = vunpack.c.l.b16 %v271
  %v528 = vunpack.c.l.b16 %v272
  %v529 = vunpack.c.l.b16 %v273
  %v530 = vunpack.c.l.b16 %v274
  %v531 = vunpack.c.l.b16 %v275
  %v532 = vunpack.c.l.b16 %v276
  %v533 = vunpack.c.l.b16 %v277
  %v534 = vunpack.c.l.b16 %v278
  %v535 = vunpack.c.l.b16 %v279
  %v536 = vunpack.c.l.b16 %v280
  %v537 = vunpack.c.l.b16 %v281
  %v538 = vunpack.c.l.b16 %v282
  %v539 = vunpack.c.l.b16 %v283
  %v540 = vunpack.c.l.b16 %v284
  %v541 = vunpack.c.l.b16 %v285
  %v542 = vunpack.c.l.b16 %v286
  %v543 = vunpack.c.l.b16 %v287
  %v544 = vunpack.c.l.b16 %v288
  %v545 = vunpack.c.l.b16 %v289
  %v546 = vunpack.c.l.b16 %v290
  %v547 = vunpack.c.l.b16 %v291
  %v548 = vunpack.c.l.b16 %v292
  %v549 = vunpack.c.l.b16 %v293
  %v550 = vunpack.c.l.b16 %v294
  %v551 = vunpack.c.l.b16 %v295
  %v552 = vunpack.c.l.b16 %v296
  %v553 = vunpack.c.l.b16 %v297
  %v554 = vunpack.c.l.b16 %v298
  %v555 = vunpack.c.l.b16 %v299
  %v556 = vunpack.c.l.b16 %v300
  %v557 = vunpack.c.l.b16 %v301
  %v558 = vunpack.c.l.b16 %v302
  %v559 = vunpack.c.l.b16 %v303
  %v560 = vunpack.c.l.b16 %v304
  %v561 = vunpack.c.l.b16 %v305
  %v562 = vunpack.c.l.b16 %v306
  %v563 = vunpack.c.l.b16 %v307
  %v564 = vunpack.c.l.b16 %v308
  %v565 = vunpack.c.l.b16 %v309
  %v566 = vunpack.c.l.b16 %v310
  %v567 = vunpack.c.l.b16 %v311
  %v568 = vunpack.c.l.b16 %v312
  %v569 = vunpack.c.l.b16 %v313
  %v570 = vunpack.c.l.b16 %v314
  %v571 = vunpack.c.l.b16 %v315
  %v572 = vunpack.c.l.b16 %v316
  %v573 = vunpack.c.l.b16 %v317
  %v574 = vunpack.c.l.b16 %v318
  %v575 = vunpack.c.l.b16 %v319
  %v576 = vunpack.c.l.b16 %v320
  %v577 = vunpack.c.l.b16 %v321
  %v578 = vunpack.c.l.b16 %v322
  %v579 = vunpack.c.l.b16 %v323
  %v580 = vunpack.c.l.b16 %v324
  %v581 = vunpack.c.l.b16 %v325
  %v582 = vunpack.c.l.b16 %v326
  %v583 = vunpack.c.l.b16 %v327
  %v584 = vunpack.c.l.b16 %v328
  %v585 = vunpack.c.l.b16 %v329
  %v586 = vunpack.c.l.b16 %v330
  %v587 = vunpack.c.l.b16 %v331
  %v588 = vunpack.c.l.b16 %v332
  %v589 = vunpack.c.l.b16 %v333
  %v590 = vunpack.c.l.b16 %v334
  %v591 = vunpack.c.l.b16 %v335
  %v592 = vunpack.c.l.b16 %v336
  %v593 = vunpack.c.l.b16 %v337
  %v594 = vunpack.c.l.b16 %v338
  %v595 = vunpack.c.l.b16 %v339
  %v596 = vunpack.c.l.b16 %v340
  %v597 = vunpack.c.l.b16 %v341
  %v598 = vunpack.c.l.b16 %v342
  %v599 = vunpack.c.l.b16 %v343
  %v600 = vunpack.c.l.b16 %v344
  %v601 = vunpack.c.l.b16 %v345
  %v602 = vunpack.c.l.b16 %v346
  %v603 = vunpack.c.l.b16 %v347
  %v604 = vunpack.c.l.b16 %v348
  %v605 = vunpack.c.l.b16 %v349
  %v606 = vunpack.c.l.b16 %v350
  %v607 = vunpack.c.l.b16 %v351
  %v608 = vunpack.c.l.b16 %v352
  %v609 = vunpack.c.l.b16 %v353
  %v610 = vunpack.c.l.b16 %v354
  %v611 = vunpack.c.l.b16 %v355
  %v612 = vunpack.c.l.b16 %v356
  %v613 = vunpack.c.l.b16 %v357
  %v614 = vunpack.c.l.b16 %v358
  %v615 = vunpack.c.l.b16 %v359
  %v616 = vunpack.c.l.b16 %v360
  %v617 = vunpack.c.l.b16 %v361
  %v618 = vunpack.c.l.b16 %v362
  %v619 = vunpack.c.l.b16 %v363
  %v620 = vunpack.c.l.b16 %v364
  %v621 = vunpack.c.l.b16 %v365
  %v622 = vunpack.c.l.b16 %v366
  %v623 = vunpack.c.l.b16 %v367
  %v624 = vunpack.c.l.b16 %v368
  %v625 = vunpack.c.l.b16 %v369
  %v626 = vunpack.c.l.b16 %v370
  %v627 = vunpack.c.l.b16 %v371
  %v628 = vunpack.c.l.b16 %v372
  %v629 = vpack.c.b16 %v502, %v501
  %v630 = vpack.c.b16 %v504, %v503
  %v631 = vpack.c.b16 %v506, %v505
  %v632 = vpack.c.b16 %v508, %v507
  %v633 = vpack.c.b16 %v510, %v509
  %v634 = vpack.c.b16 %v512, %v511
  %v635 = vpack.c.b16 %v514, %v513
  %v636 = vpack.c.b16 %v516, %v515
  %v637 = vpack.c.b16 %v518, %v517
  %v638 = vpack.c.b16 %v520, %v519
  %v639 = vpack.c.b16 %v522, %v521
  %v640 = vpack.c.b16 %v524, %v523
  %v641 = vpack.c.b16 %v526, %v525
  %v642 = vpack.c.b16 %v528, %v527
  %v643 = vpack.c.b16 %v530, %v529
  %v644 = vpack.c.b16 %v532, %v531
  %v645 = vpack.c.b16 %v534, %v533
  %v646 = vpack.c.b16 %v536, %v535
  %v647 = vpack.c.b16 %v538, %v537
  %v648 = vpack.c.b16 %v540, %v539
  %v649 = vpack.c.b16 %v542, %v541
  %v650 = vpack.c.b16 %v544, %v543
  %v651 = vpack.c.b16 %v546, %v545
  %v652 = vpack.c.b16 %v548, %v547
  %v653 = vpack.c.b16 %v550, %v549
  %v654 = vpack.c.b16 %v552, %v551
  %v655 = vpack.c.b16 %v554, %v553
  %v656 = vpack.c.b16 %v556, %v555
  %v657 = vpack.c.b16 %v558, %v557
  %v658 = vpack.c.b16 %v560, %v559
  %v659 = vpack.c.b16 %v562, %v561
  %v660 = vpack.c.b16 %v564, %v563
  %v661 = vpack.c.b16 %v566, %v565
  %v662 = vpack.c.b16 %v568, %v567
  %v663 = vpack.c.b16 %v570, %v569
  %v664 = vpack.c.b16 %v572, %v571
  %v665 = vpack.c.b16 %v574, %v573
  %v666 = vpack.c.b16 %v576, %v575
  %v667 = vpack.c.b16 %v578, %v577
  %v668 = vpack.c.b16 %v580, %v579
  %v669 = vpack.c.b16 %v582, %v581
  %v670 = vpack.c.b16 %v584, %v583
  %v671 = vpack.c.b16 %v586, %v585
  %v672 = vpack.c.b16 %v588, %v587
  %v673 = vpack.c.b16 %v590, %v589
  %v674 = vpack.c.b16 %v592, %v591
  %v675 = vpack.c.b16 %v594, %v593
  %v676 = vpack.c.b16 %v596, %v595
  %v677 = vpack.c.b16 %v598, %v597
  %v678 = vpack.c.b16 %v600, %v599
  %v679 = vpack.c.b16 %v602, %v601
  %v680 = vpack.c.b16 %v604, %v603
  %v681 = vpack.c.b16 %v606, %v605
  %v682 = vpack.c.b16 %v608, %v607
  %v683 = vpack.c.b16 %v610, %v609
  %v684 = vpack.c.b16 %v612, %v611
  %v685 = vpack.c.b16 %v614, %v613
  %v686 = vpack.c.b16 %v616, %v615
  %v687 = vpack.c.b16 %v618, %v617
  %v688 = vpack.c.b16 %v620, %v619
  %v689 = vpack.c.b16 %v622, %v621
  %v690 = vpack.c.b16 %v624, %v623
  %v691 = vpack.c.b16 %v626, %v625
  %v692 = vpack.c.b16 %v628, %v627
  %757 = vmatprep.subr.bf16.mxu0 0
  %758 = vmatpush1.bf16.msra.mxu0 %v629
  %759 = vmatprep.subr.bf16.mxu0 0
  %760 = vmatpush1.bf16.msra.mxu0 %v630
  %761 = vmatprep.subr.bf16.mxu0 0
  %762 = vmatpush1.bf16.msra.mxu0 %v631
  %763 = vmatprep.subr.bf16.mxu0 0
  %764 = vmatpush1.bf16.msra.mxu0 %v632
  %765 = vmatprep.subr.bf16.mxu0 0
  %766 = vmatpush1.bf16.msra.mxu0 %v633
  %767 = vmatprep.subr.bf16.mxu0 0
  %768 = vmatpush1.bf16.msra.mxu0 %v634
  %769 = vmatprep.subr.bf16.mxu0 0
  %770 = vmatpush1.bf16.msra.mxu0 %v635
  %771 = vmatprep.subr.bf16.mxu0 0
  %772 = vmatpush1.bf16.msra.mxu0 %v636
  %773 = vmatprep.subr.bf16.mxu0 0
  %774 = vmatpush1.bf16.msra.mxu0 %v637
  %775 = vmatprep.subr.bf16.mxu0 0
  %776 = vmatpush1.bf16.msra.mxu0 %v638
  %777 = vmatprep.subr.bf16.mxu0 0
  %778 = vmatpush1.bf16.msra.mxu0 %v639
  %779 = vmatprep.subr.bf16.mxu0 0
  %780 = vmatpush1.bf16.msra.mxu0 %v640
  %781 = vmatprep.subr.bf16.mxu0 0
  %782 = vmatpush1.bf16.msra.mxu0 %v641
  %783 = vmatprep.subr.bf16.mxu0 0
  %784 = vmatpush1.bf16.msra.mxu0 %v642
  %785 = vmatprep.subr.bf16.mxu0 0
  %786 = vmatpush1.bf16.msra.mxu0 %v643
  %787 = vmatprep.subr.bf16.mxu0 0
  %788 = vmatpush1.bf16.msra.mxu0 %v644
  %789 = vmatprep.mubr.bf16.mxu0 %v117
  %790 = vmatmul.mubr.bf16.gmra.mrb[0].mxu0 %v116
  %v791 = vpop.f32.mrb[0].mxu0
  %v792 = vadd.f32 0.0, %v791
  %v793 = vpop.f32.mrb[0].mxu0
  %v794 = vpop.f32.mrb[0].mxu0
  %v795 = vadd.f32 0.0, %v794
  %v796 = vpop.f32.mrb[0].mxu0
  %797 = vmatprep.mubr.bf16.mxu0 %v119
  %798 = vmatmul.mubr.bf16.gmra.mrb[0].mxu0 %v118
  %v799 = vpop.f32.mrb[0].mxu0
  %v800 = vadd.f32 0.0, %v799
  %v801 = vpop.f32.mrb[0].mxu0
  %v802 = vpop.f32.mrb[0].mxu0
  %v803 = vadd.f32 0.0, %v802
  %v804 = vpop.f32.mrb[0].mxu0
  %805 = vdwg.mxu0
  %806 = vmatprep.subr.bf16.mxu0 0
  %807 = vmatpush1.bf16.msra.mxu0 %v645
  %808 = vmatprep.subr.bf16.mxu0 0
  %809 = vmatpush1.bf16.msra.mxu0 %v646
  %810 = vmatprep.subr.bf16.mxu0 0
  %811 = vmatpush1.bf16.msra.mxu0 %v647
  %812 = vmatprep.subr.bf16.mxu0 0
  %813 = vmatpush1.bf16.msra.mxu0 %v648
  %814 = vmatprep.subr.bf16.mxu0 0
  %815 = vmatpush1.bf16.msra.mxu0 %v649
  %816 = vmatprep.subr.bf16.mxu0 0
  %817 = vmatpush1.bf16.msra.mxu0 %v650
  %818 = vmatprep.subr.bf16.mxu0 0
  %819 = vmatpush1.bf16.msra.mxu0 %v651
  %820 = vmatprep.subr.bf16.mxu0 0
  %821 = vmatpush1.bf16.msra.mxu0 %v652
  %822 = vmatprep.subr.bf16.mxu0 0
  %823 = vmatpush1.bf16.msra.mxu0 %v653
  %824 = vmatprep.subr.bf16.mxu0 0
  %825 = vmatpush1.bf16.msra.mxu0 %v654
  %826 = vmatprep.subr.bf16.mxu0 0
  %827 = vmatpush1.bf16.msra.mxu0 %v655
  %828 = vmatprep.subr.bf16.mxu0 0
  %829 = vmatpush1.bf16.msra.mxu0 %v656
  %830 = vmatprep.subr.bf16.mxu0 0
  %831 = vmatpush1.bf16.msra.mxu0 %v657
  %832 = vmatprep.subr.bf16.mxu0 0
  %833 = vmatpush1.bf16.msra.mxu0 %v658
  %834 = vmatprep.subr.bf16.mxu0 0
  %835 = vmatpush1.bf16.msra.mxu0 %v659
  %836 = vmatprep.subr.bf16.mxu0 0
  %837 = vmatpush1.bf16.msra.mxu0 %v660
  %838 = vmatprep.mubr.bf16.mxu0 %v156
  %839 = vmatmul.mubr.bf16.gmra.mrb[0].mxu0 %v144
  %v840 = vpop.f32.mrb[0].mxu0
  %v841 = vadd.f32 %v792, %v840
  %v842 = vpop.f32.mrb[0].mxu0
  %v843 = vpop.f32.mrb[0].mxu0
  %v844 = vadd.f32 %v795, %v843
  %v845 = vpop.f32.mrb[0].mxu0
  %846 = vmatprep.mubr.bf16.mxu0 %v172
  %847 = vmatmul.mubr.bf16.gmra.mrb[0].mxu0 %v164
  %v848 = vpop.f32.mrb[0].mxu0
  %v849 = vadd.f32 %v800, %v848
  %v850 = vpop.f32.mrb[0].mxu0
  %v851 = vpop.f32.mrb[0].mxu0
  %v852 = vadd.f32 %v803, %v851
  %v853 = vpop.f32.mrb[0].mxu0
  %854 = vdwg.mxu0
  %855 = vmatprep.subr.bf16.mxu0 0
  %856 = vmatpush1.bf16.msra.mxu0 %v661
  %857 = vmatprep.subr.bf16.mxu0 0
  %858 = vmatpush1.bf16.msra.mxu0 %v662
  %859 = vmatprep.subr.bf16.mxu0 0
  %860 = vmatpush1.bf16.msra.mxu0 %v663
  %861 = vmatprep.subr.bf16.mxu0 0
  %862 = vmatpush1.bf16.msra.mxu0 %v664
  %863 = vmatprep.subr.bf16.mxu0 0
  %864 = vmatpush1.bf16.msra.mxu0 %v665
  %865 = vmatprep.subr.bf16.mxu0 0
  %866 = vmatpush1.bf16.msra.mxu0 %v666
  %867 = vmatprep.subr.bf16.mxu0 0
  %868 = vmatpush1.bf16.msra.mxu0 %v667
  %869 = vmatprep.subr.bf16.mxu0 0
  %870 = vmatpush1.bf16.msra.mxu0 %v668
  %871 = vmatprep.subr.bf16.mxu0 0
  %872 = vmatpush1.bf16.msra.mxu0 %v669
  %873 = vmatprep.subr.bf16.mxu0 0
  %874 = vmatpush1.bf16.msra.mxu0 %v670
  %875 = vmatprep.subr.bf16.mxu0 0
  %876 = vmatpush1.bf16.msra.mxu0 %v671
  %877 = vmatprep.subr.bf16.mxu0 0
  %878 = vmatpush1.bf16.msra.mxu0 %v672
  %879 = vmatprep.subr.bf16.mxu0 0
  %880 = vmatpush1.bf16.msra.mxu0 %v673
  %881 = vmatprep.subr.bf16.mxu0 0
  %882 = vmatpush1.bf16.msra.mxu0 %v674
  %883 = vmatprep.subr.bf16.mxu0 0
  %884 = vmatpush1.bf16.msra.mxu0 %v675
  %885 = vmatprep.subr.bf16.mxu0 0
  %886 = vmatpush1.bf16.msra.mxu0 %v676
  %887 = vmatprep.mubr.bf16.mxu0 %v189
  %888 = vmatmul.mubr.bf16.gmra.mrb[0].mxu0 %v186
  %v889 = vpop.f32.mrb[0].mxu0
  %v890 = vadd.f32 %v841, %v889
  %v891 = vpop.f32.mrb[0].mxu0
  %v892 = vpop.f32.mrb[0].mxu0
  %v893 = vadd.f32 %v844, %v892
  %v894 = vpop.f32.mrb[0].mxu0
  %895 = vmatprep.mubr.bf16.mxu0 %v193
  %896 = vmatmul.mubr.bf16.gmra.mrb[0].mxu0 %v191
  %v897 = vpop.f32.mrb[0].mxu0
  %v898 = vadd.f32 %v849, %v897
  %v899 = vpop.f32.mrb[0].mxu0
  %v900 = vpop.f32.mrb[0].mxu0
  %v901 = vadd.f32 %v852, %v900
  %v902 = vpop.f32.mrb[0].mxu0
  %903 = vdwg.mxu0
  %904 = vmatprep.subr.bf16.mxu0 0
  %905 = vmatpush1.bf16.msra.mxu0 %v677
  %906 = vmatprep.subr.bf16.mxu0 0
  %907 = vmatpush1.bf16.msra.mxu0 %v678
  %908 = vmatprep.subr.bf16.mxu0 0
  %909 = vmatpush1.bf16.msra.mxu0 %v679
  %910 = vmatprep.subr.bf16.mxu0 0
  %911 = vmatpush1.bf16.msra.mxu0 %v680
  %912 = vmatprep.subr.bf16.mxu0 0
  %913 = vmatpush1.bf16.msra.mxu0 %v681
  %914 = vmatprep.subr.bf16.mxu0 0
  %915 = vmatpush1.bf16.msra.mxu0 %v682
  %916 = vmatprep.subr.bf16.mxu0 0
  %917 = vmatpush1.bf16.msra.mxu0 %v683
  %918 = vmatprep.subr.bf16.mxu0 0
  %919 = vmatpush1.bf16.msra.mxu0 %v684
  %920 = vmatprep.subr.bf16.mxu0 0
  %921 = vmatpush1.bf16.msra.mxu0 %v685
  %922 = vmatprep.subr.bf16.mxu0 0
  %923 = vmatpush1.bf16.msra.mxu0 %v686
  %924 = vmatprep.subr.bf16.mxu0 0
  %925 = vmatpush1.bf16.msra.mxu0 %v687
  %926 = vmatprep.subr.bf16.mxu0 0
  %927 = vmatpush1.bf16.msra.mxu0 %v688
  %928 = vmatprep.subr.bf16.mxu0 0
  %929 = vmatpush1.bf16.msra.mxu0 %v689
  %930 = vmatprep.subr.bf16.mxu0 0
  %931 = vmatpush1.bf16.msra.mxu0 %v690
  %932 = vmatprep.subr.bf16.mxu0 0
  %933 = vmatpush1.bf16.msra.mxu0 %v691
  %934 = vmatprep.subr.bf16.mxu0 0
  %935 = vmatpush1.bf16.msra.mxu0 %v692
  %936 = vmatprep.mubr.bf16.mxu0 %v222
  %937 = vmatmul.mubr.bf16.gmra.mrb[0].mxu0 %v210
  %v938 = vpop.f32.mrb[0].mxu0
  %v939 = vadd.f32 %v890, %v938
  %v940 = vpop.f32.mrb[0].mxu0
  %v941 = vpop.f32.mrb[0].mxu0
  %v942 = vadd.f32 %v893, %v941
  %v943 = vpop.f32.mrb[0].mxu0
  %944 = vmatprep.mubr.bf16.mxu0 %v240
  %945 = vmatmul.mubr.bf16.gmra.mrb[0].mxu0 %v231
  %v946 = vpop.f32.mrb[0].mxu0
  %v947 = vadd.f32 %v898, %v946
  %v948 = vpop.f32.mrb[0].mxu0
  %v949 = vpop.f32.mrb[0].mxu0
  %v950 = vadd.f32 %v901, %v949
  %v951 = vpop.f32.mrb[0].mxu0
  %952 = vdwg.mxu0
  %vm953 = vcmp.ge.f32.partialorder %v939, 0.0
  %vm954 = vcmp.ge.f32.partialorder %v942, 0.0
  %vm955 = vcmp.ge.f32.partialorder %v947, 0.0
  %vm956 = vcmp.ge.f32.partialorder %v950, 0.0
  %v957 = vmul.f32 %v939, 0.2
  %v958 = vmul.f32 %v942, 0.2
  %v959 = vmul.f32 %v947, 0.2
  %v960 = vmul.f32 %v950, 0.2
  %v961 = vsel %vm953, %v939, %v957
  %v962 = vsel %vm954, %v942, %v958
  %v963 = vsel %vm955, %v947, %v959
  %v964 = vsel %vm956, %v950, %v960
  %v965 = vpack.c.bf16 %v962, %v961
  %v966 = vpack.c.bf16 %v964, %v963
  %v969 = vunpack.c.l.b16 %v965
  %v970 = vunpack.c.h.b16 %v965
  %v971 = vunpack.c.l.b16 %v966
  %v972 = vunpack.c.h.b16 %v966
  %v973 = vpack.c.b16 %v969, %v969
  %v974 = vpack.c.b16 %v970, %v970
  %v975 = vpack.c.b16 %v971, %v971
  %v976 = vpack.c.b16 %v972, %v972
  %981 = vst [vmem:[%s2] sm:$0xf] %v973
  %982 = vst [vmem:[%s2 + $0x4] sm:$0xf] %v974
  %983 = vst [vmem:[%s2 + $0x8] sm:$0xf] %v975
  %984 = vst [vmem:[%s2 + $0xc] sm:$0xf] %v976
  // Predicated region
  $region43: #{pose_encoder_forward.10} parent=0 // pred_check
    _
  $region44: #{pose_encoder_forward.10} parent=0 // pred_check_branch
    %986 = sbr.rel (0) target = $region46
  $region45: #{pose_encoder_forward.10} parent=0 // pred_region
    _
  $region46: #{pose_encoder_forward.10} parent=0 // pred_fallthru
    _
  // Predicated region
  $region47: #{pose_encoder_forward.10} parent=0 // pred_check
    _
  $region48: #{pose_encoder_forward.10} parent=0 // pred_check_branch
    %988 = sbr.rel (0) target = $region50
  $region49: #{pose_encoder_forward.10} parent=0 // pred_region
    _
  $region50: #{pose_encoder_forward.10} parent=0 // pred_fallthru
    _
  %989 = vsyncmov [#allocation3]
  %s990 = vpop.sfrf %989
  %p991 = scmp.eq.s32.totalorder %s990, 0
  %p992 = pneg %p991
  %994 = shalt.err (%p992)

// kernel: pose_encoder_forward.7
$region0: #{pose_encoder_forward.7}
  #allocation0 [shape = 'u32[]', space=smem, size = 0x4, offset = 0x4, fixed_abs, tag = 'smem constant byte address 0x4 - core index']
  #allocation1 [shape = 'u32[144,128]{1,0:T(1,128)}', space=vmem, size = 0x12000, scoped, tag = 'internal scratch']
  #allocation2 [shape = 'bf16[440,24]{1,0:T(8,128)(2,1)}', space=vmem, size = 0x1b800, scoped, tag = 'scratch operand']
  #allocation3 [shape = 's32[1]{0}', space=sflag, size = 0x4, scoped, tag = 'scratch operand']
  #allocation6 [shape = 's32[]', space=sflag, size = 0x4, offset = 0, fixed_abs, tag = 'sflag constant byte address 0x0 - dummy sync flag']
  %s0 = inlined_call_operand.vmem [shape: bf16[440,24], index: 0, kind: input, shape index: {}]
  %s1 = inlined_call_operand.hbm [shape: bf16[384,128], index: 1, kind: input, shape index: {}]
  %s2 = inlined_call_operand.vmem [shape: bf16[384,128], index: 2, kind: output, shape index: {}]
  %s3 = sld [smem:[#allocation0]]
  $region55: #{pose_encoder_forward.7} parent=0
    _
  %s5 = ssub.s32 1, %s3
  %s6 = scalar_select 0, %s5, %s3
  $region1: #{pose_encoder_forward.7} parent=0
    #allocation4 [shape = 'u8[98304]{0}', space=vmem, size = 0x18000, scoped, tag = 'input window, operand 1, single buffered']
    #allocation5 [shape = 's32[1]{0}', space=sflag, size = 0x4, scoped, tag = 'scoped memory for pose_encoder_forward.7']
    %7 = vsyncpa [#allocation5], 0
    // Predicated region
    $region2: #{pose_encoder_forward.7} parent=1 // pred_check
      _
    $region3: #{pose_encoder_forward.7} parent=1 // pred_check_branch
      %9 = sbr.rel (0) target = $region5
    $region4: #{pose_encoder_forward.7} parent=1 // pred_region
      %s11 = ssub.s32 3072, 3072
      %12 = vsyncadd [#allocation5], %s11
      %s13 = sshll.u32 [#allocation4], 4
      %s14 = int_to_ptr.vmem [resolvable:$true] %s13
      %19 = dma.hbm_to_vmem [thread:$0]  %s1, 3072, %s14, [#allocation5], 64, 64, 4
    $region5: #{pose_encoder_forward.7} parent=1 // pred_fallthru
      _
    // Predicated region
    $region6: #{pose_encoder_forward.7} parent=1 // pred_check
      _
    $region7: #{pose_encoder_forward.7} parent=1 // pred_check_branch
      %21 = sbr.rel (0) target = $region9
    $region8: #{pose_encoder_forward.7} parent=1 // pred_region
      %22 = dma.done [#allocation5], 3072
    $region9: #{pose_encoder_forward.7} parent=1 // pred_fallthru
      _
    %s24 = smul.u32 0, 384
    %s25 = sshra.s32 %s24, 3
    %s26 = sand.u32 %s24, 7
    %s27 = smul.addr %s25, 4
    %s28 = scalar_lea.vmem %s0, %s27
    %p30 = scmp.lt.u32.totalorder 220, 8
    %p31 = pneg %p30
    // Predicated region
    $region10: #{pose_encoder_forward.7} parent=1 // pred_check
      _
    $region11: #{pose_encoder_forward.7} parent=1 // pred_check_branch
      %33 = sbr.rel (%p30) target = $region13
    $region12: #{pose_encoder_forward.7} parent=1 // pred_region
      %s48 = sand.u32 220, 7
      %p49 = scmp.eq.s32.totalorder %s48, 0
      %p50 = pneg %p49
      // Predicated region
      $region25: #{pose_encoder_forward.7} parent=12 // pred_check
        _
      $region26: #{pose_encoder_forward.7} parent=12 // pred_check_branch
        %52 = sbr.rel (%p49) target = $region28
      $region27: #{pose_encoder_forward.7} parent=12 // pred_region
        %s53 = sand.u32 220, 7
        %s54 = ssub.s32 220, %s53
        %s55 = scalar_lea.vmem %s28, %s54
        %s56 = ssub.s32 220, %s53
        %s57 = scalar_lea.vmem [#allocation2], %s56
        loop: start=0, step=1, limit=1
        $region29: #{pose_encoder_forward.7} parent=27 // loop_pre_header
          _
        $region30: #{pose_encoder_forward.7} parent=27 // loop_header
          %s59 = sphi 0, %s63
          %p60 = scmp.ge.s32.totalorder %s59, 1
          %s64 = sphi %s28, %s28
          %s65 = sphi [#allocation2], [#allocation2]
        $region31: #{pose_encoder_forward.7} parent=27 // loop_header_branch
          %62 = sbr.rel (%p60) target = $region35
        $region32: #{pose_encoder_forward.7} parent=27 // loop_body
          %v66 = vld [vmem:[%s64] sm:$0xff]
          %67 = vst [vmem:[%s65] sm:$0xff] %v66
          %v68 = vld [vmem:[%s64 + $0x8] sm:$0xff]
          %69 = vst [vmem:[%s65 + $0x8] sm:$0xff] %v68
          %v70 = vld [vmem:[%s64 + $0x10] sm:$0xff]
          %71 = vst [vmem:[%s65 + $0x10] sm:$0xff] %v70
          %v72 = vld [vmem:[%s64 + $0x18] sm:$0xff]
          %73 = vst [vmem:[%s65 + $0x18] sm:$0xff] %v72
          %v74 = vld [vmem:[%s64 + $0x20] sm:$0xff]
          %75 = vst [vmem:[%s65 + $0x20] sm:$0xff] %v74
          %v76 = vld [vmem:[%s64 + $0x28] sm:$0xff]
          %77 = vst [vmem:[%s65 + $0x28] sm:$0xff] %v76
          %v78 = vld [vmem:[%s64 + $0x30] sm:$0xff]
          %79 = vst [vmem:[%s65 + $0x30] sm:$0xff] %v78
          %v80 = vld [vmem:[%s64 + $0x38] sm:$0xff]
          %81 = vst [vmem:[%s65 + $0x38] sm:$0xff] %v80
          %v82 = vld [vmem:[%s64 + $0x40] sm:$0xff]
          %83 = vst [vmem:[%s65 + $0x40] sm:$0xff] %v82
          %v84 = vld [vmem:[%s64 + $0x48] sm:$0xff]
          %85 = vst [vmem:[%s65 + $0x48] sm:$0xff] %v84
          %v86 = vld [vmem:[%s64 + $0x50] sm:$0xff]
          %87 = vst [vmem:[%s65 + $0x50] sm:$0xff] %v86
          %v88 = vld [vmem:[%s64 + $0x58] sm:$0xff]
          %89 = vst [vmem:[%s65 + $0x58] sm:$0xff] %v88
          %v90 = vld [vmem:[%s64 + $0x60] sm:$0xff]
          %91 = vst [vmem:[%s65 + $0x60] sm:$0xff] %v90
          %v92 = vld [vmem:[%s64 + $0x68] sm:$0xff]
          %93 = vst [vmem:[%s65 + $0x68] sm:$0xff] %v92
          %v94 = vld [vmem:[%s64 + $0x70] sm:$0xff]
          %95 = vst [vmem:[%s65 + $0x70] sm:$0xff] %v94
          %v96 = vld [vmem:[%s64 + $0x78] sm:$0xff]
          %97 = vst [vmem:[%s65 + $0x78] sm:$0xff] %v96
          %v98 = vld [vmem:[%s64 + $0x80] sm:$0xff]
          %99 = vst [vmem:[%s65 + $0x80] sm:$0xff] %v98
          %v100 = vld [vmem:[%s64 + $0x88] sm:$0xff]
          %101 = vst [vmem:[%s65 + $0x88] sm:$0xff] %v100
          %v102 = vld [vmem:[%s64 + $0x90] sm:$0xff]
          %103 = vst [vmem:[%s65 + $0x90] sm:$0xff] %v102
          %v104 = vld [vmem:[%s64 + $0x98] sm:$0xff]
          %105 = vst [vmem:[%s65 + $0x98] sm:$0xff] %v104
          %v106 = vld [vmem:[%s64 + $0xa0] sm:$0xff]
          %107 = vst [vmem:[%s65 + $0xa0] sm:$0xff] %v106
          %v108 = vld [vmem:[%s64 + $0xa8] sm:$0xff]
          %109 = vst [vmem:[%s65 + $0xa8] sm:$0xff] %v108
          %v110 = vld [vmem:[%s64 + $0xb0] sm:$0xff]
          %111 = vst [vmem:[%s65 + $0xb0] sm:$0xff] %v110
          %v112 = vld [vmem:[%s64 + $0xb8] sm:$0xff]
          %113 = vst [vmem:[%s65 + $0xb8] sm:$0xff] %v112
          %v114 = vld [vmem:[%s64 + $0xc0] sm:$0xff]
          %115 = vst [vmem:[%s65 + $0xc0] sm:$0xff] %v114
          %v116 = vld [vmem:[%s64 + $0xc8] sm:$0xff]
          %117 = vst [vmem:[%s65 + $0xc8] sm:$0xff] %v116
          %v118 = vld [vmem:[%s64 + $0xd0] sm:$0xff]
          %119 = vst [vmem:[%s65 + $0xd0] sm:$0xff] %v118
        $region33: #{pose_encoder_forward.7} parent=27 // loop_footer
          %s63 = sadd.s32 1, %s59
        $region34: #{pose_encoder_forward.7} parent=27 // loop_footer_branch
          %58 = sbr.rel target = $region30
        $region35: #{pose_encoder_forward.7} parent=27 // loop_exit
          _
        %s120 = sshllo.u32 0, %s53
        loop: start=0, step=1, limit=1
        $region36: #{pose_encoder_forward.7} parent=27 // loop_pre_header
          _
        $region37: #{pose_encoder_forward.7} parent=27 // loop_header
          %s122 = sphi 0, %s126
          %p123 = scmp.ge.s32.totalorder %s122, 1
          %s127 = sphi %s55, %s55
          %s128 = sphi %s57, %s57
        $region38: #{pose_encoder_forward.7} parent=27 // loop_header_branch
          %125 = sbr.rel (%p123) target = $region42
        $region39: #{pose_encoder_forward.7} parent=27 // loop_body
          %v129 = vld [vmem:[%s127] sm:%s120]
          %130 = vst [vmem:[%s128] sm:%s120] %v129
        $region40: #{pose_encoder_forward.7} parent=27 // loop_footer
          %s126 = sadd.s32 1, %s122
        $region41: #{pose_encoder_forward.7} parent=27 // loop_footer_branch
          %121 = sbr.rel target = $region37
        $region42: #{pose_encoder_forward.7} parent=27 // loop_exit
          _
      $region28: #{pose_encoder_forward.7} parent=12 // pred_fallthru
        _
    $region13: #{pose_encoder_forward.7} parent=1 // pred_fallthru
      _
    // Predicated region
    $region14: #{pose_encoder_forward.7} parent=1 // pred_check
      %p34 = pneg %p30
    $region15: #{pose_encoder_forward.7} parent=1 // pred_check_branch
      %36 = sbr.rel (%p34) target = $region17
    $region16: #{pose_encoder_forward.7} parent=1 // pred_region
      %s37 = sshllo.u32 0, 220
      loop: start=0, step=1, limit=1
      $region18: #{pose_encoder_forward.7} parent=16 // loop_pre_header
        _
      $region19: #{pose_encoder_forward.7} parent=16 // loop_header
        %s39 = sphi 0, %s43
        %p40 = scmp.ge.s32.totalorder %s39, 1
        %s44 = sphi %s28, %s28
        %s45 = sphi [#allocation2], [#allocation2]
      $region20: #{pose_encoder_forward.7} parent=16 // loop_header_branch
        %42 = sbr.rel (%p40) target = $region24
      $region21: #{pose_encoder_forward.7} parent=16 // loop_body
        %v46 = vld [vmem:[%s44] sm:%s37]
        %47 = vst [vmem:[%s45] sm:%s37] %v46
      $region22: #{pose_encoder_forward.7} parent=16 // loop_footer
        %s43 = sadd.s32 1, %s39
      $region23: #{pose_encoder_forward.7} parent=16 // loop_footer_branch
        %38 = sbr.rel target = $region19
      $region24: #{pose_encoder_forward.7} parent=16 // loop_exit
        _
    $region17: #{pose_encoder_forward.7} parent=1 // pred_fallthru
      _
    // Predicated region
    $region43: #{pose_encoder_forward.7} parent=1 // pred_check
      _
    $region44: #{pose_encoder_forward.7} parent=1 // pred_check_branch
      %133 = sbr.rel (0) target = $region46
    $region45: #{pose_encoder_forward.7} parent=1 // pred_region
      %134 = vsyncadd [#allocation3], 3520
    $region46: #{pose_encoder_forward.7} parent=1 // pred_fallthru
      _
    %s135 = smul.u32 4, 55
    %s136 = smul.u32 %s135, 1
    %s137 = sshll.u32 %s136, 4
    %138 = dma.done [#allocation3], %s137
    %v139 = vld [vmem:[#allocation2] sm:$0xf]
    %v140 = vld [vmem:[#allocation2 + $0x4] sm:$0xf]
    %v141 = vld [vmem:[#allocation2 + $0x8] sm:$0xf]
    %v142 = vld [vmem:[#allocation2 + $0xc] sm:$0xf]
    %v143 = vld [vmem:[#allocation2 + $0x10] sm:$0xf]
    %v144 = vld [vmem:[#allocation2 + $0x14] sm:$0xf]
    %v145 = vld [vmem:[#allocation2 + $0x18] sm:$0xf]
    %v146 = vld [vmem:[#allocation2 + $0x1c] sm:$0xf]
    %v147 = vld [vmem:[#allocation2 + $0x20] sm:$0xf]
    %v148 = vld [vmem:[#allocation2 + $0x24] sm:$0xf]
    %v149 = vld [vmem:[#allocation2 + $0x28] sm:$0xf]
    %v150 = vld [vmem:[#allocation2 + $0x2c] sm:$0xf]
    %v151 = vld [vmem:[#allocation2 + $0x30] sm:$0xf]
    %v152 = vld [vmem:[#allocation2 + $0x34] sm:$0xf]
    %v153 = vld [vmem:[#allocation2 + $0x38] sm:$0xf]
    %v154 = vld [vmem:[#allocation2 + $0x3c] sm:$0xf]
    %v155 = vld [vmem:[#allocation2 + $0x40] sm:$0xf]
    %v156 = vld [vmem:[#allocation2 + $0x44] sm:$0xf]
    %v157 = vld [vmem:[#allocation2 + $0x48] sm:$0xf]
    %v158 = vld [vmem:[#allocation2 + $0x4c] sm:$0xf]
    %v159 = vld [vmem:[#allocation2 + $0x50] sm:$0xf]
    %v160 = vld [vmem:[#allocation2 + $0x54] sm:$0xf]
    %v161 = vld [vmem:[#allocation2 + $0x58] sm:$0xf]
    %v162 = vld [vmem:[#allocation2 + $0x5c] sm:$0xf]
    %v163 = vld [vmem:[#allocation2 + $0x60] sm:$0xf]
    %v164 = vld [vmem:[#allocation2 + $0x64] sm:$0xf]
    %v165 = vld [vmem:[#allocation2 + $0x68] sm:$0xf]
    %v166 = vld [vmem:[#allocation2 + $0x6c] sm:$0xf]
    %v167 = vld [vmem:[#allocation2 + $0x70] sm:$0xf]
    %v168 = vld [vmem:[#allocation2 + $0x74] sm:$0xf]
    %v169 = vld [vmem:[#allocation2 + $0x78] sm:$0xf]
    %v170 = vld [vmem:[#allocation2 + $0x7c] sm:$0xf]
    %v171 = vld [vmem:[#allocation2 + $0x80] sm:$0xf]
    %v172 = vld [vmem:[#allocation2 + $0x84] sm:$0xf]
    %v173 = vld [vmem:[#allocation2 + $0x88] sm:$0xf]
    %v174 = vld [vmem:[#allocation2 + $0x8c] sm:$0xf]
    %v175 = vld [vmem:[#allocation2 + $0x90] sm:$0xf]
    %v176 = vld [vmem:[#allocation2 + $0x94] sm:$0xf]
    %v177 = vld [vmem:[#allocation2 + $0x98] sm:$0xf]
    %v178 = vld [vmem:[#allocation2 + $0x9c] sm:$0xf]
    %v179 = vld [vmem:[#allocation2 + $0xa0] sm:$0xf]
    %v180 = vld [vmem:[#allocation2 + $0xa4] sm:$0xf]
    %v181 = vld [vmem:[#allocation2 + $0xa8] sm:$0xf]
    %v182 = vld [vmem:[#allocation2 + $0xac] sm:$0xf]
    %v183 = vld [vmem:[#allocation2 + $0xb0] sm:$0xf]
    %v184 = vld [vmem:[#allocation2 + $0xb4] sm:$0xf]
    %v185 = vld [vmem:[#allocation2 + $0xb8] sm:$0xf]
    %v186 = vld [vmem:[#allocation2 + $0xbc] sm:$0xf]
    %v187 = vld [vmem:[#allocation2 + $0xc0] sm:$0x1]
    %v188 = vld [vmem:[#allocation2] sm:$0xe]
    %v189 = vld [vmem:[#allocation2 + $0xc0] sm:$0x3]
    %v190 = vld [vmem:[#allocation2 + $0xc0] sm:$0xf]
    %v191 = vld [vmem:[#allocation2 + $0xc4] sm:$0xf]
    %v192 = vld [vmem:[#allocation2 + $0xc8] sm:$0x1]
    %v193 = vld [vmem:[#allocation2 + $0x8] sm:$0xe]
    %v194 = vld [vmem:[#allocation2 + $0xc8] sm:$0x3]
    %v195 = vld [vmem:[#allocation2 + $0xc8] sm:$0xf]
    %v196 = vld [vmem:[#allocation2 + $0xcc] sm:$0xf]
    %v197 = vld [vmem:[#allocation2 + $0xd0] sm:$0x1]
    %v198 = vld [vmem:[#allocation2 + $0x10] sm:$0xe]
    %v199 = vld [vmem:[#allocation2 + $0xd0] sm:$0x3]
    %v200 = vld [vmem:[#allocation2 + $0xd0] sm:$0xf]
    %v201 = vld [vmem:[#allocation2 + $0xd4] sm:$0xf]
    %v202 = vld [vmem:[#allocation2 + $0xd8] sm:$0x1]
    %v203 = vld [vmem:[#allocation2 + $0x18] sm:$0xe]
    %v204 = vld [vmem:[#allocation2 + $0xd8] sm:$0x3]
    %v253 = vunpack.c.l.b16 %v139
    %v254 = vunpack.c.l.b16 %v140
    %v255 = vunpack.c.l.b16 %v141
    %v256 = vunpack.c.l.b16 %v142
    %v257 = vunpack.c.l.b16 %v143
    %v258 = vunpack.c.l.b16 %v144
    %v259 = vunpack.c.l.b16 %v145
    %v260 = vunpack.c.l.b16 %v146
    %v261 = vunpack.c.l.b16 %v147
    %v262 = vunpack.c.l.b16 %v148
    %v263 = vunpack.c.l.b16 %v149
    %v264 = vunpack.c.l.b16 %v150
    %v265 = vunpack.c.l.b16 %v151
    %v266 = vunpack.c.l.b16 %v152
    %v267 = vunpack.c.l.b16 %v153
    %v268 = vunpack.c.l.b16 %v154
    %v269 = vunpack.c.l.b16 %v155
    %v270 = vunpack.c.l.b16 %v156
    %v271 = vunpack.c.l.b16 %v157
    %v272 = vunpack.c.l.b16 %v158
    %v273 = vunpack.c.l.b16 %v159
    %v274 = vunpack.c.l.b16 %v160
    %v275 = vunpack.c.l.b16 %v161
    %v276 = vunpack.c.l.b16 %v162
    %v277 = vunpack.c.l.b16 %v163
    %v278 = vunpack.c.l.b16 %v164
    %v279 = vunpack.c.l.b16 %v165
    %v280 = vunpack.c.l.b16 %v166
    %v281 = vunpack.c.l.b16 %v167
    %v282 = vunpack.c.l.b16 %v168
    %v283 = vunpack.c.l.b16 %v169
    %v284 = vunpack.c.l.b16 %v170
    %v285 = vunpack.c.l.b16 %v171
    %v286 = vunpack.c.l.b16 %v172
    %v287 = vunpack.c.l.b16 %v173
    %v288 = vunpack.c.l.b16 %v174
    %v289 = vunpack.c.l.b16 %v175
    %v290 = vunpack.c.l.b16 %v176
    %v291 = vunpack.c.l.b16 %v177
    %v292 = vunpack.c.l.b16 %v178
    %v293 = vunpack.c.l.b16 %v179
    %v294 = vunpack.c.l.b16 %v180
    %v295 = vunpack.c.l.b16 %v181
    %v296 = vunpack.c.l.b16 %v182
    %v297 = vunpack.c.l.b16 %v183
    %v298 = vunpack.c.l.b16 %v184
    %v299 = vunpack.c.l.b16 %v185
    %v300 = vunpack.c.l.b16 %v186
    %v301 = vpack.c.b16 %v254, %v253
    %v302 = vpack.c.b16 %v256, %v255
    %v303 = vpack.c.b16 %v258, %v257
    %v304 = vpack.c.b16 %v260, %v259
    %v305 = vpack.c.b16 %v262, %v261
    %v306 = vpack.c.b16 %v264, %v263
    %v307 = vpack.c.b16 %v266, %v265
    %v308 = vpack.c.b16 %v268, %v267
    %v309 = vpack.c.b16 %v270, %v269
    %v310 = vpack.c.b16 %v272, %v271
    %v311 = vpack.c.b16 %v274, %v273
    %v312 = vpack.c.b16 %v276, %v275
    %v313 = vpack.c.b16 %v278, %v277
    %v314 = vpack.c.b16 %v280, %v279
    %v315 = vpack.c.b16 %v282, %v281
    %v316 = vpack.c.b16 %v284, %v283
    %v317 = vpack.c.b16 %v286, %v285
    %v318 = vpack.c.b16 %v288, %v287
    %v319 = vpack.c.b16 %v290, %v289
    %v320 = vpack.c.b16 %v292, %v291
    %v321 = vpack.c.b16 %v294, %v293
    %v322 = vpack.c.b16 %v296, %v295
    %v323 = vpack.c.b16 %v298, %v297
    %v324 = vpack.c.b16 %v300, %v299
    %v326 = vunpack.c.l.b16 %v187
    %v327 = vpack.c.b16 %v326, %v326
    %vm328 = vsmask.f32 7424
    %v330 = vshrl.u32 %v301, 16
    %v332 = vshll.u32 %v301, 16
    %v334 = vrot.slane %v332, 1
    %v335 = vor.u32 %v330, %v334
    %v337 = vshll.u32 %v302, 16
    %v339 = vrot.slane %v337, 1
    %v340 = vsel %vm328, %v335, %v339
    %v341 = vshrl.u32 %v302, 16
    %v343 = vor.u32 %v341, %v339
    %v345 = vshll.u32 %v303, 16
    %v347 = vrot.slane %v345, 1
    %v348 = vsel %vm328, %v343, %v347
    %v349 = vshrl.u32 %v303, 16
    %v351 = vor.u32 %v349, %v347
    %v353 = vshll.u32 %v304, 16
    %v355 = vrot.slane %v353, 1
    %v356 = vsel %vm328, %v351, %v355
    %v357 = vshrl.u32 %v304, 16
    %v359 = vor.u32 %v357, %v355
    %v361 = vshll.u32 %v305, 16
    %v363 = vrot.slane %v361, 1
    %v364 = vsel %vm328, %v359, %v363
    %v365 = vshrl.u32 %v305, 16
    %v367 = vor.u32 %v365, %v363
    %v369 = vshll.u32 %v306, 16
    %v371 = vrot.slane %v369, 1
    %v372 = vsel %vm328, %v367, %v371
    %v373 = vshrl.u32 %v306, 16
    %v375 = vor.u32 %v373, %v371
    %v377 = vshll.u32 %v307, 16
    %v379 = vrot.slane %v377, 1
    %v380 = vsel %vm328, %v375, %v379
    %v381 = vshrl.u32 %v307, 16
    %v383 = vor.u32 %v381, %v379
    %v385 = vshll.u32 %v308, 16
    %v387 = vrot.slane %v385, 1
    %v388 = vsel %vm328, %v383, %v387
    %v389 = vshrl.u32 %v308, 16
    %v391 = vor.u32 %v389, %v387
    %v393 = vshll.u32 %v309, 16
    %v395 = vrot.slane %v393, 1
    %v396 = vsel %vm328, %v391, %v395
    %v397 = vshrl.u32 %v309, 16
    %v399 = vor.u32 %v397, %v395
    %v401 = vshll.u32 %v310, 16
    %v403 = vrot.slane %v401, 1
    %v404 = vsel %vm328, %v399, %v403
    %v405 = vshrl.u32 %v310, 16
    %v407 = vor.u32 %v405, %v403
    %v409 = vshll.u32 %v311, 16
    %v411 = vrot.slane %v409, 1
    %v412 = vsel %vm328, %v407, %v411
    %v413 = vshrl.u32 %v311, 16
    %v415 = vor.u32 %v413, %v411
    %v417 = vshll.u32 %v312, 16
    %v419 = vrot.slane %v417, 1
    %v420 = vsel %vm328, %v415, %v419
    %v421 = vshrl.u32 %v312, 16
    %v423 = vor.u32 %v421, %v419
    %v425 = vshll.u32 %v313, 16
    %v427 = vrot.slane %v425, 1
    %v428 = vsel %vm328, %v423, %v427
    %v429 = vshrl.u32 %v313, 16
    %v431 = vor.u32 %v429, %v427
    %v433 = vshll.u32 %v314, 16
    %v435 = vrot.slane %v433, 1
    %v436 = vsel %vm328, %v431, %v435
    %v437 = vshrl.u32 %v314, 16
    %v439 = vor.u32 %v437, %v435
    %v441 = vshll.u32 %v315, 16
    %v443 = vrot.slane %v441, 1
    %v444 = vsel %vm328, %v439, %v443
    %v445 = vshrl.u32 %v315, 16
    %v447 = vor.u32 %v445, %v443
    %v449 = vshll.u32 %v316, 16
    %v451 = vrot.slane %v449, 1
    %v452 = vsel %vm328, %v447, %v451
    %v453 = vshrl.u32 %v316, 16
    %v455 = vor.u32 %v453, %v451
    %v457 = vshll.u32 %v317, 16
    %v459 = vrot.slane %v457, 1
    %v460 = vsel %vm328, %v455, %v459
    %v461 = vshrl.u32 %v317, 16
    %v463 = vor.u32 %v461, %v459
    %v465 = vshll.u32 %v318, 16
    %v467 = vrot.slane %v465, 1
    %v468 = vsel %vm328, %v463, %v467
    %v469 = vshrl.u32 %v318, 16
    %v471 = vor.u32 %v469, %v467
    %v473 = vshll.u32 %v319, 16
    %v475 = vrot.slane %v473, 1
    %v476 = vsel %vm328, %v471, %v475
    %v477 = vshrl.u32 %v319, 16
    %v479 = vor.u32 %v477, %v475
    %v481 = vshll.u32 %v320, 16
    %v483 = vrot.slane %v481, 1
    %v484 = vsel %vm328, %v479, %v483
    %v485 = vshrl.u32 %v320, 16
    %v487 = vor.u32 %v485, %v483
    %v489 = vshll.u32 %v321, 16
    %v491 = vrot.slane %v489, 1
    %v492 = vsel %vm328, %v487, %v491
    %v493 = vshrl.u32 %v321, 16
    %v495 = vor.u32 %v493, %v491
    %v497 = vshll.u32 %v322, 16
    %v499 = vrot.slane %v497, 1
    %v500 = vsel %vm328, %v495, %v499
    %v501 = vshrl.u32 %v322, 16
    %v503 = vor.u32 %v501, %v499
    %v505 = vshll.u32 %v323, 16
    %v507 = vrot.slane %v505, 1
    %v508 = vsel %vm328, %v503, %v507
    %v509 = vshrl.u32 %v323, 16
    %v511 = vor.u32 %v509, %v507
    %v513 = vshll.u32 %v324, 16
    %v515 = vrot.slane %v513, 1
    %v516 = vsel %vm328, %v511, %v515
    %v517 = vshrl.u32 %v324, 16
    %v519 = vor.u32 %v517, %v515
    %v521 = vshll.u32 %v327, 16
    %v523 = vrot.slane %v521, 1
    %v524 = vsel %vm328, %v519, %v523
    %525 = vrot.lane.b32.xlu0 %v340, 24
    %v526 = vpop.permute.xlu0 %525
    %527 = vrot.lane.b32.xlu0 %v348, 24
    %v528 = vpop.permute.xlu0 %527
    %529 = vrot.lane.b32.xlu0 %v356, 24
    %v530 = vpop.permute.xlu0 %529
    %531 = vrot.lane.b32.xlu0 %v364, 24
    %v532 = vpop.permute.xlu0 %531
    %533 = vrot.lane.b32.xlu0 %v372, 24
    %v534 = vpop.permute.xlu0 %533
    %535 = vrot.lane.b32.xlu0 %v380, 24
    %v536 = vpop.permute.xlu0 %535
    %537 = vrot.lane.b32.xlu0 %v388, 24
    %v538 = vpop.permute.xlu0 %537
    %539 = vrot.lane.b32.xlu0 %v396, 24
    %v540 = vpop.permute.xlu0 %539
    %541 = vrot.lane.b32.xlu0 %v404, 24
    %v542 = vpop.permute.xlu0 %541
    %543 = vrot.lane.b32.xlu0 %v412, 24
    %v544 = vpop.permute.xlu0 %543
    %545 = vrot.lane.b32.xlu0 %v420, 24
    %v546 = vpop.permute.xlu0 %545
    %547 = vrot.lane.b32.xlu0 %v428, 24
    %v548 = vpop.permute.xlu0 %547
    %549 = vrot.lane.b32.xlu0 %v436, 24
    %v550 = vpop.permute.xlu0 %549
    %551 = vrot.lane.b32.xlu0 %v444, 24
    %v552 = vpop.permute.xlu0 %551
    %553 = vrot.lane.b32.xlu0 %v452, 24
    %v554 = vpop.permute.xlu0 %553
    %555 = vrot.lane.b32.xlu0 %v460, 24
    %v556 = vpop.permute.xlu0 %555
    %557 = vrot.lane.b32.xlu0 %v468, 24
    %v558 = vpop.permute.xlu0 %557
    %559 = vrot.lane.b32.xlu0 %v476, 24
    %v560 = vpop.permute.xlu0 %559
    %561 = vrot.lane.b32.xlu0 %v484, 24
    %v562 = vpop.permute.xlu0 %561
    %563 = vrot.lane.b32.xlu0 %v492, 24
    %v564 = vpop.permute.xlu0 %563
    %565 = vrot.lane.b32.xlu0 %v500, 24
    %v566 = vpop.permute.xlu0 %565
    %567 = vrot.lane.b32.xlu0 %v508, 24
    %v568 = vpop.permute.xlu0 %567
    %569 = vrot.lane.b32.xlu0 %v516, 24
    %v570 = vpop.permute.xlu0 %569
    %571 = vrot.lane.b32.xlu0 %v524, 24
    %v572 = vpop.permute.xlu0 %571
    %v574 = vunpack.c.l.b16 %v188
    %v575 = vpack.c.b16 %v254, %v574
    %vm576 = vcmask 1046528
    %v577 = vrot.slane %v575, 1
    %v578 = vrot.slane %v302, 1
    %v579 = vsel %vm576, %v577, %v578
    %v580 = vrot.slane %v303, 1
    %v581 = vsel %vm576, %v578, %v580
    %v582 = vrot.slane %v304, 1
    %v583 = vsel %vm576, %v580, %v582
    %v584 = vrot.slane %v305, 1
    %v585 = vsel %vm576, %v582, %v584
    %v586 = vrot.slane %v306, 1
    %v587 = vsel %vm576, %v584, %v586
    %v588 = vrot.slane %v307, 1
    %v589 = vsel %vm576, %v586, %v588
    %v590 = vrot.slane %v308, 1
    %v591 = vsel %vm576, %v588, %v590
    %v592 = vrot.slane %v309, 1
    %v593 = vsel %vm576, %v590, %v592
    %v594 = vrot.slane %v310, 1
    %v595 = vsel %vm576, %v592, %v594
    %v596 = vrot.slane %v311, 1
    %v597 = vsel %vm576, %v594, %v596
    %v598 = vrot.slane %v312, 1
    %v599 = vsel %vm576, %v596, %v598
    %v600 = vrot.slane %v313, 1
    %v601 = vsel %vm576, %v598, %v600
    %v602 = vrot.slane %v314, 1
    %v603 = vsel %vm576, %v600, %v602
    %v604 = vrot.slane %v315, 1
    %v605 = vsel %vm576, %v602, %v604
    %v606 = vrot.slane %v316, 1
    %v607 = vsel %vm576, %v604, %v606
    %v608 = vrot.slane %v317, 1
    %v609 = vsel %vm576, %v606, %v608
    %v610 = vrot.slane %v318, 1
    %v611 = vsel %vm576, %v608, %v610
    %v612 = vrot.slane %v319, 1
    %v613 = vsel %vm576, %v610, %v612
    %v614 = vrot.slane %v320, 1
    %v615 = vsel %vm576, %v612, %v614
    %v616 = vrot.slane %v321, 1
    %v617 = vsel %vm576, %v614, %v616
    %v618 = vrot.slane %v322, 1
    %v619 = vsel %vm576, %v616, %v618
    %v620 = vrot.slane %v323, 1
    %v621 = vsel %vm576, %v618, %v620
    %v622 = vrot.slane %v324, 1
    %v623 = vsel %vm576, %v620, %v622
    %v624 = vrot.slane %v327, 1
    %v625 = vsel %vm576, %v622, %v624
    %626 = vrot.lane.b32.xlu0 %v579, 48
    %v627 = vpop.permute.xlu0 %626
    %628 = vrot.lane.b32.xlu0 %v581, 48
    %v629 = vpop.permute.xlu0 %628
    %630 = vrot.lane.b32.xlu0 %v583, 48
    %v631 = vpop.permute.xlu0 %630
    %632 = vrot.lane.b32.xlu0 %v585, 48
    %v633 = vpop.permute.xlu0 %632
    %634 = vrot.lane.b32.xlu0 %v587, 48
    %v635 = vpop.permute.xlu0 %634
    %636 = vrot.lane.b32.xlu0 %v589, 48
    %v637 = vpop.permute.xlu0 %636
    %638 = vrot.lane.b32.xlu0 %v591, 48
    %v639 = vpop.permute.xlu0 %638
    %640 = vrot.lane.b32.xlu0 %v593, 48
    %v641 = vpop.permute.xlu0 %640
    %642 = vrot.lane.b32.xlu0 %v595, 48
    %v643 = vpop.permute.xlu0 %642
    %644 = vrot.lane.b32.xlu0 %v597, 48
    %v645 = vpop.permute.xlu0 %644
    %646 = vrot.lane.b32.xlu0 %v599, 48
    %v647 = vpop.permute.xlu0 %646
    %648 = vrot.lane.b32.xlu0 %v601, 48
    %v649 = vpop.permute.xlu0 %648
    %650 = vrot.lane.b32.xlu0 %v603, 48
    %v651 = vpop.permute.xlu0 %650
    %652 = vrot.lane.b32.xlu0 %v605, 48
    %v653 = vpop.permute.xlu0 %652
    %654 = vrot.lane.b32.xlu0 %v607, 48
    %v655 = vpop.permute.xlu0 %654
    %656 = vrot.lane.b32.xlu0 %v609, 48
    %v657 = vpop.permute.xlu0 %656
    %658 = vrot.lane.b32.xlu0 %v611, 48
    %v659 = vpop.permute.xlu0 %658
    %660 = vrot.lane.b32.xlu0 %v613, 48
    %v661 = vpop.permute.xlu0 %660
    %662 = vrot.lane.b32.xlu0 %v615, 48
    %v663 = vpop.permute.xlu0 %662
    %664 = vrot.lane.b32.xlu0 %v617, 48
    %v665 = vpop.permute.xlu0 %664
    %666 = vrot.lane.b32.xlu0 %v619, 48
    %v667 = vpop.permute.xlu0 %666
    %668 = vrot.lane.b32.xlu0 %v621, 48
    %v669 = vpop.permute.xlu0 %668
    %670 = vrot.lane.b32.xlu0 %v623, 48
    %v671 = vpop.permute.xlu0 %670
    %672 = vrot.lane.b32.xlu0 %v625, 48
    %v673 = vpop.permute.xlu0 %672
    %v675 = vunpack.c.l.b16 %v189
    %v676 = vpack.c.b16 %v675, %v675
    %vm677 = vsmask.f32 6400
    %v679 = vshrl.u32 %v575, 16
    %v681 = vrot.slane %v679, 1
    %v682 = vshll.u32 %v575, 16
    %v684 = vrot.slane %v682, 2
    %v685 = vor.u32 %v681, %v684
    %v686 = vrot.slane %v341, 1
    %v687 = vrot.slane %v337, 2
    %v688 = vor.u32 %v686, %v687
    %v689 = vsel %vm677, %v685, %v688
    %v690 = vrot.slane %v349, 1
    %v691 = vrot.slane %v345, 2
    %v692 = vor.u32 %v690, %v691
    %v693 = vsel %vm677, %v688, %v692
    %v694 = vrot.slane %v357, 1
    %v695 = vrot.slane %v353, 2
    %v696 = vor.u32 %v694, %v695
    %v697 = vsel %vm677, %v692, %v696
    %v698 = vrot.slane %v365, 1
    %v699 = vrot.slane %v361, 2
    %v700 = vor.u32 %v698, %v699
    %v701 = vsel %vm677, %v696, %v700
    %v702 = vrot.slane %v373, 1
    %v703 = vrot.slane %v369, 2
    %v704 = vor.u32 %v702, %v703
    %v705 = vsel %vm677, %v700, %v704
    %v706 = vrot.slane %v381, 1
    %v707 = vrot.slane %v377, 2
    %v708 = vor.u32 %v706, %v707
    %v709 = vsel %vm677, %v704, %v708
    %v710 = vrot.slane %v389, 1
    %v711 = vrot.slane %v385, 2
    %v712 = vor.u32 %v710, %v711
    %v713 = vsel %vm677, %v708, %v712
    %v714 = vrot.slane %v397, 1
    %v715 = vrot.slane %v393, 2
    %v716 = vor.u32 %v714, %v715
    %v717 = vsel %vm677, %v712, %v716
    %v718 = vrot.slane %v405, 1
    %v719 = vrot.slane %v401, 2
    %v720 = vor.u32 %v718, %v719
    %v721 = vsel %vm677, %v716, %v720
    %v722 = vrot.slane %v413, 1
    %v723 = vrot.slane %v409, 2
    %v724 = vor.u32 %v722, %v723
    %v725 = vsel %vm677, %v720, %v724
    %v726 = vrot.slane %v421, 1
    %v727 = vrot.slane %v417, 2
    %v728 = vor.u32 %v726, %v727
    %v729 = vsel %vm677, %v724, %v728
    %v730 = vrot.slane %v429, 1
    %v731 = vrot.slane %v425, 2
    %v732 = vor.u32 %v730, %v731
    %v733 = vsel %vm677, %v728, %v732
    %v734 = vrot.slane %v437, 1
    %v735 = vrot.slane %v433, 2
    %v736 = vor.u32 %v734, %v735
    %v737 = vsel %vm677, %v732, %v736
    %v738 = vrot.slane %v445, 1
    %v739 = vrot.slane %v441, 2
    %v740 = vor.u32 %v738, %v739
    %v741 = vsel %vm677, %v736, %v740
    %v742 = vrot.slane %v453, 1
    %v743 = vrot.slane %v449, 2
    %v744 = vor.u32 %v742, %v743
    %v745 = vsel %vm677, %v740, %v744
    %v746 = vrot.slane %v461, 1
    %v747 = vrot.slane %v457, 2
    %v748 = vor.u32 %v746, %v747
    %v749 = vsel %vm677, %v744, %v748
    %v750 = vrot.slane %v469, 1
    %v751 = vrot.slane %v465, 2
    %v752 = vor.u32 %v750, %v751
    %v753 = vsel %vm677, %v748, %v752
    %v754 = vrot.slane %v477, 1
    %v755 = vrot.slane %v473, 2
    %v756 = vor.u32 %v754, %v755
    %v757 = vsel %vm677, %v752, %v756
    %v758 = vrot.slane %v485, 1
    %v759 = vrot.slane %v481, 2
    %v760 = vor.u32 %v758, %v759
    %v761 = vsel %vm677, %v756, %v760
    %v762 = vrot.slane %v493, 1
    %v763 = vrot.slane %v489, 2
    %v764 = vor.u32 %v762, %v763
    %v765 = vsel %vm677, %v760, %v764
    %v766 = vrot.slane %v501, 1
    %v767 = vrot.slane %v497, 2
    %v768 = vor.u32 %v766, %v767
    %v769 = vsel %vm677, %v764, %v768
    %v770 = vrot.slane %v509, 1
    %v771 = vrot.slane %v505, 2
    %v772 = vor.u32 %v770, %v771
    %v773 = vsel %vm677, %v768, %v772
    %v774 = vrot.slane %v517, 1
    %v775 = vrot.slane %v513, 2
    %v776 = vor.u32 %v774, %v775
    %v777 = vsel %vm677, %v772, %v776
    %v779 = vshrl.u32 %v676, 16
    %v781 = vrot.slane %v779, 1
    %v782 = vshll.u32 %v676, 16
    %v784 = vrot.slane %v782, 2
    %v785 = vor.u32 %v781, %v784
    %v786 = vsel %vm677, %v776, %v785
    %787 = vrot.lane.b32.xlu0 %v689, 72
    %v788 = vpop.permute.xlu0 %787
    %789 = vrot.lane.b32.xlu0 %v693, 72
    %v790 = vpop.permute.xlu0 %789
    %791 = vrot.lane.b32.xlu0 %v697, 72
    %v792 = vpop.permute.xlu0 %791
    %793 = vrot.lane.b32.xlu0 %v701, 72
    %v794 = vpop.permute.xlu0 %793
    %795 = vrot.lane.b32.xlu0 %v705, 72
    %v796 = vpop.permute.xlu0 %795
    %797 = vrot.lane.b32.xlu0 %v709, 72
    %v798 = vpop.permute.xlu0 %797
    %799 = vrot.lane.b32.xlu0 %v713, 72
    %v800 = vpop.permute.xlu0 %799
    %801 = vrot.lane.b32.xlu0 %v717, 72
    %v802 = vpop.permute.xlu0 %801
    %803 = vrot.lane.b32.xlu0 %v721, 72
    %v804 = vpop.permute.xlu0 %803
    %805 = vrot.lane.b32.xlu0 %v725, 72
    %v806 = vpop.permute.xlu0 %805
    %807 = vrot.lane.b32.xlu0 %v729, 72
    %v808 = vpop.permute.xlu0 %807
    %809 = vrot.lane.b32.xlu0 %v733, 72
    %v810 = vpop.permute.xlu0 %809
    %811 = vrot.lane.b32.xlu0 %v737, 72
    %v812 = vpop.permute.xlu0 %811
    %813 = vrot.lane.b32.xlu0 %v741, 72
    %v814 = vpop.permute.xlu0 %813
    %815 = vrot.lane.b32.xlu0 %v745, 72
    %v816 = vpop.permute.xlu0 %815
    %817 = vrot.lane.b32.xlu0 %v749, 72
    %v818 = vpop.permute.xlu0 %817
    %819 = vrot.lane.b32.xlu0 %v753, 72
    %v820 = vpop.permute.xlu0 %819
    %821 = vrot.lane.b32.xlu0 %v757, 72
    %v822 = vpop.permute.xlu0 %821
    %823 = vrot.lane.b32.xlu0 %v761, 72
    %v824 = vpop.permute.xlu0 %823
    %825 = vrot.lane.b32.xlu0 %v765, 72
    %v826 = vpop.permute.xlu0 %825
    %827 = vrot.lane.b32.xlu0 %v769, 72
    %v828 = vpop.permute.xlu0 %827
    %829 = vrot.lane.b32.xlu0 %v773, 72
    %v830 = vpop.permute.xlu0 %829
    %831 = vrot.lane.b32.xlu0 %v777, 72
    %v832 = vpop.permute.xlu0 %831
    %833 = vrot.lane.b32.xlu0 %v786, 72
    %v834 = vpop.permute.xlu0 %833
    %v837 = vunpack.c.l.b16 %v190
    %v838 = vunpack.c.l.b16 %v191
    %v839 = vpack.c.b16 %v838, %v837
    %840 = vrot.lane.b32.xlu0 %v302, 96
    %v841 = vpop.permute.xlu0 %840
    %842 = vrot.lane.b32.xlu0 %v303, 96
    %v843 = vpop.permute.xlu0 %842
    %844 = vrot.lane.b32.xlu0 %v304, 96
    %v845 = vpop.permute.xlu0 %844
    %846 = vrot.lane.b32.xlu0 %v305, 96
    %v847 = vpop.permute.xlu0 %846
    %848 = vrot.lane.b32.xlu0 %v306, 96
    %v849 = vpop.permute.xlu0 %848
    %850 = vrot.lane.b32.xlu0 %v307, 96
    %v851 = vpop.permute.xlu0 %850
    %852 = vrot.lane.b32.xlu0 %v308, 96
    %v853 = vpop.permute.xlu0 %852
    %854 = vrot.lane.b32.xlu0 %v309, 96
    %v855 = vpop.permute.xlu0 %854
    %856 = vrot.lane.b32.xlu0 %v310, 96
    %v857 = vpop.permute.xlu0 %856
    %858 = vrot.lane.b32.xlu0 %v311, 96
    %v859 = vpop.permute.xlu0 %858
    %860 = vrot.lane.b32.xlu0 %v312, 96
    %v861 = vpop.permute.xlu0 %860
    %862 = vrot.lane.b32.xlu0 %v313, 96
    %v863 = vpop.permute.xlu0 %862
    %864 = vrot.lane.b32.xlu0 %v314, 96
    %v865 = vpop.permute.xlu0 %864
    %866 = vrot.lane.b32.xlu0 %v315, 96
    %v867 = vpop.permute.xlu0 %866
    %868 = vrot.lane.b32.xlu0 %v316, 96
    %v869 = vpop.permute.xlu0 %868
    %870 = vrot.lane.b32.xlu0 %v317, 96
    %v871 = vpop.permute.xlu0 %870
    %872 = vrot.lane.b32.xlu0 %v318, 96
    %v873 = vpop.permute.xlu0 %872
    %874 = vrot.lane.b32.xlu0 %v319, 96
    %v875 = vpop.permute.xlu0 %874
    %876 = vrot.lane.b32.xlu0 %v320, 96
    %v877 = vpop.permute.xlu0 %876
    %878 = vrot.lane.b32.xlu0 %v321, 96
    %v879 = vpop.permute.xlu0 %878
    %880 = vrot.lane.b32.xlu0 %v322, 96
    %v881 = vpop.permute.xlu0 %880
    %882 = vrot.lane.b32.xlu0 %v323, 96
    %v883 = vpop.permute.xlu0 %882
    %884 = vrot.lane.b32.xlu0 %v324, 96
    %v885 = vpop.permute.xlu0 %884
    %886 = vrot.lane.b32.xlu0 %v839, 96
    %v887 = vpop.permute.xlu0 %886
    %v889 = vunpack.c.l.b16 %v192
    %v890 = vpack.c.b16 %v889, %v889
    %v892 = vshll.u32 %v839, 16
    %v894 = vrot.slane %v892, 1
    %v895 = vsel %vm328, %v519, %v894
    %v896 = vshrl.u32 %v839, 16
    %v898 = vor.u32 %v896, %v894
    %v900 = vshll.u32 %v890, 16
    %v902 = vrot.slane %v900, 1
    %v903 = vsel %vm328, %v898, %v902
    %904 = vrot.lane.b32.xlu0 %v348, 120
    %v905 = vpop.permute.xlu0 %904
    %906 = vrot.lane.b32.xlu0 %v356, 120
    %v907 = vpop.permute.xlu0 %906
    %908 = vrot.lane.b32.xlu0 %v364, 120
    %v909 = vpop.permute.xlu0 %908
    %910 = vrot.lane.b32.xlu0 %v372, 120
    %v911 = vpop.permute.xlu0 %910
    %912 = vrot.lane.b32.xlu0 %v380, 120
    %v913 = vpop.permute.xlu0 %912
    %914 = vrot.lane.b32.xlu0 %v388, 120
    %v915 = vpop.permute.xlu0 %914
    %916 = vrot.lane.b32.xlu0 %v396, 120
    %v917 = vpop.permute.xlu0 %916
    %918 = vrot.lane.b32.xlu0 %v404, 120
    %v919 = vpop.permute.xlu0 %918
    %920 = vrot.lane.b32.xlu0 %v412, 120
    %v921 = vpop.permute.xlu0 %920
    %922 = vrot.lane.b32.xlu0 %v420, 120
    %v923 = vpop.permute.xlu0 %922
    %924 = vrot.lane.b32.xlu0 %v428, 120
    %v925 = vpop.permute.xlu0 %924
    %926 = vrot.lane.b32.xlu0 %v436, 120
    %v927 = vpop.permute.xlu0 %926
    %928 = vrot.lane.b32.xlu0 %v444, 120
    %v929 = vpop.permute.xlu0 %928
    %930 = vrot.lane.b32.xlu0 %v452, 120
    %v931 = vpop.permute.xlu0 %930
    %932 = vrot.lane.b32.xlu0 %v460, 120
    %v933 = vpop.permute.xlu0 %932
    %934 = vrot.lane.b32.xlu0 %v468, 120
    %v935 = vpop.permute.xlu0 %934
    %936 = vrot.lane.b32.xlu0 %v476, 120
    %v937 = vpop.permute.xlu0 %936
    %938 = vrot.lane.b32.xlu0 %v484, 120
    %v939 = vpop.permute.xlu0 %938
    %940 = vrot.lane.b32.xlu0 %v492, 120
    %v941 = vpop.permute.xlu0 %940
    %942 = vrot.lane.b32.xlu0 %v500, 120
    %v943 = vpop.permute.xlu0 %942
    %944 = vrot.lane.b32.xlu0 %v508, 120
    %v945 = vpop.permute.xlu0 %944
    %946 = vrot.lane.b32.xlu0 %v516, 120
    %v947 = vpop.permute.xlu0 %946
    %948 = vrot.lane.b32.xlu0 %v895, 120
    %v949 = vpop.permute.xlu0 %948
    %950 = vrot.lane.b32.xlu0 %v903, 120
    %v951 = vpop.permute.xlu0 %950
    %v953 = vunpack.c.l.b16 %v193
    %v954 = vpack.c.b16 %v256, %v953
    %v955 = vrot.slane %v954, 1
    %v956 = vsel %vm576, %v955, %v580
    %v957 = vrot.slane %v839, 1
    %v958 = vsel %vm576, %v622, %v957
    %v959 = vrot.slane %v890, 1
    %v960 = vsel %vm576, %v957, %v959
    %961 = vrot.lane.b32.xlu0 %v956, 16
    %v962 = vpop.permute.xlu0 %961
    %963 = vrot.lane.b32.xlu0 %v583, 16
    %v964 = vpop.permute.xlu0 %963
    %965 = vrot.lane.b32.xlu0 %v585, 16
    %v966 = vpop.permute.xlu0 %965
    %967 = vrot.lane.b32.xlu0 %v587, 16
    %v968 = vpop.permute.xlu0 %967
    %969 = vrot.lane.b32.xlu0 %v589, 16
    %v970 = vpop.permute.xlu0 %969
    %971 = vrot.lane.b32.xlu0 %v591, 16
    %v972 = vpop.permute.xlu0 %971
    %973 = vrot.lane.b32.xlu0 %v593, 16
    %v974 = vpop.permute.xlu0 %973
    %975 = vrot.lane.b32.xlu0 %v595, 16
    %v976 = vpop.permute.xlu0 %975
    %977 = vrot.lane.b32.xlu0 %v597, 16
    %v978 = vpop.permute.xlu0 %977
    %979 = vrot.lane.b32.xlu0 %v599, 16
    %v980 = vpop.permute.xlu0 %979
    %981 = vrot.lane.b32.xlu0 %v601, 16
    %v982 = vpop.permute.xlu0 %981
    %983 = vrot.lane.b32.xlu0 %v603, 16
    %v984 = vpop.permute.xlu0 %983
    %985 = vrot.lane.b32.xlu0 %v605, 16
    %v986 = vpop.permute.xlu0 %985
    %987 = vrot.lane.b32.xlu0 %v607, 16
    %v988 = vpop.permute.xlu0 %987
    %989 = vrot.lane.b32.xlu0 %v609, 16
    %v990 = vpop.permute.xlu0 %989
    %991 = vrot.lane.b32.xlu0 %v611, 16
    %v992 = vpop.permute.xlu0 %991
    %993 = vrot.lane.b32.xlu0 %v613, 16
    %v994 = vpop.permute.xlu0 %993
    %995 = vrot.lane.b32.xlu0 %v615, 16
    %v996 = vpop.permute.xlu0 %995
    %997 = vrot.lane.b32.xlu0 %v617, 16
    %v998 = vpop.permute.xlu0 %997
    %999 = vrot.lane.b32.xlu0 %v619, 16
    %v1000 = vpop.permute.xlu0 %999
    %1001 = vrot.lane.b32.xlu0 %v621, 16
    %v1002 = vpop.permute.xlu0 %1001
    %1003 = vrot.lane.b32.xlu0 %v623, 16
    %v1004 = vpop.permute.xlu0 %1003
    %1005 = vrot.lane.b32.xlu0 %v958, 16
    %v1006 = vpop.permute.xlu0 %1005
    %1007 = vrot.lane.b32.xlu0 %v960, 16
    %v1008 = vpop.permute.xlu0 %1007
    %v1010 = vunpack.c.l.b16 %v194
    %v1011 = vpack.c.b16 %v1010, %v1010
    %v1013 = vshrl.u32 %v954, 16
    %v1015 = vrot.slane %v1013, 1
    %v1016 = vshll.u32 %v954, 16
    %v1018 = vrot.slane %v1016, 2
    %v1019 = vor.u32 %v1015, %v1018
    %v1020 = vsel %vm677, %v1019, %v692
    %v1021 = vrot.slane %v896, 1
    %v1022 = vrot.slane %v892, 2
    %v1023 = vor.u32 %v1021, %v1022
    %v1024 = vsel %vm677, %v776, %v1023
    %v1026 = vshrl.u32 %v1011, 16
    %v1028 = vrot.slane %v1026, 1
    %v1029 = vshll.u32 %v1011, 16
    %v1031 = vrot.slane %v1029, 2
    %v1032 = vor.u32 %v1028, %v1031
    %v1033 = vsel %vm677, %v1023, %v1032
    %1034 = vrot.lane.b32.xlu0 %v1020, 40
    %v1035 = vpop.permute.xlu0 %1034
    %1036 = vrot.lane.b32.xlu0 %v697, 40
    %v1037 = vpop.permute.xlu0 %1036
    %1038 = vrot.lane.b32.xlu0 %v701, 40
    %v1039 = vpop.permute.xlu0 %1038
    %1040 = vrot.lane.b32.xlu0 %v705, 40
    %v1041 = vpop.permute.xlu0 %1040
    %1042 = vrot.lane.b32.xlu0 %v709, 40
    %v1043 = vpop.permute.xlu0 %1042
    %1044 = vrot.lane.b32.xlu0 %v713, 40
    %v1045 = vpop.permute.xlu0 %1044
    %1046 = vrot.lane.b32.xlu0 %v717, 40
    %v1047 = vpop.permute.xlu0 %1046
    %1048 = vrot.lane.b32.xlu0 %v721, 40
    %v1049 = vpop.permute.xlu0 %1048
    %1050 = vrot.lane.b32.xlu0 %v725, 40
    %v1051 = vpop.permute.xlu0 %1050
    %1052 = vrot.lane.b32.xlu0 %v729, 40
    %v1053 = vpop.permute.xlu0 %1052
    %1054 = vrot.lane.b32.xlu0 %v733, 40
    %v1055 = vpop.permute.xlu0 %1054
    %1056 = vrot.lane.b32.xlu0 %v737, 40
    %v1057 = vpop.permute.xlu0 %1056
    %1058 = vrot.lane.b32.xlu0 %v741, 40
    %v1059 = vpop.permute.xlu0 %1058
    %1060 = vrot.lane.b32.xlu0 %v745, 40
    %v1061 = vpop.permute.xlu0 %1060
    %1062 = vrot.lane.b32.xlu0 %v749, 40
    %v1063 = vpop.permute.xlu0 %1062
    %1064 = vrot.lane.b32.xlu0 %v753, 40
    %v1065 = vpop.permute.xlu0 %1064
    %1066 = vrot.lane.b32.xlu0 %v757, 40
    %v1067 = vpop.permute.xlu0 %1066
    %1068 = vrot.lane.b32.xlu0 %v761, 40
    %v1069 = vpop.permute.xlu0 %1068
    %1070 = vrot.lane.b32.xlu0 %v765, 40
    %v1071 = vpop.permute.xlu0 %1070
    %1072 = vrot.lane.b32.xlu0 %v769, 40
    %v1073 = vpop.permute.xlu0 %1072
    %1074 = vrot.lane.b32.xlu0 %v773, 40
    %v1075 = vpop.permute.xlu0 %1074
    %1076 = vrot.lane.b32.xlu0 %v777, 40
    %v1077 = vpop.permute.xlu0 %1076
    %1078 = vrot.lane.b32.xlu0 %v1024, 40
    %v1079 = vpop.permute.xlu0 %1078
    %1080 = vrot.lane.b32.xlu0 %v1033, 40
    %v1081 = vpop.permute.xlu0 %1080
    %v1084 = vunpack.c.l.b16 %v195
    %v1085 = vunpack.c.l.b16 %v196
    %v1086 = vpack.c.b16 %v1085, %v1084
    %1087 = vrot.lane.b32.xlu0 %v303, 64
    %v1088 = vpop.permute.xlu0 %1087
    %1089 = vrot.lane.b32.xlu0 %v304, 64
    %v1090 = vpop.permute.xlu0 %1089
    %1091 = vrot.lane.b32.xlu0 %v305, 64
    %v1092 = vpop.permute.xlu0 %1091
    %1093 = vrot.lane.b32.xlu0 %v306, 64
    %v1094 = vpop.permute.xlu0 %1093
    %1095 = vrot.lane.b32.xlu0 %v307, 64
    %v1096 = vpop.permute.xlu0 %1095
    %1097 = vrot.lane.b32.xlu0 %v308, 64
    %v1098 = vpop.permute.xlu0 %1097
    %1099 = vrot.lane.b32.xlu0 %v309, 64
    %v1100 = vpop.permute.xlu0 %1099
    %1101 = vrot.lane.b32.xlu0 %v310, 64
    %v1102 = vpop.permute.xlu0 %1101
    %1103 = vrot.lane.b32.xlu0 %v311, 64
    %v1104 = vpop.permute.xlu0 %1103
    %1105 = vrot.lane.b32.xlu0 %v312, 64
    %v1106 = vpop.permute.xlu0 %1105
    %1107 = vrot.lane.b32.xlu0 %v313, 64
    %v1108 = vpop.permute.xlu0 %1107
    %1109 = vrot.lane.b32.xlu0 %v314, 64
    %v1110 = vpop.permute.xlu0 %1109
    %1111 = vrot.lane.b32.xlu0 %v315, 64
    %v1112 = vpop.permute.xlu0 %1111
    %1113 = vrot.lane.b32.xlu0 %v316, 64
    %v1114 = vpop.permute.xlu0 %1113
    %1115 = vrot.lane.b32.xlu0 %v317, 64
    %v1116 = vpop.permute.xlu0 %1115
    %1117 = vrot.lane.b32.xlu0 %v318, 64
    %v1118 = vpop.permute.xlu0 %1117
    %1119 = vrot.lane.b32.xlu0 %v319, 64
    %v1120 = vpop.permute.xlu0 %1119
    %1121 = vrot.lane.b32.xlu0 %v320, 64
    %v1122 = vpop.permute.xlu0 %1121
    %1123 = vrot.lane.b32.xlu0 %v321, 64
    %v1124 = vpop.permute.xlu0 %1123
    %1125 = vrot.lane.b32.xlu0 %v322, 64
    %v1126 = vpop.permute.xlu0 %1125
    %1127 = vrot.lane.b32.xlu0 %v323, 64
    %v1128 = vpop.permute.xlu0 %1127
    %1129 = vrot.lane.b32.xlu0 %v324, 64
    %v1130 = vpop.permute.xlu0 %1129
    %1131 = vrot.lane.b32.xlu0 %v839, 64
    %v1132 = vpop.permute.xlu0 %1131
    %1133 = vrot.lane.b32.xlu0 %v1086, 64
    %v1134 = vpop.permute.xlu0 %1133
    %v1136 = vunpack.c.l.b16 %v197
    %v1137 = vpack.c.b16 %v1136, %v1136
    %v1139 = vshll.u32 %v1086, 16
    %v1141 = vrot.slane %v1139, 1
    %v1142 = vsel %vm328, %v898, %v1141
    %v1143 = vshrl.u32 %v1086, 16
    %v1145 = vor.u32 %v1143, %v1141
    %v1147 = vshll.u32 %v1137, 16
    %v1149 = vrot.slane %v1147, 1
    %v1150 = vsel %vm328, %v1145, %v1149
    %1151 = vrot.lane.b32.xlu0 %v356, 88
    %v1152 = vpop.permute.xlu0 %1151
    %1153 = vrot.lane.b32.xlu0 %v364, 88
    %v1154 = vpop.permute.xlu0 %1153
    %1155 = vrot.lane.b32.xlu0 %v372, 88
    %v1156 = vpop.permute.xlu0 %1155
    %1157 = vrot.lane.b32.xlu0 %v380, 88
    %v1158 = vpop.permute.xlu0 %1157
    %1159 = vrot.lane.b32.xlu0 %v388, 88
    %v1160 = vpop.permute.xlu0 %1159
    %1161 = vrot.lane.b32.xlu0 %v396, 88
    %v1162 = vpop.permute.xlu0 %1161
    %1163 = vrot.lane.b32.xlu0 %v404, 88
    %v1164 = vpop.permute.xlu0 %1163
    %1165 = vrot.lane.b32.xlu0 %v412, 88
    %v1166 = vpop.permute.xlu0 %1165
    %1167 = vrot.lane.b32.xlu0 %v420, 88
    %v1168 = vpop.permute.xlu0 %1167
    %1169 = vrot.lane.b32.xlu0 %v428, 88
    %v1170 = vpop.permute.xlu0 %1169
    %1171 = vrot.lane.b32.xlu0 %v436, 88
    %v1172 = vpop.permute.xlu0 %1171
    %1173 = vrot.lane.b32.xlu0 %v444, 88
    %v1174 = vpop.permute.xlu0 %1173
    %1175 = vrot.lane.b32.xlu0 %v452, 88
    %v1176 = vpop.permute.xlu0 %1175
    %1177 = vrot.lane.b32.xlu0 %v460, 88
    %v1178 = vpop.permute.xlu0 %1177
    %1179 = vrot.lane.b32.xlu0 %v468, 88
    %v1180 = vpop.permute.xlu0 %1179
    %1181 = vrot.lane.b32.xlu0 %v476, 88
    %v1182 = vpop.permute.xlu0 %1181
    %1183 = vrot.lane.b32.xlu0 %v484, 88
    %v1184 = vpop.permute.xlu0 %1183
    %1185 = vrot.lane.b32.xlu0 %v492, 88
    %v1186 = vpop.permute.xlu0 %1185
    %1187 = vrot.lane.b32.xlu0 %v500, 88
    %v1188 = vpop.permute.xlu0 %1187
    %1189 = vrot.lane.b32.xlu0 %v508, 88
    %v1190 = vpop.permute.xlu0 %1189
    %1191 = vrot.lane.b32.xlu0 %v516, 88
    %v1192 = vpop.permute.xlu0 %1191
    %1193 = vrot.lane.b32.xlu0 %v895, 88
    %v1194 = vpop.permute.xlu0 %1193
    %1195 = vrot.lane.b32.xlu0 %v1142, 88
    %v1196 = vpop.permute.xlu0 %1195
    %1197 = vrot.lane.b32.xlu0 %v1150, 88
    %v1198 = vpop.permute.xlu0 %1197
    %v1200 = vunpack.c.l.b16 %v198
    %v1201 = vpack.c.b16 %v258, %v1200
    %v1202 = vrot.slane %v1201, 1
    %v1203 = vsel %vm576, %v1202, %v582
    %v1204 = vrot.slane %v1086, 1
    %v1205 = vsel %vm576, %v957, %v1204
    %v1206 = vrot.slane %v1137, 1
    %v1207 = vsel %vm576, %v1204, %v1206
    %1208 = vrot.lane.b32.xlu0 %v1203, 112
    %v1209 = vpop.permute.xlu0 %1208
    %1210 = vrot.lane.b32.xlu0 %v585, 112
    %v1211 = vpop.permute.xlu0 %1210
    %1212 = vrot.lane.b32.xlu0 %v587, 112
    %v1213 = vpop.permute.xlu0 %1212
    %1214 = vrot.lane.b32.xlu0 %v589, 112
    %v1215 = vpop.permute.xlu0 %1214
    %1216 = vrot.lane.b32.xlu0 %v591, 112
    %v1217 = vpop.permute.xlu0 %1216
    %1218 = vrot.lane.b32.xlu0 %v593, 112
    %v1219 = vpop.permute.xlu0 %1218
    %1220 = vrot.lane.b32.xlu0 %v595, 112
    %v1221 = vpop.permute.xlu0 %1220
    %1222 = vrot.lane.b32.xlu0 %v597, 112
    %v1223 = vpop.permute.xlu0 %1222
    %1224 = vrot.lane.b32.xlu0 %v599, 112
    %v1225 = vpop.permute.xlu0 %1224
    %1226 = vrot.lane.b32.xlu0 %v601, 112
    %v1227 = vpop.permute.xlu0 %1226
    %1228 = vrot.lane.b32.xlu0 %v603, 112
    %v1229 = vpop.permute.xlu0 %1228
    %1230 = vrot.lane.b32.xlu0 %v605, 112
    %v1231 = vpop.permute.xlu0 %1230
    %1232 = vrot.lane.b32.xlu0 %v607, 112
    %v1233 = vpop.permute.xlu0 %1232
    %1234 = vrot.lane.b32.xlu0 %v609, 112
    %v1235 = vpop.permute.xlu0 %1234
    %1236 = vrot.lane.b32.xlu0 %v611, 112
    %v1237 = vpop.permute.xlu0 %1236
    %1238 = vrot.lane.b32.xlu0 %v613, 112
    %v1239 = vpop.permute.xlu0 %1238
    %1240 = vrot.lane.b32.xlu0 %v615, 112
    %v1241 = vpop.permute.xlu0 %1240
    %1242 = vrot.lane.b32.xlu0 %v617, 112
    %v1243 = vpop.permute.xlu0 %1242
    %1244 = vrot.lane.b32.xlu0 %v619, 112
    %v1245 = vpop.permute.xlu0 %1244
    %1246 = vrot.lane.b32.xlu0 %v621, 112
    %v1247 = vpop.permute.xlu0 %1246
    %1248 = vrot.lane.b32.xlu0 %v623, 112
    %v1249 = vpop.permute.xlu0 %1248
    %1250 = vrot.lane.b32.xlu0 %v958, 112
    %v1251 = vpop.permute.xlu0 %1250
    %1252 = vrot.lane.b32.xlu0 %v1205, 112
    %v1253 = vpop.permute.xlu0 %1252
    %1254 = vrot.lane.b32.xlu0 %v1207, 112
    %v1255 = vpop.permute.xlu0 %1254
    %v1257 = vunpack.c.l.b16 %v199
    %v1258 = vpack.c.b16 %v1257, %v1257
    %v1260 = vshrl.u32 %v1201, 16
    %v1262 = vrot.slane %v1260, 1
    %v1263 = vshll.u32 %v1201, 16
    %v1265 = vrot.slane %v1263, 2
    %v1266 = vor.u32 %v1262, %v1265
    %v1267 = vsel %vm677, %v1266, %v696
    %v1268 = vrot.slane %v1143, 1
    %v1269 = vrot.slane %v1139, 2
    %v1270 = vor.u32 %v1268, %v1269
    %v1271 = vsel %vm677, %v1023, %v1270
    %v1273 = vshrl.u32 %v1258, 16
    %v1275 = vrot.slane %v1273, 1
    %v1276 = vshll.u32 %v1258, 16
    %v1278 = vrot.slane %v1276, 2
    %v1279 = vor.u32 %v1275, %v1278
    %v1280 = vsel %vm677, %v1270, %v1279
    %1281 = vrot.lane.b32.xlu0 %v1267, 8
    %v1282 = vpop.permute.xlu0 %1281
    %1283 = vrot.lane.b32.xlu0 %v701, 8
    %v1284 = vpop.permute.xlu0 %1283
    %1285 = vrot.lane.b32.xlu0 %v705, 8
    %v1286 = vpop.permute.xlu0 %1285
    %1287 = vrot.lane.b32.xlu0 %v709, 8
    %v1288 = vpop.permute.xlu0 %1287
    %1289 = vrot.lane.b32.xlu0 %v713, 8
    %v1290 = vpop.permute.xlu0 %1289
    %1291 = vrot.lane.b32.xlu0 %v717, 8
    %v1292 = vpop.permute.xlu0 %1291
    %1293 = vrot.lane.b32.xlu0 %v721, 8
    %v1294 = vpop.permute.xlu0 %1293
    %1295 = vrot.lane.b32.xlu0 %v725, 8
    %v1296 = vpop.permute.xlu0 %1295
    %1297 = vrot.lane.b32.xlu0 %v729, 8
    %v1298 = vpop.permute.xlu0 %1297
    %1299 = vrot.lane.b32.xlu0 %v733, 8
    %v1300 = vpop.permute.xlu0 %1299
    %1301 = vrot.lane.b32.xlu0 %v737, 8
    %v1302 = vpop.permute.xlu0 %1301
    %1303 = vrot.lane.b32.xlu0 %v741, 8
    %v1304 = vpop.permute.xlu0 %1303
    %1305 = vrot.lane.b32.xlu0 %v745, 8
    %v1306 = vpop.permute.xlu0 %1305
    %1307 = vrot.lane.b32.xlu0 %v749, 8
    %v1308 = vpop.permute.xlu0 %1307
    %1309 = vrot.lane.b32.xlu0 %v753, 8
    %v1310 = vpop.permute.xlu0 %1309
    %1311 = vrot.lane.b32.xlu0 %v757, 8
    %v1312 = vpop.permute.xlu0 %1311
    %1313 = vrot.lane.b32.xlu0 %v761, 8
    %v1314 = vpop.permute.xlu0 %1313
    %1315 = vrot.lane.b32.xlu0 %v765, 8
    %v1316 = vpop.permute.xlu0 %1315
    %1317 = vrot.lane.b32.xlu0 %v769, 8
    %v1318 = vpop.permute.xlu0 %1317
    %1319 = vrot.lane.b32.xlu0 %v773, 8
    %v1320 = vpop.permute.xlu0 %1319
    %1321 = vrot.lane.b32.xlu0 %v777, 8
    %v1322 = vpop.permute.xlu0 %1321
    %1323 = vrot.lane.b32.xlu0 %v1024, 8
    %v1324 = vpop.permute.xlu0 %1323
    %1325 = vrot.lane.b32.xlu0 %v1271, 8
    %v1326 = vpop.permute.xlu0 %1325
    %1327 = vrot.lane.b32.xlu0 %v1280, 8
    %v1328 = vpop.permute.xlu0 %1327
    %v1331 = vunpack.c.l.b16 %v200
    %v1332 = vunpack.c.l.b16 %v201
    %v1333 = vpack.c.b16 %v1332, %v1331
    %1334 = vrot.lane.b32.xlu0 %v304, 32
    %v1335 = vpop.permute.xlu0 %1334
    %1336 = vrot.lane.b32.xlu0 %v305, 32
    %v1337 = vpop.permute.xlu0 %1336
    %1338 = vrot.lane.b32.xlu0 %v306, 32
    %v1339 = vpop.permute.xlu0 %1338
    %1340 = vrot.lane.b32.xlu0 %v307, 32
    %v1341 = vpop.permute.xlu0 %1340
    %1342 = vrot.lane.b32.xlu0 %v308, 32
    %v1343 = vpop.permute.xlu0 %1342
    %1344 = vrot.lane.b32.xlu0 %v309, 32
    %v1345 = vpop.permute.xlu0 %1344
    %1346 = vrot.lane.b32.xlu0 %v310, 32
    %v1347 = vpop.permute.xlu0 %1346
    %1348 = vrot.lane.b32.xlu0 %v311, 32
    %v1349 = vpop.permute.xlu0 %1348
    %1350 = vrot.lane.b32.xlu0 %v312, 32
    %v1351 = vpop.permute.xlu0 %1350
    %1352 = vrot.lane.b32.xlu0 %v313, 32
    %v1353 = vpop.permute.xlu0 %1352
    %1354 = vrot.lane.b32.xlu0 %v314, 32
    %v1355 = vpop.permute.xlu0 %1354
    %1356 = vrot.lane.b32.xlu0 %v315, 32
    %v1357 = vpop.permute.xlu0 %1356
    %1358 = vrot.lane.b32.xlu0 %v316, 32
    %v1359 = vpop.permute.xlu0 %1358
    %1360 = vrot.lane.b32.xlu0 %v317, 32
    %v1361 = vpop.permute.xlu0 %1360
    %1362 = vrot.lane.b32.xlu0 %v318, 32
    %v1363 = vpop.permute.xlu0 %1362
    %1364 = vrot.lane.b32.xlu0 %v319, 32
    %v1365 = vpop.permute.xlu0 %1364
    %1366 = vrot.lane.b32.xlu0 %v320, 32
    %v1367 = vpop.permute.xlu0 %1366
    %1368 = vrot.lane.b32.xlu0 %v321, 32
    %v1369 = vpop.permute.xlu0 %1368
    %1370 = vrot.lane.b32.xlu0 %v322, 32
    %v1371 = vpop.permute.xlu0 %1370
    %1372 = vrot.lane.b32.xlu0 %v323, 32
    %v1373 = vpop.permute.xlu0 %1372
    %1374 = vrot.lane.b32.xlu0 %v324, 32
    %v1375 = vpop.permute.xlu0 %1374
    %1376 = vrot.lane.b32.xlu0 %v839, 32
    %v1377 = vpop.permute.xlu0 %1376
    %1378 = vrot.lane.b32.xlu0 %v1086, 32
    %v1379 = vpop.permute.xlu0 %1378
    %1380 = vrot.lane.b32.xlu0 %v1333, 32
    %v1381 = vpop.permute.xlu0 %1380
    %v1383 = vunpack.c.l.b16 %v202
    %v1384 = vpack.c.b16 %v1383, %v1383
    %v1386 = vshll.u32 %v1333, 16
    %v1388 = vrot.slane %v1386, 1
    %v1389 = vsel %vm328, %v1145, %v1388
    %v1390 = vshrl.u32 %v1333, 16
    %v1392 = vor.u32 %v1390, %v1388
    %v1394 = vshll.u32 %v1384, 16
    %v1396 = vrot.slane %v1394, 1
    %v1397 = vsel %vm328, %v1392, %v1396
    %1398 = vrot.lane.b32.xlu0 %v364, 56
    %v1399 = vpop.permute.xlu0 %1398
    %1400 = vrot.lane.b32.xlu0 %v372, 56
    %v1401 = vpop.permute.xlu0 %1400
    %1402 = vrot.lane.b32.xlu0 %v380, 56
    %v1403 = vpop.permute.xlu0 %1402
    %1404 = vrot.lane.b32.xlu0 %v388, 56
    %v1405 = vpop.permute.xlu0 %1404
    %1406 = vrot.lane.b32.xlu0 %v396, 56
    %v1407 = vpop.permute.xlu0 %1406
    %1408 = vrot.lane.b32.xlu0 %v404, 56
    %v1409 = vpop.permute.xlu0 %1408
    %1410 = vrot.lane.b32.xlu0 %v412, 56
    %v1411 = vpop.permute.xlu0 %1410
    %1412 = vrot.lane.b32.xlu0 %v420, 56
    %v1413 = vpop.permute.xlu0 %1412
    %1414 = vrot.lane.b32.xlu0 %v428, 56
    %v1415 = vpop.permute.xlu0 %1414
    %1416 = vrot.lane.b32.xlu0 %v436, 56
    %v1417 = vpop.permute.xlu0 %1416
    %1418 = vrot.lane.b32.xlu0 %v444, 56
    %v1419 = vpop.permute.xlu0 %1418
    %1420 = vrot.lane.b32.xlu0 %v452, 56
    %v1421 = vpop.permute.xlu0 %1420
    %1422 = vrot.lane.b32.xlu0 %v460, 56
    %v1423 = vpop.permute.xlu0 %1422
    %1424 = vrot.lane.b32.xlu0 %v468, 56
    %v1425 = vpop.permute.xlu0 %1424
    %1426 = vrot.lane.b32.xlu0 %v476, 56
    %v1427 = vpop.permute.xlu0 %1426
    %1428 = vrot.lane.b32.xlu0 %v484, 56
    %v1429 = vpop.permute.xlu0 %1428
    %1430 = vrot.lane.b32.xlu0 %v492, 56
    %v1431 = vpop.permute.xlu0 %1430
    %1432 = vrot.lane.b32.xlu0 %v500, 56
    %v1433 = vpop.permute.xlu0 %1432
    %1434 = vrot.lane.b32.xlu0 %v508, 56
    %v1435 = vpop.permute.xlu0 %1434
    %1436 = vrot.lane.b32.xlu0 %v516, 56
    %v1437 = vpop.permute.xlu0 %1436
    %1438 = vrot.lane.b32.xlu0 %v895, 56
    %v1439 = vpop.permute.xlu0 %1438
    %1440 = vrot.lane.b32.xlu0 %v1142, 56
    %v1441 = vpop.permute.xlu0 %1440
    %1442 = vrot.lane.b32.xlu0 %v1389, 56
    %v1443 = vpop.permute.xlu0 %1442
    %1444 = vrot.lane.b32.xlu0 %v1397, 56
    %v1445 = vpop.permute.xlu0 %1444
    %v1447 = vunpack.c.l.b16 %v203
    %v1448 = vpack.c.b16 %v260, %v1447
    %v1449 = vrot.slane %v1448, 1
    %v1450 = vsel %vm576, %v1449, %v584
    %v1451 = vrot.slane %v1333, 1
    %v1452 = vsel %vm576, %v1204, %v1451
    %v1453 = vrot.slane %v1384, 1
    %v1454 = vsel %vm576, %v1451, %v1453
    %1455 = vrot.lane.b32.xlu0 %v1450, 80
    %v1456 = vpop.permute.xlu0 %1455
    %1457 = vrot.lane.b32.xlu0 %v587, 80
    %v1458 = vpop.permute.xlu0 %1457
    %1459 = vrot.lane.b32.xlu0 %v589, 80
    %v1460 = vpop.permute.xlu0 %1459
    %1461 = vrot.lane.b32.xlu0 %v591, 80
    %v1462 = vpop.permute.xlu0 %1461
    %1463 = vrot.lane.b32.xlu0 %v593, 80
    %v1464 = vpop.permute.xlu0 %1463
    %1465 = vrot.lane.b32.xlu0 %v595, 80
    %v1466 = vpop.permute.xlu0 %1465
    %1467 = vrot.lane.b32.xlu0 %v597, 80
    %v1468 = vpop.permute.xlu0 %1467
    %1469 = vrot.lane.b32.xlu0 %v599, 80
    %v1470 = vpop.permute.xlu0 %1469
    %1471 = vrot.lane.b32.xlu0 %v601, 80
    %v1472 = vpop.permute.xlu0 %1471
    %1473 = vrot.lane.b32.xlu0 %v603, 80
    %v1474 = vpop.permute.xlu0 %1473
    %1475 = vrot.lane.b32.xlu0 %v605, 80
    %v1476 = vpop.permute.xlu0 %1475
    %1477 = vrot.lane.b32.xlu0 %v607, 80
    %v1478 = vpop.permute.xlu0 %1477
    %1479 = vrot.lane.b32.xlu0 %v609, 80
    %v1480 = vpop.permute.xlu0 %1479
    %1481 = vrot.lane.b32.xlu0 %v611, 80
    %v1482 = vpop.permute.xlu0 %1481
    %1483 = vrot.lane.b32.xlu0 %v613, 80
    %v1484 = vpop.permute.xlu0 %1483
    %1485 = vrot.lane.b32.xlu0 %v615, 80
    %v1486 = vpop.permute.xlu0 %1485
    %1487 = vrot.lane.b32.xlu0 %v617, 80
    %v1488 = vpop.permute.xlu0 %1487
    %1489 = vrot.lane.b32.xlu0 %v619, 80
    %v1490 = vpop.permute.xlu0 %1489
    %1491 = vrot.lane.b32.xlu0 %v621, 80
    %v1492 = vpop.permute.xlu0 %1491
    %1493 = vrot.lane.b32.xlu0 %v623, 80
    %v1494 = vpop.permute.xlu0 %1493
    %1495 = vrot.lane.b32.xlu0 %v958, 80
    %v1496 = vpop.permute.xlu0 %1495
    %1497 = vrot.lane.b32.xlu0 %v1205, 80
    %v1498 = vpop.permute.xlu0 %1497
    %1499 = vrot.lane.b32.xlu0 %v1452, 80
    %v1500 = vpop.permute.xlu0 %1499
    %1501 = vrot.lane.b32.xlu0 %v1454, 80
    %v1502 = vpop.permute.xlu0 %1501
    %v1504 = vunpack.c.l.b16 %v204
    %v1505 = vpack.c.b16 %v1504, %v1504
    %v1507 = vshrl.u32 %v1448, 16
    %v1509 = vrot.slane %v1507, 1
    %v1510 = vshll.u32 %v1448, 16
    %v1512 = vrot.slane %v1510, 2
    %v1513 = vor.u32 %v1509, %v1512
    %v1514 = vsel %vm677, %v1513, %v700
    %v1515 = vrot.slane %v1390, 1
    %v1516 = vrot.slane %v1386, 2
    %v1517 = vor.u32 %v1515, %v1516
    %v1518 = vsel %vm677, %v1270, %v1517
    %v1520 = vshrl.u32 %v1505, 16
    %v1522 = vrot.slane %v1520, 1
    %v1523 = vshll.u32 %v1505, 16
    %v1525 = vrot.slane %v1523, 2
    %v1526 = vor.u32 %v1522, %v1525
    %v1527 = vsel %vm677, %v1517, %v1526
    %1528 = vrot.lane.b32.xlu0 %v1514, 104
    %v1529 = vpop.permute.xlu0 %1528
    %1530 = vrot.lane.b32.xlu0 %v705, 104
    %v1531 = vpop.permute.xlu0 %1530
    %1532 = vrot.lane.b32.xlu0 %v709, 104
    %v1533 = vpop.permute.xlu0 %1532
    %1534 = vrot.lane.b32.xlu0 %v713, 104
    %v1535 = vpop.permute.xlu0 %1534
    %1536 = vrot.lane.b32.xlu0 %v717, 104
    %v1537 = vpop.permute.xlu0 %1536
    %1538 = vrot.lane.b32.xlu0 %v721, 104
    %v1539 = vpop.permute.xlu0 %1538
    %1540 = vrot.lane.b32.xlu0 %v725, 104
    %v1541 = vpop.permute.xlu0 %1540
    %1542 = vrot.lane.b32.xlu0 %v729, 104
    %v1543 = vpop.permute.xlu0 %1542
    %1544 = vrot.lane.b32.xlu0 %v733, 104
    %v1545 = vpop.permute.xlu0 %1544
    %1546 = vrot.lane.b32.xlu0 %v737, 104
    %v1547 = vpop.permute.xlu0 %1546
    %1548 = vrot.lane.b32.xlu0 %v741, 104
    %v1549 = vpop.permute.xlu0 %1548
    %1550 = vrot.lane.b32.xlu0 %v745, 104
    %v1551 = vpop.permute.xlu0 %1550
    %1552 = vrot.lane.b32.xlu0 %v749, 104
    %v1553 = vpop.permute.xlu0 %1552
    %1554 = vrot.lane.b32.xlu0 %v753, 104
    %v1555 = vpop.permute.xlu0 %1554
    %1556 = vrot.lane.b32.xlu0 %v757, 104
    %v1557 = vpop.permute.xlu0 %1556
    %1558 = vrot.lane.b32.xlu0 %v761, 104
    %v1559 = vpop.permute.xlu0 %1558
    %1560 = vrot.lane.b32.xlu0 %v765, 104
    %v1561 = vpop.permute.xlu0 %1560
    %1562 = vrot.lane.b32.xlu0 %v769, 104
    %v1563 = vpop.permute.xlu0 %1562
    %1564 = vrot.lane.b32.xlu0 %v773, 104
    %v1565 = vpop.permute.xlu0 %1564
    %1566 = vrot.lane.b32.xlu0 %v777, 104
    %v1567 = vpop.permute.xlu0 %1566
    %1568 = vrot.lane.b32.xlu0 %v1024, 104
    %v1569 = vpop.permute.xlu0 %1568
    %1570 = vrot.lane.b32.xlu0 %v1271, 104
    %v1571 = vpop.permute.xlu0 %1570
    %1572 = vrot.lane.b32.xlu0 %v1518, 104
    %v1573 = vpop.permute.xlu0 %1572
    %1574 = vrot.lane.b32.xlu0 %v1527, 104
    %v1575 = vpop.permute.xlu0 %1574
    %vm1576 = vcmask 195584
    %v1578 = vsel %vm1576, %v301, %v526
    %v1580 = vsel %vm1576, %v302, %v528
    %v1582 = vsel %vm1576, %v303, %v530
    %v1584 = vsel %vm1576, %v304, %v532
    %v1586 = vsel %vm1576, %v305, %v534
    %v1588 = vsel %vm1576, %v306, %v536
    %v1590 = vsel %vm1576, %v307, %v538
    %v1592 = vsel %vm1576, %v308, %v540
    %v1594 = vsel %vm1576, %v309, %v542
    %v1596 = vsel %vm1576, %v310, %v544
    %v1598 = vsel %vm1576, %v311, %v546
    %v1600 = vsel %vm1576, %v312, %v548
    %v1602 = vsel %vm1576, %v313, %v550
    %v1604 = vsel %vm1576, %v314, %v552
    %v1606 = vsel %vm1576, %v315, %v554
    %v1608 = vsel %vm1576, %v316, %v556
    %v1610 = vsel %vm1576, %v317, %v558
    %v1612 = vsel %vm1576, %v318, %v560
    %v1614 = vsel %vm1576, %v319, %v562
    %v1616 = vsel %vm1576, %v320, %v564
    %v1618 = vsel %vm1576, %v321, %v566
    %v1620 = vsel %vm1576, %v322, %v568
    %v1622 = vsel %vm1576, %v323, %v570
    %v1624 = vsel %vm1576, %v324, %v572
    %vm1625 = vcmask 392192
    %v1627 = vsel %vm1625, %v1578, %v627
    %v1629 = vsel %vm1625, %v1580, %v629
    %v1631 = vsel %vm1625, %v1582, %v631
    %v1633 = vsel %vm1625, %v1584, %v633
    %v1635 = vsel %vm1625, %v1586, %v635
    %v1637 = vsel %vm1625, %v1588, %v637
    %v1639 = vsel %vm1625, %v1590, %v639
    %v1641 = vsel %vm1625, %v1592, %v641
    %v1643 = vsel %vm1625, %v1594, %v643
    %v1645 = vsel %vm1625, %v1596, %v645
    %v1647 = vsel %vm1625, %v1598, %v647
    %v1649 = vsel %vm1625, %v1600, %v649
    %v1651 = vsel %vm1625, %v1602, %v651
    %v1653 = vsel %vm1625, %v1604, %v653
    %v1655 = vsel %vm1625, %v1606, %v655
    %v1657 = vsel %vm1625, %v1608, %v657
    %v1659 = vsel %vm1625, %v1610, %v659
    %v1661 = vsel %vm1625, %v1612, %v661
    %v1663 = vsel %vm1625, %v1614, %v663
    %v1665 = vsel %vm1625, %v1616, %v665
    %v1667 = vsel %vm1625, %v1618, %v667
    %v1669 = vsel %vm1625, %v1620, %v669
    %v1671 = vsel %vm1625, %v1622, %v671
    %v1673 = vsel %vm1625, %v1624, %v673
    %vm1674 = vcmask 588800
    %v1676 = vsel %vm1674, %v1627, %v788
    %v1678 = vsel %vm1674, %v1629, %v790
    %v1680 = vsel %vm1674, %v1631, %v792
    %v1682 = vsel %vm1674, %v1633, %v794
    %v1684 = vsel %vm1674, %v1635, %v796
    %v1686 = vsel %vm1674, %v1637, %v798
    %v1688 = vsel %vm1674, %v1639, %v800
    %v1690 = vsel %vm1674, %v1641, %v802
    %v1692 = vsel %vm1674, %v1643, %v804
    %v1694 = vsel %vm1674, %v1645, %v806
    %v1696 = vsel %vm1674, %v1647, %v808
    %v1698 = vsel %vm1674, %v1649, %v810
    %v1700 = vsel %vm1674, %v1651, %v812
    %v1702 = vsel %vm1674, %v1653, %v814
    %v1704 = vsel %vm1674, %v1655, %v816
    %v1706 = vsel %vm1674, %v1657, %v818
    %v1708 = vsel %vm1674, %v1659, %v820
    %v1710 = vsel %vm1674, %v1661, %v822
    %v1712 = vsel %vm1674, %v1663, %v824
    %v1714 = vsel %vm1674, %v1665, %v826
    %v1716 = vsel %vm1674, %v1667, %v828
    %v1718 = vsel %vm1674, %v1669, %v830
    %v1720 = vsel %vm1674, %v1671, %v832
    %v1722 = vsel %vm1674, %v1673, %v834
    %vm1723 = vcmask 785408
    %v1725 = vsel %vm1723, %v1676, %v841
    %v1727 = vsel %vm1723, %v1678, %v843
    %v1729 = vsel %vm1723, %v1680, %v845
    %v1731 = vsel %vm1723, %v1682, %v847
    %v1733 = vsel %vm1723, %v1684, %v849
    %v1735 = vsel %vm1723, %v1686, %v851
    %v1737 = vsel %vm1723, %v1688, %v853
    %v1739 = vsel %vm1723, %v1690, %v855
    %v1741 = vsel %vm1723, %v1692, %v857
    %v1743 = vsel %vm1723, %v1694, %v859
    %v1745 = vsel %vm1723, %v1696, %v861
    %v1747 = vsel %vm1723, %v1698, %v863
    %v1749 = vsel %vm1723, %v1700, %v865
    %v1751 = vsel %vm1723, %v1702, %v867
    %v1753 = vsel %vm1723, %v1704, %v869
    %v1755 = vsel %vm1723, %v1706, %v871
    %v1757 = vsel %vm1723, %v1708, %v873
    %v1759 = vsel %vm1723, %v1710, %v875
    %v1761 = vsel %vm1723, %v1712, %v877
    %v1763 = vsel %vm1723, %v1714, %v879
    %v1765 = vsel %vm1723, %v1716, %v881
    %v1767 = vsel %vm1723, %v1718, %v883
    %v1769 = vsel %vm1723, %v1720, %v885
    %v1771 = vsel %vm1723, %v1722, %v887
    %vm1772 = vcmask 982016
    %v1774 = vsel %vm1772, %v1725, %v905
    %v1777 = vsel %vm1772, %v1727, %v907
    %v1780 = vsel %vm1772, %v1729, %v909
    %v1783 = vsel %vm1772, %v1731, %v911
    %v1786 = vsel %vm1772, %v1733, %v913
    %v1789 = vsel %vm1772, %v1735, %v915
    %v1792 = vsel %vm1772, %v1737, %v917
    %v1795 = vsel %vm1772, %v1739, %v919
    %v1798 = vsel %vm1772, %v1741, %v921
    %v1801 = vsel %vm1772, %v1743, %v923
    %v1804 = vsel %vm1772, %v1745, %v925
    %v1807 = vsel %vm1772, %v1747, %v927
    %v1810 = vsel %vm1772, %v1749, %v929
    %v1813 = vsel %vm1772, %v1751, %v931
    %v1816 = vsel %vm1772, %v1753, %v933
    %v1819 = vsel %vm1772, %v1755, %v935
    %v1822 = vsel %vm1772, %v1757, %v937
    %v1825 = vsel %vm1772, %v1759, %v939
    %v1828 = vsel %vm1772, %v1761, %v941
    %v1831 = vsel %vm1772, %v1763, %v943
    %v1834 = vsel %vm1772, %v1765, %v945
    %v1837 = vsel %vm1772, %v1767, %v947
    %v1840 = vsel %vm1772, %v1769, %v949
    %v1843 = vsel %vm1772, %v1771, %v951
    %vm1845 = vcmask 130048
    %v1847 = vsel %vm1845, %v905, %v962
    %v1849 = vsel %vm1845, %v907, %v964
    %v1851 = vsel %vm1845, %v909, %v966
    %v1853 = vsel %vm1845, %v911, %v968
    %v1855 = vsel %vm1845, %v913, %v970
    %v1857 = vsel %vm1845, %v915, %v972
    %v1859 = vsel %vm1845, %v917, %v974
    %v1861 = vsel %vm1845, %v919, %v976
    %v1863 = vsel %vm1845, %v921, %v978
    %v1865 = vsel %vm1845, %v923, %v980
    %v1867 = vsel %vm1845, %v925, %v982
    %v1869 = vsel %vm1845, %v927, %v984
    %v1871 = vsel %vm1845, %v929, %v986
    %v1873 = vsel %vm1845, %v931, %v988
    %v1875 = vsel %vm1845, %v933, %v990
    %v1877 = vsel %vm1845, %v935, %v992
    %v1879 = vsel %vm1845, %v937, %v994
    %v1881 = vsel %vm1845, %v939, %v996
    %v1883 = vsel %vm1845, %v941, %v998
    %v1885 = vsel %vm1845, %v943, %v1000
    %v1887 = vsel %vm1845, %v945, %v1002
    %v1889 = vsel %vm1845, %v947, %v1004
    %v1891 = vsel %vm1845, %v949, %v1006
    %v1893 = vsel %vm1845, %v951, %v1008
    %vm1894 = vcmask 326656
    %v1896 = vsel %vm1894, %v1847, %v1035
    %v1898 = vsel %vm1894, %v1849, %v1037
    %v1900 = vsel %vm1894, %v1851, %v1039
    %v1902 = vsel %vm1894, %v1853, %v1041
    %v1904 = vsel %vm1894, %v1855, %v1043
    %v1906 = vsel %vm1894, %v1857, %v1045
    %v1908 = vsel %vm1894, %v1859, %v1047
    %v1910 = vsel %vm1894, %v1861, %v1049
    %v1912 = vsel %vm1894, %v1863, %v1051
    %v1914 = vsel %vm1894, %v1865, %v1053
    %v1916 = vsel %vm1894, %v1867, %v1055
    %v1918 = vsel %vm1894, %v1869, %v1057
    %v1920 = vsel %vm1894, %v1871, %v1059
    %v1922 = vsel %vm1894, %v1873, %v1061
    %v1924 = vsel %vm1894, %v1875, %v1063
    %v1926 = vsel %vm1894, %v1877, %v1065
    %v1928 = vsel %vm1894, %v1879, %v1067
    %v1930 = vsel %vm1894, %v1881, %v1069
    %v1932 = vsel %vm1894, %v1883, %v1071
    %v1934 = vsel %vm1894, %v1885, %v1073
    %v1936 = vsel %vm1894, %v1887, %v1075
    %v1938 = vsel %vm1894, %v1889, %v1077
    %v1940 = vsel %vm1894, %v1891, %v1079
    %v1942 = vsel %vm1894, %v1893, %v1081
    %vm1943 = vcmask 523264
    %v1945 = vsel %vm1943, %v1896, %v1088
    %v1947 = vsel %vm1943, %v1898, %v1090
    %v1949 = vsel %vm1943, %v1900, %v1092
    %v1951 = vsel %vm1943, %v1902, %v1094
    %v1953 = vsel %vm1943, %v1904, %v1096
    %v1955 = vsel %vm1943, %v1906, %v1098
    %v1957 = vsel %vm1943, %v1908, %v1100
    %v1959 = vsel %vm1943, %v1910, %v1102
    %v1961 = vsel %vm1943, %v1912, %v1104
    %v1963 = vsel %vm1943, %v1914, %v1106
    %v1965 = vsel %vm1943, %v1916, %v1108
    %v1967 = vsel %vm1943, %v1918, %v1110
    %v1969 = vsel %vm1943, %v1920, %v1112
    %v1971 = vsel %vm1943, %v1922, %v1114
    %v1973 = vsel %vm1943, %v1924, %v1116
    %v1975 = vsel %vm1943, %v1926, %v1118
    %v1977 = vsel %vm1943, %v1928, %v1120
    %v1979 = vsel %vm1943, %v1930, %v1122
    %v1981 = vsel %vm1943, %v1932, %v1124
    %v1983 = vsel %vm1943, %v1934, %v1126
    %v1985 = vsel %vm1943, %v1936, %v1128
    %v1987 = vsel %vm1943, %v1938, %v1130
    %v1989 = vsel %vm1943, %v1940, %v1132
    %v1991 = vsel %vm1943, %v1942, %v1134
    %vm1992 = vcmask 719872
    %v1994 = vsel %vm1992, %v1945, %v1152
    %v1996 = vsel %vm1992, %v1947, %v1154
    %v1998 = vsel %vm1992, %v1949, %v1156
    %v2000 = vsel %vm1992, %v1951, %v1158
    %v2002 = vsel %vm1992, %v1953, %v1160
    %v2004 = vsel %vm1992, %v1955, %v1162
    %v2006 = vsel %vm1992, %v1957, %v1164
    %v2008 = vsel %vm1992, %v1959, %v1166
    %v2010 = vsel %vm1992, %v1961, %v1168
    %v2012 = vsel %vm1992, %v1963, %v1170
    %v2014 = vsel %vm1992, %v1965, %v1172
    %v2016 = vsel %vm1992, %v1967, %v1174
    %v2018 = vsel %vm1992, %v1969, %v1176
    %v2020 = vsel %vm1992, %v1971, %v1178
    %v2022 = vsel %vm1992, %v1973, %v1180
    %v2024 = vsel %vm1992, %v1975, %v1182
    %v2026 = vsel %vm1992, %v1977, %v1184
    %v2028 = vsel %vm1992, %v1979, %v1186
    %v2030 = vsel %vm1992, %v1981, %v1188
    %v2032 = vsel %vm1992, %v1983, %v1190
    %v2034 = vsel %vm1992, %v1985, %v1192
    %v2036 = vsel %vm1992, %v1987, %v1194
    %v2038 = vsel %vm1992, %v1989, %v1196
    %v2040 = vsel %vm1992, %v1991, %v1198
    %vm2041 = vcmask 916480
    %v2043 = vsel %vm2041, %v1994, %v1209
    %v2046 = vsel %vm2041, %v1996, %v1211
    %v2049 = vsel %vm2041, %v1998, %v1213
    %v2052 = vsel %vm2041, %v2000, %v1215
    %v2055 = vsel %vm2041, %v2002, %v1217
    %v2058 = vsel %vm2041, %v2004, %v1219
    %v2061 = vsel %vm2041, %v2006, %v1221
    %v2064 = vsel %vm2041, %v2008, %v1223
    %v2067 = vsel %vm2041, %v2010, %v1225
    %v2070 = vsel %vm2041, %v2012, %v1227
    %v2073 = vsel %vm2041, %v2014, %v1229
    %v2076 = vsel %vm2041, %v2016, %v1231
    %v2079 = vsel %vm2041, %v2018, %v1233
    %v2082 = vsel %vm2041, %v2020, %v1235
    %v2085 = vsel %vm2041, %v2022, %v1237
    %v2088 = vsel %vm2041, %v2024, %v1239
    %v2091 = vsel %vm2041, %v2026, %v1241
    %v2094 = vsel %vm2041, %v2028, %v1243
    %v2097 = vsel %vm2041, %v2030, %v1245
    %v2100 = vsel %vm2041, %v2032, %v1247
    %v2103 = vsel %vm2041, %v2034, %v1249
    %v2106 = vsel %vm2041, %v2036, %v1251
    %v2109 = vsel %vm2041, %v2038, %v1253
    %v2112 = vsel %vm2041, %v2040, %v1255
    %vm2114 = vcmask 64512
    %v2116 = vsel %vm2114, %v1209, %v1282
    %v2118 = vsel %vm2114, %v1211, %v1284
    %v2120 = vsel %vm2114, %v1213, %v1286
    %v2122 = vsel %vm2114, %v1215, %v1288
    %v2124 = vsel %vm2114, %v1217, %v1290
    %v2126 = vsel %vm2114, %v1219, %v1292
    %v2128 = vsel %vm2114, %v1221, %v1294
    %v2130 = vsel %vm2114, %v1223, %v1296
    %v2132 = vsel %vm2114, %v1225, %v1298
    %v2134 = vsel %vm2114, %v1227, %v1300
    %v2136 = vsel %vm2114, %v1229, %v1302
    %v2138 = vsel %vm2114, %v1231, %v1304
    %v2140 = vsel %vm2114, %v1233, %v1306
    %v2142 = vsel %vm2114, %v1235, %v1308
    %v2144 = vsel %vm2114, %v1237, %v1310
    %v2146 = vsel %vm2114, %v1239, %v1312
    %v2148 = vsel %vm2114, %v1241, %v1314
    %v2150 = vsel %vm2114, %v1243, %v1316
    %v2152 = vsel %vm2114, %v1245, %v1318
    %v2154 = vsel %vm2114, %v1247, %v1320
    %v2156 = vsel %vm2114, %v1249, %v1322
    %v2158 = vsel %vm2114, %v1251, %v1324
    %v2160 = vsel %vm2114, %v1253, %v1326
    %v2162 = vsel %vm2114, %v1255, %v1328
    %vm2163 = vcmask 261120
    %v2165 = vsel %vm2163, %v2116, %v1335
    %v2167 = vsel %vm2163, %v2118, %v1337
    %v2169 = vsel %vm2163, %v2120, %v1339
    %v2171 = vsel %vm2163, %v2122, %v1341
    %v2173 = vsel %vm2163, %v2124, %v1343
    %v2175 = vsel %vm2163, %v2126, %v1345
    %v2177 = vsel %vm2163, %v2128, %v1347
    %v2179 = vsel %vm2163, %v2130, %v1349
    %v2181 = vsel %vm2163, %v2132, %v1351
    %v2183 = vsel %vm2163, %v2134, %v1353
    %v2185 = vsel %vm2163, %v2136, %v1355
    %v2187 = vsel %vm2163, %v2138, %v1357
    %v2189 = vsel %vm2163, %v2140, %v1359
    %v2191 = vsel %vm2163, %v2142, %v1361
    %v2193 = vsel %vm2163, %v2144, %v1363
    %v2195 = vsel %vm2163, %v2146, %v1365
    %v2197 = vsel %vm2163, %v2148, %v1367
    %v2199 = vsel %vm2163, %v2150, %v1369
    %v2201 = vsel %vm2163, %v2152, %v1371
    %v2203 = vsel %vm2163, %v2154, %v1373
    %v2205 = vsel %vm2163, %v2156, %v1375
    %v2207 = vsel %vm2163, %v2158, %v1377
    %v2209 = vsel %vm2163, %v2160, %v1379
    %v2211 = vsel %vm2163, %v2162, %v1381
    %vm2212 = vcmask 457728
    %v2214 = vsel %vm2212, %v2165, %v1399
    %v2216 = vsel %vm2212, %v2167, %v1401
    %v2218 = vsel %vm2212, %v2169, %v1403
    %v2220 = vsel %vm2212, %v2171, %v1405
    %v2222 = vsel %vm2212, %v2173, %v1407
    %v2224 = vsel %vm2212, %v2175, %v1409
    %v2226 = vsel %vm2212, %v2177, %v1411
    %v2228 = vsel %vm2212, %v2179, %v1413
    %v2230 = vsel %vm2212, %v2181, %v1415
    %v2232 = vsel %vm2212, %v2183, %v1417
    %v2234 = vsel %vm2212, %v2185, %v1419
    %v2236 = vsel %vm2212, %v2187, %v1421
    %v2238 = vsel %vm2212, %v2189, %v1423
    %v2240 = vsel %vm2212, %v2191, %v1425
    %v2242 = vsel %vm2212, %v2193, %v1427
    %v2244 = vsel %vm2212, %v2195, %v1429
    %v2246 = vsel %vm2212, %v2197, %v1431
    %v2248 = vsel %vm2212, %v2199, %v1433
    %v2250 = vsel %vm2212, %v2201, %v1435
    %v2252 = vsel %vm2212, %v2203, %v1437
    %v2254 = vsel %vm2212, %v2205, %v1439
    %v2256 = vsel %vm2212, %v2207, %v1441
    %v2258 = vsel %vm2212, %v2209, %v1443
    %v2260 = vsel %vm2212, %v2211, %v1445
    %vm2261 = vcmask 654336
    %v2263 = vsel %vm2261, %v2214, %v1456
    %v2265 = vsel %vm2261, %v2216, %v1458
    %v2267 = vsel %vm2261, %v2218, %v1460
    %v2269 = vsel %vm2261, %v2220, %v1462
    %v2271 = vsel %vm2261, %v2222, %v1464
    %v2273 = vsel %vm2261, %v2224, %v1466
    %v2275 = vsel %vm2261, %v2226, %v1468
    %v2277 = vsel %vm2261, %v2228, %v1470
    %v2279 = vsel %vm2261, %v2230, %v1472
    %v2281 = vsel %vm2261, %v2232, %v1474
    %v2283 = vsel %vm2261, %v2234, %v1476
    %v2285 = vsel %vm2261, %v2236, %v1478
    %v2287 = vsel %vm2261, %v2238, %v1480
    %v2289 = vsel %vm2261, %v2240, %v1482
    %v2291 = vsel %vm2261, %v2242, %v1484
    %v2293 = vsel %vm2261, %v2244, %v1486
    %v2295 = vsel %vm2261, %v2246, %v1488
    %v2297 = vsel %vm2261, %v2248, %v1490
    %v2299 = vsel %vm2261, %v2250, %v1492
    %v2301 = vsel %vm2261, %v2252, %v1494
    %v2303 = vsel %vm2261, %v2254, %v1496
    %v2305 = vsel %vm2261, %v2256, %v1498
    %v2307 = vsel %vm2261, %v2258, %v1500
    %v2309 = vsel %vm2261, %v2260, %v1502
    %vm2310 = vcmask 850944
    %v2312 = vsel %vm2310, %v2263, %v1529
    %v2315 = vsel %vm2310, %v2265, %v1531
    %v2318 = vsel %vm2310, %v2267, %v1533
    %v2321 = vsel %vm2310, %v2269, %v1535
    %v2324 = vsel %vm2310, %v2271, %v1537
    %v2327 = vsel %vm2310, %v2273, %v1539
    %v2330 = vsel %vm2310, %v2275, %v1541
    %v2333 = vsel %vm2310, %v2277, %v1543
    %v2336 = vsel %vm2310, %v2279, %v1545
    %v2339 = vsel %vm2310, %v2281, %v1547
    %v2342 = vsel %vm2310, %v2283, %v1549
    %v2345 = vsel %vm2310, %v2285, %v1551
    %v2348 = vsel %vm2310, %v2287, %v1553
    %v2351 = vsel %vm2310, %v2289, %v1555
    %v2354 = vsel %vm2310, %v2291, %v1557
    %v2357 = vsel %vm2310, %v2293, %v1559
    %v2360 = vsel %vm2310, %v2295, %v1561
    %v2363 = vsel %vm2310, %v2297, %v1563
    %v2366 = vsel %vm2310, %v2299, %v1565
    %v2369 = vsel %vm2310, %v2301, %v1567
    %v2372 = vsel %vm2310, %v2303, %v1569
    %v2375 = vsel %vm2310, %v2305, %v1571
    %v2378 = vsel %vm2310, %v2307, %v1573
    %v2381 = vsel %vm2310, %v2309, %v1575
    %v2383 = vld [vmem:[#allocation4] sm:$0xf]
    %v2384 = vld [vmem:[#allocation4 + $0x4] sm:$0xf]
    %v2385 = vld [vmem:[#allocation4 + $0x8] sm:$0xf]
    %v2386 = vld [vmem:[#allocation4 + $0xc] sm:$0xf]
    %v2387 = vld [vmem:[#allocation4 + $0x10] sm:$0xf]
    %v2388 = vld [vmem:[#allocation4 + $0x14] sm:$0xf]
    %v2389 = vld [vmem:[#allocation4 + $0x18] sm:$0xf]
    %v2390 = vld [vmem:[#allocation4 + $0x1c] sm:$0xf]
    %v2391 = vld [vmem:[#allocation4 + $0x20] sm:$0xf]
    %v2392 = vld [vmem:[#allocation4 + $0x24] sm:$0xf]
    %v2393 = vld [vmem:[#allocation4 + $0x28] sm:$0xf]
    %v2394 = vld [vmem:[#allocation4 + $0x2c] sm:$0xf]
    %v2395 = vld [vmem:[#allocation4 + $0x30] sm:$0xf]
    %v2396 = vld [vmem:[#allocation4 + $0x34] sm:$0xf]
    %v2397 = vld [vmem:[#allocation4 + $0x38] sm:$0xf]
    %v2398 = vld [vmem:[#allocation4 + $0x3c] sm:$0xf]
    %v2399 = vld [vmem:[#allocation4 + $0x40] sm:$0xf]
    %v2400 = vld [vmem:[#allocation4 + $0x44] sm:$0xf]
    %v2401 = vld [vmem:[#allocation4 + $0x48] sm:$0xf]
    %v2402 = vld [vmem:[#allocation4 + $0x4c] sm:$0xf]
    %v2403 = vld [vmem:[#allocation4 + $0x50] sm:$0xf]
    %v2404 = vld [vmem:[#allocation4 + $0x54] sm:$0xf]
    %v2405 = vld [vmem:[#allocation4 + $0x58] sm:$0xf]
    %v2406 = vld [vmem:[#allocation4 + $0x5c] sm:$0xf]
    %v2407 = vld [vmem:[#allocation4 + $0x60] sm:$0xf]
    %v2408 = vld [vmem:[#allocation4 + $0x64] sm:$0xf]
    %v2409 = vld [vmem:[#allocation4 + $0x68] sm:$0xf]
    %v2410 = vld [vmem:[#allocation4 + $0x6c] sm:$0xf]
    %v2411 = vld [vmem:[#allocation4 + $0x70] sm:$0xf]
    %v2412 = vld [vmem:[#allocation4 + $0x74] sm:$0xf]
    %v2413 = vld [vmem:[#allocation4 + $0x78] sm:$0xf]
    %v2414 = vld [vmem:[#allocation4 + $0x7c] sm:$0xf]
    %v2415 = vld [vmem:[#allocation4 + $0x80] sm:$0xf]
    %v2416 = vld [vmem:[#allocation4 + $0x84] sm:$0xf]
    %v2417 = vld [vmem:[#allocation4 + $0x88] sm:$0xf]
    %v2418 = vld [vmem:[#allocation4 + $0x8c] sm:$0xf]
    %v2419 = vld [vmem:[#allocation4 + $0x90] sm:$0xf]
    %v2420 = vld [vmem:[#allocation4 + $0x94] sm:$0xf]
    %v2421 = vld [vmem:[#allocation4 + $0x98] sm:$0xf]
    %v2422 = vld [vmem:[#allocation4 + $0x9c] sm:$0xf]
    %v2423 = vld [vmem:[#allocation4 + $0xa0] sm:$0xf]
    %v2424 = vld [vmem:[#allocation4 + $0xa4] sm:$0xf]
    %v2425 = vld [vmem:[#allocation4 + $0xa8] sm:$0xf]
    %v2426 = vld [vmem:[#allocation4 + $0xac] sm:$0xf]
    %v2427 = vld [vmem:[#allocation4 + $0xb0] sm:$0xf]
    %v2428 = vld [vmem:[#allocation4 + $0xb4] sm:$0xf]
    %v2429 = vld [vmem:[#allocation4 + $0xb8] sm:$0xf]
    %v2430 = vld [vmem:[#allocation4 + $0xbc] sm:$0xf]
    %v2479 = vunpack.c.l.b16 %v2383
    %v2480 = vunpack.c.l.b16 %v2384
    %v2481 = vunpack.c.l.b16 %v2385
    %v2482 = vunpack.c.l.b16 %v2386
    %v2483 = vunpack.c.l.b16 %v2387
    %v2484 = vunpack.c.l.b16 %v2388
    %v2485 = vunpack.c.l.b16 %v2389
    %v2486 = vunpack.c.l.b16 %v2390
    %v2487 = vunpack.c.l.b16 %v2391
    %v2488 = vunpack.c.l.b16 %v2392
    %v2489 = vunpack.c.l.b16 %v2393
    %v2490 = vunpack.c.l.b16 %v2394
    %v2491 = vunpack.c.l.b16 %v2395
    %v2492 = vunpack.c.l.b16 %v2396
    %v2493 = vunpack.c.l.b16 %v2397
    %v2494 = vunpack.c.l.b16 %v2398
    %v2495 = vunpack.c.l.b16 %v2399
    %v2496 = vunpack.c.l.b16 %v2400
    %v2497 = vunpack.c.l.b16 %v2401
    %v2498 = vunpack.c.l.b16 %v2402
    %v2499 = vunpack.c.l.b16 %v2403
    %v2500 = vunpack.c.l.b16 %v2404
    %v2501 = vunpack.c.l.b16 %v2405
    %v2502 = vunpack.c.l.b16 %v2406
    %v2503 = vunpack.c.l.b16 %v2407
    %v2504 = vunpack.c.l.b16 %v2408
    %v2505 = vunpack.c.l.b16 %v2409
    %v2506 = vunpack.c.l.b16 %v2410
    %v2507 = vunpack.c.l.b16 %v2411
    %v2508 = vunpack.c.l.b16 %v2412
    %v2509 = vunpack.c.l.b16 %v2413
    %v2510 = vunpack.c.l.b16 %v2414
    %v2511 = vunpack.c.l.b16 %v2415
    %v2512 = vunpack.c.l.b16 %v2416
    %v2513 = vunpack.c.l.b16 %v2417
    %v2514 = vunpack.c.l.b16 %v2418
    %v2515 = vunpack.c.l.b16 %v2419
    %v2516 = vunpack.c.l.b16 %v2420
    %v2517 = vunpack.c.l.b16 %v2421
    %v2518 = vunpack.c.l.b16 %v2422
    %v2519 = vunpack.c.l.b16 %v2423
    %v2520 = vunpack.c.l.b16 %v2424
    %v2521 = vunpack.c.l.b16 %v2425
    %v2522 = vunpack.c.l.b16 %v2426
    %v2523 = vunpack.c.l.b16 %v2427
    %v2524 = vunpack.c.l.b16 %v2428
    %v2525 = vunpack.c.l.b16 %v2429
    %v2526 = vunpack.c.l.b16 %v2430
    %v2527 = vpack.c.b16 %v2480, %v2479
    %v2528 = vpack.c.b16 %v2482, %v2481
    %v2529 = vpack.c.b16 %v2484, %v2483
    %v2530 = vpack.c.b16 %v2486, %v2485
    %v2531 = vpack.c.b16 %v2488, %v2487
    %v2532 = vpack.c.b16 %v2490, %v2489
    %v2533 = vpack.c.b16 %v2492, %v2491
    %v2534 = vpack.c.b16 %v2494, %v2493
    %v2535 = vpack.c.b16 %v2496, %v2495
    %v2536 = vpack.c.b16 %v2498, %v2497
    %v2537 = vpack.c.b16 %v2500, %v2499
    %v2538 = vpack.c.b16 %v2502, %v2501
    %v2539 = vpack.c.b16 %v2504, %v2503
    %v2540 = vpack.c.b16 %v2506, %v2505
    %v2541 = vpack.c.b16 %v2508, %v2507
    %v2542 = vpack.c.b16 %v2510, %v2509
    %v2543 = vpack.c.b16 %v2512, %v2511
    %v2544 = vpack.c.b16 %v2514, %v2513
    %v2545 = vpack.c.b16 %v2516, %v2515
    %v2546 = vpack.c.b16 %v2518, %v2517
    %v2547 = vpack.c.b16 %v2520, %v2519
    %v2548 = vpack.c.b16 %v2522, %v2521
    %v2549 = vpack.c.b16 %v2524, %v2523
    %v2550 = vpack.c.b16 %v2526, %v2525
    %2575 = vmatprep.subr.bf16.mxu0 0
    %2576 = vmatpush1.bf16.msra.mxu0 %v2527
    %2577 = vmatprep.subr.bf16.mxu0 0
    %2578 = vmatpush1.bf16.msra.mxu0 %v2528
    %2579 = vmatprep.subr.bf16.mxu0 0
    %2580 = vmatpush1.bf16.msra.mxu0 %v2529
    %2581 = vmatprep.subr.bf16.mxu0 0
    %2582 = vmatpush1.bf16.msra.mxu0 %v2530
    %2583 = vmatprep.subr.bf16.mxu0 0
    %2584 = vmatpush1.bf16.msra.mxu0 %v2531
    %2585 = vmatprep.subr.bf16.mxu0 0
    %2586 = vmatpush1.bf16.msra.mxu0 %v2532
    %2587 = vmatprep.subr.bf16.mxu0 0
    %2588 = vmatpush1.bf16.msra.mxu0 %v2533
    %2589 = vmatprep.subr.bf16.mxu0 0
    %2590 = vmatpush1.bf16.msra.mxu0 %v2534
    %2591 = vmatprep.subr.bf16.mxu0 0
    %2592 = vmatpush1.bf16.msra.mxu0 %v2535
    %2593 = vmatprep.subr.bf16.mxu0 0
    %2594 = vmatpush1.bf16.msra.mxu0 %v2536
    %2595 = vmatprep.subr.bf16.mxu0 0
    %2596 = vmatpush1.bf16.msra.mxu0 %v2537
    %2597 = vmatprep.subr.bf16.mxu0 0
    %2598 = vmatpush1.bf16.msra.mxu0 %v2538
    %2599 = vmatprep.subr.bf16.mxu0 0
    %2600 = vmatpush1.bf16.msra.mxu0 %v2539
    %2601 = vmatprep.subr.bf16.mxu0 0
    %2602 = vmatpush1.bf16.msra.mxu0 %v2540
    %2603 = vmatprep.subr.bf16.mxu0 0
    %2604 = vmatpush1.bf16.msra.mxu0 %v2541
    %2605 = vmatprep.subr.bf16.mxu0 0
    %2606 = vmatpush1.bf16.msra.mxu0 %v2542
    %2607 = vmatprep.mubr.bf16.mxu0 %v2043
    %2608 = vmatmul.mubr.bf16.gmra.mrb[0].mxu0 %v1774
    %v2609 = vpop.f32.mrb[0].mxu0
    %v2610 = vadd.f32 0.0, %v2609
    %v2611 = vpop.f32.mrb[0].mxu0
    %v2612 = vpop.f32.mrb[0].mxu0
    %v2613 = vadd.f32 0.0, %v2612
    %v2614 = vpop.f32.mrb[0].mxu0
    %2615 = vmatprep.mubr.bf16.mxu0 %v2046
    %2616 = vmatmul.mubr.bf16.gmra.mrb[0].mxu0 %v1777
    %v2617 = vpop.f32.mrb[0].mxu0
    %v2618 = vadd.f32 0.0, %v2617
    %v2619 = vpop.f32.mrb[0].mxu0
    %v2620 = vpop.f32.mrb[0].mxu0
    %v2621 = vadd.f32 0.0, %v2620
    %v2622 = vpop.f32.mrb[0].mxu0
    %2623 = vmatprep.mubr.bf16.mxu0 %v2049
    %2624 = vmatmul.mubr.bf16.gmra.mrb[0].mxu0 %v1780
    %v2625 = vpop.f32.mrb[0].mxu0
    %v2626 = vadd.f32 0.0, %v2625
    %v2627 = vpop.f32.mrb[0].mxu0
    %v2628 = vpop.f32.mrb[0].mxu0
    %v2629 = vadd.f32 0.0, %v2628
    %v2630 = vpop.f32.mrb[0].mxu0
    %2631 = vmatprep.mubr.bf16.mxu0 %v2052
    %2632 = vmatmul.mubr.bf16.gmra.mrb[0].mxu0 %v1783
    %v2633 = vpop.f32.mrb[0].mxu0
    %v2634 = vadd.f32 0.0, %v2633
    %v2635 = vpop.f32.mrb[0].mxu0
    %v2636 = vpop.f32.mrb[0].mxu0
    %v2637 = vadd.f32 0.0, %v2636
    %v2638 = vpop.f32.mrb[0].mxu0
    %2639 = vmatprep.mubr.bf16.mxu0 %v2055
    %2640 = vmatmul.mubr.bf16.gmra.mrb[0].mxu0 %v1786
    %v2641 = vpop.f32.mrb[0].mxu0
    %v2642 = vadd.f32 0.0, %v2641
    %v2643 = vpop.f32.mrb[0].mxu0
    %v2644 = vpop.f32.mrb[0].mxu0
    %v2645 = vadd.f32 0.0, %v2644
    %v2646 = vpop.f32.mrb[0].mxu0
    %2647 = vmatprep.mubr.bf16.mxu0 %v2058
    %2648 = vmatmul.mubr.bf16.gmra.mrb[0].mxu0 %v1789
    %v2649 = vpop.f32.mrb[0].mxu0
    %v2650 = vadd.f32 0.0, %v2649
    %v2651 = vpop.f32.mrb[0].mxu0
    %v2652 = vpop.f32.mrb[0].mxu0
    %v2653 = vadd.f32 0.0, %v2652
    %v2654 = vpop.f32.mrb[0].mxu0
    %2655 = vmatprep.mubr.bf16.mxu0 %v2061
    %2656 = vmatmul.mubr.bf16.gmra.mrb[0].mxu0 %v1792
    %v2657 = vpop.f32.mrb[0].mxu0
    %v2658 = vadd.f32 0.0, %v2657
    %v2659 = vpop.f32.mrb[0].mxu0
    %v2660 = vpop.f32.mrb[0].mxu0
    %v2661 = vadd.f32 0.0, %v2660
    %v2662 = vpop.f32.mrb[0].mxu0
    %2663 = vmatprep.mubr.bf16.mxu0 %v2064
    %2664 = vmatmul.mubr.bf16.gmra.mrb[0].mxu0 %v1795
    %v2665 = vpop.f32.mrb[0].mxu0
    %v2666 = vadd.f32 0.0, %v2665
    %v2667 = vpop.f32.mrb[0].mxu0
    %v2668 = vpop.f32.mrb[0].mxu0
    %v2669 = vadd.f32 0.0, %v2668
    %v2670 = vpop.f32.mrb[0].mxu0
    %2671 = vmatprep.mubr.bf16.mxu0 %v2067
    %2672 = vmatmul.mubr.bf16.gmra.mrb[0].mxu0 %v1798
    %v2673 = vpop.f32.mrb[0].mxu0
    %v2674 = vadd.f32 0.0, %v2673
    %v2675 = vpop.f32.mrb[0].mxu0
    %v2676 = vpop.f32.mrb[0].mxu0
    %v2677 = vadd.f32 0.0, %v2676
    %v2678 = vpop.f32.mrb[0].mxu0
    %2679 = vmatprep.mubr.bf16.mxu0 %v2070
    %2680 = vmatmul.mubr.bf16.gmra.mrb[0].mxu0 %v1801
    %v2681 = vpop.f32.mrb[0].mxu0
    %v2682 = vadd.f32 0.0, %v2681
    %v2683 = vpop.f32.mrb[0].mxu0
    %v2684 = vpop.f32.mrb[0].mxu0
    %v2685 = vadd.f32 0.0, %v2684
    %v2686 = vpop.f32.mrb[0].mxu0
    %2687 = vmatprep.mubr.bf16.mxu0 %v2073
    %2688 = vmatmul.mubr.bf16.gmra.mrb[0].mxu0 %v1804
    %v2689 = vpop.f32.mrb[0].mxu0
    %v2690 = vadd.f32 0.0, %v2689
    %v2691 = vpop.f32.mrb[0].mxu0
    %v2692 = vpop.f32.mrb[0].mxu0
    %v2693 = vadd.f32 0.0, %v2692
    %v2694 = vpop.f32.mrb[0].mxu0
    %2695 = vmatprep.mubr.bf16.mxu0 %v2076
    %2696 = vmatmul.mubr.bf16.gmra.mrb[0].mxu0 %v1807
    %v2697 = vpop.f32.mrb[0].mxu0
    %v2698 = vadd.f32 0.0, %v2697
    %v2699 = vpop.f32.mrb[0].mxu0
    %v2700 = vpop.f32.mrb[0].mxu0
    %v2701 = vadd.f32 0.0, %v2700
    %v2702 = vpop.f32.mrb[0].mxu0
    %2703 = vmatprep.mubr.bf16.mxu0 %v2079
    %2704 = vmatmul.mubr.bf16.gmra.mrb[0].mxu0 %v1810
    %v2705 = vpop.f32.mrb[0].mxu0
    %v2706 = vadd.f32 0.0, %v2705
    %v2707 = vpop.f32.mrb[0].mxu0
    %v2708 = vpop.f32.mrb[0].mxu0
    %v2709 = vadd.f32 0.0, %v2708
    %v2710 = vpop.f32.mrb[0].mxu0
    %2711 = vmatprep.mubr.bf16.mxu0 %v2082
    %2712 = vmatmul.mubr.bf16.gmra.mrb[0].mxu0 %v1813
    %v2713 = vpop.f32.mrb[0].mxu0
    %v2714 = vadd.f32 0.0, %v2713
    %v2715 = vpop.f32.mrb[0].mxu0
    %v2716 = vpop.f32.mrb[0].mxu0
    %v2717 = vadd.f32 0.0, %v2716
    %v2718 = vpop.f32.mrb[0].mxu0
    %2719 = vmatprep.mubr.bf16.mxu0 %v2085
    %2720 = vmatmul.mubr.bf16.gmra.mrb[0].mxu0 %v1816
    %v2721 = vpop.f32.mrb[0].mxu0
    %v2722 = vadd.f32 0.0, %v2721
    %v2723 = vpop.f32.mrb[0].mxu0
    %v2724 = vpop.f32.mrb[0].mxu0
    %v2725 = vadd.f32 0.0, %v2724
    %v2726 = vpop.f32.mrb[0].mxu0
    %2727 = vmatprep.mubr.bf16.mxu0 %v2088
    %2728 = vmatmul.mubr.bf16.gmra.mrb[0].mxu0 %v1819
    %v2729 = vpop.f32.mrb[0].mxu0
    %v2730 = vadd.f32 0.0, %v2729
    %v2731 = vpop.f32.mrb[0].mxu0
    %v2732 = vpop.f32.mrb[0].mxu0
    %v2733 = vadd.f32 0.0, %v2732
    %v2734 = vpop.f32.mrb[0].mxu0
    %2735 = vmatprep.mubr.bf16.mxu0 %v2091
    %2736 = vmatmul.mubr.bf16.gmra.mrb[0].mxu0 %v1822
    %v2737 = vpop.f32.mrb[0].mxu0
    %v2738 = vadd.f32 0.0, %v2737
    %v2739 = vpop.f32.mrb[0].mxu0
    %v2740 = vpop.f32.mrb[0].mxu0
    %v2741 = vadd.f32 0.0, %v2740
    %v2742 = vpop.f32.mrb[0].mxu0
    %2743 = vmatprep.mubr.bf16.mxu0 %v2094
    %2744 = vmatmul.mubr.bf16.gmra.mrb[0].mxu0 %v1825
    %v2745 = vpop.f32.mrb[0].mxu0
    %v2746 = vadd.f32 0.0, %v2745
    %v2747 = vpop.f32.mrb[0].mxu0
    %v2748 = vpop.f32.mrb[0].mxu0
    %v2749 = vadd.f32 0.0, %v2748
    %v2750 = vpop.f32.mrb[0].mxu0
    %2751 = vmatprep.mubr.bf16.mxu0 %v2097
    %2752 = vmatmul.mubr.bf16.gmra.mrb[0].mxu0 %v1828
    %v2753 = vpop.f32.mrb[0].mxu0
    %v2754 = vadd.f32 0.0, %v2753
    %v2755 = vpop.f32.mrb[0].mxu0
    %v2756 = vpop.f32.mrb[0].mxu0
    %v2757 = vadd.f32 0.0, %v2756
    %v2758 = vpop.f32.mrb[0].mxu0
    %2759 = vmatprep.mubr.bf16.mxu0 %v2100
    %2760 = vmatmul.mubr.bf16.gmra.mrb[0].mxu0 %v1831
    %v2761 = vpop.f32.mrb[0].mxu0
    %v2762 = vadd.f32 0.0, %v2761
    %v2763 = vpop.f32.mrb[0].mxu0
    %v2764 = vpop.f32.mrb[0].mxu0
    %v2765 = vadd.f32 0.0, %v2764
    %v2766 = vpop.f32.mrb[0].mxu0
    %2767 = vmatprep.mubr.bf16.mxu0 %v2103
    %2768 = vmatmul.mubr.bf16.gmra.mrb[0].mxu0 %v1834
    %v2769 = vpop.f32.mrb[0].mxu0
    %v2770 = vadd.f32 0.0, %v2769
    %v2771 = vpop.f32.mrb[0].mxu0
    %v2772 = vpop.f32.mrb[0].mxu0
    %v2773 = vadd.f32 0.0, %v2772
    %v2774 = vpop.f32.mrb[0].mxu0
    %2775 = vmatprep.mubr.bf16.mxu0 %v2106
    %2776 = vmatmul.mubr.bf16.gmra.mrb[0].mxu0 %v1837
    %v2777 = vpop.f32.mrb[0].mxu0
    %v2778 = vadd.f32 0.0, %v2777
    %v2779 = vpop.f32.mrb[0].mxu0
    %v2780 = vpop.f32.mrb[0].mxu0
    %v2781 = vadd.f32 0.0, %v2780
    %v2782 = vpop.f32.mrb[0].mxu0
    %2783 = vmatprep.mubr.bf16.mxu0 %v2109
    %2784 = vmatmul.mubr.bf16.gmra.mrb[0].mxu0 %v1840
    %v2785 = vpop.f32.mrb[0].mxu0
    %v2786 = vadd.f32 0.0, %v2785
    %v2787 = vpop.f32.mrb[0].mxu0
    %v2788 = vpop.f32.mrb[0].mxu0
    %v2789 = vadd.f32 0.0, %v2788
    %v2790 = vpop.f32.mrb[0].mxu0
    %2791 = vmatprep.mubr.bf16.mxu0 %v2112
    %2792 = vmatmul.mubr.bf16.gmra.mrb[0].mxu0 %v1843
    %v2793 = vpop.f32.mrb[0].mxu0
    %v2794 = vadd.f32 0.0, %v2793
    %v2795 = vpop.f32.mrb[0].mxu0
    %v2796 = vpop.f32.mrb[0].mxu0
    %v2797 = vadd.f32 0.0, %v2796
    %v2798 = vpop.f32.mrb[0].mxu0
    %2799 = vdwg.mxu0
    %2800 = vmatprep.subr.bf16.mxu0 0
    %2801 = vmatpush1.bf16.msra.mxu0 %v2543
    %2802 = vmatprep.subr.bf16.mxu0 0
    %2803 = vmatpush1.bf16.msra.mxu0 %v2544
    %2804 = vmatprep.subr.bf16.mxu0 0
    %2805 = vmatpush1.bf16.msra.mxu0 %v2545
    %2806 = vmatprep.subr.bf16.mxu0 0
    %2807 = vmatpush1.bf16.msra.mxu0 %v2546
    %2808 = vmatprep.subr.bf16.mxu0 0
    %2809 = vmatpush1.bf16.msra.mxu0 %v2547
    %2810 = vmatprep.subr.bf16.mxu0 0
    %2811 = vmatpush1.bf16.msra.mxu0 %v2548
    %2812 = vmatprep.subr.bf16.mxu0 0
    %2813 = vmatpush1.bf16.msra.mxu0 %v2549
    %2814 = vmatprep.subr.bf16.mxu0 0
    %2815 = vmatpush1.bf16.msra.mxu0 %v2550
    %2816 = vmatprep.subr.bf16.mxu0 0
    %2817 = vmatpush1.bf16.msra.mxu0 0
    %2818 = vmatprep.subr.bf16.mxu0 0
    %2819 = vmatpush1.bf16.msra.mxu0 0
    %2820 = vmatprep.subr.bf16.mxu0 0
    %2821 = vmatpush1.bf16.msra.mxu0 0
    %2822 = vmatprep.subr.bf16.mxu0 0
    %2823 = vmatpush1.bf16.msra.mxu0 0
    %2824 = vmatprep.subr.bf16.mxu0 0
    %2825 = vmatpush1.bf16.msra.mxu0 0
    %2826 = vmatprep.subr.bf16.mxu0 0
    %2827 = vmatpush1.bf16.msra.mxu0 0
    %2828 = vmatprep.subr.bf16.mxu0 0
    %2829 = vmatpush1.bf16.msra.mxu0 0
    %2830 = vmatprep.subr.bf16.mxu0 0
    %2831 = vmatpush1.bf16.msra.mxu0 0
    %2832 = vmatprep.mubr.bf16.mxu0 0
    %2833 = vmatmul.mubr.bf16.gmra.mrb[0].mxu0 %v2312
    %v2834 = vpop.f32.mrb[0].mxu0
    %v2835 = vadd.f32 %v2610, %v2834
    %v2836 = vpop.f32.mrb[0].mxu0
    %v2837 = vpop.f32.mrb[0].mxu0
    %v2838 = vadd.f32 %v2613, %v2837
    %v2839 = vpop.f32.mrb[0].mxu0
    %2840 = vmatprep.mubr.bf16.mxu0 0
    %2841 = vmatmul.mubr.bf16.gmra.mrb[0].mxu0 %v2315
    %v2842 = vpop.f32.mrb[0].mxu0
    %v2843 = vadd.f32 %v2618, %v2842
    %v2844 = vpop.f32.mrb[0].mxu0
    %v2845 = vpop.f32.mrb[0].mxu0
    %v2846 = vadd.f32 %v2621, %v2845
    %v2847 = vpop.f32.mrb[0].mxu0
    %2848 = vmatprep.mubr.bf16.mxu0 0
    %2849 = vmatmul.mubr.bf16.gmra.mrb[0].mxu0 %v2318
    %v2850 = vpop.f32.mrb[0].mxu0
    %v2851 = vadd.f32 %v2626, %v2850
    %v2852 = vpop.f32.mrb[0].mxu0
    %v2853 = vpop.f32.mrb[0].mxu0
    %v2854 = vadd.f32 %v2629, %v2853
    %v2855 = vpop.f32.mrb[0].mxu0
    %2856 = vmatprep.mubr.bf16.mxu0 0
    %2857 = vmatmul.mubr.bf16.gmra.mrb[0].mxu0 %v2321
    %v2858 = vpop.f32.mrb[0].mxu0
    %v2859 = vadd.f32 %v2634, %v2858
    %v2860 = vpop.f32.mrb[0].mxu0
    %v2861 = vpop.f32.mrb[0].mxu0
    %v2862 = vadd.f32 %v2637, %v2861
    %v2863 = vpop.f32.mrb[0].mxu0
    %2864 = vmatprep.mubr.bf16.mxu0 0
    %2865 = vmatmul.mubr.bf16.gmra.mrb[0].mxu0 %v2324
    %v2866 = vpop.f32.mrb[0].mxu0
    %v2867 = vadd.f32 %v2642, %v2866
    %v2868 = vpop.f32.mrb[0].mxu0
    %v2869 = vpop.f32.mrb[0].mxu0
    %v2870 = vadd.f32 %v2645, %v2869
    %v2871 = vpop.f32.mrb[0].mxu0
    %2872 = vmatprep.mubr.bf16.mxu0 0
    %2873 = vmatmul.mubr.bf16.gmra.mrb[0].mxu0 %v2327
    %v2874 = vpop.f32.mrb[0].mxu0
    %v2875 = vadd.f32 %v2650, %v2874
    %v2876 = vpop.f32.mrb[0].mxu0
    %v2877 = vpop.f32.mrb[0].mxu0
    %v2878 = vadd.f32 %v2653, %v2877
    %v2879 = vpop.f32.mrb[0].mxu0
    %2880 = vmatprep.mubr.bf16.mxu0 0
    %2881 = vmatmul.mubr.bf16.gmra.mrb[0].mxu0 %v2330
    %v2882 = vpop.f32.mrb[0].mxu0
    %v2883 = vadd.f32 %v2658, %v2882
    %v2884 = vpop.f32.mrb[0].mxu0
    %v2885 = vpop.f32.mrb[0].mxu0
    %v2886 = vadd.f32 %v2661, %v2885
    %v2887 = vpop.f32.mrb[0].mxu0
    %2888 = vmatprep.mubr.bf16.mxu0 0
    %2889 = vmatmul.mubr.bf16.gmra.mrb[0].mxu0 %v2333
    %v2890 = vpop.f32.mrb[0].mxu0
    %v2891 = vadd.f32 %v2666, %v2890
    %v2892 = vpop.f32.mrb[0].mxu0
    %v2893 = vpop.f32.mrb[0].mxu0
    %v2894 = vadd.f32 %v2669, %v2893
    %v2895 = vpop.f32.mrb[0].mxu0
    %2896 = vmatprep.mubr.bf16.mxu0 0
    %2897 = vmatmul.mubr.bf16.gmra.mrb[0].mxu0 %v2336
    %v2898 = vpop.f32.mrb[0].mxu0
    %v2899 = vadd.f32 %v2674, %v2898
    %v2900 = vpop.f32.mrb[0].mxu0
    %v2901 = vpop.f32.mrb[0].mxu0
    %v2902 = vadd.f32 %v2677, %v2901
    %v2903 = vpop.f32.mrb[0].mxu0
    %2904 = vmatprep.mubr.bf16.mxu0 0
    %2905 = vmatmul.mubr.bf16.gmra.mrb[0].mxu0 %v2339
    %v2906 = vpop.f32.mrb[0].mxu0
    %v2907 = vadd.f32 %v2682, %v2906
    %v2908 = vpop.f32.mrb[0].mxu0
    %v2909 = vpop.f32.mrb[0].mxu0
    %v2910 = vadd.f32 %v2685, %v2909
    %v2911 = vpop.f32.mrb[0].mxu0
    %2912 = vmatprep.mubr.bf16.mxu0 0
    %2913 = vmatmul.mubr.bf16.gmra.mrb[0].mxu0 %v2342
    %v2914 = vpop.f32.mrb[0].mxu0
    %v2915 = vadd.f32 %v2690, %v2914
    %v2916 = vpop.f32.mrb[0].mxu0
    %v2917 = vpop.f32.mrb[0].mxu0
    %v2918 = vadd.f32 %v2693, %v2917
    %v2919 = vpop.f32.mrb[0].mxu0
    %2920 = vmatprep.mubr.bf16.mxu0 0
    %2921 = vmatmul.mubr.bf16.gmra.mrb[0].mxu0 %v2345
    %v2922 = vpop.f32.mrb[0].mxu0
    %v2923 = vadd.f32 %v2698, %v2922
    %v2924 = vpop.f32.mrb[0].mxu0
    %v2925 = vpop.f32.mrb[0].mxu0
    %v2926 = vadd.f32 %v2701, %v2925
    %v2927 = vpop.f32.mrb[0].mxu0
    %2928 = vmatprep.mubr.bf16.mxu0 0
    %2929 = vmatmul.mubr.bf16.gmra.mrb[0].mxu0 %v2348
    %v2930 = vpop.f32.mrb[0].mxu0
    %v2931 = vadd.f32 %v2706, %v2930
    %v2932 = vpop.f32.mrb[0].mxu0
    %v2933 = vpop.f32.mrb[0].mxu0
    %v2934 = vadd.f32 %v2709, %v2933
    %v2935 = vpop.f32.mrb[0].mxu0
    %2936 = vmatprep.mubr.bf16.mxu0 0
    %2937 = vmatmul.mubr.bf16.gmra.mrb[0].mxu0 %v2351
    %v2938 = vpop.f32.mrb[0].mxu0
    %v2939 = vadd.f32 %v2714, %v2938
    %v2940 = vpop.f32.mrb[0].mxu0
    %v2941 = vpop.f32.mrb[0].mxu0
    %v2942 = vadd.f32 %v2717, %v2941
    %v2943 = vpop.f32.mrb[0].mxu0
    %2944 = vmatprep.mubr.bf16.mxu0 0
    %2945 = vmatmul.mubr.bf16.gmra.mrb[0].mxu0 %v2354
    %v2946 = vpop.f32.mrb[0].mxu0
    %v2947 = vadd.f32 %v2722, %v2946
    %v2948 = vpop.f32.mrb[0].mxu0
    %v2949 = vpop.f32.mrb[0].mxu0
    %v2950 = vadd.f32 %v2725, %v2949
    %v2951 = vpop.f32.mrb[0].mxu0
    %2952 = vmatprep.mubr.bf16.mxu0 0
    %2953 = vmatmul.mubr.bf16.gmra.mrb[0].mxu0 %v2357
    %v2954 = vpop.f32.mrb[0].mxu0
    %v2955 = vadd.f32 %v2730, %v2954
    %v2956 = vpop.f32.mrb[0].mxu0
    %v2957 = vpop.f32.mrb[0].mxu0
    %v2958 = vadd.f32 %v2733, %v2957
    %v2959 = vpop.f32.mrb[0].mxu0
    %2960 = vmatprep.mubr.bf16.mxu0 0
    %2961 = vmatmul.mubr.bf16.gmra.mrb[0].mxu0 %v2360
    %v2962 = vpop.f32.mrb[0].mxu0
    %v2963 = vadd.f32 %v2738, %v2962
    %v2964 = vpop.f32.mrb[0].mxu0
    %v2965 = vpop.f32.mrb[0].mxu0
    %v2966 = vadd.f32 %v2741, %v2965
    %v2967 = vpop.f32.mrb[0].mxu0
    %2968 = vmatprep.mubr.bf16.mxu0 0
    %2969 = vmatmul.mubr.bf16.gmra.mrb[0].mxu0 %v2363
    %v2970 = vpop.f32.mrb[0].mxu0
    %v2971 = vadd.f32 %v2746, %v2970
    %v2972 = vpop.f32.mrb[0].mxu0
    %v2973 = vpop.f32.mrb[0].mxu0
    %v2974 = vadd.f32 %v2749, %v2973
    %v2975 = vpop.f32.mrb[0].mxu0
    %2976 = vmatprep.mubr.bf16.mxu0 0
    %2977 = vmatmul.mubr.bf16.gmra.mrb[0].mxu0 %v2366
    %v2978 = vpop.f32.mrb[0].mxu0
    %v2979 = vadd.f32 %v2754, %v2978
    %v2980 = vpop.f32.mrb[0].mxu0
    %v2981 = vpop.f32.mrb[0].mxu0
    %v2982 = vadd.f32 %v2757, %v2981
    %v2983 = vpop.f32.mrb[0].mxu0
    %2984 = vmatprep.mubr.bf16.mxu0 0
    %2985 = vmatmul.mubr.bf16.gmra.mrb[0].mxu0 %v2369
    %v2986 = vpop.f32.mrb[0].mxu0
    %v2987 = vadd.f32 %v2762, %v2986
    %v2988 = vpop.f32.mrb[0].mxu0
    %v2989 = vpop.f32.mrb[0].mxu0
    %v2990 = vadd.f32 %v2765, %v2989
    %v2991 = vpop.f32.mrb[0].mxu0
    %2992 = vmatprep.mubr.bf16.mxu0 0
    %2993 = vmatmul.mubr.bf16.gmra.mrb[0].mxu0 %v2372
    %v2994 = vpop.f32.mrb[0].mxu0
    %v2995 = vadd.f32 %v2770, %v2994
    %v2996 = vpop.f32.mrb[0].mxu0
    %v2997 = vpop.f32.mrb[0].mxu0
    %v2998 = vadd.f32 %v2773, %v2997
    %v2999 = vpop.f32.mrb[0].mxu0
    %3000 = vmatprep.mubr.bf16.mxu0 0
    %3001 = vmatmul.mubr.bf16.gmra.mrb[0].mxu0 %v2375
    %v3002 = vpop.f32.mrb[0].mxu0
    %v3003 = vadd.f32 %v2778, %v3002
    %v3004 = vpop.f32.mrb[0].mxu0
    %v3005 = vpop.f32.mrb[0].mxu0
    %v3006 = vadd.f32 %v2781, %v3005
    %v3007 = vpop.f32.mrb[0].mxu0
    %3008 = vmatprep.mubr.bf16.mxu0 0
    %3009 = vmatmul.mubr.bf16.gmra.mrb[0].mxu0 %v2378
    %v3010 = vpop.f32.mrb[0].mxu0
    %v3011 = vadd.f32 %v2786, %v3010
    %v3012 = vpop.f32.mrb[0].mxu0
    %v3013 = vpop.f32.mrb[0].mxu0
    %v3014 = vadd.f32 %v2789, %v3013
    %v3015 = vpop.f32.mrb[0].mxu0
    %3016 = vmatprep.mubr.bf16.mxu0 0
    %3017 = vmatmul.mubr.bf16.gmra.mrb[0].mxu0 %v2381
    %v3018 = vpop.f32.mrb[0].mxu0
    %v3019 = vadd.f32 %v2794, %v3018
    %v3020 = vpop.f32.mrb[0].mxu0
    %v3021 = vpop.f32.mrb[0].mxu0
    %v3022 = vadd.f32 %v2797, %v3021
    %v3023 = vpop.f32.mrb[0].mxu0
    %3024 = vdwg.mxu0
    %vm3025 = vcmp.ge.f32.partialorder %v2835, 0.0
    %vm3026 = vcmp.ge.f32.partialorder %v2838, 0.0
    %vm3027 = vcmp.ge.f32.partialorder %v2843, 0.0
    %vm3028 = vcmp.ge.f32.partialorder %v2846, 0.0
    %vm3029 = vcmp.ge.f32.partialorder %v2851, 0.0
    %vm3030 = vcmp.ge.f32.partialorder %v2854, 0.0
    %vm3031 = vcmp.ge.f32.partialorder %v2859, 0.0
    %vm3032 = vcmp.ge.f32.partialorder %v2862, 0.0
    %vm3033 = vcmp.ge.f32.partialorder %v2867, 0.0
    %vm3034 = vcmp.ge.f32.partialorder %v2870, 0.0
    %vm3035 = vcmp.ge.f32.partialorder %v2875, 0.0
    %vm3036 = vcmp.ge.f32.partialorder %v2878, 0.0
    %vm3037 = vcmp.ge.f32.partialorder %v2883, 0.0
    %vm3038 = vcmp.ge.f32.partialorder %v2886, 0.0
    %vm3039 = vcmp.ge.f32.partialorder %v2891, 0.0
    %vm3040 = vcmp.ge.f32.partialorder %v2894, 0.0
    %vm3041 = vcmp.ge.f32.partialorder %v2899, 0.0
    %vm3042 = vcmp.ge.f32.partialorder %v2902, 0.0
    %vm3043 = vcmp.ge.f32.partialorder %v2907, 0.0
    %vm3044 = vcmp.ge.f32.partialorder %v2910, 0.0
    %vm3045 = vcmp.ge.f32.partialorder %v2915, 0.0
    %vm3046 = vcmp.ge.f32.partialorder %v2918, 0.0
    %vm3047 = vcmp.ge.f32.partialorder %v2923, 0.0
    %vm3048 = vcmp.ge.f32.partialorder %v2926, 0.0
    %vm3049 = vcmp.ge.f32.partialorder %v2931, 0.0
    %vm3050 = vcmp.ge.f32.partialorder %v2934, 0.0
    %vm3051 = vcmp.ge.f32.partialorder %v2939, 0.0
    %vm3052 = vcmp.ge.f32.partialorder %v2942, 0.0
    %vm3053 = vcmp.ge.f32.partialorder %v2947, 0.0
    %vm3054 = vcmp.ge.f32.partialorder %v2950, 0.0
    %vm3055 = vcmp.ge.f32.partialorder %v2955, 0.0
    %vm3056 = vcmp.ge.f32.partialorder %v2958, 0.0
    %vm3057 = vcmp.ge.f32.partialorder %v2963, 0.0
    %vm3058 = vcmp.ge.f32.partialorder %v2966, 0.0
    %vm3059 = vcmp.ge.f32.partialorder %v2971, 0.0
    %vm3060 = vcmp.ge.f32.partialorder %v2974, 0.0
    %vm3061 = vcmp.ge.f32.partialorder %v2979, 0.0
    %vm3062 = vcmp.ge.f32.partialorder %v2982, 0.0
    %vm3063 = vcmp.ge.f32.partialorder %v2987, 0.0
    %vm3064 = vcmp.ge.f32.partialorder %v2990, 0.0
    %vm3065 = vcmp.ge.f32.partialorder %v2995, 0.0
    %vm3066 = vcmp.ge.f32.partialorder %v2998, 0.0
    %vm3067 = vcmp.ge.f32.partialorder %v3003, 0.0
    %vm3068 = vcmp.ge.f32.partialorder %v3006, 0.0
    %vm3069 = vcmp.ge.f32.partialorder %v3011, 0.0
    %vm3070 = vcmp.ge.f32.partialorder %v3014, 0.0
    %vm3071 = vcmp.ge.f32.partialorder %v3019, 0.0
    %vm3072 = vcmp.ge.f32.partialorder %v3022, 0.0
    %v3073 = vmul.f32 %v2835, 0.2
    %v3074 = vmul.f32 %v2838, 0.2
    %v3075 = vmul.f32 %v2843, 0.2
    %v3076 = vmul.f32 %v2846, 0.2
    %v3077 = vmul.f32 %v2851, 0.2
    %v3078 = vmul.f32 %v2854, 0.2
    %v3079 = vmul.f32 %v2859, 0.2
    %v3080 = vmul.f32 %v2862, 0.2
    %v3081 = vmul.f32 %v2867, 0.2
    %v3082 = vmul.f32 %v2870, 0.2
    %v3083 = vmul.f32 %v2875, 0.2
    %v3084 = vmul.f32 %v2878, 0.2
    %v3085 = vmul.f32 %v2883, 0.2
    %v3086 = vmul.f32 %v2886, 0.2
    %v3087 = vmul.f32 %v2891, 0.2
    %v3088 = vmul.f32 %v2894, 0.2
    %v3089 = vmul.f32 %v2899, 0.2
    %v3090 = vmul.f32 %v2902, 0.2
    %v3091 = vmul.f32 %v2907, 0.2
    %v3092 = vmul.f32 %v2910, 0.2
    %v3093 = vmul.f32 %v2915, 0.2
    %v3094 = vmul.f32 %v2918, 0.2
    %v3095 = vmul.f32 %v2923, 0.2
    %v3096 = vmul.f32 %v2926, 0.2
    %v3097 = vmul.f32 %v2931, 0.2
    %v3098 = vmul.f32 %v2934, 0.2
    %v3099 = vmul.f32 %v2939, 0.2
    %v3100 = vmul.f32 %v2942, 0.2
    %v3101 = vmul.f32 %v2947, 0.2
    %v3102 = vmul.f32 %v2950, 0.2
    %v3103 = vmul.f32 %v2955, 0.2
    %v3104 = vmul.f32 %v2958, 0.2
    %v3105 = vmul.f32 %v2963, 0.2
    %v3106 = vmul.f32 %v2966, 0.2
    %v3107 = vmul.f32 %v2971, 0.2
    %v3108 = vmul.f32 %v2974, 0.2
    %v3109 = vmul.f32 %v2979, 0.2
    %v3110 = vmul.f32 %v2982, 0.2
    %v3111 = vmul.f32 %v2987, 0.2
    %v3112 = vmul.f32 %v2990, 0.2
    %v3113 = vmul.f32 %v2995, 0.2
    %v3114 = vmul.f32 %v2998, 0.2
    %v3115 = vmul.f32 %v3003, 0.2
    %v3116 = vmul.f32 %v3006, 0.2
    %v3117 = vmul.f32 %v3011, 0.2
    %v3118 = vmul.f32 %v3014, 0.2
    %v3119 = vmul.f32 %v3019, 0.2
    %v3120 = vmul.f32 %v3022, 0.2
    %v3121 = vsel %vm3025, %v2835, %v3073
    %v3122 = vsel %vm3026, %v2838, %v3074
    %v3123 = vsel %vm3027, %v2843, %v3075
    %v3124 = vsel %vm3028, %v2846, %v3076
    %v3125 = vsel %vm3029, %v2851, %v3077
    %v3126 = vsel %vm3030, %v2854, %v3078
    %v3127 = vsel %vm3031, %v2859, %v3079
    %v3128 = vsel %vm3032, %v2862, %v3080
    %v3129 = vsel %vm3033, %v2867, %v3081
    %v3130 = vsel %vm3034, %v2870, %v3082
    %v3131 = vsel %vm3035, %v2875, %v3083
    %v3132 = vsel %vm3036, %v2878, %v3084
    %v3133 = vsel %vm3037, %v2883, %v3085
    %v3134 = vsel %vm3038, %v2886, %v3086
    %v3135 = vsel %vm3039, %v2891, %v3087
    %v3136 = vsel %vm3040, %v2894, %v3088
    %v3137 = vsel %vm3041, %v2899, %v3089
    %v3138 = vsel %vm3042, %v2902, %v3090
    %v3139 = vsel %vm3043, %v2907, %v3091
    %v3140 = vsel %vm3044, %v2910, %v3092
    %v3141 = vsel %vm3045, %v2915, %v3093
    %v3142 = vsel %vm3046, %v2918, %v3094
    %v3143 = vsel %vm3047, %v2923, %v3095
    %v3144 = vsel %vm3048, %v2926, %v3096
    %v3145 = vsel %vm3049, %v2931, %v3097
    %v3146 = vsel %vm3050, %v2934, %v3098
    %v3147 = vsel %vm3051, %v2939, %v3099
    %v3148 = vsel %vm3052, %v2942, %v3100
    %v3149 = vsel %vm3053, %v2947, %v3101
    %v3150 = vsel %vm3054, %v2950, %v3102
    %v3151 = vsel %vm3055, %v2955, %v3103
    %v3152 = vsel %vm3056, %v2958, %v3104
    %v3153 = vsel %vm3057, %v2963, %v3105
    %v3154 = vsel %vm3058, %v2966, %v3106
    %v3155 = vsel %vm3059, %v2971, %v3107
    %v3156 = vsel %vm3060, %v2974, %v3108
    %v3157 = vsel %vm3061, %v2979, %v3109
    %v3158 = vsel %vm3062, %v2982, %v3110
    %v3159 = vsel %vm3063, %v2987, %v3111
    %v3160 = vsel %vm3064, %v2990, %v3112
    %v3161 = vsel %vm3065, %v2995, %v3113
    %v3162 = vsel %vm3066, %v2998, %v3114
    %v3163 = vsel %vm3067, %v3003, %v3115
    %v3164 = vsel %vm3068, %v3006, %v3116
    %v3165 = vsel %vm3069, %v3011, %v3117
    %v3166 = vsel %vm3070, %v3014, %v3118
    %v3167 = vsel %vm3071, %v3019, %v3119
    %v3168 = vsel %vm3072, %v3022, %v3120
    %v3169 = vpack.c.bf16 %v3122, %v3121
    %v3170 = vpack.c.bf16 %v3124, %v3123
    %v3171 = vpack.c.bf16 %v3126, %v3125
    %v3172 = vpack.c.bf16 %v3128, %v3127
    %v3173 = vpack.c.bf16 %v3130, %v3129
    %v3174 = vpack.c.bf16 %v3132, %v3131
    %v3175 = vpack.c.bf16 %v3134, %v3133
    %v3176 = vpack.c.bf16 %v3136, %v3135
    %v3177 = vpack.c.bf16 %v3138, %v3137
    %v3178 = vpack.c.bf16 %v3140, %v3139
    %v3179 = vpack.c.bf16 %v3142, %v3141
    %v3180 = vpack.c.bf16 %v3144, %v3143
    %v3181 = vpack.c.bf16 %v3146, %v3145
    %v3182 = vpack.c.bf16 %v3148, %v3147
    %v3183 = vpack.c.bf16 %v3150, %v3149
    %v3184 = vpack.c.bf16 %v3152, %v3151
    %v3185 = vpack.c.bf16 %v3154, %v3153
    %v3186 = vpack.c.bf16 %v3156, %v3155
    %v3187 = vpack.c.bf16 %v3158, %v3157
    %v3188 = vpack.c.bf16 %v3160, %v3159
    %v3189 = vpack.c.bf16 %v3162, %v3161
    %v3190 = vpack.c.bf16 %v3164, %v3163
    %v3191 = vpack.c.bf16 %v3166, %v3165
    %v3192 = vpack.c.bf16 %v3168, %v3167
    %v3217 = vunpack.c.l.b16 %v3169
    %v3218 = vunpack.c.h.b16 %v3169
    %v3219 = vunpack.c.l.b16 %v3170
    %v3220 = vunpack.c.h.b16 %v3170
    %v3221 = vunpack.c.l.b16 %v3171
    %v3222 = vunpack.c.h.b16 %v3171
    %v3223 = vunpack.c.l.b16 %v3172
    %v3224 = vunpack.c.h.b16 %v3172
    %v3225 = vunpack.c.l.b16 %v3173
    %v3226 = vunpack.c.h.b16 %v3173
    %v3227 = vunpack.c.l.b16 %v3174
    %v3228 = vunpack.c.h.b16 %v3174
    %v3229 = vunpack.c.l.b16 %v3175
    %v3230 = vunpack.c.h.b16 %v3175
    %v3231 = vunpack.c.l.b16 %v3176
    %v3232 = vunpack.c.h.b16 %v3176
    %v3233 = vunpack.c.l.b16 %v3177
    %v3234 = vunpack.c.h.b16 %v3177
    %v3235 = vunpack.c.l.b16 %v3178
    %v3236 = vunpack.c.h.b16 %v3178
    %v3237 = vunpack.c.l.b16 %v3179
    %v3238 = vunpack.c.h.b16 %v3179
    %v3239 = vunpack.c.l.b16 %v3180
    %v3240 = vunpack.c.h.b16 %v3180
    %v3241 = vunpack.c.l.b16 %v3181
    %v3242 = vunpack.c.h.b16 %v3181
    %v3243 = vunpack.c.l.b16 %v3182
    %v3244 = vunpack.c.h.b16 %v3182
    %v3245 = vunpack.c.l.b16 %v3183
    %v3246 = vunpack.c.h.b16 %v3183
    %v3247 = vunpack.c.l.b16 %v3184
    %v3248 = vunpack.c.h.b16 %v3184
    %v3249 = vunpack.c.l.b16 %v3185
    %v3250 = vunpack.c.h.b16 %v3185
    %v3251 = vunpack.c.l.b16 %v3186
    %v3252 = vunpack.c.h.b16 %v3186
    %v3253 = vunpack.c.l.b16 %v3187
    %v3254 = vunpack.c.h.b16 %v3187
    %v3255 = vunpack.c.l.b16 %v3188
    %v3256 = vunpack.c.h.b16 %v3188
    %v3257 = vunpack.c.l.b16 %v3189
    %v3258 = vunpack.c.h.b16 %v3189
    %v3259 = vunpack.c.l.b16 %v3190
    %v3260 = vunpack.c.h.b16 %v3190
    %v3261 = vunpack.c.l.b16 %v3191
    %v3262 = vunpack.c.h.b16 %v3191
    %v3263 = vunpack.c.l.b16 %v3192
    %v3264 = vunpack.c.h.b16 %v3192
    %v3265 = vpack.c.b16 %v3217, %v3217
    %v3266 = vpack.c.b16 %v3218, %v3218
    %v3267 = vpack.c.b16 %v3219, %v3219
    %v3268 = vpack.c.b16 %v3220, %v3220
    %v3269 = vpack.c.b16 %v3221, %v3221
    %v3270 = vpack.c.b16 %v3222, %v3222
    %v3271 = vpack.c.b16 %v3223, %v3223
    %v3272 = vpack.c.b16 %v3224, %v3224
    %v3273 = vpack.c.b16 %v3225, %v3225
    %v3274 = vpack.c.b16 %v3226, %v3226
    %v3275 = vpack.c.b16 %v3227, %v3227
    %v3276 = vpack.c.b16 %v3228, %v3228
    %v3277 = vpack.c.b16 %v3229, %v3229
    %v3278 = vpack.c.b16 %v3230, %v3230
    %v3279 = vpack.c.b16 %v3231, %v3231
    %v3280 = vpack.c.b16 %v3232, %v3232
    %v3281 = vpack.c.b16 %v3233, %v3233
    %v3282 = vpack.c.b16 %v3234, %v3234
    %v3283 = vpack.c.b16 %v3235, %v3235
    %v3284 = vpack.c.b16 %v3236, %v3236
    %v3285 = vpack.c.b16 %v3237, %v3237
    %v3286 = vpack.c.b16 %v3238, %v3238
    %v3287 = vpack.c.b16 %v3239, %v3239
    %v3288 = vpack.c.b16 %v3240, %v3240
    %v3289 = vpack.c.b16 %v3241, %v3241
    %v3290 = vpack.c.b16 %v3242, %v3242
    %v3291 = vpack.c.b16 %v3243, %v3243
    %v3292 = vpack.c.b16 %v3244, %v3244
    %v3293 = vpack.c.b16 %v3245, %v3245
    %v3294 = vpack.c.b16 %v3246, %v3246
    %v3295 = vpack.c.b16 %v3247, %v3247
    %v3296 = vpack.c.b16 %v3248, %v3248
    %v3297 = vpack.c.b16 %v3249, %v3249
    %v3298 = vpack.c.b16 %v3250, %v3250
    %v3299 = vpack.c.b16 %v3251, %v3251
    %v3300 = vpack.c.b16 %v3252, %v3252
    %v3301 = vpack.c.b16 %v3253, %v3253
    %v3302 = vpack.c.b16 %v3254, %v3254
    %v3303 = vpack.c.b16 %v3255, %v3255
    %v3304 = vpack.c.b16 %v3256, %v3256
    %v3305 = vpack.c.b16 %v3257, %v3257
    %v3306 = vpack.c.b16 %v3258, %v3258
    %v3307 = vpack.c.b16 %v3259, %v3259
    %v3308 = vpack.c.b16 %v3260, %v3260
    %v3309 = vpack.c.b16 %v3261, %v3261
    %v3310 = vpack.c.b16 %v3262, %v3262
    %v3311 = vpack.c.b16 %v3263, %v3263
    %v3312 = vpack.c.b16 %v3264, %v3264
    %3361 = vst [vmem:[%s2] sm:$0xf] %v3265
    %3362 = vst [vmem:[%s2 + $0x4] sm:$0xf] %v3266
    %3363 = vst [vmem:[%s2 + $0x8] sm:$0xf] %v3267
    %3364 = vst [vmem:[%s2 + $0xc] sm:$0xf] %v3268
    %3365 = vst [vmem:[%s2 + $0x10] sm:$0xf] %v3269
    %3366 = vst [vmem:[%s2 + $0x14] sm:$0xf] %v3270
    %3367 = vst [vmem:[%s2 + $0x18] sm:$0xf] %v3271
    %3368 = vst [vmem:[%s2 + $0x1c] sm:$0xf] %v3272
    %3369 = vst [vmem:[%s2 + $0x20] sm:$0xf] %v3273
    %3370 = vst [vmem:[%s2 + $0x24] sm:$0xf] %v3274
    %3371 = vst [vmem:[%s2 + $0x28] sm:$0xf] %v3275
    %3372 = vst [vmem:[%s2 + $0x2c] sm:$0xf] %v3276
    %3373 = vst [vmem:[%s2 + $0x30] sm:$0xf] %v3277
    %3374 = vst [vmem:[%s2 + $0x34] sm:$0xf] %v3278
    %3375 = vst [vmem:[%s2 + $0x38] sm:$0xf] %v3279
    %3376 = vst [vmem:[%s2 + $0x3c] sm:$0xf] %v3280
    %3377 = vst [vmem:[%s2 + $0x40] sm:$0xf] %v3281
    %3378 = vst [vmem:[%s2 + $0x44] sm:$0xf] %v3282
    %3379 = vst [vmem:[%s2 + $0x48] sm:$0xf] %v3283
    %3380 = vst [vmem:[%s2 + $0x4c] sm:$0xf] %v3284
    %3381 = vst [vmem:[%s2 + $0x50] sm:$0xf] %v3285
    %3382 = vst [vmem:[%s2 + $0x54] sm:$0xf] %v3286
    %3383 = vst [vmem:[%s2 + $0x58] sm:$0xf] %v3287
    %3384 = vst [vmem:[%s2 + $0x5c] sm:$0xf] %v3288
    %3385 = vst [vmem:[%s2 + $0x60] sm:$0xf] %v3289
    %3386 = vst [vmem:[%s2 + $0x64] sm:$0xf] %v3290
    %3387 = vst [vmem:[%s2 + $0x68] sm:$0xf] %v3291
    %3388 = vst [vmem:[%s2 + $0x6c] sm:$0xf] %v3292
    %3389 = vst [vmem:[%s2 + $0x70] sm:$0xf] %v3293
    %3390 = vst [vmem:[%s2 + $0x74] sm:$0xf] %v3294
    %3391 = vst [vmem:[%s2 + $0x78] sm:$0xf] %v3295
    %3392 = vst [vmem:[%s2 + $0x7c] sm:$0xf] %v3296
    %3393 = vst [vmem:[%s2 + $0x80] sm:$0xf] %v3297
    %3394 = vst [vmem:[%s2 + $0x84] sm:$0xf] %v3298
    %3395 = vst [vmem:[%s2 + $0x88] sm:$0xf] %v3299
    %3396 = vst [vmem:[%s2 + $0x8c] sm:$0xf] %v3300
    %3397 = vst [vmem:[%s2 + $0x90] sm:$0xf] %v3301
    %3398 = vst [vmem:[%s2 + $0x94] sm:$0xf] %v3302
    %3399 = vst [vmem:[%s2 + $0x98] sm:$0xf] %v3303
    %3400 = vst [vmem:[%s2 + $0x9c] sm:$0xf] %v3304
    %3401 = vst [vmem:[%s2 + $0xa0] sm:$0xf] %v3305
    %3402 = vst [vmem:[%s2 + $0xa4] sm:$0xf] %v3306
    %3403 = vst [vmem:[%s2 + $0xa8] sm:$0xf] %v3307
    %3404 = vst [vmem:[%s2 + $0xac] sm:$0xf] %v3308
    %3405 = vst [vmem:[%s2 + $0xb0] sm:$0xf] %v3309
    %3406 = vst [vmem:[%s2 + $0xb4] sm:$0xf] %v3310
    %3407 = vst [vmem:[%s2 + $0xb8] sm:$0xf] %v3311
    %3408 = vst [vmem:[%s2 + $0xbc] sm:$0xf] %v3312
    // Predicated region
    $region47: #{pose_encoder_forward.7} parent=1 // pred_check
      _
    $region48: #{pose_encoder_forward.7} parent=1 // pred_check_branch
      %3410 = sbr.rel (0) target = $region50
    $region49: #{pose_encoder_forward.7} parent=1 // pred_region
      _
    $region50: #{pose_encoder_forward.7} parent=1 // pred_fallthru
      _
    // Predicated region
    $region51: #{pose_encoder_forward.7} parent=1 // pred_check
      _
    $region52: #{pose_encoder_forward.7} parent=1 // pred_check_branch
      %3412 = sbr.rel (0) target = $region54
    $region53: #{pose_encoder_forward.7} parent=1 // pred_region
      _
    $region54: #{pose_encoder_forward.7} parent=1 // pred_fallthru
      _
    %3413 = vsyncpa [#allocation5], 1
  %3414 = vsyncmov [#allocation3]
  %s3415 = vpop.sfrf %3414
  %p3416 = scmp.eq.s32.totalorder %s3415, 0
  %p3417 = pneg %p3416
  %3419 = shalt.err (%p3417)

// kernel: pose_encoder_forward.11
$region0: #{pose_encoder_forward.11}
  #allocation0 [shape = 'u32[]', space=smem, size = 0x4, offset = 0x4, fixed_abs, tag = 'smem constant byte address 0x4 - core index']
  #allocation1 [shape = 'u32[144,128]{1,0:T(1,128)}', space=vmem, size = 0x12000, scoped, tag = 'internal scratch']
  #allocation2 [shape = 'bf16[48,512]{1,0:T(16,128)(2,1)}', space=vmem, size = 0xc000, scoped, tag = 'scratch operand']
  #allocation3 [shape = 's32[1]{0}', space=sflag, size = 0x4, scoped, tag = 'scratch operand']
  #allocation4 [shape = 's32[]', space=sflag, size = 0x4, offset = 0, fixed_abs, tag = 'sflag constant byte address 0x0 - dummy sync flag']
  %s0 = inlined_call_operand.vmem [shape: bf16[48,512], index: 0, kind: input, shape index: {}]
  %s1 = inlined_call_operand.vmem [shape: bf16[2048,256], index: 1, kind: input, shape index: {}]
  %s2 = inlined_call_operand.vmem [shape: bf16[32,256], index: 2, kind: output, shape index: {}]
  %s3 = sld [smem:[#allocation0]]
  $region51: #{pose_encoder_forward.11} parent=0
    _
  %s5 = ssub.s32 1, %s3
  %s6 = scalar_select 0, %s5, %s3
  // Predicated region
  $region2: #{pose_encoder_forward.11} parent=0 // pred_check
    _
  $region3: #{pose_encoder_forward.11} parent=0 // pred_check_branch
    %8 = sbr.rel (0) target = $region5
  $region4: #{pose_encoder_forward.11} parent=0 // pred_region
    _
  $region5: #{pose_encoder_forward.11} parent=0 // pred_fallthru
    _
  %s9 = smul.u32 0, 32
  %s10 = sshra.s32 %s9, 3
  %s11 = sand.u32 %s9, 7
  %s12 = smul.u32 %s10, 4
  %s13 = smul.addr %s12, 4
  %s14 = scalar_lea.vmem %s0, %s13
  %p16 = scmp.lt.u32.totalorder 4, 8
  %p17 = pneg %p16
  // Predicated region
  $region6: #{pose_encoder_forward.11} parent=0 // pred_check
    _
  $region7: #{pose_encoder_forward.11} parent=0 // pred_check_branch
    %19 = sbr.rel (%p16) target = $region9
  $region8: #{pose_encoder_forward.11} parent=0 // pred_region
    %s80 = sand.u32 4, 7
    %p81 = scmp.eq.s32.totalorder %s80, 0
    %p82 = pneg %p81
    // Predicated region
    $region21: #{pose_encoder_forward.11} parent=8 // pred_check
      _
    $region22: #{pose_encoder_forward.11} parent=8 // pred_check_branch
      %84 = sbr.rel (%p81) target = $region24
    $region23: #{pose_encoder_forward.11} parent=8 // pred_region
      %s85 = sand.u32 4, 7
      %s86 = ssub.s32 4, %s85
      %s87 = scalar_lea.vmem %s14, %s86
      %s88 = ssub.s32 4, %s85
      %s89 = scalar_lea.vmem [#allocation2], %s88
      loop: start=0, step=1, limit=1
      $region25: #{pose_encoder_forward.11} parent=23 // loop_pre_header
        _
      $region26: #{pose_encoder_forward.11} parent=23 // loop_header
        %s91 = sphi 0, %s95
        %p92 = scmp.ge.s32.totalorder %s91, 1
        %s96 = sphi %s14, %s14
        %s97 = sphi [#allocation2], [#allocation2]
      $region27: #{pose_encoder_forward.11} parent=23 // loop_header_branch
        %94 = sbr.rel (%p92) target = $region31
      $region28: #{pose_encoder_forward.11} parent=23 // loop_body
        _
      $region29: #{pose_encoder_forward.11} parent=23 // loop_footer
        %s95 = sadd.s32 1, %s91
      $region30: #{pose_encoder_forward.11} parent=23 // loop_footer_branch
        %90 = sbr.rel target = $region26
      $region31: #{pose_encoder_forward.11} parent=23 // loop_exit
        _
      %s98 = sshllo.u32 0, %s85
      loop: start=0, step=1, limit=1
      $region32: #{pose_encoder_forward.11} parent=23 // loop_pre_header
        _
      $region33: #{pose_encoder_forward.11} parent=23 // loop_header
        %s100 = sphi 0, %s104
        %p101 = scmp.ge.s32.totalorder %s100, 1
        %s105 = sphi %s87, %s87
        %s106 = sphi %s89, %s89
      $region34: #{pose_encoder_forward.11} parent=23 // loop_header_branch
        %103 = sbr.rel (%p101) target = $region38
      $region35: #{pose_encoder_forward.11} parent=23 // loop_body
        %v107 = vld [vmem:[%s105] sm:%s98]
        %108 = vst [vmem:[%s106] sm:%s98] %v107
        %v109 = vld [vmem:[%s105 + $0x10] sm:%s98]
        %110 = vst [vmem:[%s106 + $0x4] sm:%s98] %v109
        %v111 = vld [vmem:[%s105 + $0x4] sm:%s98]
        %112 = vst [vmem:[%s106 + $0x8] sm:%s98] %v111
        %v113 = vld [vmem:[%s105 + $0x14] sm:%s98]
        %114 = vst [vmem:[%s106 + $0xc] sm:%s98] %v113
        %v115 = vld [vmem:[%s105 + $0x8] sm:%s98]
        %116 = vst [vmem:[%s106 + $0x10] sm:%s98] %v115
        %v117 = vld [vmem:[%s105 + $0x18] sm:%s98]
        %118 = vst [vmem:[%s106 + $0x14] sm:%s98] %v117
        %v119 = vld [vmem:[%s105 + $0xc] sm:%s98]
        %120 = vst [vmem:[%s106 + $0x18] sm:%s98] %v119
        %v121 = vld [vmem:[%s105 + $0x1c] sm:%s98]
        %122 = vst [vmem:[%s106 + $0x1c] sm:%s98] %v121
        %v123 = vld [vmem:[%s105 + $0x20] sm:%s98]
        %124 = vst [vmem:[%s106 + $0x20] sm:%s98] %v123
        %v125 = vld [vmem:[%s105 + $0x30] sm:%s98]
        %126 = vst [vmem:[%s106 + $0x24] sm:%s98] %v125
        %v127 = vld [vmem:[%s105 + $0x24] sm:%s98]
        %128 = vst [vmem:[%s106 + $0x28] sm:%s98] %v127
        %v129 = vld [vmem:[%s105 + $0x34] sm:%s98]
        %130 = vst [vmem:[%s106 + $0x2c] sm:%s98] %v129
        %v131 = vld [vmem:[%s105 + $0x28] sm:%s98]
        %132 = vst [vmem:[%s106 + $0x30] sm:%s98] %v131
        %v133 = vld [vmem:[%s105 + $0x38] sm:%s98]
        %134 = vst [vmem:[%s106 + $0x34] sm:%s98] %v133
        %v135 = vld [vmem:[%s105 + $0x2c] sm:%s98]
        %136 = vst [vmem:[%s106 + $0x38] sm:%s98] %v135
        %v137 = vld [vmem:[%s105 + $0x3c] sm:%s98]
        %138 = vst [vmem:[%s106 + $0x3c] sm:%s98] %v137
        %v139 = vld [vmem:[%s105 + $0x40] sm:%s98]
        %140 = vst [vmem:[%s106 + $0x40] sm:%s98] %v139
        %v141 = vld [vmem:[%s105 + $0x50] sm:%s98]
        %142 = vst [vmem:[%s106 + $0x44] sm:%s98] %v141
        %v143 = vld [vmem:[%s105 + $0x44] sm:%s98]
        %144 = vst [vmem:[%s106 + $0x48] sm:%s98] %v143
        %v145 = vld [vmem:[%s105 + $0x54] sm:%s98]
        %146 = vst [vmem:[%s106 + $0x4c] sm:%s98] %v145
        %v147 = vld [vmem:[%s105 + $0x48] sm:%s98]
        %148 = vst [vmem:[%s106 + $0x50] sm:%s98] %v147
        %v149 = vld [vmem:[%s105 + $0x58] sm:%s98]
        %150 = vst [vmem:[%s106 + $0x54] sm:%s98] %v149
        %v151 = vld [vmem:[%s105 + $0x4c] sm:%s98]
        %152 = vst [vmem:[%s106 + $0x58] sm:%s98] %v151
        %v153 = vld [vmem:[%s105 + $0x5c] sm:%s98]
        %154 = vst [vmem:[%s106 + $0x5c] sm:%s98] %v153
      $region36: #{pose_encoder_forward.11} parent=23 // loop_footer
        %s104 = sadd.s32 1, %s100
      $region37: #{pose_encoder_forward.11} parent=23 // loop_footer_branch
        %99 = sbr.rel target = $region33
      $region38: #{pose_encoder_forward.11} parent=23 // loop_exit
        _
    $region24: #{pose_encoder_forward.11} parent=8 // pred_fallthru
      _
  $region9: #{pose_encoder_forward.11} parent=0 // pred_fallthru
    _
  // Predicated region
  $region10: #{pose_encoder_forward.11} parent=0 // pred_check
    %p20 = pneg %p16
  $region11: #{pose_encoder_forward.11} parent=0 // pred_check_branch
    %22 = sbr.rel (%p20) target = $region13
  $region12: #{pose_encoder_forward.11} parent=0 // pred_region
    %s23 = sshllo.u32 0, 4
    loop: start=0, step=1, limit=1
    $region14: #{pose_encoder_forward.11} parent=12 // loop_pre_header
      _
    $region15: #{pose_encoder_forward.11} parent=12 // loop_header
      %s25 = sphi 0, %s29
      %p26 = scmp.ge.s32.totalorder %s25, 1
      %s30 = sphi %s14, %s14
      %s31 = sphi [#allocation2], [#allocation2]
    $region16: #{pose_encoder_forward.11} parent=12 // loop_header_branch
      %28 = sbr.rel (%p26) target = $region20
    $region17: #{pose_encoder_forward.11} parent=12 // loop_body
      %v32 = vld [vmem:[%s30] sm:%s23]
      %33 = vst [vmem:[%s31] sm:%s23] %v32
      %v34 = vld [vmem:[%s30 + $0x10] sm:%s23]
      %35 = vst [vmem:[%s31 + $0x4] sm:%s23] %v34
      %v36 = vld [vmem:[%s30 + $0x4] sm:%s23]
      %37 = vst [vmem:[%s31 + $0x8] sm:%s23] %v36
      %v38 = vld [vmem:[%s30 + $0x14] sm:%s23]
      %39 = vst [vmem:[%s31 + $0xc] sm:%s23] %v38
      %v40 = vld [vmem:[%s30 + $0x8] sm:%s23]
      %41 = vst [vmem:[%s31 + $0x10] sm:%s23] %v40
      %v42 = vld [vmem:[%s30 + $0x18] sm:%s23]
      %43 = vst [vmem:[%s31 + $0x14] sm:%s23] %v42
      %v44 = vld [vmem:[%s30 + $0xc] sm:%s23]
      %45 = vst [vmem:[%s31 + $0x18] sm:%s23] %v44
      %v46 = vld [vmem:[%s30 + $0x1c] sm:%s23]
      %47 = vst [vmem:[%s31 + $0x1c] sm:%s23] %v46
      %v48 = vld [vmem:[%s30 + $0x20] sm:%s23]
      %49 = vst [vmem:[%s31 + $0x20] sm:%s23] %v48
      %v50 = vld [vmem:[%s30 + $0x30] sm:%s23]
      %51 = vst [vmem:[%s31 + $0x24] sm:%s23] %v50
      %v52 = vld [vmem:[%s30 + $0x24] sm:%s23]
      %53 = vst [vmem:[%s31 + $0x28] sm:%s23] %v52
      %v54 = vld [vmem:[%s30 + $0x34] sm:%s23]
      %55 = vst [vmem:[%s31 + $0x2c] sm:%s23] %v54
      %v56 = vld [vmem:[%s30 + $0x28] sm:%s23]
      %57 = vst [vmem:[%s31 + $0x30] sm:%s23] %v56
      %v58 = vld [vmem:[%s30 + $0x38] sm:%s23]
      %59 = vst [vmem:[%s31 + $0x34] sm:%s23] %v58
      %v60 = vld [vmem:[%s30 + $0x2c] sm:%s23]
      %61 = vst [vmem:[%s31 + $0x38] sm:%s23] %v60
      %v62 = vld [vmem:[%s30 + $0x3c] sm:%s23]
      %63 = vst [vmem:[%s31 + $0x3c] sm:%s23] %v62
      %v64 = vld [vmem:[%s30 + $0x40] sm:%s23]
      %65 = vst [vmem:[%s31 + $0x40] sm:%s23] %v64
      %v66 = vld [vmem:[%s30 + $0x50] sm:%s23]
      %67 = vst [vmem:[%s31 + $0x44] sm:%s23] %v66
      %v68 = vld [vmem:[%s30 + $0x44] sm:%s23]
      %69 = vst [vmem:[%s31 + $0x48] sm:%s23] %v68
      %v70 = vld [vmem:[%s30 + $0x54] sm:%s23]
      %71 = vst [vmem:[%s31 + $0x4c] sm:%s23] %v70
      %v72 = vld [vmem:[%s30 + $0x48] sm:%s23]
      %73 = vst [vmem:[%s31 + $0x50] sm:%s23] %v72
      %v74 = vld [vmem:[%s30 + $0x58] sm:%s23]
      %75 = vst [vmem:[%s31 + $0x54] sm:%s23] %v74
      %v76 = vld [vmem:[%s30 + $0x4c] sm:%s23]
      %77 = vst [vmem:[%s31 + $0x58] sm:%s23] %v76
      %v78 = vld [vmem:[%s30 + $0x5c] sm:%s23]
      %79 = vst [vmem:[%s31 + $0x5c] sm:%s23] %v78
    $region18: #{pose_encoder_forward.11} parent=12 // loop_footer
      %s29 = sadd.s32 1, %s25
    $region19: #{pose_encoder_forward.11} parent=12 // loop_footer_branch
      %24 = sbr.rel target = $region15
    $region20: #{pose_encoder_forward.11} parent=12 // loop_exit
      _
  $region13: #{pose_encoder_forward.11} parent=0 // pred_fallthru
    _
  // Predicated region
  $region39: #{pose_encoder_forward.11} parent=0 // pred_check
    _
  $region40: #{pose_encoder_forward.11} parent=0 // pred_check_branch
    %157 = sbr.rel (0) target = $region42
  $region41: #{pose_encoder_forward.11} parent=0 // pred_region
    %158 = vsyncadd [#allocation3], 1536
  $region42: #{pose_encoder_forward.11} parent=0 // pred_fallthru
    _
  %s159 = smul.u32 4, 6
  %s160 = smul.u32 %s159, 4
  %s161 = sshll.u32 %s160, 4
  %162 = dma.done [#allocation3], %s161
  %v163 = vld [vmem:[#allocation2] sm:$0xff]
  %v164 = vld [vmem:[#allocation2 + $0x8] sm:$0xff]
  %v165 = vld [vmem:[#allocation2 + $0x10] sm:$0xff]
  %v166 = vld [vmem:[#allocation2 + $0x18] sm:$0xff]
  %v167 = vld [vmem:[#allocation2 + $0x20] sm:$0xff]
  %v168 = vld [vmem:[#allocation2 + $0x28] sm:$0xff]
  %v169 = vld [vmem:[#allocation2 + $0x30] sm:$0xff]
  %v170 = vld [vmem:[#allocation2 + $0x38] sm:$0xff]
  %v171 = vld [vmem:[#allocation2] sm:$0xff]
  %v172 = vld [vmem:[#allocation2 + $0x8] sm:$0xff]
  %v173 = vld [vmem:[#allocation2 + $0x10] sm:$0xff]
  %v174 = vld [vmem:[#allocation2 + $0x18] sm:$0xff]
  %v175 = vld [vmem:[#allocation2 + $0x20] sm:$0xff]
  %v176 = vld [vmem:[#allocation2 + $0x28] sm:$0xff]
  %v177 = vld [vmem:[#allocation2 + $0x30] sm:$0xff]
  %v178 = vld [vmem:[#allocation2 + $0x38] sm:$0xff]
  %v179 = vld [vmem:[#allocation2 + $0x40] sm:$0x1]
  %v180 = vld [vmem:[#allocation2 + $0x48] sm:$0x1]
  %v181 = vld [vmem:[#allocation2 + $0x50] sm:$0x1]
  %v182 = vld [vmem:[#allocation2 + $0x58] sm:$0x1]
  %v183 = vld [vmem:[#allocation2] sm:$0xf0]
  %v184 = vld [vmem:[#allocation2 + $0x8] sm:$0xf0]
  %v185 = vld [vmem:[#allocation2 + $0x10] sm:$0xf0]
  %v186 = vld [vmem:[#allocation2 + $0x18] sm:$0xf0]
  %v187 = vld [vmem:[#allocation2 + $0x40] sm:$0xf]
  %v188 = vld [vmem:[#allocation2 + $0x48] sm:$0xf]
  %v189 = vld [vmem:[#allocation2 + $0x50] sm:$0xf]
  %v190 = vld [vmem:[#allocation2 + $0x58] sm:$0xf]
  %v191 = vld [vmem:[#allocation2 + $0x40] sm:$0x1f]
  %v192 = vld [vmem:[#allocation2 + $0x48] sm:$0x1f]
  %v193 = vld [vmem:[#allocation2 + $0x50] sm:$0x1f]
  %v194 = vld [vmem:[#allocation2 + $0x58] sm:$0x1f]
  %vm195 = vsmask.f32 7424
  %v197 = vshrl.u32 %v171, 16
  %v199 = vshll.u32 %v171, 16
  %v201 = vrot.slane %v199, 1
  %v202 = vor.u32 %v197, %v201
  %v204 = vshll.u32 %v175, 16
  %v206 = vrot.slane %v204, 1
  %v207 = vsel %vm195, %v202, %v206
  %v209 = vshrl.u32 %v172, 16
  %v211 = vshll.u32 %v172, 16
  %v213 = vrot.slane %v211, 1
  %v214 = vor.u32 %v209, %v213
  %v216 = vshll.u32 %v176, 16
  %v218 = vrot.slane %v216, 1
  %v219 = vsel %vm195, %v214, %v218
  %v221 = vshrl.u32 %v173, 16
  %v223 = vshll.u32 %v173, 16
  %v225 = vrot.slane %v223, 1
  %v226 = vor.u32 %v221, %v225
  %v228 = vshll.u32 %v177, 16
  %v230 = vrot.slane %v228, 1
  %v231 = vsel %vm195, %v226, %v230
  %v233 = vshrl.u32 %v174, 16
  %v235 = vshll.u32 %v174, 16
  %v237 = vrot.slane %v235, 1
  %v238 = vor.u32 %v233, %v237
  %v240 = vshll.u32 %v178, 16
  %v242 = vrot.slane %v240, 1
  %v243 = vsel %vm195, %v238, %v242
  %v244 = vshrl.u32 %v175, 16
  %v246 = vor.u32 %v244, %v206
  %v248 = vshll.u32 %v179, 16
  %v250 = vrot.slane %v248, 1
  %v251 = vsel %vm195, %v246, %v250
  %v252 = vshrl.u32 %v176, 16
  %v254 = vor.u32 %v252, %v218
  %v256 = vshll.u32 %v180, 16
  %v258 = vrot.slane %v256, 1
  %v259 = vsel %vm195, %v254, %v258
  %v260 = vshrl.u32 %v177, 16
  %v262 = vor.u32 %v260, %v230
  %v264 = vshll.u32 %v181, 16
  %v266 = vrot.slane %v264, 1
  %v267 = vsel %vm195, %v262, %v266
  %v268 = vshrl.u32 %v178, 16
  %v270 = vor.u32 %v268, %v242
  %v272 = vshll.u32 %v182, 16
  %v274 = vrot.slane %v272, 1
  %v275 = vsel %vm195, %v270, %v274
  %vm296 = vcmask 1043456
  %v297 = vrot.slane %v183, 4
  %v298 = vrot.slane %v175, 4
  %v299 = vsel %vm296, %v297, %v298
  %v300 = vrot.slane %v184, 4
  %v301 = vrot.slane %v176, 4
  %v302 = vsel %vm296, %v300, %v301
  %v303 = vrot.slane %v185, 4
  %v304 = vrot.slane %v177, 4
  %v305 = vsel %vm296, %v303, %v304
  %v306 = vrot.slane %v186, 4
  %v307 = vrot.slane %v178, 4
  %v308 = vsel %vm296, %v306, %v307
  %v309 = vrot.slane %v187, 4
  %v310 = vsel %vm296, %v298, %v309
  %v311 = vrot.slane %v188, 4
  %v312 = vsel %vm296, %v301, %v311
  %v313 = vrot.slane %v189, 4
  %v314 = vsel %vm296, %v304, %v313
  %v315 = vrot.slane %v190, 4
  %v316 = vsel %vm296, %v307, %v315
  %vm325 = vsmask.f32 3328
  %v327 = vshrl.u32 %v183, 16
  %v329 = vrot.slane %v327, 4
  %v330 = vshll.u32 %v183, 16
  %v332 = vrot.slane %v330, 5
  %v333 = vor.u32 %v329, %v332
  %v334 = vrot.slane %v244, 4
  %v335 = vrot.slane %v204, 5
  %v336 = vor.u32 %v334, %v335
  %v337 = vsel %vm325, %v333, %v336
  %v339 = vshrl.u32 %v184, 16
  %v341 = vrot.slane %v339, 4
  %v342 = vshll.u32 %v184, 16
  %v344 = vrot.slane %v342, 5
  %v345 = vor.u32 %v341, %v344
  %v346 = vrot.slane %v252, 4
  %v347 = vrot.slane %v216, 5
  %v348 = vor.u32 %v346, %v347
  %v349 = vsel %vm325, %v345, %v348
  %v351 = vshrl.u32 %v185, 16
  %v353 = vrot.slane %v351, 4
  %v354 = vshll.u32 %v185, 16
  %v356 = vrot.slane %v354, 5
  %v357 = vor.u32 %v353, %v356
  %v358 = vrot.slane %v260, 4
  %v359 = vrot.slane %v228, 5
  %v360 = vor.u32 %v358, %v359
  %v361 = vsel %vm325, %v357, %v360
  %v363 = vshrl.u32 %v186, 16
  %v365 = vrot.slane %v363, 4
  %v366 = vshll.u32 %v186, 16
  %v368 = vrot.slane %v366, 5
  %v369 = vor.u32 %v365, %v368
  %v370 = vrot.slane %v268, 4
  %v371 = vrot.slane %v240, 5
  %v372 = vor.u32 %v370, %v371
  %v373 = vsel %vm325, %v369, %v372
  %v375 = vshrl.u32 %v191, 16
  %v377 = vrot.slane %v375, 4
  %v378 = vshll.u32 %v191, 16
  %v380 = vrot.slane %v378, 5
  %v381 = vor.u32 %v377, %v380
  %v382 = vsel %vm325, %v336, %v381
  %v384 = vshrl.u32 %v192, 16
  %v386 = vrot.slane %v384, 4
  %v387 = vshll.u32 %v192, 16
  %v389 = vrot.slane %v387, 5
  %v390 = vor.u32 %v386, %v389
  %v391 = vsel %vm325, %v348, %v390
  %v393 = vshrl.u32 %v193, 16
  %v395 = vrot.slane %v393, 4
  %v396 = vshll.u32 %v193, 16
  %v398 = vrot.slane %v396, 5
  %v399 = vor.u32 %v395, %v398
  %v400 = vsel %vm325, %v360, %v399
  %v402 = vshrl.u32 %v194, 16
  %v404 = vrot.slane %v402, 4
  %v405 = vshll.u32 %v194, 16
  %v407 = vrot.slane %v405, 5
  %v408 = vor.u32 %v404, %v407
  %v409 = vsel %vm325, %v372, %v408
  %v418 = vld [vmem:[%s1] sm:$0xff]
  %v419 = vld [vmem:[%s1 + $0x8] sm:$0xff]
  %v420 = vld [vmem:[%s1 + $0x10] sm:$0xff]
  %v421 = vld [vmem:[%s1 + $0x18] sm:$0xff]
  %v422 = vld [vmem:[%s1 + $0x20] sm:$0xff]
  %v423 = vld [vmem:[%s1 + $0x28] sm:$0xff]
  %v424 = vld [vmem:[%s1 + $0x30] sm:$0xff]
  %v425 = vld [vmem:[%s1 + $0x38] sm:$0xff]
  %v426 = vld [vmem:[%s1 + $0x40] sm:$0xff]
  %v427 = vld [vmem:[%s1 + $0x48] sm:$0xff]
  %v428 = vld [vmem:[%s1 + $0x50] sm:$0xff]
  %v429 = vld [vmem:[%s1 + $0x58] sm:$0xff]
  %v430 = vld [vmem:[%s1 + $0x60] sm:$0xff]
  %v431 = vld [vmem:[%s1 + $0x68] sm:$0xff]
  %v432 = vld [vmem:[%s1 + $0x70] sm:$0xff]
  %v433 = vld [vmem:[%s1 + $0x78] sm:$0xff]
  %v434 = vld [vmem:[%s1 + $0x80] sm:$0xff]
  %v435 = vld [vmem:[%s1 + $0x88] sm:$0xff]
  %v436 = vld [vmem:[%s1 + $0x90] sm:$0xff]
  %v437 = vld [vmem:[%s1 + $0x98] sm:$0xff]
  %v438 = vld [vmem:[%s1 + $0xa0] sm:$0xff]
  %v439 = vld [vmem:[%s1 + $0xa8] sm:$0xff]
  %v440 = vld [vmem:[%s1 + $0xb0] sm:$0xff]
  %v441 = vld [vmem:[%s1 + $0xb8] sm:$0xff]
  %v442 = vld [vmem:[%s1 + $0xc0] sm:$0xff]
  %v443 = vld [vmem:[%s1 + $0xc8] sm:$0xff]
  %v444 = vld [vmem:[%s1 + $0xd0] sm:$0xff]
  %v445 = vld [vmem:[%s1 + $0xd8] sm:$0xff]
  %v446 = vld [vmem:[%s1 + $0xe0] sm:$0xff]
  %v447 = vld [vmem:[%s1 + $0xe8] sm:$0xff]
  %v448 = vld [vmem:[%s1 + $0xf0] sm:$0xff]
  %v449 = vld [vmem:[%s1 + $0xf8] sm:$0xff]
  %v450 = vld [vmem:[%s1 + $0x100] sm:$0xff]
  %v451 = vld [vmem:[%s1 + $0x108] sm:$0xff]
  %v452 = vld [vmem:[%s1 + $0x110] sm:$0xff]
  %v453 = vld [vmem:[%s1 + $0x118] sm:$0xff]
  %v454 = vld [vmem:[%s1 + $0x120] sm:$0xff]
  %v455 = vld [vmem:[%s1 + $0x128] sm:$0xff]
  %v456 = vld [vmem:[%s1 + $0x130] sm:$0xff]
  %v457 = vld [vmem:[%s1 + $0x138] sm:$0xff]
  %v458 = vld [vmem:[%s1 + $0x140] sm:$0xff]
  %v459 = vld [vmem:[%s1 + $0x148] sm:$0xff]
  %v460 = vld [vmem:[%s1 + $0x150] sm:$0xff]
  %v461 = vld [vmem:[%s1 + $0x158] sm:$0xff]
  %v462 = vld [vmem:[%s1 + $0x160] sm:$0xff]
  %v463 = vld [vmem:[%s1 + $0x168] sm:$0xff]
  %v464 = vld [vmem:[%s1 + $0x170] sm:$0xff]
  %v465 = vld [vmem:[%s1 + $0x178] sm:$0xff]
  %v466 = vld [vmem:[%s1 + $0x180] sm:$0xff]
  %v467 = vld [vmem:[%s1 + $0x188] sm:$0xff]
  %v468 = vld [vmem:[%s1 + $0x190] sm:$0xff]
  %v469 = vld [vmem:[%s1 + $0x198] sm:$0xff]
  %v470 = vld [vmem:[%s1 + $0x1a0] sm:$0xff]
  %v471 = vld [vmem:[%s1 + $0x1a8] sm:$0xff]
  %v472 = vld [vmem:[%s1 + $0x1b0] sm:$0xff]
  %v473 = vld [vmem:[%s1 + $0x1b8] sm:$0xff]
  %v474 = vld [vmem:[%s1 + $0x1c0] sm:$0xff]
  %v475 = vld [vmem:[%s1 + $0x1c8] sm:$0xff]
  %v476 = vld [vmem:[%s1 + $0x1d0] sm:$0xff]
  %v477 = vld [vmem:[%s1 + $0x1d8] sm:$0xff]
  %v478 = vld [vmem:[%s1 + $0x1e0] sm:$0xff]
  %v479 = vld [vmem:[%s1 + $0x1e8] sm:$0xff]
  %v480 = vld [vmem:[%s1 + $0x1f0] sm:$0xff]
  %v481 = vld [vmem:[%s1 + $0x1f8] sm:$0xff]
  %v482 = vld [vmem:[%s1 + $0x200] sm:$0xff]
  %v483 = vld [vmem:[%s1 + $0x208] sm:$0xff]
  %v484 = vld [vmem:[%s1 + $0x210] sm:$0xff]
  %v485 = vld [vmem:[%s1 + $0x218] sm:$0xff]
  %v486 = vld [vmem:[%s1 + $0x220] sm:$0xff]
  %v487 = vld [vmem:[%s1 + $0x228] sm:$0xff]
  %v488 = vld [vmem:[%s1 + $0x230] sm:$0xff]
  %v489 = vld [vmem:[%s1 + $0x238] sm:$0xff]
  %v490 = vld [vmem:[%s1 + $0x240] sm:$0xff]
  %v491 = vld [vmem:[%s1 + $0x248] sm:$0xff]
  %v492 = vld [vmem:[%s1 + $0x250] sm:$0xff]
  %v493 = vld [vmem:[%s1 + $0x258] sm:$0xff]
  %v494 = vld [vmem:[%s1 + $0x260] sm:$0xff]
  %v495 = vld [vmem:[%s1 + $0x268] sm:$0xff]
  %v496 = vld [vmem:[%s1 + $0x270] sm:$0xff]
  %v497 = vld [vmem:[%s1 + $0x278] sm:$0xff]
  %v498 = vld [vmem:[%s1 + $0x280] sm:$0xff]
  %v499 = vld [vmem:[%s1 + $0x288] sm:$0xff]
  %v500 = vld [vmem:[%s1 + $0x290] sm:$0xff]
  %v501 = vld [vmem:[%s1 + $0x298] sm:$0xff]
  %v502 = vld [vmem:[%s1 + $0x2a0] sm:$0xff]
  %v503 = vld [vmem:[%s1 + $0x2a8] sm:$0xff]
  %v504 = vld [vmem:[%s1 + $0x2b0] sm:$0xff]
  %v505 = vld [vmem:[%s1 + $0x2b8] sm:$0xff]
  %v506 = vld [vmem:[%s1 + $0x2c0] sm:$0xff]
  %v507 = vld [vmem:[%s1 + $0x2c8] sm:$0xff]
  %v508 = vld [vmem:[%s1 + $0x2d0] sm:$0xff]
  %v509 = vld [vmem:[%s1 + $0x2d8] sm:$0xff]
  %v510 = vld [vmem:[%s1 + $0x2e0] sm:$0xff]
  %v511 = vld [vmem:[%s1 + $0x2e8] sm:$0xff]
  %v512 = vld [vmem:[%s1 + $0x2f0] sm:$0xff]
  %v513 = vld [vmem:[%s1 + $0x2f8] sm:$0xff]
  %v514 = vld [vmem:[%s1 + $0x300] sm:$0xff]
  %v515 = vld [vmem:[%s1 + $0x308] sm:$0xff]
  %v516 = vld [vmem:[%s1 + $0x310] sm:$0xff]
  %v517 = vld [vmem:[%s1 + $0x318] sm:$0xff]
  %v518 = vld [vmem:[%s1 + $0x320] sm:$0xff]
  %v519 = vld [vmem:[%s1 + $0x328] sm:$0xff]
  %v520 = vld [vmem:[%s1 + $0x330] sm:$0xff]
  %v521 = vld [vmem:[%s1 + $0x338] sm:$0xff]
  %v522 = vld [vmem:[%s1 + $0x340] sm:$0xff]
  %v523 = vld [vmem:[%s1 + $0x348] sm:$0xff]
  %v524 = vld [vmem:[%s1 + $0x350] sm:$0xff]
  %v525 = vld [vmem:[%s1 + $0x358] sm:$0xff]
  %v526 = vld [vmem:[%s1 + $0x360] sm:$0xff]
  %v527 = vld [vmem:[%s1 + $0x368] sm:$0xff]
  %v528 = vld [vmem:[%s1 + $0x370] sm:$0xff]
  %v529 = vld [vmem:[%s1 + $0x378] sm:$0xff]
  %v530 = vld [vmem:[%s1 + $0x380] sm:$0xff]
  %v531 = vld [vmem:[%s1 + $0x388] sm:$0xff]
  %v532 = vld [vmem:[%s1 + $0x390] sm:$0xff]
  %v533 = vld [vmem:[%s1 + $0x398] sm:$0xff]
  %v534 = vld [vmem:[%s1 + $0x3a0] sm:$0xff]
  %v535 = vld [vmem:[%s1 + $0x3a8] sm:$0xff]
  %v536 = vld [vmem:[%s1 + $0x3b0] sm:$0xff]
  %v537 = vld [vmem:[%s1 + $0x3b8] sm:$0xff]
  %v538 = vld [vmem:[%s1 + $0x3c0] sm:$0xff]
  %v539 = vld [vmem:[%s1 + $0x3c8] sm:$0xff]
  %v540 = vld [vmem:[%s1 + $0x3d0] sm:$0xff]
  %v541 = vld [vmem:[%s1 + $0x3d8] sm:$0xff]
  %v542 = vld [vmem:[%s1 + $0x3e0] sm:$0xff]
  %v543 = vld [vmem:[%s1 + $0x3e8] sm:$0xff]
  %v544 = vld [vmem:[%s1 + $0x3f0] sm:$0xff]
  %v545 = vld [vmem:[%s1 + $0x3f8] sm:$0xff]
  %v546 = vld [vmem:[%s1 + $0x400] sm:$0xff]
  %v547 = vld [vmem:[%s1 + $0x408] sm:$0xff]
  %v548 = vld [vmem:[%s1 + $0x410] sm:$0xff]
  %v549 = vld [vmem:[%s1 + $0x418] sm:$0xff]
  %v550 = vld [vmem:[%s1 + $0x420] sm:$0xff]
  %v551 = vld [vmem:[%s1 + $0x428] sm:$0xff]
  %v552 = vld [vmem:[%s1 + $0x430] sm:$0xff]
  %v553 = vld [vmem:[%s1 + $0x438] sm:$0xff]
  %v554 = vld [vmem:[%s1 + $0x440] sm:$0xff]
  %v555 = vld [vmem:[%s1 + $0x448] sm:$0xff]
  %v556 = vld [vmem:[%s1 + $0x450] sm:$0xff]
  %v557 = vld [vmem:[%s1 + $0x458] sm:$0xff]
  %v558 = vld [vmem:[%s1 + $0x460] sm:$0xff]
  %v559 = vld [vmem:[%s1 + $0x468] sm:$0xff]
  %v560 = vld [vmem:[%s1 + $0x470] sm:$0xff]
  %v561 = vld [vmem:[%s1 + $0x478] sm:$0xff]
  %v562 = vld [vmem:[%s1 + $0x480] sm:$0xff]
  %v563 = vld [vmem:[%s1 + $0x488] sm:$0xff]
  %v564 = vld [vmem:[%s1 + $0x490] sm:$0xff]
  %v565 = vld [vmem:[%s1 + $0x498] sm:$0xff]
  %v566 = vld [vmem:[%s1 + $0x4a0] sm:$0xff]
  %v567 = vld [vmem:[%s1 + $0x4a8] sm:$0xff]
  %v568 = vld [vmem:[%s1 + $0x4b0] sm:$0xff]
  %v569 = vld [vmem:[%s1 + $0x4b8] sm:$0xff]
  %v570 = vld [vmem:[%s1 + $0x4c0] sm:$0xff]
  %v571 = vld [vmem:[%s1 + $0x4c8] sm:$0xff]
  %v572 = vld [vmem:[%s1 + $0x4d0] sm:$0xff]
  %v573 = vld [vmem:[%s1 + $0x4d8] sm:$0xff]
  %v574 = vld [vmem:[%s1 + $0x4e0] sm:$0xff]
  %v575 = vld [vmem:[%s1 + $0x4e8] sm:$0xff]
  %v576 = vld [vmem:[%s1 + $0x4f0] sm:$0xff]
  %v577 = vld [vmem:[%s1 + $0x4f8] sm:$0xff]
  %v578 = vld [vmem:[%s1 + $0x500] sm:$0xff]
  %v579 = vld [vmem:[%s1 + $0x508] sm:$0xff]
  %v580 = vld [vmem:[%s1 + $0x510] sm:$0xff]
  %v581 = vld [vmem:[%s1 + $0x518] sm:$0xff]
  %v582 = vld [vmem:[%s1 + $0x520] sm:$0xff]
  %v583 = vld [vmem:[%s1 + $0x528] sm:$0xff]
  %v584 = vld [vmem:[%s1 + $0x530] sm:$0xff]
  %v585 = vld [vmem:[%s1 + $0x538] sm:$0xff]
  %v586 = vld [vmem:[%s1 + $0x540] sm:$0xff]
  %v587 = vld [vmem:[%s1 + $0x548] sm:$0xff]
  %v588 = vld [vmem:[%s1 + $0x550] sm:$0xff]
  %v589 = vld [vmem:[%s1 + $0x558] sm:$0xff]
  %v590 = vld [vmem:[%s1 + $0x560] sm:$0xff]
  %v591 = vld [vmem:[%s1 + $0x568] sm:$0xff]
  %v592 = vld [vmem:[%s1 + $0x570] sm:$0xff]
  %v593 = vld [vmem:[%s1 + $0x578] sm:$0xff]
  %v594 = vld [vmem:[%s1 + $0x580] sm:$0xff]
  %v595 = vld [vmem:[%s1 + $0x588] sm:$0xff]
  %v596 = vld [vmem:[%s1 + $0x590] sm:$0xff]
  %v597 = vld [vmem:[%s1 + $0x598] sm:$0xff]
  %v598 = vld [vmem:[%s1 + $0x5a0] sm:$0xff]
  %v599 = vld [vmem:[%s1 + $0x5a8] sm:$0xff]
  %v600 = vld [vmem:[%s1 + $0x5b0] sm:$0xff]
  %v601 = vld [vmem:[%s1 + $0x5b8] sm:$0xff]
  %v602 = vld [vmem:[%s1 + $0x5c0] sm:$0xff]
  %v603 = vld [vmem:[%s1 + $0x5c8] sm:$0xff]
  %v604 = vld [vmem:[%s1 + $0x5d0] sm:$0xff]
  %v605 = vld [vmem:[%s1 + $0x5d8] sm:$0xff]
  %v606 = vld [vmem:[%s1 + $0x5e0] sm:$0xff]
  %v607 = vld [vmem:[%s1 + $0x5e8] sm:$0xff]
  %v608 = vld [vmem:[%s1 + $0x5f0] sm:$0xff]
  %v609 = vld [vmem:[%s1 + $0x5f8] sm:$0xff]
  %v610 = vld [vmem:[%s1 + $0x600] sm:$0xff]
  %v611 = vld [vmem:[%s1 + $0x608] sm:$0xff]
  %v612 = vld [vmem:[%s1 + $0x610] sm:$0xff]
  %v613 = vld [vmem:[%s1 + $0x618] sm:$0xff]
  %v614 = vld [vmem:[%s1 + $0x620] sm:$0xff]
  %v615 = vld [vmem:[%s1 + $0x628] sm:$0xff]
  %v616 = vld [vmem:[%s1 + $0x630] sm:$0xff]
  %v617 = vld [vmem:[%s1 + $0x638] sm:$0xff]
  %v618 = vld [vmem:[%s1 + $0x640] sm:$0xff]
  %v619 = vld [vmem:[%s1 + $0x648] sm:$0xff]
  %v620 = vld [vmem:[%s1 + $0x650] sm:$0xff]
  %v621 = vld [vmem:[%s1 + $0x658] sm:$0xff]
  %v622 = vld [vmem:[%s1 + $0x660] sm:$0xff]
  %v623 = vld [vmem:[%s1 + $0x668] sm:$0xff]
  %v624 = vld [vmem:[%s1 + $0x670] sm:$0xff]
  %v625 = vld [vmem:[%s1 + $0x678] sm:$0xff]
  %v626 = vld [vmem:[%s1 + $0x680] sm:$0xff]
  %v627 = vld [vmem:[%s1 + $0x688] sm:$0xff]
  %v628 = vld [vmem:[%s1 + $0x690] sm:$0xff]
  %v629 = vld [vmem:[%s1 + $0x698] sm:$0xff]
  %v630 = vld [vmem:[%s1 + $0x6a0] sm:$0xff]
  %v631 = vld [vmem:[%s1 + $0x6a8] sm:$0xff]
  %v632 = vld [vmem:[%s1 + $0x6b0] sm:$0xff]
  %v633 = vld [vmem:[%s1 + $0x6b8] sm:$0xff]
  %v634 = vld [vmem:[%s1 + $0x6c0] sm:$0xff]
  %v635 = vld [vmem:[%s1 + $0x6c8] sm:$0xff]
  %v636 = vld [vmem:[%s1 + $0x6d0] sm:$0xff]
  %v637 = vld [vmem:[%s1 + $0x6d8] sm:$0xff]
  %v638 = vld [vmem:[%s1 + $0x6e0] sm:$0xff]
  %v639 = vld [vmem:[%s1 + $0x6e8] sm:$0xff]
  %v640 = vld [vmem:[%s1 + $0x6f0] sm:$0xff]
  %v641 = vld [vmem:[%s1 + $0x6f8] sm:$0xff]
  %v642 = vld [vmem:[%s1 + $0x700] sm:$0xff]
  %v643 = vld [vmem:[%s1 + $0x708] sm:$0xff]
  %v644 = vld [vmem:[%s1 + $0x710] sm:$0xff]
  %v645 = vld [vmem:[%s1 + $0x718] sm:$0xff]
  %v646 = vld [vmem:[%s1 + $0x720] sm:$0xff]
  %v647 = vld [vmem:[%s1 + $0x728] sm:$0xff]
  %v648 = vld [vmem:[%s1 + $0x730] sm:$0xff]
  %v649 = vld [vmem:[%s1 + $0x738] sm:$0xff]
  %v650 = vld [vmem:[%s1 + $0x740] sm:$0xff]
  %v651 = vld [vmem:[%s1 + $0x748] sm:$0xff]
  %v652 = vld [vmem:[%s1 + $0x750] sm:$0xff]
  %v653 = vld [vmem:[%s1 + $0x758] sm:$0xff]
  %v654 = vld [vmem:[%s1 + $0x760] sm:$0xff]
  %v655 = vld [vmem:[%s1 + $0x768] sm:$0xff]
  %v656 = vld [vmem:[%s1 + $0x770] sm:$0xff]
  %v657 = vld [vmem:[%s1 + $0x778] sm:$0xff]
  %v658 = vld [vmem:[%s1 + $0x780] sm:$0xff]
  %v659 = vld [vmem:[%s1 + $0x788] sm:$0xff]
  %v660 = vld [vmem:[%s1 + $0x790] sm:$0xff]
  %v661 = vld [vmem:[%s1 + $0x798] sm:$0xff]
  %v662 = vld [vmem:[%s1 + $0x7a0] sm:$0xff]
  %v663 = vld [vmem:[%s1 + $0x7a8] sm:$0xff]
  %v664 = vld [vmem:[%s1 + $0x7b0] sm:$0xff]
  %v665 = vld [vmem:[%s1 + $0x7b8] sm:$0xff]
  %v666 = vld [vmem:[%s1 + $0x7c0] sm:$0xff]
  %v667 = vld [vmem:[%s1 + $0x7c8] sm:$0xff]
  %v668 = vld [vmem:[%s1 + $0x7d0] sm:$0xff]
  %v669 = vld [vmem:[%s1 + $0x7d8] sm:$0xff]
  %v670 = vld [vmem:[%s1 + $0x7e0] sm:$0xff]
  %v671 = vld [vmem:[%s1 + $0x7e8] sm:$0xff]
  %v672 = vld [vmem:[%s1 + $0x7f0] sm:$0xff]
  %v673 = vld [vmem:[%s1 + $0x7f8] sm:$0xff]
  %v930 = vunpack.c.l.b16 %v418
  %v931 = vunpack.c.h.b16 %v418
  %v932 = vunpack.c.l.b16 %v419
  %v933 = vunpack.c.h.b16 %v419
  %v934 = vunpack.c.l.b16 %v420
  %v935 = vunpack.c.h.b16 %v420
  %v936 = vunpack.c.l.b16 %v421
  %v937 = vunpack.c.h.b16 %v421
  %v938 = vunpack.c.l.b16 %v422
  %v939 = vunpack.c.h.b16 %v422
  %v940 = vunpack.c.l.b16 %v423
  %v941 = vunpack.c.h.b16 %v423
  %v942 = vunpack.c.l.b16 %v424
  %v943 = vunpack.c.h.b16 %v424
  %v944 = vunpack.c.l.b16 %v425
  %v945 = vunpack.c.h.b16 %v425
  %v946 = vunpack.c.l.b16 %v426
  %v947 = vunpack.c.h.b16 %v426
  %v948 = vunpack.c.l.b16 %v427
  %v949 = vunpack.c.h.b16 %v427
  %v950 = vunpack.c.l.b16 %v428
  %v951 = vunpack.c.h.b16 %v428
  %v952 = vunpack.c.l.b16 %v429
  %v953 = vunpack.c.h.b16 %v429
  %v954 = vunpack.c.l.b16 %v430
  %v955 = vunpack.c.h.b16 %v430
  %v956 = vunpack.c.l.b16 %v431
  %v957 = vunpack.c.h.b16 %v431
  %v958 = vunpack.c.l.b16 %v432
  %v959 = vunpack.c.h.b16 %v432
  %v960 = vunpack.c.l.b16 %v433
  %v961 = vunpack.c.h.b16 %v433
  %v962 = vunpack.c.l.b16 %v434
  %v963 = vunpack.c.h.b16 %v434
  %v964 = vunpack.c.l.b16 %v435
  %v965 = vunpack.c.h.b16 %v435
  %v966 = vunpack.c.l.b16 %v436
  %v967 = vunpack.c.h.b16 %v436
  %v968 = vunpack.c.l.b16 %v437
  %v969 = vunpack.c.h.b16 %v437
  %v970 = vunpack.c.l.b16 %v438
  %v971 = vunpack.c.h.b16 %v438
  %v972 = vunpack.c.l.b16 %v439
  %v973 = vunpack.c.h.b16 %v439
  %v974 = vunpack.c.l.b16 %v440
  %v975 = vunpack.c.h.b16 %v440
  %v976 = vunpack.c.l.b16 %v441
  %v977 = vunpack.c.h.b16 %v441
  %v978 = vunpack.c.l.b16 %v442
  %v979 = vunpack.c.h.b16 %v442
  %v980 = vunpack.c.l.b16 %v443
  %v981 = vunpack.c.h.b16 %v443
  %v982 = vunpack.c.l.b16 %v444
  %v983 = vunpack.c.h.b16 %v444
  %v984 = vunpack.c.l.b16 %v445
  %v985 = vunpack.c.h.b16 %v445
  %v986 = vunpack.c.l.b16 %v446
  %v987 = vunpack.c.h.b16 %v446
  %v988 = vunpack.c.l.b16 %v447
  %v989 = vunpack.c.h.b16 %v447
  %v990 = vunpack.c.l.b16 %v448
  %v991 = vunpack.c.h.b16 %v448
  %v992 = vunpack.c.l.b16 %v449
  %v993 = vunpack.c.h.b16 %v449
  %v994 = vunpack.c.l.b16 %v450
  %v995 = vunpack.c.h.b16 %v450
  %v996 = vunpack.c.l.b16 %v451
  %v997 = vunpack.c.h.b16 %v451
  %v998 = vunpack.c.l.b16 %v452
  %v999 = vunpack.c.h.b16 %v452
  %v1000 = vunpack.c.l.b16 %v453
  %v1001 = vunpack.c.h.b16 %v453
  %v1002 = vunpack.c.l.b16 %v454
  %v1003 = vunpack.c.h.b16 %v454
  %v1004 = vunpack.c.l.b16 %v455
  %v1005 = vunpack.c.h.b16 %v455
  %v1006 = vunpack.c.l.b16 %v456
  %v1007 = vunpack.c.h.b16 %v456
  %v1008 = vunpack.c.l.b16 %v457
  %v1009 = vunpack.c.h.b16 %v457
  %v1010 = vunpack.c.l.b16 %v458
  %v1011 = vunpack.c.h.b16 %v458
  %v1012 = vunpack.c.l.b16 %v459
  %v1013 = vunpack.c.h.b16 %v459
  %v1014 = vunpack.c.l.b16 %v460
  %v1015 = vunpack.c.h.b16 %v460
  %v1016 = vunpack.c.l.b16 %v461
  %v1017 = vunpack.c.h.b16 %v461
  %v1018 = vunpack.c.l.b16 %v462
  %v1019 = vunpack.c.h.b16 %v462
  %v1020 = vunpack.c.l.b16 %v463
  %v1021 = vunpack.c.h.b16 %v463
  %v1022 = vunpack.c.l.b16 %v464
  %v1023 = vunpack.c.h.b16 %v464
  %v1024 = vunpack.c.l.b16 %v465
  %v1025 = vunpack.c.h.b16 %v465
  %v1026 = vunpack.c.l.b16 %v466
  %v1027 = vunpack.c.h.b16 %v466
  %v1028 = vunpack.c.l.b16 %v467
  %v1029 = vunpack.c.h.b16 %v467
  %v1030 = vunpack.c.l.b16 %v468
  %v1031 = vunpack.c.h.b16 %v468
  %v1032 = vunpack.c.l.b16 %v469
  %v1033 = vunpack.c.h.b16 %v469
  %v1034 = vunpack.c.l.b16 %v470
  %v1035 = vunpack.c.h.b16 %v470
  %v1036 = vunpack.c.l.b16 %v471
  %v1037 = vunpack.c.h.b16 %v471
  %v1038 = vunpack.c.l.b16 %v472
  %v1039 = vunpack.c.h.b16 %v472
  %v1040 = vunpack.c.l.b16 %v473
  %v1041 = vunpack.c.h.b16 %v473
  %v1042 = vunpack.c.l.b16 %v474
  %v1043 = vunpack.c.h.b16 %v474
  %v1044 = vunpack.c.l.b16 %v475
  %v1045 = vunpack.c.h.b16 %v475
  %v1046 = vunpack.c.l.b16 %v476
  %v1047 = vunpack.c.h.b16 %v476
  %v1048 = vunpack.c.l.b16 %v477
  %v1049 = vunpack.c.h.b16 %v477
  %v1050 = vunpack.c.l.b16 %v478
  %v1051 = vunpack.c.h.b16 %v478
  %v1052 = vunpack.c.l.b16 %v479
  %v1053 = vunpack.c.h.b16 %v479
  %v1054 = vunpack.c.l.b16 %v480
  %v1055 = vunpack.c.h.b16 %v480
  %v1056 = vunpack.c.l.b16 %v481
  %v1057 = vunpack.c.h.b16 %v481
  %v1058 = vunpack.c.l.b16 %v482
  %v1059 = vunpack.c.h.b16 %v482
  %v1060 = vunpack.c.l.b16 %v483
  %v1061 = vunpack.c.h.b16 %v483
  %v1062 = vunpack.c.l.b16 %v484
  %v1063 = vunpack.c.h.b16 %v484
  %v1064 = vunpack.c.l.b16 %v485
  %v1065 = vunpack.c.h.b16 %v485
  %v1066 = vunpack.c.l.b16 %v486
  %v1067 = vunpack.c.h.b16 %v486
  %v1068 = vunpack.c.l.b16 %v487
  %v1069 = vunpack.c.h.b16 %v487
  %v1070 = vunpack.c.l.b16 %v488
  %v1071 = vunpack.c.h.b16 %v488
  %v1072 = vunpack.c.l.b16 %v489
  %v1073 = vunpack.c.h.b16 %v489
  %v1074 = vunpack.c.l.b16 %v490
  %v1075 = vunpack.c.h.b16 %v490
  %v1076 = vunpack.c.l.b16 %v491
  %v1077 = vunpack.c.h.b16 %v491
  %v1078 = vunpack.c.l.b16 %v492
  %v1079 = vunpack.c.h.b16 %v492
  %v1080 = vunpack.c.l.b16 %v493
  %v1081 = vunpack.c.h.b16 %v493
  %v1082 = vunpack.c.l.b16 %v494
  %v1083 = vunpack.c.h.b16 %v494
  %v1084 = vunpack.c.l.b16 %v495
  %v1085 = vunpack.c.h.b16 %v495
  %v1086 = vunpack.c.l.b16 %v496
  %v1087 = vunpack.c.h.b16 %v496
  %v1088 = vunpack.c.l.b16 %v497
  %v1089 = vunpack.c.h.b16 %v497
  %v1090 = vunpack.c.l.b16 %v498
  %v1091 = vunpack.c.h.b16 %v498
  %v1092 = vunpack.c.l.b16 %v499
  %v1093 = vunpack.c.h.b16 %v499
  %v1094 = vunpack.c.l.b16 %v500
  %v1095 = vunpack.c.h.b16 %v500
  %v1096 = vunpack.c.l.b16 %v501
  %v1097 = vunpack.c.h.b16 %v501
  %v1098 = vunpack.c.l.b16 %v502
  %v1099 = vunpack.c.h.b16 %v502
  %v1100 = vunpack.c.l.b16 %v503
  %v1101 = vunpack.c.h.b16 %v503
  %v1102 = vunpack.c.l.b16 %v504
  %v1103 = vunpack.c.h.b16 %v504
  %v1104 = vunpack.c.l.b16 %v505
  %v1105 = vunpack.c.h.b16 %v505
  %v1106 = vunpack.c.l.b16 %v506
  %v1107 = vunpack.c.h.b16 %v506
  %v1108 = vunpack.c.l.b16 %v507
  %v1109 = vunpack.c.h.b16 %v507
  %v1110 = vunpack.c.l.b16 %v508
  %v1111 = vunpack.c.h.b16 %v508
  %v1112 = vunpack.c.l.b16 %v509
  %v1113 = vunpack.c.h.b16 %v509
  %v1114 = vunpack.c.l.b16 %v510
  %v1115 = vunpack.c.h.b16 %v510
  %v1116 = vunpack.c.l.b16 %v511
  %v1117 = vunpack.c.h.b16 %v511
  %v1118 = vunpack.c.l.b16 %v512
  %v1119 = vunpack.c.h.b16 %v512
  %v1120 = vunpack.c.l.b16 %v513
  %v1121 = vunpack.c.h.b16 %v513
  %v1122 = vunpack.c.l.b16 %v514
  %v1123 = vunpack.c.h.b16 %v514
  %v1124 = vunpack.c.l.b16 %v515
  %v1125 = vunpack.c.h.b16 %v515
  %v1126 = vunpack.c.l.b16 %v516
  %v1127 = vunpack.c.h.b16 %v516
  %v1128 = vunpack.c.l.b16 %v517
  %v1129 = vunpack.c.h.b16 %v517
  %v1130 = vunpack.c.l.b16 %v518
  %v1131 = vunpack.c.h.b16 %v518
  %v1132 = vunpack.c.l.b16 %v519
  %v1133 = vunpack.c.h.b16 %v519
  %v1134 = vunpack.c.l.b16 %v520
  %v1135 = vunpack.c.h.b16 %v520
  %v1136 = vunpack.c.l.b16 %v521
  %v1137 = vunpack.c.h.b16 %v521
  %v1138 = vunpack.c.l.b16 %v522
  %v1139 = vunpack.c.h.b16 %v522
  %v1140 = vunpack.c.l.b16 %v523
  %v1141 = vunpack.c.h.b16 %v523
  %v1142 = vunpack.c.l.b16 %v524
  %v1143 = vunpack.c.h.b16 %v524
  %v1144 = vunpack.c.l.b16 %v525
  %v1145 = vunpack.c.h.b16 %v525
  %v1146 = vunpack.c.l.b16 %v526
  %v1147 = vunpack.c.h.b16 %v526
  %v1148 = vunpack.c.l.b16 %v527
  %v1149 = vunpack.c.h.b16 %v527
  %v1150 = vunpack.c.l.b16 %v528
  %v1151 = vunpack.c.h.b16 %v528
  %v1152 = vunpack.c.l.b16 %v529
  %v1153 = vunpack.c.h.b16 %v529
  %v1154 = vunpack.c.l.b16 %v530
  %v1155 = vunpack.c.h.b16 %v530
  %v1156 = vunpack.c.l.b16 %v531
  %v1157 = vunpack.c.h.b16 %v531
  %v1158 = vunpack.c.l.b16 %v532
  %v1159 = vunpack.c.h.b16 %v532
  %v1160 = vunpack.c.l.b16 %v533
  %v1161 = vunpack.c.h.b16 %v533
  %v1162 = vunpack.c.l.b16 %v534
  %v1163 = vunpack.c.h.b16 %v534
  %v1164 = vunpack.c.l.b16 %v535
  %v1165 = vunpack.c.h.b16 %v535
  %v1166 = vunpack.c.l.b16 %v536
  %v1167 = vunpack.c.h.b16 %v536
  %v1168 = vunpack.c.l.b16 %v537
  %v1169 = vunpack.c.h.b16 %v537
  %v1170 = vunpack.c.l.b16 %v538
  %v1171 = vunpack.c.h.b16 %v538
  %v1172 = vunpack.c.l.b16 %v539
  %v1173 = vunpack.c.h.b16 %v539
  %v1174 = vunpack.c.l.b16 %v540
  %v1175 = vunpack.c.h.b16 %v540
  %v1176 = vunpack.c.l.b16 %v541
  %v1177 = vunpack.c.h.b16 %v541
  %v1178 = vunpack.c.l.b16 %v542
  %v1179 = vunpack.c.h.b16 %v542
  %v1180 = vunpack.c.l.b16 %v543
  %v1181 = vunpack.c.h.b16 %v543
  %v1182 = vunpack.c.l.b16 %v544
  %v1183 = vunpack.c.h.b16 %v544
  %v1184 = vunpack.c.l.b16 %v545
  %v1185 = vunpack.c.h.b16 %v545
  %v1186 = vunpack.c.l.b16 %v546
  %v1187 = vunpack.c.h.b16 %v546
  %v1188 = vunpack.c.l.b16 %v547
  %v1189 = vunpack.c.h.b16 %v547
  %v1190 = vunpack.c.l.b16 %v548
  %v1191 = vunpack.c.h.b16 %v548
  %v1192 = vunpack.c.l.b16 %v549
  %v1193 = vunpack.c.h.b16 %v549
  %v1194 = vunpack.c.l.b16 %v550
  %v1195 = vunpack.c.h.b16 %v550
  %v1196 = vunpack.c.l.b16 %v551
  %v1197 = vunpack.c.h.b16 %v551
  %v1198 = vunpack.c.l.b16 %v552
  %v1199 = vunpack.c.h.b16 %v552
  %v1200 = vunpack.c.l.b16 %v553
  %v1201 = vunpack.c.h.b16 %v553
  %v1202 = vunpack.c.l.b16 %v554
  %v1203 = vunpack.c.h.b16 %v554
  %v1204 = vunpack.c.l.b16 %v555
  %v1205 = vunpack.c.h.b16 %v555
  %v1206 = vunpack.c.l.b16 %v556
  %v1207 = vunpack.c.h.b16 %v556
  %v1208 = vunpack.c.l.b16 %v557
  %v1209 = vunpack.c.h.b16 %v557
  %v1210 = vunpack.c.l.b16 %v558
  %v1211 = vunpack.c.h.b16 %v558
  %v1212 = vunpack.c.l.b16 %v559
  %v1213 = vunpack.c.h.b16 %v559
  %v1214 = vunpack.c.l.b16 %v560
  %v1215 = vunpack.c.h.b16 %v560
  %v1216 = vunpack.c.l.b16 %v561
  %v1217 = vunpack.c.h.b16 %v561
  %v1218 = vunpack.c.l.b16 %v562
  %v1219 = vunpack.c.h.b16 %v562
  %v1220 = vunpack.c.l.b16 %v563
  %v1221 = vunpack.c.h.b16 %v563
  %v1222 = vunpack.c.l.b16 %v564
  %v1223 = vunpack.c.h.b16 %v564
  %v1224 = vunpack.c.l.b16 %v565
  %v1225 = vunpack.c.h.b16 %v565
  %v1226 = vunpack.c.l.b16 %v566
  %v1227 = vunpack.c.h.b16 %v566
  %v1228 = vunpack.c.l.b16 %v567
  %v1229 = vunpack.c.h.b16 %v567
  %v1230 = vunpack.c.l.b16 %v568
  %v1231 = vunpack.c.h.b16 %v568
  %v1232 = vunpack.c.l.b16 %v569
  %v1233 = vunpack.c.h.b16 %v569
  %v1234 = vunpack.c.l.b16 %v570
  %v1235 = vunpack.c.h.b16 %v570
  %v1236 = vunpack.c.l.b16 %v571
  %v1237 = vunpack.c.h.b16 %v571
  %v1238 = vunpack.c.l.b16 %v572
  %v1239 = vunpack.c.h.b16 %v572
  %v1240 = vunpack.c.l.b16 %v573
  %v1241 = vunpack.c.h.b16 %v573
  %v1242 = vunpack.c.l.b16 %v574
  %v1243 = vunpack.c.h.b16 %v574
  %v1244 = vunpack.c.l.b16 %v575
  %v1245 = vunpack.c.h.b16 %v575
  %v1246 = vunpack.c.l.b16 %v576
  %v1247 = vunpack.c.h.b16 %v576
  %v1248 = vunpack.c.l.b16 %v577
  %v1249 = vunpack.c.h.b16 %v577
  %v1250 = vunpack.c.l.b16 %v578
  %v1251 = vunpack.c.h.b16 %v578
  %v1252 = vunpack.c.l.b16 %v579
  %v1253 = vunpack.c.h.b16 %v579
  %v1254 = vunpack.c.l.b16 %v580
  %v1255 = vunpack.c.h.b16 %v580
  %v1256 = vunpack.c.l.b16 %v581
  %v1257 = vunpack.c.h.b16 %v581
  %v1258 = vunpack.c.l.b16 %v582
  %v1259 = vunpack.c.h.b16 %v582
  %v1260 = vunpack.c.l.b16 %v583
  %v1261 = vunpack.c.h.b16 %v583
  %v1262 = vunpack.c.l.b16 %v584
  %v1263 = vunpack.c.h.b16 %v584
  %v1264 = vunpack.c.l.b16 %v585
  %v1265 = vunpack.c.h.b16 %v585
  %v1266 = vunpack.c.l.b16 %v586
  %v1267 = vunpack.c.h.b16 %v586
  %v1268 = vunpack.c.l.b16 %v587
  %v1269 = vunpack.c.h.b16 %v587
  %v1270 = vunpack.c.l.b16 %v588
  %v1271 = vunpack.c.h.b16 %v588
  %v1272 = vunpack.c.l.b16 %v589
  %v1273 = vunpack.c.h.b16 %v589
  %v1274 = vunpack.c.l.b16 %v590
  %v1275 = vunpack.c.h.b16 %v590
  %v1276 = vunpack.c.l.b16 %v591
  %v1277 = vunpack.c.h.b16 %v591
  %v1278 = vunpack.c.l.b16 %v592
  %v1279 = vunpack.c.h.b16 %v592
  %v1280 = vunpack.c.l.b16 %v593
  %v1281 = vunpack.c.h.b16 %v593
  %v1282 = vunpack.c.l.b16 %v594
  %v1283 = vunpack.c.h.b16 %v594
  %v1284 = vunpack.c.l.b16 %v595
  %v1285 = vunpack.c.h.b16 %v595
  %v1286 = vunpack.c.l.b16 %v596
  %v1287 = vunpack.c.h.b16 %v596
  %v1288 = vunpack.c.l.b16 %v597
  %v1289 = vunpack.c.h.b16 %v597
  %v1290 = vunpack.c.l.b16 %v598
  %v1291 = vunpack.c.h.b16 %v598
  %v1292 = vunpack.c.l.b16 %v599
  %v1293 = vunpack.c.h.b16 %v599
  %v1294 = vunpack.c.l.b16 %v600
  %v1295 = vunpack.c.h.b16 %v600
  %v1296 = vunpack.c.l.b16 %v601
  %v1297 = vunpack.c.h.b16 %v601
  %v1298 = vunpack.c.l.b16 %v602
  %v1299 = vunpack.c.h.b16 %v602
  %v1300 = vunpack.c.l.b16 %v603
  %v1301 = vunpack.c.h.b16 %v603
  %v1302 = vunpack.c.l.b16 %v604
  %v1303 = vunpack.c.h.b16 %v604
  %v1304 = vunpack.c.l.b16 %v605
  %v1305 = vunpack.c.h.b16 %v605
  %v1306 = vunpack.c.l.b16 %v606
  %v1307 = vunpack.c.h.b16 %v606
  %v1308 = vunpack.c.l.b16 %v607
  %v1309 = vunpack.c.h.b16 %v607
  %v1310 = vunpack.c.l.b16 %v608
  %v1311 = vunpack.c.h.b16 %v608
  %v1312 = vunpack.c.l.b16 %v609
  %v1313 = vunpack.c.h.b16 %v609
  %v1314 = vunpack.c.l.b16 %v610
  %v1315 = vunpack.c.h.b16 %v610
  %v1316 = vunpack.c.l.b16 %v611
  %v1317 = vunpack.c.h.b16 %v611
  %v1318 = vunpack.c.l.b16 %v612
  %v1319 = vunpack.c.h.b16 %v612
  %v1320 = vunpack.c.l.b16 %v613
  %v1321 = vunpack.c.h.b16 %v613
  %v1322 = vunpack.c.l.b16 %v614
  %v1323 = vunpack.c.h.b16 %v614
  %v1324 = vunpack.c.l.b16 %v615
  %v1325 = vunpack.c.h.b16 %v615
  %v1326 = vunpack.c.l.b16 %v616
  %v1327 = vunpack.c.h.b16 %v616
  %v1328 = vunpack.c.l.b16 %v617
  %v1329 = vunpack.c.h.b16 %v617
  %v1330 = vunpack.c.l.b16 %v618
  %v1331 = vunpack.c.h.b16 %v618
  %v1332 = vunpack.c.l.b16 %v619
  %v1333 = vunpack.c.h.b16 %v619
  %v1334 = vunpack.c.l.b16 %v620
  %v1335 = vunpack.c.h.b16 %v620
  %v1336 = vunpack.c.l.b16 %v621
  %v1337 = vunpack.c.h.b16 %v621
  %v1338 = vunpack.c.l.b16 %v622
  %v1339 = vunpack.c.h.b16 %v622
  %v1340 = vunpack.c.l.b16 %v623
  %v1341 = vunpack.c.h.b16 %v623
  %v1342 = vunpack.c.l.b16 %v624
  %v1343 = vunpack.c.h.b16 %v624
  %v1344 = vunpack.c.l.b16 %v625
  %v1345 = vunpack.c.h.b16 %v625
  %v1346 = vunpack.c.l.b16 %v626
  %v1347 = vunpack.c.h.b16 %v626
  %v1348 = vunpack.c.l.b16 %v627
  %v1349 = vunpack.c.h.b16 %v627
  %v1350 = vunpack.c.l.b16 %v628
  %v1351 = vunpack.c.h.b16 %v628
  %v1352 = vunpack.c.l.b16 %v629
  %v1353 = vunpack.c.h.b16 %v629
  %v1354 = vunpack.c.l.b16 %v630
  %v1355 = vunpack.c.h.b16 %v630
  %v1356 = vunpack.c.l.b16 %v631
  %v1357 = vunpack.c.h.b16 %v631
  %v1358 = vunpack.c.l.b16 %v632
  %v1359 = vunpack.c.h.b16 %v632
  %v1360 = vunpack.c.l.b16 %v633
  %v1361 = vunpack.c.h.b16 %v633
  %v1362 = vunpack.c.l.b16 %v634
  %v1363 = vunpack.c.h.b16 %v634
  %v1364 = vunpack.c.l.b16 %v635
  %v1365 = vunpack.c.h.b16 %v635
  %v1366 = vunpack.c.l.b16 %v636
  %v1367 = vunpack.c.h.b16 %v636
  %v1368 = vunpack.c.l.b16 %v637
  %v1369 = vunpack.c.h.b16 %v637
  %v1370 = vunpack.c.l.b16 %v638
  %v1371 = vunpack.c.h.b16 %v638
  %v1372 = vunpack.c.l.b16 %v639
  %v1373 = vunpack.c.h.b16 %v639
  %v1374 = vunpack.c.l.b16 %v640
  %v1375 = vunpack.c.h.b16 %v640
  %v1376 = vunpack.c.l.b16 %v641
  %v1377 = vunpack.c.h.b16 %v641
  %v1378 = vunpack.c.l.b16 %v642
  %v1379 = vunpack.c.h.b16 %v642
  %v1380 = vunpack.c.l.b16 %v643
  %v1381 = vunpack.c.h.b16 %v643
  %v1382 = vunpack.c.l.b16 %v644
  %v1383 = vunpack.c.h.b16 %v644
  %v1384 = vunpack.c.l.b16 %v645
  %v1385 = vunpack.c.h.b16 %v645
  %v1386 = vunpack.c.l.b16 %v646
  %v1387 = vunpack.c.h.b16 %v646
  %v1388 = vunpack.c.l.b16 %v647
  %v1389 = vunpack.c.h.b16 %v647
  %v1390 = vunpack.c.l.b16 %v648
  %v1391 = vunpack.c.h.b16 %v648
  %v1392 = vunpack.c.l.b16 %v649
  %v1393 = vunpack.c.h.b16 %v649
  %v1394 = vunpack.c.l.b16 %v650
  %v1395 = vunpack.c.h.b16 %v650
  %v1396 = vunpack.c.l.b16 %v651
  %v1397 = vunpack.c.h.b16 %v651
  %v1398 = vunpack.c.l.b16 %v652
  %v1399 = vunpack.c.h.b16 %v652
  %v1400 = vunpack.c.l.b16 %v653
  %v1401 = vunpack.c.h.b16 %v653
  %v1402 = vunpack.c.l.b16 %v654
  %v1403 = vunpack.c.h.b16 %v654
  %v1404 = vunpack.c.l.b16 %v655
  %v1405 = vunpack.c.h.b16 %v655
  %v1406 = vunpack.c.l.b16 %v656
  %v1407 = vunpack.c.h.b16 %v656
  %v1408 = vunpack.c.l.b16 %v657
  %v1409 = vunpack.c.h.b16 %v657
  %v1410 = vunpack.c.l.b16 %v658
  %v1411 = vunpack.c.h.b16 %v658
  %v1412 = vunpack.c.l.b16 %v659
  %v1413 = vunpack.c.h.b16 %v659
  %v1414 = vunpack.c.l.b16 %v660
  %v1415 = vunpack.c.h.b16 %v660
  %v1416 = vunpack.c.l.b16 %v661
  %v1417 = vunpack.c.h.b16 %v661
  %v1418 = vunpack.c.l.b16 %v662
  %v1419 = vunpack.c.h.b16 %v662
  %v1420 = vunpack.c.l.b16 %v663
  %v1421 = vunpack.c.h.b16 %v663
  %v1422 = vunpack.c.l.b16 %v664
  %v1423 = vunpack.c.h.b16 %v664
  %v1424 = vunpack.c.l.b16 %v665
  %v1425 = vunpack.c.h.b16 %v665
  %v1426 = vunpack.c.l.b16 %v666
  %v1427 = vunpack.c.h.b16 %v666
  %v1428 = vunpack.c.l.b16 %v667
  %v1429 = vunpack.c.h.b16 %v667
  %v1430 = vunpack.c.l.b16 %v668
  %v1431 = vunpack.c.h.b16 %v668
  %v1432 = vunpack.c.l.b16 %v669
  %v1433 = vunpack.c.h.b16 %v669
  %v1434 = vunpack.c.l.b16 %v670
  %v1435 = vunpack.c.h.b16 %v670
  %v1436 = vunpack.c.l.b16 %v671
  %v1437 = vunpack.c.h.b16 %v671
  %v1438 = vunpack.c.l.b16 %v672
  %v1439 = vunpack.c.h.b16 %v672
  %v1440 = vunpack.c.l.b16 %v673
  %v1441 = vunpack.c.h.b16 %v673
  %v1442 = vpack.c.b16 %v932, %v930
  %v1443 = vpack.c.b16 %v933, %v931
  %v1444 = vpack.c.b16 %v936, %v934
  %v1445 = vpack.c.b16 %v937, %v935
  %v1446 = vpack.c.b16 %v940, %v938
  %v1447 = vpack.c.b16 %v941, %v939
  %v1448 = vpack.c.b16 %v944, %v942
  %v1449 = vpack.c.b16 %v945, %v943
  %v1450 = vpack.c.b16 %v948, %v946
  %v1451 = vpack.c.b16 %v949, %v947
  %v1452 = vpack.c.b16 %v952, %v950
  %v1453 = vpack.c.b16 %v953, %v951
  %v1454 = vpack.c.b16 %v956, %v954
  %v1455 = vpack.c.b16 %v957, %v955
  %v1456 = vpack.c.b16 %v960, %v958
  %v1457 = vpack.c.b16 %v961, %v959
  %v1458 = vpack.c.b16 %v964, %v962
  %v1459 = vpack.c.b16 %v965, %v963
  %v1460 = vpack.c.b16 %v968, %v966
  %v1461 = vpack.c.b16 %v969, %v967
  %v1462 = vpack.c.b16 %v972, %v970
  %v1463 = vpack.c.b16 %v973, %v971
  %v1464 = vpack.c.b16 %v976, %v974
  %v1465 = vpack.c.b16 %v977, %v975
  %v1466 = vpack.c.b16 %v980, %v978
  %v1467 = vpack.c.b16 %v981, %v979
  %v1468 = vpack.c.b16 %v984, %v982
  %v1469 = vpack.c.b16 %v985, %v983
  %v1470 = vpack.c.b16 %v988, %v986
  %v1471 = vpack.c.b16 %v989, %v987
  %v1472 = vpack.c.b16 %v992, %v990
  %v1473 = vpack.c.b16 %v993, %v991
  %v1474 = vpack.c.b16 %v996, %v994
  %v1475 = vpack.c.b16 %v997, %v995
  %v1476 = vpack.c.b16 %v1000, %v998
  %v1477 = vpack.c.b16 %v1001, %v999
  %v1478 = vpack.c.b16 %v1004, %v1002
  %v1479 = vpack.c.b16 %v1005, %v1003
  %v1480 = vpack.c.b16 %v1008, %v1006
  %v1481 = vpack.c.b16 %v1009, %v1007
  %v1482 = vpack.c.b16 %v1012, %v1010
  %v1483 = vpack.c.b16 %v1013, %v1011
  %v1484 = vpack.c.b16 %v1016, %v1014
  %v1485 = vpack.c.b16 %v1017, %v1015
  %v1486 = vpack.c.b16 %v1020, %v1018
  %v1487 = vpack.c.b16 %v1021, %v1019
  %v1488 = vpack.c.b16 %v1024, %v1022
  %v1489 = vpack.c.b16 %v1025, %v1023
  %v1490 = vpack.c.b16 %v1028, %v1026
  %v1491 = vpack.c.b16 %v1029, %v1027
  %v1492 = vpack.c.b16 %v1032, %v1030
  %v1493 = vpack.c.b16 %v1033, %v1031
  %v1494 = vpack.c.b16 %v1036, %v1034
  %v1495 = vpack.c.b16 %v1037, %v1035
  %v1496 = vpack.c.b16 %v1040, %v1038
  %v1497 = vpack.c.b16 %v1041, %v1039
  %v1498 = vpack.c.b16 %v1044, %v1042
  %v1499 = vpack.c.b16 %v1045, %v1043
  %v1500 = vpack.c.b16 %v1048, %v1046
  %v1501 = vpack.c.b16 %v1049, %v1047
  %v1502 = vpack.c.b16 %v1052, %v1050
  %v1503 = vpack.c.b16 %v1053, %v1051
  %v1504 = vpack.c.b16 %v1056, %v1054
  %v1505 = vpack.c.b16 %v1057, %v1055
  %v1506 = vpack.c.b16 %v1060, %v1058
  %v1507 = vpack.c.b16 %v1061, %v1059
  %v1508 = vpack.c.b16 %v1064, %v1062
  %v1509 = vpack.c.b16 %v1065, %v1063
  %v1510 = vpack.c.b16 %v1068, %v1066
  %v1511 = vpack.c.b16 %v1069, %v1067
  %v1512 = vpack.c.b16 %v1072, %v1070
  %v1513 = vpack.c.b16 %v1073, %v1071
  %v1514 = vpack.c.b16 %v1076, %v1074
  %v1515 = vpack.c.b16 %v1077, %v1075
  %v1516 = vpack.c.b16 %v1080, %v1078
  %v1517 = vpack.c.b16 %v1081, %v1079
  %v1518 = vpack.c.b16 %v1084, %v1082
  %v1519 = vpack.c.b16 %v1085, %v1083
  %v1520 = vpack.c.b16 %v1088, %v1086
  %v1521 = vpack.c.b16 %v1089, %v1087
  %v1522 = vpack.c.b16 %v1092, %v1090
  %v1523 = vpack.c.b16 %v1093, %v1091
  %v1524 = vpack.c.b16 %v1096, %v1094
  %v1525 = vpack.c.b16 %v1097, %v1095
  %v1526 = vpack.c.b16 %v1100, %v1098
  %v1527 = vpack.c.b16 %v1101, %v1099
  %v1528 = vpack.c.b16 %v1104, %v1102
  %v1529 = vpack.c.b16 %v1105, %v1103
  %v1530 = vpack.c.b16 %v1108, %v1106
  %v1531 = vpack.c.b16 %v1109, %v1107
  %v1532 = vpack.c.b16 %v1112, %v1110
  %v1533 = vpack.c.b16 %v1113, %v1111
  %v1534 = vpack.c.b16 %v1116, %v1114
  %v1535 = vpack.c.b16 %v1117, %v1115
  %v1536 = vpack.c.b16 %v1120, %v1118
  %v1537 = vpack.c.b16 %v1121, %v1119
  %v1538 = vpack.c.b16 %v1124, %v1122
  %v1539 = vpack.c.b16 %v1125, %v1123
  %v1540 = vpack.c.b16 %v1128, %v1126
  %v1541 = vpack.c.b16 %v1129, %v1127
  %v1542 = vpack.c.b16 %v1132, %v1130
  %v1543 = vpack.c.b16 %v1133, %v1131
  %v1544 = vpack.c.b16 %v1136, %v1134
  %v1545 = vpack.c.b16 %v1137, %v1135
  %v1546 = vpack.c.b16 %v1140, %v1138
  %v1547 = vpack.c.b16 %v1141, %v1139
  %v1548 = vpack.c.b16 %v1144, %v1142
  %v1549 = vpack.c.b16 %v1145, %v1143
  %v1550 = vpack.c.b16 %v1148, %v1146
  %v1551 = vpack.c.b16 %v1149, %v1147
  %v1552 = vpack.c.b16 %v1152, %v1150
  %v1553 = vpack.c.b16 %v1153, %v1151
  %v1554 = vpack.c.b16 %v1156, %v1154
  %v1555 = vpack.c.b16 %v1157, %v1155
  %v1556 = vpack.c.b16 %v1160, %v1158
  %v1557 = vpack.c.b16 %v1161, %v1159
  %v1558 = vpack.c.b16 %v1164, %v1162
  %v1559 = vpack.c.b16 %v1165, %v1163
  %v1560 = vpack.c.b16 %v1168, %v1166
  %v1561 = vpack.c.b16 %v1169, %v1167
  %v1562 = vpack.c.b16 %v1172, %v1170
  %v1563 = vpack.c.b16 %v1173, %v1171
  %v1564 = vpack.c.b16 %v1176, %v1174
  %v1565 = vpack.c.b16 %v1177, %v1175
  %v1566 = vpack.c.b16 %v1180, %v1178
  %v1567 = vpack.c.b16 %v1181, %v1179
  %v1568 = vpack.c.b16 %v1184, %v1182
  %v1569 = vpack.c.b16 %v1185, %v1183
  %v1570 = vpack.c.b16 %v1188, %v1186
  %v1571 = vpack.c.b16 %v1189, %v1187
  %v1572 = vpack.c.b16 %v1192, %v1190
  %v1573 = vpack.c.b16 %v1193, %v1191
  %v1574 = vpack.c.b16 %v1196, %v1194
  %v1575 = vpack.c.b16 %v1197, %v1195
  %v1576 = vpack.c.b16 %v1200, %v1198
  %v1577 = vpack.c.b16 %v1201, %v1199
  %v1578 = vpack.c.b16 %v1204, %v1202
  %v1579 = vpack.c.b16 %v1205, %v1203
  %v1580 = vpack.c.b16 %v1208, %v1206
  %v1581 = vpack.c.b16 %v1209, %v1207
  %v1582 = vpack.c.b16 %v1212, %v1210
  %v1583 = vpack.c.b16 %v1213, %v1211
  %v1584 = vpack.c.b16 %v1216, %v1214
  %v1585 = vpack.c.b16 %v1217, %v1215
  %v1586 = vpack.c.b16 %v1220, %v1218
  %v1587 = vpack.c.b16 %v1221, %v1219
  %v1588 = vpack.c.b16 %v1224, %v1222
  %v1589 = vpack.c.b16 %v1225, %v1223
  %v1590 = vpack.c.b16 %v1228, %v1226
  %v1591 = vpack.c.b16 %v1229, %v1227
  %v1592 = vpack.c.b16 %v1232, %v1230
  %v1593 = vpack.c.b16 %v1233, %v1231
  %v1594 = vpack.c.b16 %v1236, %v1234
  %v1595 = vpack.c.b16 %v1237, %v1235
  %v1596 = vpack.c.b16 %v1240, %v1238
  %v1597 = vpack.c.b16 %v1241, %v1239
  %v1598 = vpack.c.b16 %v1244, %v1242
  %v1599 = vpack.c.b16 %v1245, %v1243
  %v1600 = vpack.c.b16 %v1248, %v1246
  %v1601 = vpack.c.b16 %v1249, %v1247
  %v1602 = vpack.c.b16 %v1252, %v1250
  %v1603 = vpack.c.b16 %v1253, %v1251
  %v1604 = vpack.c.b16 %v1256, %v1254
  %v1605 = vpack.c.b16 %v1257, %v1255
  %v1606 = vpack.c.b16 %v1260, %v1258
  %v1607 = vpack.c.b16 %v1261, %v1259
  %v1608 = vpack.c.b16 %v1264, %v1262
  %v1609 = vpack.c.b16 %v1265, %v1263
  %v1610 = vpack.c.b16 %v1268, %v1266
  %v1611 = vpack.c.b16 %v1269, %v1267
  %v1612 = vpack.c.b16 %v1272, %v1270
  %v1613 = vpack.c.b16 %v1273, %v1271
  %v1614 = vpack.c.b16 %v1276, %v1274
  %v1615 = vpack.c.b16 %v1277, %v1275
  %v1616 = vpack.c.b16 %v1280, %v1278
  %v1617 = vpack.c.b16 %v1281, %v1279
  %v1618 = vpack.c.b16 %v1284, %v1282
  %v1619 = vpack.c.b16 %v1285, %v1283
  %v1620 = vpack.c.b16 %v1288, %v1286
  %v1621 = vpack.c.b16 %v1289, %v1287
  %v1622 = vpack.c.b16 %v1292, %v1290
  %v1623 = vpack.c.b16 %v1293, %v1291
  %v1624 = vpack.c.b16 %v1296, %v1294
  %v1625 = vpack.c.b16 %v1297, %v1295
  %v1626 = vpack.c.b16 %v1300, %v1298
  %v1627 = vpack.c.b16 %v1301, %v1299
  %v1628 = vpack.c.b16 %v1304, %v1302
  %v1629 = vpack.c.b16 %v1305, %v1303
  %v1630 = vpack.c.b16 %v1308, %v1306
  %v1631 = vpack.c.b16 %v1309, %v1307
  %v1632 = vpack.c.b16 %v1312, %v1310
  %v1633 = vpack.c.b16 %v1313, %v1311
  %v1634 = vpack.c.b16 %v1316, %v1314
  %v1635 = vpack.c.b16 %v1317, %v1315
  %v1636 = vpack.c.b16 %v1320, %v1318
  %v1637 = vpack.c.b16 %v1321, %v1319
  %v1638 = vpack.c.b16 %v1324, %v1322
  %v1639 = vpack.c.b16 %v1325, %v1323
  %v1640 = vpack.c.b16 %v1328, %v1326
  %v1641 = vpack.c.b16 %v1329, %v1327
  %v1642 = vpack.c.b16 %v1332, %v1330
  %v1643 = vpack.c.b16 %v1333, %v1331
  %v1644 = vpack.c.b16 %v1336, %v1334
  %v1645 = vpack.c.b16 %v1337, %v1335
  %v1646 = vpack.c.b16 %v1340, %v1338
  %v1647 = vpack.c.b16 %v1341, %v1339
  %v1648 = vpack.c.b16 %v1344, %v1342
  %v1649 = vpack.c.b16 %v1345, %v1343
  %v1650 = vpack.c.b16 %v1348, %v1346
  %v1651 = vpack.c.b16 %v1349, %v1347
  %v1652 = vpack.c.b16 %v1352, %v1350
  %v1653 = vpack.c.b16 %v1353, %v1351
  %v1654 = vpack.c.b16 %v1356, %v1354
  %v1655 = vpack.c.b16 %v1357, %v1355
  %v1656 = vpack.c.b16 %v1360, %v1358
  %v1657 = vpack.c.b16 %v1361, %v1359
  %v1658 = vpack.c.b16 %v1364, %v1362
  %v1659 = vpack.c.b16 %v1365, %v1363
  %v1660 = vpack.c.b16 %v1368, %v1366
  %v1661 = vpack.c.b16 %v1369, %v1367
  %v1662 = vpack.c.b16 %v1372, %v1370
  %v1663 = vpack.c.b16 %v1373, %v1371
  %v1664 = vpack.c.b16 %v1376, %v1374
  %v1665 = vpack.c.b16 %v1377, %v1375
  %v1666 = vpack.c.b16 %v1380, %v1378
  %v1667 = vpack.c.b16 %v1381, %v1379
  %v1668 = vpack.c.b16 %v1384, %v1382
  %v1669 = vpack.c.b16 %v1385, %v1383
  %v1670 = vpack.c.b16 %v1388, %v1386
  %v1671 = vpack.c.b16 %v1389, %v1387
  %v1672 = vpack.c.b16 %v1392, %v1390
  %v1673 = vpack.c.b16 %v1393, %v1391
  %v1674 = vpack.c.b16 %v1396, %v1394
  %v1675 = vpack.c.b16 %v1397, %v1395
  %v1676 = vpack.c.b16 %v1400, %v1398
  %v1677 = vpack.c.b16 %v1401, %v1399
  %v1678 = vpack.c.b16 %v1404, %v1402
  %v1679 = vpack.c.b16 %v1405, %v1403
  %v1680 = vpack.c.b16 %v1408, %v1406
  %v1681 = vpack.c.b16 %v1409, %v1407
  %v1682 = vpack.c.b16 %v1412, %v1410
  %v1683 = vpack.c.b16 %v1413, %v1411
  %v1684 = vpack.c.b16 %v1416, %v1414
  %v1685 = vpack.c.b16 %v1417, %v1415
  %v1686 = vpack.c.b16 %v1420, %v1418
  %v1687 = vpack.c.b16 %v1421, %v1419
  %v1688 = vpack.c.b16 %v1424, %v1422
  %v1689 = vpack.c.b16 %v1425, %v1423
  %v1690 = vpack.c.b16 %v1428, %v1426
  %v1691 = vpack.c.b16 %v1429, %v1427
  %v1692 = vpack.c.b16 %v1432, %v1430
  %v1693 = vpack.c.b16 %v1433, %v1431
  %v1694 = vpack.c.b16 %v1436, %v1434
  %v1695 = vpack.c.b16 %v1437, %v1435
  %v1696 = vpack.c.b16 %v1440, %v1438
  %v1697 = vpack.c.b16 %v1441, %v1439
  %1954 = vmatprep.subr.bf16.mxu0 %v1443
  %1955 = vmatpush1.bf16.msra.mxu0 %v1442
  %1956 = vmatprep.subr.bf16.mxu0 %v1445
  %1957 = vmatpush1.bf16.msra.mxu0 %v1444
  %1958 = vmatprep.subr.bf16.mxu0 %v1447
  %1959 = vmatpush1.bf16.msra.mxu0 %v1446
  %1960 = vmatprep.subr.bf16.mxu0 %v1449
  %1961 = vmatpush1.bf16.msra.mxu0 %v1448
  %1962 = vmatprep.subr.bf16.mxu0 %v1451
  %1963 = vmatpush1.bf16.msra.mxu0 %v1450
  %1964 = vmatprep.subr.bf16.mxu0 %v1453
  %1965 = vmatpush1.bf16.msra.mxu0 %v1452
  %1966 = vmatprep.subr.bf16.mxu0 %v1455
  %1967 = vmatpush1.bf16.msra.mxu0 %v1454
  %1968 = vmatprep.subr.bf16.mxu0 %v1457
  %1969 = vmatpush1.bf16.msra.mxu0 %v1456
  %1970 = vmatprep.subr.bf16.mxu0 %v1459
  %1971 = vmatpush1.bf16.msra.mxu0 %v1458
  %1972 = vmatprep.subr.bf16.mxu0 %v1461
  %1973 = vmatpush1.bf16.msra.mxu0 %v1460
  %1974 = vmatprep.subr.bf16.mxu0 %v1463
  %1975 = vmatpush1.bf16.msra.mxu0 %v1462
  %1976 = vmatprep.subr.bf16.mxu0 %v1465
  %1977 = vmatpush1.bf16.msra.mxu0 %v1464
  %1978 = vmatprep.subr.bf16.mxu0 %v1467
  %1979 = vmatpush1.bf16.msra.mxu0 %v1466
  %1980 = vmatprep.subr.bf16.mxu0 %v1469
  %1981 = vmatpush1.bf16.msra.mxu0 %v1468
  %1982 = vmatprep.subr.bf16.mxu0 %v1471
  %1983 = vmatpush1.bf16.msra.mxu0 %v1470
  %1984 = vmatprep.subr.bf16.mxu0 %v1473
  %1985 = vmatpush1.bf16.msra.mxu0 %v1472
  %1986 = vmatprep.mubr.bf16.mxu0 %v164
  %1987 = vmatmul.mubr.bf16.gmra.mrb[0].mxu0 %v163
  %v1988 = vpop.f32.mrb[0].mxu0
  %v1989 = vadd.f32 0.0, %v1988
  %v1990 = vpop.f32.mrb[0].mxu0
  %v1991 = vadd.f32 0.0, %v1990
  %v1992 = vpop.f32.mrb[0].mxu0
  %v1993 = vadd.f32 0.0, %v1992
  %v1994 = vpop.f32.mrb[0].mxu0
  %v1995 = vadd.f32 0.0, %v1994
  %1996 = vmatprep.mubr.bf16.mxu0 %v168
  %1997 = vmatmul.mubr.bf16.gmra.mrb[0].mxu0 %v167
  %v1998 = vpop.f32.mrb[0].mxu0
  %v1999 = vadd.f32 0.0, %v1998
  %v2000 = vpop.f32.mrb[0].mxu0
  %v2001 = vadd.f32 0.0, %v2000
  %v2002 = vpop.f32.mrb[0].mxu0
  %v2003 = vadd.f32 0.0, %v2002
  %v2004 = vpop.f32.mrb[0].mxu0
  %v2005 = vadd.f32 0.0, %v2004
  %2006 = vdwg.mxu0
  %2007 = vmatprep.subr.bf16.mxu0 %v1475
  %2008 = vmatpush1.bf16.msra.mxu0 %v1474
  %2009 = vmatprep.subr.bf16.mxu0 %v1477
  %2010 = vmatpush1.bf16.msra.mxu0 %v1476
  %2011 = vmatprep.subr.bf16.mxu0 %v1479
  %2012 = vmatpush1.bf16.msra.mxu0 %v1478
  %2013 = vmatprep.subr.bf16.mxu0 %v1481
  %2014 = vmatpush1.bf16.msra.mxu0 %v1480
  %2015 = vmatprep.subr.bf16.mxu0 %v1483
  %2016 = vmatpush1.bf16.msra.mxu0 %v1482
  %2017 = vmatprep.subr.bf16.mxu0 %v1485
  %2018 = vmatpush1.bf16.msra.mxu0 %v1484
  %2019 = vmatprep.subr.bf16.mxu0 %v1487
  %2020 = vmatpush1.bf16.msra.mxu0 %v1486
  %2021 = vmatprep.subr.bf16.mxu0 %v1489
  %2022 = vmatpush1.bf16.msra.mxu0 %v1488
  %2023 = vmatprep.subr.bf16.mxu0 %v1491
  %2024 = vmatpush1.bf16.msra.mxu0 %v1490
  %2025 = vmatprep.subr.bf16.mxu0 %v1493
  %2026 = vmatpush1.bf16.msra.mxu0 %v1492
  %2027 = vmatprep.subr.bf16.mxu0 %v1495
  %2028 = vmatpush1.bf16.msra.mxu0 %v1494
  %2029 = vmatprep.subr.bf16.mxu0 %v1497
  %2030 = vmatpush1.bf16.msra.mxu0 %v1496
  %2031 = vmatprep.subr.bf16.mxu0 %v1499
  %2032 = vmatpush1.bf16.msra.mxu0 %v1498
  %2033 = vmatprep.subr.bf16.mxu0 %v1501
  %2034 = vmatpush1.bf16.msra.mxu0 %v1500
  %2035 = vmatprep.subr.bf16.mxu0 %v1503
  %2036 = vmatpush1.bf16.msra.mxu0 %v1502
  %2037 = vmatprep.subr.bf16.mxu0 %v1505
  %2038 = vmatpush1.bf16.msra.mxu0 %v1504
  %2039 = vmatprep.mubr.bf16.mxu0 %v166
  %2040 = vmatmul.mubr.bf16.gmra.mrb[0].mxu0 %v165
  %v2041 = vpop.f32.mrb[0].mxu0
  %v2042 = vadd.f32 %v1989, %v2041
  %v2043 = vpop.f32.mrb[0].mxu0
  %v2044 = vadd.f32 %v1991, %v2043
  %v2045 = vpop.f32.mrb[0].mxu0
  %v2046 = vadd.f32 %v1993, %v2045
  %v2047 = vpop.f32.mrb[0].mxu0
  %v2048 = vadd.f32 %v1995, %v2047
  %2049 = vmatprep.mubr.bf16.mxu0 %v170
  %2050 = vmatmul.mubr.bf16.gmra.mrb[0].mxu0 %v169
  %v2051 = vpop.f32.mrb[0].mxu0
  %v2052 = vadd.f32 %v1999, %v2051
  %v2053 = vpop.f32.mrb[0].mxu0
  %v2054 = vadd.f32 %v2001, %v2053
  %v2055 = vpop.f32.mrb[0].mxu0
  %v2056 = vadd.f32 %v2003, %v2055
  %v2057 = vpop.f32.mrb[0].mxu0
  %v2058 = vadd.f32 %v2005, %v2057
  %2059 = vdwg.mxu0
  %2060 = vmatprep.subr.bf16.mxu0 %v1507
  %2061 = vmatpush1.bf16.msra.mxu0 %v1506
  %2062 = vmatprep.subr.bf16.mxu0 %v1509
  %2063 = vmatpush1.bf16.msra.mxu0 %v1508
  %2064 = vmatprep.subr.bf16.mxu0 %v1511
  %2065 = vmatpush1.bf16.msra.mxu0 %v1510
  %2066 = vmatprep.subr.bf16.mxu0 %v1513
  %2067 = vmatpush1.bf16.msra.mxu0 %v1512
  %2068 = vmatprep.subr.bf16.mxu0 %v1515
  %2069 = vmatpush1.bf16.msra.mxu0 %v1514
  %2070 = vmatprep.subr.bf16.mxu0 %v1517
  %2071 = vmatpush1.bf16.msra.mxu0 %v1516
  %2072 = vmatprep.subr.bf16.mxu0 %v1519
  %2073 = vmatpush1.bf16.msra.mxu0 %v1518
  %2074 = vmatprep.subr.bf16.mxu0 %v1521
  %2075 = vmatpush1.bf16.msra.mxu0 %v1520
  %2076 = vmatprep.subr.bf16.mxu0 %v1523
  %2077 = vmatpush1.bf16.msra.mxu0 %v1522
  %2078 = vmatprep.subr.bf16.mxu0 %v1525
  %2079 = vmatpush1.bf16.msra.mxu0 %v1524
  %2080 = vmatprep.subr.bf16.mxu0 %v1527
  %2081 = vmatpush1.bf16.msra.mxu0 %v1526
  %2082 = vmatprep.subr.bf16.mxu0 %v1529
  %2083 = vmatpush1.bf16.msra.mxu0 %v1528
  %2084 = vmatprep.subr.bf16.mxu0 %v1531
  %2085 = vmatpush1.bf16.msra.mxu0 %v1530
  %2086 = vmatprep.subr.bf16.mxu0 %v1533
  %2087 = vmatpush1.bf16.msra.mxu0 %v1532
  %2088 = vmatprep.subr.bf16.mxu0 %v1535
  %2089 = vmatpush1.bf16.msra.mxu0 %v1534
  %2090 = vmatprep.subr.bf16.mxu0 %v1537
  %2091 = vmatpush1.bf16.msra.mxu0 %v1536
  %2092 = vmatprep.mubr.bf16.mxu0 %v219
  %2093 = vmatmul.mubr.bf16.gmra.mrb[0].mxu0 %v207
  %v2094 = vpop.f32.mrb[0].mxu0
  %v2095 = vadd.f32 %v2042, %v2094
  %v2096 = vpop.f32.mrb[0].mxu0
  %v2097 = vadd.f32 %v2044, %v2096
  %v2098 = vpop.f32.mrb[0].mxu0
  %v2099 = vadd.f32 %v2046, %v2098
  %v2100 = vpop.f32.mrb[0].mxu0
  %v2101 = vadd.f32 %v2048, %v2100
  %2102 = vmatprep.mubr.bf16.mxu0 %v259
  %2103 = vmatmul.mubr.bf16.gmra.mrb[0].mxu0 %v251
  %v2104 = vpop.f32.mrb[0].mxu0
  %v2105 = vadd.f32 %v2052, %v2104
  %v2106 = vpop.f32.mrb[0].mxu0
  %v2107 = vadd.f32 %v2054, %v2106
  %v2108 = vpop.f32.mrb[0].mxu0
  %v2109 = vadd.f32 %v2056, %v2108
  %v2110 = vpop.f32.mrb[0].mxu0
  %v2111 = vadd.f32 %v2058, %v2110
  %2112 = vdwg.mxu0
  %2113 = vmatprep.subr.bf16.mxu0 %v1539
  %2114 = vmatpush1.bf16.msra.mxu0 %v1538
  %2115 = vmatprep.subr.bf16.mxu0 %v1541
  %2116 = vmatpush1.bf16.msra.mxu0 %v1540
  %2117 = vmatprep.subr.bf16.mxu0 %v1543
  %2118 = vmatpush1.bf16.msra.mxu0 %v1542
  %2119 = vmatprep.subr.bf16.mxu0 %v1545
  %2120 = vmatpush1.bf16.msra.mxu0 %v1544
  %2121 = vmatprep.subr.bf16.mxu0 %v1547
  %2122 = vmatpush1.bf16.msra.mxu0 %v1546
  %2123 = vmatprep.subr.bf16.mxu0 %v1549
  %2124 = vmatpush1.bf16.msra.mxu0 %v1548
  %2125 = vmatprep.subr.bf16.mxu0 %v1551
  %2126 = vmatpush1.bf16.msra.mxu0 %v1550
  %2127 = vmatprep.subr.bf16.mxu0 %v1553
  %2128 = vmatpush1.bf16.msra.mxu0 %v1552
  %2129 = vmatprep.subr.bf16.mxu0 %v1555
  %2130 = vmatpush1.bf16.msra.mxu0 %v1554
  %2131 = vmatprep.subr.bf16.mxu0 %v1557
  %2132 = vmatpush1.bf16.msra.mxu0 %v1556
  %2133 = vmatprep.subr.bf16.mxu0 %v1559
  %2134 = vmatpush1.bf16.msra.mxu0 %v1558
  %2135 = vmatprep.subr.bf16.mxu0 %v1561
  %2136 = vmatpush1.bf16.msra.mxu0 %v1560
  %2137 = vmatprep.subr.bf16.mxu0 %v1563
  %2138 = vmatpush1.bf16.msra.mxu0 %v1562
  %2139 = vmatprep.subr.bf16.mxu0 %v1565
  %2140 = vmatpush1.bf16.msra.mxu0 %v1564
  %2141 = vmatprep.subr.bf16.mxu0 %v1567
  %2142 = vmatpush1.bf16.msra.mxu0 %v1566
  %2143 = vmatprep.subr.bf16.mxu0 %v1569
  %2144 = vmatpush1.bf16.msra.mxu0 %v1568
  %2145 = vmatprep.mubr.bf16.mxu0 %v243
  %2146 = vmatmul.mubr.bf16.gmra.mrb[0].mxu0 %v231
  %v2147 = vpop.f32.mrb[0].mxu0
  %v2148 = vadd.f32 %v2095, %v2147
  %v2149 = vpop.f32.mrb[0].mxu0
  %v2150 = vadd.f32 %v2097, %v2149
  %v2151 = vpop.f32.mrb[0].mxu0
  %v2152 = vadd.f32 %v2099, %v2151
  %v2153 = vpop.f32.mrb[0].mxu0
  %v2154 = vadd.f32 %v2101, %v2153
  %2155 = vmatprep.mubr.bf16.mxu0 %v275
  %2156 = vmatmul.mubr.bf16.gmra.mrb[0].mxu0 %v267
  %v2157 = vpop.f32.mrb[0].mxu0
  %v2158 = vadd.f32 %v2105, %v2157
  %v2159 = vpop.f32.mrb[0].mxu0
  %v2160 = vadd.f32 %v2107, %v2159
  %v2161 = vpop.f32.mrb[0].mxu0
  %v2162 = vadd.f32 %v2109, %v2161
  %v2163 = vpop.f32.mrb[0].mxu0
  %v2164 = vadd.f32 %v2111, %v2163
  %2165 = vdwg.mxu0
  %2166 = vmatprep.subr.bf16.mxu0 %v1571
  %2167 = vmatpush1.bf16.msra.mxu0 %v1570
  %2168 = vmatprep.subr.bf16.mxu0 %v1573
  %2169 = vmatpush1.bf16.msra.mxu0 %v1572
  %2170 = vmatprep.subr.bf16.mxu0 %v1575
  %2171 = vmatpush1.bf16.msra.mxu0 %v1574
  %2172 = vmatprep.subr.bf16.mxu0 %v1577
  %2173 = vmatpush1.bf16.msra.mxu0 %v1576
  %2174 = vmatprep.subr.bf16.mxu0 %v1579
  %2175 = vmatpush1.bf16.msra.mxu0 %v1578
  %2176 = vmatprep.subr.bf16.mxu0 %v1581
  %2177 = vmatpush1.bf16.msra.mxu0 %v1580
  %2178 = vmatprep.subr.bf16.mxu0 %v1583
  %2179 = vmatpush1.bf16.msra.mxu0 %v1582
  %2180 = vmatprep.subr.bf16.mxu0 %v1585
  %2181 = vmatpush1.bf16.msra.mxu0 %v1584
  %2182 = vmatprep.subr.bf16.mxu0 %v1587
  %2183 = vmatpush1.bf16.msra.mxu0 %v1586
  %2184 = vmatprep.subr.bf16.mxu0 %v1589
  %2185 = vmatpush1.bf16.msra.mxu0 %v1588
  %2186 = vmatprep.subr.bf16.mxu0 %v1591
  %2187 = vmatpush1.bf16.msra.mxu0 %v1590
  %2188 = vmatprep.subr.bf16.mxu0 %v1593
  %2189 = vmatpush1.bf16.msra.mxu0 %v1592
  %2190 = vmatprep.subr.bf16.mxu0 %v1595
  %2191 = vmatpush1.bf16.msra.mxu0 %v1594
  %2192 = vmatprep.subr.bf16.mxu0 %v1597
  %2193 = vmatpush1.bf16.msra.mxu0 %v1596
  %2194 = vmatprep.subr.bf16.mxu0 %v1599
  %2195 = vmatpush1.bf16.msra.mxu0 %v1598
  %2196 = vmatprep.subr.bf16.mxu0 %v1601
  %2197 = vmatpush1.bf16.msra.mxu0 %v1600
  %2198 = vmatprep.mubr.bf16.mxu0 %v302
  %2199 = vmatmul.mubr.bf16.gmra.mrb[0].mxu0 %v299
  %v2200 = vpop.f32.mrb[0].mxu0
  %v2201 = vadd.f32 %v2148, %v2200
  %v2202 = vpop.f32.mrb[0].mxu0
  %v2203 = vadd.f32 %v2150, %v2202
  %v2204 = vpop.f32.mrb[0].mxu0
  %v2205 = vadd.f32 %v2152, %v2204
  %v2206 = vpop.f32.mrb[0].mxu0
  %v2207 = vadd.f32 %v2154, %v2206
  %2208 = vmatprep.mubr.bf16.mxu0 %v312
  %2209 = vmatmul.mubr.bf16.gmra.mrb[0].mxu0 %v310
  %v2210 = vpop.f32.mrb[0].mxu0
  %v2211 = vadd.f32 %v2158, %v2210
  %v2212 = vpop.f32.mrb[0].mxu0
  %v2213 = vadd.f32 %v2160, %v2212
  %v2214 = vpop.f32.mrb[0].mxu0
  %v2215 = vadd.f32 %v2162, %v2214
  %v2216 = vpop.f32.mrb[0].mxu0
  %v2217 = vadd.f32 %v2164, %v2216
  %2218 = vdwg.mxu0
  %2219 = vmatprep.subr.bf16.mxu0 %v1603
  %2220 = vmatpush1.bf16.msra.mxu0 %v1602
  %2221 = vmatprep.subr.bf16.mxu0 %v1605
  %2222 = vmatpush1.bf16.msra.mxu0 %v1604
  %2223 = vmatprep.subr.bf16.mxu0 %v1607
  %2224 = vmatpush1.bf16.msra.mxu0 %v1606
  %2225 = vmatprep.subr.bf16.mxu0 %v1609
  %2226 = vmatpush1.bf16.msra.mxu0 %v1608
  %2227 = vmatprep.subr.bf16.mxu0 %v1611
  %2228 = vmatpush1.bf16.msra.mxu0 %v1610
  %2229 = vmatprep.subr.bf16.mxu0 %v1613
  %2230 = vmatpush1.bf16.msra.mxu0 %v1612
  %2231 = vmatprep.subr.bf16.mxu0 %v1615
  %2232 = vmatpush1.bf16.msra.mxu0 %v1614
  %2233 = vmatprep.subr.bf16.mxu0 %v1617
  %2234 = vmatpush1.bf16.msra.mxu0 %v1616
  %2235 = vmatprep.subr.bf16.mxu0 %v1619
  %2236 = vmatpush1.bf16.msra.mxu0 %v1618
  %2237 = vmatprep.subr.bf16.mxu0 %v1621
  %2238 = vmatpush1.bf16.msra.mxu0 %v1620
  %2239 = vmatprep.subr.bf16.mxu0 %v1623
  %2240 = vmatpush1.bf16.msra.mxu0 %v1622
  %2241 = vmatprep.subr.bf16.mxu0 %v1625
  %2242 = vmatpush1.bf16.msra.mxu0 %v1624
  %2243 = vmatprep.subr.bf16.mxu0 %v1627
  %2244 = vmatpush1.bf16.msra.mxu0 %v1626
  %2245 = vmatprep.subr.bf16.mxu0 %v1629
  %2246 = vmatpush1.bf16.msra.mxu0 %v1628
  %2247 = vmatprep.subr.bf16.mxu0 %v1631
  %2248 = vmatpush1.bf16.msra.mxu0 %v1630
  %2249 = vmatprep.subr.bf16.mxu0 %v1633
  %2250 = vmatpush1.bf16.msra.mxu0 %v1632
  %2251 = vmatprep.mubr.bf16.mxu0 %v308
  %2252 = vmatmul.mubr.bf16.gmra.mrb[0].mxu0 %v305
  %v2253 = vpop.f32.mrb[0].mxu0
  %v2254 = vadd.f32 %v2201, %v2253
  %v2255 = vpop.f32.mrb[0].mxu0
  %v2256 = vadd.f32 %v2203, %v2255
  %v2257 = vpop.f32.mrb[0].mxu0
  %v2258 = vadd.f32 %v2205, %v2257
  %v2259 = vpop.f32.mrb[0].mxu0
  %v2260 = vadd.f32 %v2207, %v2259
  %2261 = vmatprep.mubr.bf16.mxu0 %v316
  %2262 = vmatmul.mubr.bf16.gmra.mrb[0].mxu0 %v314
  %v2263 = vpop.f32.mrb[0].mxu0
  %v2264 = vadd.f32 %v2211, %v2263
  %v2265 = vpop.f32.mrb[0].mxu0
  %v2266 = vadd.f32 %v2213, %v2265
  %v2267 = vpop.f32.mrb[0].mxu0
  %v2268 = vadd.f32 %v2215, %v2267
  %v2269 = vpop.f32.mrb[0].mxu0
  %v2270 = vadd.f32 %v2217, %v2269
  %2271 = vdwg.mxu0
  %2272 = vmatprep.subr.bf16.mxu0 %v1635
  %2273 = vmatpush1.bf16.msra.mxu0 %v1634
  %2274 = vmatprep.subr.bf16.mxu0 %v1637
  %2275 = vmatpush1.bf16.msra.mxu0 %v1636
  %2276 = vmatprep.subr.bf16.mxu0 %v1639
  %2277 = vmatpush1.bf16.msra.mxu0 %v1638
  %2278 = vmatprep.subr.bf16.mxu0 %v1641
  %2279 = vmatpush1.bf16.msra.mxu0 %v1640
  %2280 = vmatprep.subr.bf16.mxu0 %v1643
  %2281 = vmatpush1.bf16.msra.mxu0 %v1642
  %2282 = vmatprep.subr.bf16.mxu0 %v1645
  %2283 = vmatpush1.bf16.msra.mxu0 %v1644
  %2284 = vmatprep.subr.bf16.mxu0 %v1647
  %2285 = vmatpush1.bf16.msra.mxu0 %v1646
  %2286 = vmatprep.subr.bf16.mxu0 %v1649
  %2287 = vmatpush1.bf16.msra.mxu0 %v1648
  %2288 = vmatprep.subr.bf16.mxu0 %v1651
  %2289 = vmatpush1.bf16.msra.mxu0 %v1650
  %2290 = vmatprep.subr.bf16.mxu0 %v1653
  %2291 = vmatpush1.bf16.msra.mxu0 %v1652
  %2292 = vmatprep.subr.bf16.mxu0 %v1655
  %2293 = vmatpush1.bf16.msra.mxu0 %v1654
  %2294 = vmatprep.subr.bf16.mxu0 %v1657
  %2295 = vmatpush1.bf16.msra.mxu0 %v1656
  %2296 = vmatprep.subr.bf16.mxu0 %v1659
  %2297 = vmatpush1.bf16.msra.mxu0 %v1658
  %2298 = vmatprep.subr.bf16.mxu0 %v1661
  %2299 = vmatpush1.bf16.msra.mxu0 %v1660
  %2300 = vmatprep.subr.bf16.mxu0 %v1663
  %2301 = vmatpush1.bf16.msra.mxu0 %v1662
  %2302 = vmatprep.subr.bf16.mxu0 %v1665
  %2303 = vmatpush1.bf16.msra.mxu0 %v1664
  %2304 = vmatprep.mubr.bf16.mxu0 %v349
  %2305 = vmatmul.mubr.bf16.gmra.mrb[0].mxu0 %v337
  %v2306 = vpop.f32.mrb[0].mxu0
  %v2307 = vadd.f32 %v2254, %v2306
  %v2308 = vpop.f32.mrb[0].mxu0
  %v2309 = vadd.f32 %v2256, %v2308
  %v2310 = vpop.f32.mrb[0].mxu0
  %v2311 = vadd.f32 %v2258, %v2310
  %v2312 = vpop.f32.mrb[0].mxu0
  %v2313 = vadd.f32 %v2260, %v2312
  %2314 = vmatprep.mubr.bf16.mxu0 %v391
  %2315 = vmatmul.mubr.bf16.gmra.mrb[0].mxu0 %v382
  %v2316 = vpop.f32.mrb[0].mxu0
  %v2317 = vadd.f32 %v2264, %v2316
  %v2318 = vpop.f32.mrb[0].mxu0
  %v2319 = vadd.f32 %v2266, %v2318
  %v2320 = vpop.f32.mrb[0].mxu0
  %v2321 = vadd.f32 %v2268, %v2320
  %v2322 = vpop.f32.mrb[0].mxu0
  %v2323 = vadd.f32 %v2270, %v2322
  %2324 = vdwg.mxu0
  %2325 = vmatprep.subr.bf16.mxu0 %v1667
  %2326 = vmatpush1.bf16.msra.mxu0 %v1666
  %2327 = vmatprep.subr.bf16.mxu0 %v1669
  %2328 = vmatpush1.bf16.msra.mxu0 %v1668
  %2329 = vmatprep.subr.bf16.mxu0 %v1671
  %2330 = vmatpush1.bf16.msra.mxu0 %v1670
  %2331 = vmatprep.subr.bf16.mxu0 %v1673
  %2332 = vmatpush1.bf16.msra.mxu0 %v1672
  %2333 = vmatprep.subr.bf16.mxu0 %v1675
  %2334 = vmatpush1.bf16.msra.mxu0 %v1674
  %2335 = vmatprep.subr.bf16.mxu0 %v1677
  %2336 = vmatpush1.bf16.msra.mxu0 %v1676
  %2337 = vmatprep.subr.bf16.mxu0 %v1679
  %2338 = vmatpush1.bf16.msra.mxu0 %v1678
  %2339 = vmatprep.subr.bf16.mxu0 %v1681
  %2340 = vmatpush1.bf16.msra.mxu0 %v1680
  %2341 = vmatprep.subr.bf16.mxu0 %v1683
  %2342 = vmatpush1.bf16.msra.mxu0 %v1682
  %2343 = vmatprep.subr.bf16.mxu0 %v1685
  %2344 = vmatpush1.bf16.msra.mxu0 %v1684
  %2345 = vmatprep.subr.bf16.mxu0 %v1687
  %2346 = vmatpush1.bf16.msra.mxu0 %v1686
  %2347 = vmatprep.subr.bf16.mxu0 %v1689
  %2348 = vmatpush1.bf16.msra.mxu0 %v1688
  %2349 = vmatprep.subr.bf16.mxu0 %v1691
  %2350 = vmatpush1.bf16.msra.mxu0 %v1690
  %2351 = vmatprep.subr.bf16.mxu0 %v1693
  %2352 = vmatpush1.bf16.msra.mxu0 %v1692
  %2353 = vmatprep.subr.bf16.mxu0 %v1695
  %2354 = vmatpush1.bf16.msra.mxu0 %v1694
  %2355 = vmatprep.subr.bf16.mxu0 %v1697
  %2356 = vmatpush1.bf16.msra.mxu0 %v1696
  %2357 = vmatprep.mubr.bf16.mxu0 %v373
  %2358 = vmatmul.mubr.bf16.gmra.mrb[0].mxu0 %v361
  %v2359 = vpop.f32.mrb[0].mxu0
  %v2360 = vadd.f32 %v2307, %v2359
  %v2361 = vpop.f32.mrb[0].mxu0
  %v2362 = vadd.f32 %v2309, %v2361
  %v2363 = vpop.f32.mrb[0].mxu0
  %v2364 = vadd.f32 %v2311, %v2363
  %v2365 = vpop.f32.mrb[0].mxu0
  %v2366 = vadd.f32 %v2313, %v2365
  %2367 = vmatprep.mubr.bf16.mxu0 %v409
  %2368 = vmatmul.mubr.bf16.gmra.mrb[0].mxu0 %v400
  %v2369 = vpop.f32.mrb[0].mxu0
  %v2370 = vadd.f32 %v2317, %v2369
  %v2371 = vpop.f32.mrb[0].mxu0
  %v2372 = vadd.f32 %v2319, %v2371
  %v2373 = vpop.f32.mrb[0].mxu0
  %v2374 = vadd.f32 %v2321, %v2373
  %v2375 = vpop.f32.mrb[0].mxu0
  %v2376 = vadd.f32 %v2323, %v2375
  %2377 = vdwg.mxu0
  %vm2378 = vcmp.ge.f32.partialorder %v2360, 0.0
  %vm2379 = vcmp.ge.f32.partialorder %v2362, 0.0
  %vm2380 = vcmp.ge.f32.partialorder %v2364, 0.0
  %vm2381 = vcmp.ge.f32.partialorder %v2366, 0.0
  %vm2382 = vcmp.ge.f32.partialorder %v2370, 0.0
  %vm2383 = vcmp.ge.f32.partialorder %v2372, 0.0
  %vm2384 = vcmp.ge.f32.partialorder %v2374, 0.0
  %vm2385 = vcmp.ge.f32.partialorder %v2376, 0.0
  %v2386 = vmul.f32 %v2360, 0.2
  %v2387 = vmul.f32 %v2362, 0.2
  %v2388 = vmul.f32 %v2364, 0.2
  %v2389 = vmul.f32 %v2366, 0.2
  %v2390 = vmul.f32 %v2370, 0.2
  %v2391 = vmul.f32 %v2372, 0.2
  %v2392 = vmul.f32 %v2374, 0.2
  %v2393 = vmul.f32 %v2376, 0.2
  %v2394 = vsel %vm2378, %v2360, %v2386
  %v2395 = vsel %vm2379, %v2362, %v2387
  %v2396 = vsel %vm2380, %v2364, %v2388
  %v2397 = vsel %vm2381, %v2366, %v2389
  %v2398 = vsel %vm2382, %v2370, %v2390
  %v2399 = vsel %vm2383, %v2372, %v2391
  %v2400 = vsel %vm2384, %v2374, %v2392
  %v2401 = vsel %vm2385, %v2376, %v2393
  %v2402 = vpack.c.bf16 %v2396, %v2394
  %v2403 = vpack.c.bf16 %v2397, %v2395
  %v2404 = vpack.c.bf16 %v2400, %v2398
  %v2405 = vpack.c.bf16 %v2401, %v2399
  %v2410 = vunpack.c.l.b16 %v2402
  %v2411 = vunpack.c.l.b16 %v2403
  %v2412 = vunpack.c.h.b16 %v2402
  %v2413 = vunpack.c.h.b16 %v2403
  %v2414 = vunpack.c.l.b16 %v2404
  %v2415 = vunpack.c.l.b16 %v2405
  %v2416 = vunpack.c.h.b16 %v2404
  %v2417 = vunpack.c.h.b16 %v2405
  %v2418 = vpack.c.b16 %v2411, %v2410
  %v2419 = vpack.c.b16 %v2413, %v2412
  %v2420 = vpack.c.b16 %v2415, %v2414
  %v2421 = vpack.c.b16 %v2417, %v2416
  %2426 = vst [vmem:[%s2] sm:$0xff] %v2418
  %2427 = vst [vmem:[%s2 + $0x8] sm:$0xff] %v2419
  %2428 = vst [vmem:[%s2 + $0x10] sm:$0xff] %v2420
  %2429 = vst [vmem:[%s2 + $0x18] sm:$0xff] %v2421
  // Predicated region
  $region43: #{pose_encoder_forward.11} parent=0 // pred_check
    _
  $region44: #{pose_encoder_forward.11} parent=0 // pred_check_branch
    %2431 = sbr.rel (0) target = $region46
  $region45: #{pose_encoder_forward.11} parent=0 // pred_region
    _
  $region46: #{pose_encoder_forward.11} parent=0 // pred_fallthru
    _
  // Predicated region
  $region47: #{pose_encoder_forward.11} parent=0 // pred_check
    _
  $region48: #{pose_encoder_forward.11} parent=0 // pred_check_branch
    %2433 = sbr.rel (0) target = $region50
  $region49: #{pose_encoder_forward.11} parent=0 // pred_region
    _
  $region50: #{pose_encoder_forward.11} parent=0 // pred_fallthru
    _
  %2434 = vsyncmov [#allocation3]
  %s2435 = vpop.sfrf %2434
  %p2436 = scmp.eq.s32.totalorder %s2435, 0
  %p2437 = pneg %p2436
  %2439 = shalt.err (%p2437)

// kernel: pose_encoder_forward.12
$region0: #{pose_encoder_forward.12}
  #allocation0 [shape = 'u32[]', space=smem, size = 0x4, offset = 0x4, fixed_abs, tag = 'smem constant byte address 0x4 - core index']
  #allocation1 [shape = 'u32[144,128]{1,0:T(1,128)}', space=vmem, size = 0x12000, scoped, tag = 'internal scratch']
  #allocation2 [shape = 'bf16[48,1024]{1,0:T(16,128)(2,1)}', space=vmem, size = 0x18000, scoped, tag = 'scratch operand']
  #allocation3 [shape = 's32[1]{0}', space=sflag, size = 0x4, scoped, tag = 'scratch operand']
  #allocation4 [shape = 's32[]', space=sflag, size = 0x4, offset = 0, fixed_abs, tag = 'sflag constant byte address 0x0 - dummy sync flag']
  %s0 = inlined_call_operand.vmem [shape: bf16[48,1024], index: 0, kind: input, shape index: {}]
  %s1 = inlined_call_operand.vmem [shape: bf16[4096,256], index: 1, kind: input, shape index: {}]
  %s2 = inlined_call_operand.vmem [shape: bf16[32,256], index: 2, kind: output, shape index: {}]
  %s3 = sld [smem:[#allocation0]]
  $region51: #{pose_encoder_forward.12} parent=0
    _
  %s5 = ssub.s32 1, %s3
  %s6 = scalar_select 0, %s5, %s3
  // Predicated region
  $region2: #{pose_encoder_forward.12} parent=0 // pred_check
    _
  $region3: #{pose_encoder_forward.12} parent=0 // pred_check_branch
    %8 = sbr.rel (0) target = $region5
  $region4: #{pose_encoder_forward.12} parent=0 // pred_region
    _
  $region5: #{pose_encoder_forward.12} parent=0 // pred_fallthru
    _
  %s9 = smul.u32 0, 32
  %s10 = sshra.s32 %s9, 3
  %s11 = sand.u32 %s9, 7
  %s12 = smul.u32 %s10, 8
  %s13 = smul.addr %s12, 4
  %s14 = scalar_lea.vmem %s0, %s13
  %p16 = scmp.lt.u32.totalorder 4, 8
  %p17 = pneg %p16
  // Predicated region
  $region6: #{pose_encoder_forward.12} parent=0 // pred_check
    _
  $region7: #{pose_encoder_forward.12} parent=0 // pred_check_branch
    %19 = sbr.rel (%p16) target = $region9
  $region8: #{pose_encoder_forward.12} parent=0 // pred_region
    %s128 = sand.u32 4, 7
    %p129 = scmp.eq.s32.totalorder %s128, 0
    %p130 = pneg %p129
    // Predicated region
    $region21: #{pose_encoder_forward.12} parent=8 // pred_check
      _
    $region22: #{pose_encoder_forward.12} parent=8 // pred_check_branch
      %132 = sbr.rel (%p129) target = $region24
    $region23: #{pose_encoder_forward.12} parent=8 // pred_region
      %s133 = sand.u32 4, 7
      %s134 = ssub.s32 4, %s133
      %s135 = scalar_lea.vmem %s14, %s134
      %s136 = ssub.s32 4, %s133
      %s137 = scalar_lea.vmem [#allocation2], %s136
      loop: start=0, step=1, limit=1
      $region25: #{pose_encoder_forward.12} parent=23 // loop_pre_header
        _
      $region26: #{pose_encoder_forward.12} parent=23 // loop_header
        %s139 = sphi 0, %s143
        %p140 = scmp.ge.s32.totalorder %s139, 1
        %s144 = sphi %s14, %s14
        %s145 = sphi [#allocation2], [#allocation2]
      $region27: #{pose_encoder_forward.12} parent=23 // loop_header_branch
        %142 = sbr.rel (%p140) target = $region31
      $region28: #{pose_encoder_forward.12} parent=23 // loop_body
        _
      $region29: #{pose_encoder_forward.12} parent=23 // loop_footer
        %s143 = sadd.s32 1, %s139
      $region30: #{pose_encoder_forward.12} parent=23 // loop_footer_branch
        %138 = sbr.rel target = $region26
      $region31: #{pose_encoder_forward.12} parent=23 // loop_exit
        _
      %s146 = sshllo.u32 0, %s133
      loop: start=0, step=1, limit=1
      $region32: #{pose_encoder_forward.12} parent=23 // loop_pre_header
        _
      $region33: #{pose_encoder_forward.12} parent=23 // loop_header
        %s148 = sphi 0, %s152
        %p149 = scmp.ge.s32.totalorder %s148, 1
        %s153 = sphi %s135, %s135
        %s154 = sphi %s137, %s137
      $region34: #{pose_encoder_forward.12} parent=23 // loop_header_branch
        %151 = sbr.rel (%p149) target = $region38
      $region35: #{pose_encoder_forward.12} parent=23 // loop_body
        %v155 = vld [vmem:[%s153] sm:%s146]
        %156 = vst [vmem:[%s154] sm:%s146] %v155
        %v157 = vld [vmem:[%s153 + $0x20] sm:%s146]
        %158 = vst [vmem:[%s154 + $0x4] sm:%s146] %v157
        %v159 = vld [vmem:[%s153 + $0x4] sm:%s146]
        %160 = vst [vmem:[%s154 + $0x8] sm:%s146] %v159
        %v161 = vld [vmem:[%s153 + $0x24] sm:%s146]
        %162 = vst [vmem:[%s154 + $0xc] sm:%s146] %v161
        %v163 = vld [vmem:[%s153 + $0x8] sm:%s146]
        %164 = vst [vmem:[%s154 + $0x10] sm:%s146] %v163
        %v165 = vld [vmem:[%s153 + $0x28] sm:%s146]
        %166 = vst [vmem:[%s154 + $0x14] sm:%s146] %v165
        %v167 = vld [vmem:[%s153 + $0xc] sm:%s146]
        %168 = vst [vmem:[%s154 + $0x18] sm:%s146] %v167
        %v169 = vld [vmem:[%s153 + $0x2c] sm:%s146]
        %170 = vst [vmem:[%s154 + $0x1c] sm:%s146] %v169
        %v171 = vld [vmem:[%s153 + $0x10] sm:%s146]
        %172 = vst [vmem:[%s154 + $0x20] sm:%s146] %v171
        %v173 = vld [vmem:[%s153 + $0x30] sm:%s146]
        %174 = vst [vmem:[%s154 + $0x24] sm:%s146] %v173
        %v175 = vld [vmem:[%s153 + $0x14] sm:%s146]
        %176 = vst [vmem:[%s154 + $0x28] sm:%s146] %v175
        %v177 = vld [vmem:[%s153 + $0x34] sm:%s146]
        %178 = vst [vmem:[%s154 + $0x2c] sm:%s146] %v177
        %v179 = vld [vmem:[%s153 + $0x18] sm:%s146]
        %180 = vst [vmem:[%s154 + $0x30] sm:%s146] %v179
        %v181 = vld [vmem:[%s153 + $0x38] sm:%s146]
        %182 = vst [vmem:[%s154 + $0x34] sm:%s146] %v181
        %v183 = vld [vmem:[%s153 + $0x1c] sm:%s146]
        %184 = vst [vmem:[%s154 + $0x38] sm:%s146] %v183
        %v185 = vld [vmem:[%s153 + $0x3c] sm:%s146]
        %186 = vst [vmem:[%s154 + $0x3c] sm:%s146] %v185
        %v187 = vld [vmem:[%s153 + $0x40] sm:%s146]
        %188 = vst [vmem:[%s154 + $0x40] sm:%s146] %v187
        %v189 = vld [vmem:[%s153 + $0x60] sm:%s146]
        %190 = vst [vmem:[%s154 + $0x44] sm:%s146] %v189
        %v191 = vld [vmem:[%s153 + $0x44] sm:%s146]
        %192 = vst [vmem:[%s154 + $0x48] sm:%s146] %v191
        %v193 = vld [vmem:[%s153 + $0x64] sm:%s146]
        %194 = vst [vmem:[%s154 + $0x4c] sm:%s146] %v193
        %v195 = vld [vmem:[%s153 + $0x48] sm:%s146]
        %196 = vst [vmem:[%s154 + $0x50] sm:%s146] %v195
        %v197 = vld [vmem:[%s153 + $0x68] sm:%s146]
        %198 = vst [vmem:[%s154 + $0x54] sm:%s146] %v197
        %v199 = vld [vmem:[%s153 + $0x4c] sm:%s146]
        %200 = vst [vmem:[%s154 + $0x58] sm:%s146] %v199
        %v201 = vld [vmem:[%s153 + $0x6c] sm:%s146]
        %202 = vst [vmem:[%s154 + $0x5c] sm:%s146] %v201
        %v203 = vld [vmem:[%s153 + $0x50] sm:%s146]
        %204 = vst [vmem:[%s154 + $0x60] sm:%s146] %v203
        %v205 = vld [vmem:[%s153 + $0x70] sm:%s146]
        %206 = vst [vmem:[%s154 + $0x64] sm:%s146] %v205
        %v207 = vld [vmem:[%s153 + $0x54] sm:%s146]
        %208 = vst [vmem:[%s154 + $0x68] sm:%s146] %v207
        %v209 = vld [vmem:[%s153 + $0x74] sm:%s146]
        %210 = vst [vmem:[%s154 + $0x6c] sm:%s146] %v209
        %v211 = vld [vmem:[%s153 + $0x58] sm:%s146]
        %212 = vst [vmem:[%s154 + $0x70] sm:%s146] %v211
        %v213 = vld [vmem:[%s153 + $0x78] sm:%s146]
        %214 = vst [vmem:[%s154 + $0x74] sm:%s146] %v213
        %v215 = vld [vmem:[%s153 + $0x5c] sm:%s146]
        %216 = vst [vmem:[%s154 + $0x78] sm:%s146] %v215
        %v217 = vld [vmem:[%s153 + $0x7c] sm:%s146]
        %218 = vst [vmem:[%s154 + $0x7c] sm:%s146] %v217
        %v219 = vld [vmem:[%s153 + $0x80] sm:%s146]
        %220 = vst [vmem:[%s154 + $0x80] sm:%s146] %v219
        %v221 = vld [vmem:[%s153 + $0xa0] sm:%s146]
        %222 = vst [vmem:[%s154 + $0x84] sm:%s146] %v221
        %v223 = vld [vmem:[%s153 + $0x84] sm:%s146]
        %224 = vst [vmem:[%s154 + $0x88] sm:%s146] %v223
        %v225 = vld [vmem:[%s153 + $0xa4] sm:%s146]
        %226 = vst [vmem:[%s154 + $0x8c] sm:%s146] %v225
        %v227 = vld [vmem:[%s153 + $0x88] sm:%s146]
        %228 = vst [vmem:[%s154 + $0x90] sm:%s146] %v227
        %v229 = vld [vmem:[%s153 + $0xa8] sm:%s146]
        %230 = vst [vmem:[%s154 + $0x94] sm:%s146] %v229
        %v231 = vld [vmem:[%s153 + $0x8c] sm:%s146]
        %232 = vst [vmem:[%s154 + $0x98] sm:%s146] %v231
        %v233 = vld [vmem:[%s153 + $0xac] sm:%s146]
        %234 = vst [vmem:[%s154 + $0x9c] sm:%s146] %v233
        %v235 = vld [vmem:[%s153 + $0x90] sm:%s146]
        %236 = vst [vmem:[%s154 + $0xa0] sm:%s146] %v235
        %v237 = vld [vmem:[%s153 + $0xb0] sm:%s146]
        %238 = vst [vmem:[%s154 + $0xa4] sm:%s146] %v237
        %v239 = vld [vmem:[%s153 + $0x94] sm:%s146]
        %240 = vst [vmem:[%s154 + $0xa8] sm:%s146] %v239
        %v241 = vld [vmem:[%s153 + $0xb4] sm:%s146]
        %242 = vst [vmem:[%s154 + $0xac] sm:%s146] %v241
        %v243 = vld [vmem:[%s153 + $0x98] sm:%s146]
        %244 = vst [vmem:[%s154 + $0xb0] sm:%s146] %v243
        %v245 = vld [vmem:[%s153 + $0xb8] sm:%s146]
        %246 = vst [vmem:[%s154 + $0xb4] sm:%s146] %v245
        %v247 = vld [vmem:[%s153 + $0x9c] sm:%s146]
        %248 = vst [vmem:[%s154 + $0xb8] sm:%s146] %v247
        %v249 = vld [vmem:[%s153 + $0xbc] sm:%s146]
        %250 = vst [vmem:[%s154 + $0xbc] sm:%s146] %v249
      $region36: #{pose_encoder_forward.12} parent=23 // loop_footer
        %s152 = sadd.s32 1, %s148
      $region37: #{pose_encoder_forward.12} parent=23 // loop_footer_branch
        %147 = sbr.rel target = $region33
      $region38: #{pose_encoder_forward.12} parent=23 // loop_exit
        _
    $region24: #{pose_encoder_forward.12} parent=8 // pred_fallthru
      _
  $region9: #{pose_encoder_forward.12} parent=0 // pred_fallthru
    _
  // Predicated region
  $region10: #{pose_encoder_forward.12} parent=0 // pred_check
    %p20 = pneg %p16
  $region11: #{pose_encoder_forward.12} parent=0 // pred_check_branch
    %22 = sbr.rel (%p20) target = $region13
  $region12: #{pose_encoder_forward.12} parent=0 // pred_region
    %s23 = sshllo.u32 0, 4
    loop: start=0, step=1, limit=1
    $region14: #{pose_encoder_forward.12} parent=12 // loop_pre_header
      _
    $region15: #{pose_encoder_forward.12} parent=12 // loop_header
      %s25 = sphi 0, %s29
      %p26 = scmp.ge.s32.totalorder %s25, 1
      %s30 = sphi %s14, %s14
      %s31 = sphi [#allocation2], [#allocation2]
    $region16: #{pose_encoder_forward.12} parent=12 // loop_header_branch
      %28 = sbr.rel (%p26) target = $region20
    $region17: #{pose_encoder_forward.12} parent=12 // loop_body
      %v32 = vld [vmem:[%s30] sm:%s23]
      %33 = vst [vmem:[%s31] sm:%s23] %v32
      %v34 = vld [vmem:[%s30 + $0x20] sm:%s23]
      %35 = vst [vmem:[%s31 + $0x4] sm:%s23] %v34
      %v36 = vld [vmem:[%s30 + $0x4] sm:%s23]
      %37 = vst [vmem:[%s31 + $0x8] sm:%s23] %v36
      %v38 = vld [vmem:[%s30 + $0x24] sm:%s23]
      %39 = vst [vmem:[%s31 + $0xc] sm:%s23] %v38
      %v40 = vld [vmem:[%s30 + $0x8] sm:%s23]
      %41 = vst [vmem:[%s31 + $0x10] sm:%s23] %v40
      %v42 = vld [vmem:[%s30 + $0x28] sm:%s23]
      %43 = vst [vmem:[%s31 + $0x14] sm:%s23] %v42
      %v44 = vld [vmem:[%s30 + $0xc] sm:%s23]
      %45 = vst [vmem:[%s31 + $0x18] sm:%s23] %v44
      %v46 = vld [vmem:[%s30 + $0x2c] sm:%s23]
      %47 = vst [vmem:[%s31 + $0x1c] sm:%s23] %v46
      %v48 = vld [vmem:[%s30 + $0x10] sm:%s23]
      %49 = vst [vmem:[%s31 + $0x20] sm:%s23] %v48
      %v50 = vld [vmem:[%s30 + $0x30] sm:%s23]
      %51 = vst [vmem:[%s31 + $0x24] sm:%s23] %v50
      %v52 = vld [vmem:[%s30 + $0x14] sm:%s23]
      %53 = vst [vmem:[%s31 + $0x28] sm:%s23] %v52
      %v54 = vld [vmem:[%s30 + $0x34] sm:%s23]
      %55 = vst [vmem:[%s31 + $0x2c] sm:%s23] %v54
      %v56 = vld [vmem:[%s30 + $0x18] sm:%s23]
      %57 = vst [vmem:[%s31 + $0x30] sm:%s23] %v56
      %v58 = vld [vmem:[%s30 + $0x38] sm:%s23]
      %59 = vst [vmem:[%s31 + $0x34] sm:%s23] %v58
      %v60 = vld [vmem:[%s30 + $0x1c] sm:%s23]
      %61 = vst [vmem:[%s31 + $0x38] sm:%s23] %v60
      %v62 = vld [vmem:[%s30 + $0x3c] sm:%s23]
      %63 = vst [vmem:[%s31 + $0x3c] sm:%s23] %v62
      %v64 = vld [vmem:[%s30 + $0x40] sm:%s23]
      %65 = vst [vmem:[%s31 + $0x40] sm:%s23] %v64
      %v66 = vld [vmem:[%s30 + $0x60] sm:%s23]
      %67 = vst [vmem:[%s31 + $0x44] sm:%s23] %v66
      %v68 = vld [vmem:[%s30 + $0x44] sm:%s23]
      %69 = vst [vmem:[%s31 + $0x48] sm:%s23] %v68
      %v70 = vld [vmem:[%s30 + $0x64] sm:%s23]
      %71 = vst [vmem:[%s31 + $0x4c] sm:%s23] %v70
      %v72 = vld [vmem:[%s30 + $0x48] sm:%s23]
      %73 = vst [vmem:[%s31 + $0x50] sm:%s23] %v72
      %v74 = vld [vmem:[%s30 + $0x68] sm:%s23]
      %75 = vst [vmem:[%s31 + $0x54] sm:%s23] %v74
      %v76 = vld [vmem:[%s30 + $0x4c] sm:%s23]
      %77 = vst [vmem:[%s31 + $0x58] sm:%s23] %v76
      %v78 = vld [vmem:[%s30 + $0x6c] sm:%s23]
      %79 = vst [vmem:[%s31 + $0x5c] sm:%s23] %v78
      %v80 = vld [vmem:[%s30 + $0x50] sm:%s23]
      %81 = vst [vmem:[%s31 + $0x60] sm:%s23] %v80
      %v82 = vld [vmem:[%s30 + $0x70] sm:%s23]
      %83 = vst [vmem:[%s31 + $0x64] sm:%s23] %v82
      %v84 = vld [vmem:[%s30 + $0x54] sm:%s23]
      %85 = vst [vmem:[%s31 + $0x68] sm:%s23] %v84
      %v86 = vld [vmem:[%s30 + $0x74] sm:%s23]
      %87 = vst [vmem:[%s31 + $0x6c] sm:%s23] %v86
      %v88 = vld [vmem:[%s30 + $0x58] sm:%s23]
      %89 = vst [vmem:[%s31 + $0x70] sm:%s23] %v88
      %v90 = vld [vmem:[%s30 + $0x78] sm:%s23]
      %91 = vst [vmem:[%s31 + $0x74] sm:%s23] %v90
      %v92 = vld [vmem:[%s30 + $0x5c] sm:%s23]
      %93 = vst [vmem:[%s31 + $0x78] sm:%s23] %v92
      %v94 = vld [vmem:[%s30 + $0x7c] sm:%s23]
      %95 = vst [vmem:[%s31 + $0x7c] sm:%s23] %v94
      %v96 = vld [vmem:[%s30 + $0x80] sm:%s23]
      %97 = vst [vmem:[%s31 + $0x80] sm:%s23] %v96
      %v98 = vld [vmem:[%s30 + $0xa0] sm:%s23]
      %99 = vst [vmem:[%s31 + $0x84] sm:%s23] %v98
      %v100 = vld [vmem:[%s30 + $0x84] sm:%s23]
      %101 = vst [vmem:[%s31 + $0x88] sm:%s23] %v100
      %v102 = vld [vmem:[%s30 + $0xa4] sm:%s23]
      %103 = vst [vmem:[%s31 + $0x8c] sm:%s23] %v102
      %v104 = vld [vmem:[%s30 + $0x88] sm:%s23]
      %105 = vst [vmem:[%s31 + $0x90] sm:%s23] %v104
      %v106 = vld [vmem:[%s30 + $0xa8] sm:%s23]
      %107 = vst [vmem:[%s31 + $0x94] sm:%s23] %v106
      %v108 = vld [vmem:[%s30 + $0x8c] sm:%s23]
      %109 = vst [vmem:[%s31 + $0x98] sm:%s23] %v108
      %v110 = vld [vmem:[%s30 + $0xac] sm:%s23]
      %111 = vst [vmem:[%s31 + $0x9c] sm:%s23] %v110
      %v112 = vld [vmem:[%s30 + $0x90] sm:%s23]
      %113 = vst [vmem:[%s31 + $0xa0] sm:%s23] %v112
      %v114 = vld [vmem:[%s30 + $0xb0] sm:%s23]
      %115 = vst [vmem:[%s31 + $0xa4] sm:%s23] %v114
      %v116 = vld [vmem:[%s30 + $0x94] sm:%s23]
      %117 = vst [vmem:[%s31 + $0xa8] sm:%s23] %v116
      %v118 = vld [vmem:[%s30 + $0xb4] sm:%s23]
      %119 = vst [vmem:[%s31 + $0xac] sm:%s23] %v118
      %v120 = vld [vmem:[%s30 + $0x98] sm:%s23]
      %121 = vst [vmem:[%s31 + $0xb0] sm:%s23] %v120
      %v122 = vld [vmem:[%s30 + $0xb8] sm:%s23]
      %123 = vst [vmem:[%s31 + $0xb4] sm:%s23] %v122
      %v124 = vld [vmem:[%s30 + $0x9c] sm:%s23]
      %125 = vst [vmem:[%s31 + $0xb8] sm:%s23] %v124
      %v126 = vld [vmem:[%s30 + $0xbc] sm:%s23]
      %127 = vst [vmem:[%s31 + $0xbc] sm:%s23] %v126
    $region18: #{pose_encoder_forward.12} parent=12 // loop_footer
      %s29 = sadd.s32 1, %s25
    $region19: #{pose_encoder_forward.12} parent=12 // loop_footer_branch
      %24 = sbr.rel target = $region15
    $region20: #{pose_encoder_forward.12} parent=12 // loop_exit
      _
  $region13: #{pose_encoder_forward.12} parent=0 // pred_fallthru
    _
  // Predicated region
  $region39: #{pose_encoder_forward.12} parent=0 // pred_check
    _
  $region40: #{pose_encoder_forward.12} parent=0 // pred_check_branch
    %253 = sbr.rel (0) target = $region42
  $region41: #{pose_encoder_forward.12} parent=0 // pred_region
    %254 = vsyncadd [#allocation3], 3072
  $region42: #{pose_encoder_forward.12} parent=0 // pred_fallthru
    _
  %s255 = smul.u32 4, 6
  %s256 = smul.u32 %s255, 8
  %s257 = sshll.u32 %s256, 4
  %258 = dma.done [#allocation3], %s257
  %v259 = vld [vmem:[#allocation2] sm:$0xff]
  %v260 = vld [vmem:[#allocation2 + $0x8] sm:$0xff]
  %v261 = vld [vmem:[#allocation2 + $0x10] sm:$0xff]
  %v262 = vld [vmem:[#allocation2 + $0x18] sm:$0xff]
  %v263 = vld [vmem:[#allocation2 + $0x20] sm:$0xff]
  %v264 = vld [vmem:[#allocation2 + $0x28] sm:$0xff]
  %v265 = vld [vmem:[#allocation2 + $0x30] sm:$0xff]
  %v266 = vld [vmem:[#allocation2 + $0x38] sm:$0xff]
  %v267 = vld [vmem:[#allocation2 + $0x40] sm:$0xff]
  %v268 = vld [vmem:[#allocation2 + $0x48] sm:$0xff]
  %v269 = vld [vmem:[#allocation2 + $0x50] sm:$0xff]
  %v270 = vld [vmem:[#allocation2 + $0x58] sm:$0xff]
  %v271 = vld [vmem:[#allocation2 + $0x60] sm:$0xff]
  %v272 = vld [vmem:[#allocation2 + $0x68] sm:$0xff]
  %v273 = vld [vmem:[#allocation2 + $0x70] sm:$0xff]
  %v274 = vld [vmem:[#allocation2 + $0x78] sm:$0xff]
  %v275 = vld [vmem:[#allocation2] sm:$0xff]
  %v276 = vld [vmem:[#allocation2 + $0x8] sm:$0xff]
  %v277 = vld [vmem:[#allocation2 + $0x10] sm:$0xff]
  %v278 = vld [vmem:[#allocation2 + $0x18] sm:$0xff]
  %v279 = vld [vmem:[#allocation2 + $0x20] sm:$0xff]
  %v280 = vld [vmem:[#allocation2 + $0x28] sm:$0xff]
  %v281 = vld [vmem:[#allocation2 + $0x30] sm:$0xff]
  %v282 = vld [vmem:[#allocation2 + $0x38] sm:$0xff]
  %v283 = vld [vmem:[#allocation2 + $0x40] sm:$0xff]
  %v284 = vld [vmem:[#allocation2 + $0x48] sm:$0xff]
  %v285 = vld [vmem:[#allocation2 + $0x50] sm:$0xff]
  %v286 = vld [vmem:[#allocation2 + $0x58] sm:$0xff]
  %v287 = vld [vmem:[#allocation2 + $0x60] sm:$0xff]
  %v288 = vld [vmem:[#allocation2 + $0x68] sm:$0xff]
  %v289 = vld [vmem:[#allocation2 + $0x70] sm:$0xff]
  %v290 = vld [vmem:[#allocation2 + $0x78] sm:$0xff]
  %v291 = vld [vmem:[#allocation2 + $0x80] sm:$0x1]
  %v292 = vld [vmem:[#allocation2 + $0x88] sm:$0x1]
  %v293 = vld [vmem:[#allocation2 + $0x90] sm:$0x1]
  %v294 = vld [vmem:[#allocation2 + $0x98] sm:$0x1]
  %v295 = vld [vmem:[#allocation2 + $0xa0] sm:$0x1]
  %v296 = vld [vmem:[#allocation2 + $0xa8] sm:$0x1]
  %v297 = vld [vmem:[#allocation2 + $0xb0] sm:$0x1]
  %v298 = vld [vmem:[#allocation2 + $0xb8] sm:$0x1]
  %v299 = vld [vmem:[#allocation2] sm:$0xf0]
  %v300 = vld [vmem:[#allocation2 + $0x8] sm:$0xf0]
  %v301 = vld [vmem:[#allocation2 + $0x10] sm:$0xf0]
  %v302 = vld [vmem:[#allocation2 + $0x18] sm:$0xf0]
  %v303 = vld [vmem:[#allocation2 + $0x20] sm:$0xf0]
  %v304 = vld [vmem:[#allocation2 + $0x28] sm:$0xf0]
  %v305 = vld [vmem:[#allocation2 + $0x30] sm:$0xf0]
  %v306 = vld [vmem:[#allocation2 + $0x38] sm:$0xf0]
  %v307 = vld [vmem:[#allocation2 + $0x80] sm:$0xf]
  %v308 = vld [vmem:[#allocation2 + $0x88] sm:$0xf]
  %v309 = vld [vmem:[#allocation2 + $0x90] sm:$0xf]
  %v310 = vld [vmem:[#allocation2 + $0x98] sm:$0xf]
  %v311 = vld [vmem:[#allocation2 + $0xa0] sm:$0xf]
  %v312 = vld [vmem:[#allocation2 + $0xa8] sm:$0xf]
  %v313 = vld [vmem:[#allocation2 + $0xb0] sm:$0xf]
  %v314 = vld [vmem:[#allocation2 + $0xb8] sm:$0xf]
  %v315 = vld [vmem:[#allocation2 + $0x80] sm:$0x1f]
  %v316 = vld [vmem:[#allocation2 + $0x88] sm:$0x1f]
  %v317 = vld [vmem:[#allocation2 + $0x90] sm:$0x1f]
  %v318 = vld [vmem:[#allocation2 + $0x98] sm:$0x1f]
  %v319 = vld [vmem:[#allocation2 + $0xa0] sm:$0x1f]
  %v320 = vld [vmem:[#allocation2 + $0xa8] sm:$0x1f]
  %v321 = vld [vmem:[#allocation2 + $0xb0] sm:$0x1f]
  %v322 = vld [vmem:[#allocation2 + $0xb8] sm:$0x1f]
  %vm323 = vsmask.f32 7424
  %v325 = vshrl.u32 %v275, 16
  %v327 = vshll.u32 %v275, 16
  %v329 = vrot.slane %v327, 1
  %v330 = vor.u32 %v325, %v329
  %v332 = vshll.u32 %v283, 16
  %v334 = vrot.slane %v332, 1
  %v335 = vsel %vm323, %v330, %v334
  %v337 = vshrl.u32 %v276, 16
  %v339 = vshll.u32 %v276, 16
  %v341 = vrot.slane %v339, 1
  %v342 = vor.u32 %v337, %v341
  %v344 = vshll.u32 %v284, 16
  %v346 = vrot.slane %v344, 1
  %v347 = vsel %vm323, %v342, %v346
  %v349 = vshrl.u32 %v277, 16
  %v351 = vshll.u32 %v277, 16
  %v353 = vrot.slane %v351, 1
  %v354 = vor.u32 %v349, %v353
  %v356 = vshll.u32 %v285, 16
  %v358 = vrot.slane %v356, 1
  %v359 = vsel %vm323, %v354, %v358
  %v361 = vshrl.u32 %v278, 16
  %v363 = vshll.u32 %v278, 16
  %v365 = vrot.slane %v363, 1
  %v366 = vor.u32 %v361, %v365
  %v368 = vshll.u32 %v286, 16
  %v370 = vrot.slane %v368, 1
  %v371 = vsel %vm323, %v366, %v370
  %v373 = vshrl.u32 %v279, 16
  %v375 = vshll.u32 %v279, 16
  %v377 = vrot.slane %v375, 1
  %v378 = vor.u32 %v373, %v377
  %v380 = vshll.u32 %v287, 16
  %v382 = vrot.slane %v380, 1
  %v383 = vsel %vm323, %v378, %v382
  %v385 = vshrl.u32 %v280, 16
  %v387 = vshll.u32 %v280, 16
  %v389 = vrot.slane %v387, 1
  %v390 = vor.u32 %v385, %v389
  %v392 = vshll.u32 %v288, 16
  %v394 = vrot.slane %v392, 1
  %v395 = vsel %vm323, %v390, %v394
  %v397 = vshrl.u32 %v281, 16
  %v399 = vshll.u32 %v281, 16
  %v401 = vrot.slane %v399, 1
  %v402 = vor.u32 %v397, %v401
  %v404 = vshll.u32 %v289, 16
  %v406 = vrot.slane %v404, 1
  %v407 = vsel %vm323, %v402, %v406
  %v409 = vshrl.u32 %v282, 16
  %v411 = vshll.u32 %v282, 16
  %v413 = vrot.slane %v411, 1
  %v414 = vor.u32 %v409, %v413
  %v416 = vshll.u32 %v290, 16
  %v418 = vrot.slane %v416, 1
  %v419 = vsel %vm323, %v414, %v418
  %v420 = vshrl.u32 %v283, 16
  %v422 = vor.u32 %v420, %v334
  %v424 = vshll.u32 %v291, 16
  %v426 = vrot.slane %v424, 1
  %v427 = vsel %vm323, %v422, %v426
  %v428 = vshrl.u32 %v284, 16
  %v430 = vor.u32 %v428, %v346
  %v432 = vshll.u32 %v292, 16
  %v434 = vrot.slane %v432, 1
  %v435 = vsel %vm323, %v430, %v434
  %v436 = vshrl.u32 %v285, 16
  %v438 = vor.u32 %v436, %v358
  %v440 = vshll.u32 %v293, 16
  %v442 = vrot.slane %v440, 1
  %v443 = vsel %vm323, %v438, %v442
  %v444 = vshrl.u32 %v286, 16
  %v446 = vor.u32 %v444, %v370
  %v448 = vshll.u32 %v294, 16
  %v450 = vrot.slane %v448, 1
  %v451 = vsel %vm323, %v446, %v450
  %v452 = vshrl.u32 %v287, 16
  %v454 = vor.u32 %v452, %v382
  %v456 = vshll.u32 %v295, 16
  %v458 = vrot.slane %v456, 1
  %v459 = vsel %vm323, %v454, %v458
  %v460 = vshrl.u32 %v288, 16
  %v462 = vor.u32 %v460, %v394
  %v464 = vshll.u32 %v296, 16
  %v466 = vrot.slane %v464, 1
  %v467 = vsel %vm323, %v462, %v466
  %v468 = vshrl.u32 %v289, 16
  %v470 = vor.u32 %v468, %v406
  %v472 = vshll.u32 %v297, 16
  %v474 = vrot.slane %v472, 1
  %v475 = vsel %vm323, %v470, %v474
  %v476 = vshrl.u32 %v290, 16
  %v478 = vor.u32 %v476, %v418
  %v480 = vshll.u32 %v298, 16
  %v482 = vrot.slane %v480, 1
  %v483 = vsel %vm323, %v478, %v482
  %vm524 = vcmask 1043456
  %v525 = vrot.slane %v299, 4
  %v526 = vrot.slane %v283, 4
  %v527 = vsel %vm524, %v525, %v526
  %v528 = vrot.slane %v300, 4
  %v529 = vrot.slane %v284, 4
  %v530 = vsel %vm524, %v528, %v529
  %v531 = vrot.slane %v301, 4
  %v532 = vrot.slane %v285, 4
  %v533 = vsel %vm524, %v531, %v532
  %v534 = vrot.slane %v302, 4
  %v535 = vrot.slane %v286, 4
  %v536 = vsel %vm524, %v534, %v535
  %v537 = vrot.slane %v303, 4
  %v538 = vrot.slane %v287, 4
  %v539 = vsel %vm524, %v537, %v538
  %v540 = vrot.slane %v304, 4
  %v541 = vrot.slane %v288, 4
  %v542 = vsel %vm524, %v540, %v541
  %v543 = vrot.slane %v305, 4
  %v544 = vrot.slane %v289, 4
  %v545 = vsel %vm524, %v543, %v544
  %v546 = vrot.slane %v306, 4
  %v547 = vrot.slane %v290, 4
  %v548 = vsel %vm524, %v546, %v547
  %v549 = vrot.slane %v307, 4
  %v550 = vsel %vm524, %v526, %v549
  %v551 = vrot.slane %v308, 4
  %v552 = vsel %vm524, %v529, %v551
  %v553 = vrot.slane %v309, 4
  %v554 = vsel %vm524, %v532, %v553
  %v555 = vrot.slane %v310, 4
  %v556 = vsel %vm524, %v535, %v555
  %v557 = vrot.slane %v311, 4
  %v558 = vsel %vm524, %v538, %v557
  %v559 = vrot.slane %v312, 4
  %v560 = vsel %vm524, %v541, %v559
  %v561 = vrot.slane %v313, 4
  %v562 = vsel %vm524, %v544, %v561
  %v563 = vrot.slane %v314, 4
  %v564 = vsel %vm524, %v547, %v563
  %vm581 = vsmask.f32 3328
  %v583 = vshrl.u32 %v299, 16
  %v585 = vrot.slane %v583, 4
  %v586 = vshll.u32 %v299, 16
  %v588 = vrot.slane %v586, 5
  %v589 = vor.u32 %v585, %v588
  %v590 = vrot.slane %v420, 4
  %v591 = vrot.slane %v332, 5
  %v592 = vor.u32 %v590, %v591
  %v593 = vsel %vm581, %v589, %v592
  %v595 = vshrl.u32 %v300, 16
  %v597 = vrot.slane %v595, 4
  %v598 = vshll.u32 %v300, 16
  %v600 = vrot.slane %v598, 5
  %v601 = vor.u32 %v597, %v600
  %v602 = vrot.slane %v428, 4
  %v603 = vrot.slane %v344, 5
  %v604 = vor.u32 %v602, %v603
  %v605 = vsel %vm581, %v601, %v604
  %v607 = vshrl.u32 %v301, 16
  %v609 = vrot.slane %v607, 4
  %v610 = vshll.u32 %v301, 16
  %v612 = vrot.slane %v610, 5
  %v613 = vor.u32 %v609, %v612
  %v614 = vrot.slane %v436, 4
  %v615 = vrot.slane %v356, 5
  %v616 = vor.u32 %v614, %v615
  %v617 = vsel %vm581, %v613, %v616
  %v619 = vshrl.u32 %v302, 16
  %v621 = vrot.slane %v619, 4
  %v622 = vshll.u32 %v302, 16
  %v624 = vrot.slane %v622, 5
  %v625 = vor.u32 %v621, %v624
  %v626 = vrot.slane %v444, 4
  %v627 = vrot.slane %v368, 5
  %v628 = vor.u32 %v626, %v627
  %v629 = vsel %vm581, %v625, %v628
  %v631 = vshrl.u32 %v303, 16
  %v633 = vrot.slane %v631, 4
  %v634 = vshll.u32 %v303, 16
  %v636 = vrot.slane %v634, 5
  %v637 = vor.u32 %v633, %v636
  %v638 = vrot.slane %v452, 4
  %v639 = vrot.slane %v380, 5
  %v640 = vor.u32 %v638, %v639
  %v641 = vsel %vm581, %v637, %v640
  %v643 = vshrl.u32 %v304, 16
  %v645 = vrot.slane %v643, 4
  %v646 = vshll.u32 %v304, 16
  %v648 = vrot.slane %v646, 5
  %v649 = vor.u32 %v645, %v648
  %v650 = vrot.slane %v460, 4
  %v651 = vrot.slane %v392, 5
  %v652 = vor.u32 %v650, %v651
  %v653 = vsel %vm581, %v649, %v652
  %v655 = vshrl.u32 %v305, 16
  %v657 = vrot.slane %v655, 4
  %v658 = vshll.u32 %v305, 16
  %v660 = vrot.slane %v658, 5
  %v661 = vor.u32 %v657, %v660
  %v662 = vrot.slane %v468, 4
  %v663 = vrot.slane %v404, 5
  %v664 = vor.u32 %v662, %v663
  %v665 = vsel %vm581, %v661, %v664
  %v667 = vshrl.u32 %v306, 16
  %v669 = vrot.slane %v667, 4
  %v670 = vshll.u32 %v306, 16
  %v672 = vrot.slane %v670, 5
  %v673 = vor.u32 %v669, %v672
  %v674 = vrot.slane %v476, 4
  %v675 = vrot.slane %v416, 5
  %v676 = vor.u32 %v674, %v675
  %v677 = vsel %vm581, %v673, %v676
  %v679 = vshrl.u32 %v315, 16
  %v681 = vrot.slane %v679, 4
  %v682 = vshll.u32 %v315, 16
  %v684 = vrot.slane %v682, 5
  %v685 = vor.u32 %v681, %v684
  %v686 = vsel %vm581, %v592, %v685
  %v688 = vshrl.u32 %v316, 16
  %v690 = vrot.slane %v688, 4
  %v691 = vshll.u32 %v316, 16
  %v693 = vrot.slane %v691, 5
  %v694 = vor.u32 %v690, %v693
  %v695 = vsel %vm581, %v604, %v694
  %v697 = vshrl.u32 %v317, 16
  %v699 = vrot.slane %v697, 4
  %v700 = vshll.u32 %v317, 16
  %v702 = vrot.slane %v700, 5
  %v703 = vor.u32 %v699, %v702
  %v704 = vsel %vm581, %v616, %v703
  %v706 = vshrl.u32 %v318, 16
  %v708 = vrot.slane %v706, 4
  %v709 = vshll.u32 %v318, 16
  %v711 = vrot.slane %v709, 5
  %v712 = vor.u32 %v708, %v711
  %v713 = vsel %vm581, %v628, %v712
  %v715 = vshrl.u32 %v319, 16
  %v717 = vrot.slane %v715, 4
  %v718 = vshll.u32 %v319, 16
  %v720 = vrot.slane %v718, 5
  %v721 = vor.u32 %v717, %v720
  %v722 = vsel %vm581, %v640, %v721
  %v724 = vshrl.u32 %v320, 16
  %v726 = vrot.slane %v724, 4
  %v727 = vshll.u32 %v320, 16
  %v729 = vrot.slane %v727, 5
  %v730 = vor.u32 %v726, %v729
  %v731 = vsel %vm581, %v652, %v730
  %v733 = vshrl.u32 %v321, 16
  %v735 = vrot.slane %v733, 4
  %v736 = vshll.u32 %v321, 16
  %v738 = vrot.slane %v736, 5
  %v739 = vor.u32 %v735, %v738
  %v740 = vsel %vm581, %v664, %v739
  %v742 = vshrl.u32 %v322, 16
  %v744 = vrot.slane %v742, 4
  %v745 = vshll.u32 %v322, 16
  %v747 = vrot.slane %v745, 5
  %v748 = vor.u32 %v744, %v747
  %v749 = vsel %vm581, %v676, %v748
  %v766 = vld [vmem:[%s1] sm:$0xff]
  %v767 = vld [vmem:[%s1 + $0x8] sm:$0xff]
  %v768 = vld [vmem:[%s1 + $0x10] sm:$0xff]
  %v769 = vld [vmem:[%s1 + $0x18] sm:$0xff]
  %v770 = vld [vmem:[%s1 + $0x20] sm:$0xff]
  %v771 = vld [vmem:[%s1 + $0x28] sm:$0xff]
  %v772 = vld [vmem:[%s1 + $0x30] sm:$0xff]
  %v773 = vld [vmem:[%s1 + $0x38] sm:$0xff]
  %v774 = vld [vmem:[%s1 + $0x40] sm:$0xff]
  %v775 = vld [vmem:[%s1 + $0x48] sm:$0xff]
  %v776 = vld [vmem:[%s1 + $0x50] sm:$0xff]
  %v777 = vld [vmem:[%s1 + $0x58] sm:$0xff]
  %v778 = vld [vmem:[%s1 + $0x60] sm:$0xff]
  %v779 = vld [vmem:[%s1 + $0x68] sm:$0xff]
  %v780 = vld [vmem:[%s1 + $0x70] sm:$0xff]
  %v781 = vld [vmem:[%s1 + $0x78] sm:$0xff]
  %v782 = vld [vmem:[%s1 + $0x80] sm:$0xff]
  %v783 = vld [vmem:[%s1 + $0x88] sm:$0xff]
  %v784 = vld [vmem:[%s1 + $0x90] sm:$0xff]
  %v785 = vld [vmem:[%s1 + $0x98] sm:$0xff]
  %v786 = vld [vmem:[%s1 + $0xa0] sm:$0xff]
  %v787 = vld [vmem:[%s1 + $0xa8] sm:$0xff]
  %v788 = vld [vmem:[%s1 + $0xb0] sm:$0xff]
  %v789 = vld [vmem:[%s1 + $0xb8] sm:$0xff]
  %v790 = vld [vmem:[%s1 + $0xc0] sm:$0xff]
  %v791 = vld [vmem:[%s1 + $0xc8] sm:$0xff]
  %v792 = vld [vmem:[%s1 + $0xd0] sm:$0xff]
  %v793 = vld [vmem:[%s1 + $0xd8] sm:$0xff]
  %v794 = vld [vmem:[%s1 + $0xe0] sm:$0xff]
  %v795 = vld [vmem:[%s1 + $0xe8] sm:$0xff]
  %v796 = vld [vmem:[%s1 + $0xf0] sm:$0xff]
  %v797 = vld [vmem:[%s1 + $0xf8] sm:$0xff]
  %v798 = vld [vmem:[%s1 + $0x100] sm:$0xff]
  %v799 = vld [vmem:[%s1 + $0x108] sm:$0xff]
  %v800 = vld [vmem:[%s1 + $0x110] sm:$0xff]
  %v801 = vld [vmem:[%s1 + $0x118] sm:$0xff]
  %v802 = vld [vmem:[%s1 + $0x120] sm:$0xff]
  %v803 = vld [vmem:[%s1 + $0x128] sm:$0xff]
  %v804 = vld [vmem:[%s1 + $0x130] sm:$0xff]
  %v805 = vld [vmem:[%s1 + $0x138] sm:$0xff]
  %v806 = vld [vmem:[%s1 + $0x140] sm:$0xff]
  %v807 = vld [vmem:[%s1 + $0x148] sm:$0xff]
  %v808 = vld [vmem:[%s1 + $0x150] sm:$0xff]
  %v809 = vld [vmem:[%s1 + $0x158] sm:$0xff]
  %v810 = vld [vmem:[%s1 + $0x160] sm:$0xff]
  %v811 = vld [vmem:[%s1 + $0x168] sm:$0xff]
  %v812 = vld [vmem:[%s1 + $0x170] sm:$0xff]
  %v813 = vld [vmem:[%s1 + $0x178] sm:$0xff]
  %v814 = vld [vmem:[%s1 + $0x180] sm:$0xff]
  %v815 = vld [vmem:[%s1 + $0x188] sm:$0xff]
  %v816 = vld [vmem:[%s1 + $0x190] sm:$0xff]
  %v817 = vld [vmem:[%s1 + $0x198] sm:$0xff]
  %v818 = vld [vmem:[%s1 + $0x1a0] sm:$0xff]
  %v819 = vld [vmem:[%s1 + $0x1a8] sm:$0xff]
  %v820 = vld [vmem:[%s1 + $0x1b0] sm:$0xff]
  %v821 = vld [vmem:[%s1 + $0x1b8] sm:$0xff]
  %v822 = vld [vmem:[%s1 + $0x1c0] sm:$0xff]
  %v823 = vld [vmem:[%s1 + $0x1c8] sm:$0xff]
  %v824 = vld [vmem:[%s1 + $0x1d0] sm:$0xff]
  %v825 = vld [vmem:[%s1 + $0x1d8] sm:$0xff]
  %v826 = vld [vmem:[%s1 + $0x1e0] sm:$0xff]
  %v827 = vld [vmem:[%s1 + $0x1e8] sm:$0xff]
  %v828 = vld [vmem:[%s1 + $0x1f0] sm:$0xff]
  %v829 = vld [vmem:[%s1 + $0x1f8] sm:$0xff]
  %v830 = vld [vmem:[%s1 + $0x200] sm:$0xff]
  %v831 = vld [vmem:[%s1 + $0x208] sm:$0xff]
  %v832 = vld [vmem:[%s1 + $0x210] sm:$0xff]
  %v833 = vld [vmem:[%s1 + $0x218] sm:$0xff]
  %v834 = vld [vmem:[%s1 + $0x220] sm:$0xff]
  %v835 = vld [vmem:[%s1 + $0x228] sm:$0xff]
  %v836 = vld [vmem:[%s1 + $0x230] sm:$0xff]
  %v837 = vld [vmem:[%s1 + $0x238] sm:$0xff]
  %v838 = vld [vmem:[%s1 + $0x240] sm:$0xff]
  %v839 = vld [vmem:[%s1 + $0x248] sm:$0xff]
  %v840 = vld [vmem:[%s1 + $0x250] sm:$0xff]
  %v841 = vld [vmem:[%s1 + $0x258] sm:$0xff]
  %v842 = vld [vmem:[%s1 + $0x260] sm:$0xff]
  %v843 = vld [vmem:[%s1 + $0x268] sm:$0xff]
  %v844 = vld [vmem:[%s1 + $0x270] sm:$0xff]
  %v845 = vld [vmem:[%s1 + $0x278] sm:$0xff]
  %v846 = vld [vmem:[%s1 + $0x280] sm:$0xff]
  %v847 = vld [vmem:[%s1 + $0x288] sm:$0xff]
  %v848 = vld [vmem:[%s1 + $0x290] sm:$0xff]
  %v849 = vld [vmem:[%s1 + $0x298] sm:$0xff]
  %v850 = vld [vmem:[%s1 + $0x2a0] sm:$0xff]
  %v851 = vld [vmem:[%s1 + $0x2a8] sm:$0xff]
  %v852 = vld [vmem:[%s1 + $0x2b0] sm:$0xff]
  %v853 = vld [vmem:[%s1 + $0x2b8] sm:$0xff]
  %v854 = vld [vmem:[%s1 + $0x2c0] sm:$0xff]
  %v855 = vld [vmem:[%s1 + $0x2c8] sm:$0xff]
  %v856 = vld [vmem:[%s1 + $0x2d0] sm:$0xff]
  %v857 = vld [vmem:[%s1 + $0x2d8] sm:$0xff]
  %v858 = vld [vmem:[%s1 + $0x2e0] sm:$0xff]
  %v859 = vld [vmem:[%s1 + $0x2e8] sm:$0xff]
  %v860 = vld [vmem:[%s1 + $0x2f0] sm:$0xff]
  %v861 = vld [vmem:[%s1 + $0x2f8] sm:$0xff]
  %v862 = vld [vmem:[%s1 + $0x300] sm:$0xff]
  %v863 = vld [vmem:[%s1 + $0x308] sm:$0xff]
  %v864 = vld [vmem:[%s1 + $0x310] sm:$0xff]
  %v865 = vld [vmem:[%s1 + $0x318] sm:$0xff]
  %v866 = vld [vmem:[%s1 + $0x320] sm:$0xff]
  %v867 = vld [vmem:[%s1 + $0x328] sm:$0xff]
  %v868 = vld [vmem:[%s1 + $0x330] sm:$0xff]
  %v869 = vld [vmem:[%s1 + $0x338] sm:$0xff]
  %v870 = vld [vmem:[%s1 + $0x340] sm:$0xff]
  %v871 = vld [vmem:[%s1 + $0x348] sm:$0xff]
  %v872 = vld [vmem:[%s1 + $0x350] sm:$0xff]
  %v873 = vld [vmem:[%s1 + $0x358] sm:$0xff]
  %v874 = vld [vmem:[%s1 + $0x360] sm:$0xff]
  %v875 = vld [vmem:[%s1 + $0x368] sm:$0xff]
  %v876 = vld [vmem:[%s1 + $0x370] sm:$0xff]
  %v877 = vld [vmem:[%s1 + $0x378] sm:$0xff]
  %v878 = vld [vmem:[%s1 + $0x380] sm:$0xff]
  %v879 = vld [vmem:[%s1 + $0x388] sm:$0xff]
  %v880 = vld [vmem:[%s1 + $0x390] sm:$0xff]
  %v881 = vld [vmem:[%s1 + $0x398] sm:$0xff]
  %v882 = vld [vmem:[%s1 + $0x3a0] sm:$0xff]
  %v883 = vld [vmem:[%s1 + $0x3a8] sm:$0xff]
  %v884 = vld [vmem:[%s1 + $0x3b0] sm:$0xff]
  %v885 = vld [vmem:[%s1 + $0x3b8] sm:$0xff]
  %v886 = vld [vmem:[%s1 + $0x3c0] sm:$0xff]
  %v887 = vld [vmem:[%s1 + $0x3c8] sm:$0xff]
  %v888 = vld [vmem:[%s1 + $0x3d0] sm:$0xff]
  %v889 = vld [vmem:[%s1 + $0x3d8] sm:$0xff]
  %v890 = vld [vmem:[%s1 + $0x3e0] sm:$0xff]
  %v891 = vld [vmem:[%s1 + $0x3e8] sm:$0xff]
  %v892 = vld [vmem:[%s1 + $0x3f0] sm:$0xff]
  %v893 = vld [vmem:[%s1 + $0x3f8] sm:$0xff]
  %v894 = vld [vmem:[%s1 + $0x400] sm:$0xff]
  %v895 = vld [vmem:[%s1 + $0x408] sm:$0xff]
  %v896 = vld [vmem:[%s1 + $0x410] sm:$0xff]
  %v897 = vld [vmem:[%s1 + $0x418] sm:$0xff]
  %v898 = vld [vmem:[%s1 + $0x420] sm:$0xff]
  %v899 = vld [vmem:[%s1 + $0x428] sm:$0xff]
  %v900 = vld [vmem:[%s1 + $0x430] sm:$0xff]
  %v901 = vld [vmem:[%s1 + $0x438] sm:$0xff]
  %v902 = vld [vmem:[%s1 + $0x440] sm:$0xff]
  %v903 = vld [vmem:[%s1 + $0x448] sm:$0xff]
  %v904 = vld [vmem:[%s1 + $0x450] sm:$0xff]
  %v905 = vld [vmem:[%s1 + $0x458] sm:$0xff]
  %v906 = vld [vmem:[%s1 + $0x460] sm:$0xff]
  %v907 = vld [vmem:[%s1 + $0x468] sm:$0xff]
  %v908 = vld [vmem:[%s1 + $0x470] sm:$0xff]
  %v909 = vld [vmem:[%s1 + $0x478] sm:$0xff]
  %v910 = vld [vmem:[%s1 + $0x480] sm:$0xff]
  %v911 = vld [vmem:[%s1 + $0x488] sm:$0xff]
  %v912 = vld [vmem:[%s1 + $0x490] sm:$0xff]
  %v913 = vld [vmem:[%s1 + $0x498] sm:$0xff]
  %v914 = vld [vmem:[%s1 + $0x4a0] sm:$0xff]
  %v915 = vld [vmem:[%s1 + $0x4a8] sm:$0xff]
  %v916 = vld [vmem:[%s1 + $0x4b0] sm:$0xff]
  %v917 = vld [vmem:[%s1 + $0x4b8] sm:$0xff]
  %v918 = vld [vmem:[%s1 + $0x4c0] sm:$0xff]
  %v919 = vld [vmem:[%s1 + $0x4c8] sm:$0xff]
  %v920 = vld [vmem:[%s1 + $0x4d0] sm:$0xff]
  %v921 = vld [vmem:[%s1 + $0x4d8] sm:$0xff]
  %v922 = vld [vmem:[%s1 + $0x4e0] sm:$0xff]
  %v923 = vld [vmem:[%s1 + $0x4e8] sm:$0xff]
  %v924 = vld [vmem:[%s1 + $0x4f0] sm:$0xff]
  %v925 = vld [vmem:[%s1 + $0x4f8] sm:$0xff]
  %v926 = vld [vmem:[%s1 + $0x500] sm:$0xff]
  %v927 = vld [vmem:[%s1 + $0x508] sm:$0xff]
  %v928 = vld [vmem:[%s1 + $0x510] sm:$0xff]
  %v929 = vld [vmem:[%s1 + $0x518] sm:$0xff]
  %v930 = vld [vmem:[%s1 + $0x520] sm:$0xff]
  %v931 = vld [vmem:[%s1 + $0x528] sm:$0xff]
  %v932 = vld [vmem:[%s1 + $0x530] sm:$0xff]
  %v933 = vld [vmem:[%s1 + $0x538] sm:$0xff]
  %v934 = vld [vmem:[%s1 + $0x540] sm:$0xff]
  %v935 = vld [vmem:[%s1 + $0x548] sm:$0xff]
  %v936 = vld [vmem:[%s1 + $0x550] sm:$0xff]
  %v937 = vld [vmem:[%s1 + $0x558] sm:$0xff]
  %v938 = vld [vmem:[%s1 + $0x560] sm:$0xff]
  %v939 = vld [vmem:[%s1 + $0x568] sm:$0xff]
  %v940 = vld [vmem:[%s1 + $0x570] sm:$0xff]
  %v941 = vld [vmem:[%s1 + $0x578] sm:$0xff]
  %v942 = vld [vmem:[%s1 + $0x580] sm:$0xff]
  %v943 = vld [vmem:[%s1 + $0x588] sm:$0xff]
  %v944 = vld [vmem:[%s1 + $0x590] sm:$0xff]
  %v945 = vld [vmem:[%s1 + $0x598] sm:$0xff]
  %v946 = vld [vmem:[%s1 + $0x5a0] sm:$0xff]
  %v947 = vld [vmem:[%s1 + $0x5a8] sm:$0xff]
  %v948 = vld [vmem:[%s1 + $0x5b0] sm:$0xff]
  %v949 = vld [vmem:[%s1 + $0x5b8] sm:$0xff]
  %v950 = vld [vmem:[%s1 + $0x5c0] sm:$0xff]
  %v951 = vld [vmem:[%s1 + $0x5c8] sm:$0xff]
  %v952 = vld [vmem:[%s1 + $0x5d0] sm:$0xff]
  %v953 = vld [vmem:[%s1 + $0x5d8] sm:$0xff]
  %v954 = vld [vmem:[%s1 + $0x5e0] sm:$0xff]
  %v955 = vld [vmem:[%s1 + $0x5e8] sm:$0xff]
  %v956 = vld [vmem:[%s1 + $0x5f0] sm:$0xff]
  %v957 = vld [vmem:[%s1 + $0x5f8] sm:$0xff]
  %v958 = vld [vmem:[%s1 + $0x600] sm:$0xff]
  %v959 = vld [vmem:[%s1 + $0x608] sm:$0xff]
  %v960 = vld [vmem:[%s1 + $0x610] sm:$0xff]
  %v961 = vld [vmem:[%s1 + $0x618] sm:$0xff]
  %v962 = vld [vmem:[%s1 + $0x620] sm:$0xff]
  %v963 = vld [vmem:[%s1 + $0x628] sm:$0xff]
  %v964 = vld [vmem:[%s1 + $0x630] sm:$0xff]
  %v965 = vld [vmem:[%s1 + $0x638] sm:$0xff]
  %v966 = vld [vmem:[%s1 + $0x640] sm:$0xff]
  %v967 = vld [vmem:[%s1 + $0x648] sm:$0xff]
  %v968 = vld [vmem:[%s1 + $0x650] sm:$0xff]
  %v969 = vld [vmem:[%s1 + $0x658] sm:$0xff]
  %v970 = vld [vmem:[%s1 + $0x660] sm:$0xff]
  %v971 = vld [vmem:[%s1 + $0x668] sm:$0xff]
  %v972 = vld [vmem:[%s1 + $0x670] sm:$0xff]
  %v973 = vld [vmem:[%s1 + $0x678] sm:$0xff]
  %v974 = vld [vmem:[%s1 + $0x680] sm:$0xff]
  %v975 = vld [vmem:[%s1 + $0x688] sm:$0xff]
  %v976 = vld [vmem:[%s1 + $0x690] sm:$0xff]
  %v977 = vld [vmem:[%s1 + $0x698] sm:$0xff]
  %v978 = vld [vmem:[%s1 + $0x6a0] sm:$0xff]
  %v979 = vld [vmem:[%s1 + $0x6a8] sm:$0xff]
  %v980 = vld [vmem:[%s1 + $0x6b0] sm:$0xff]
  %v981 = vld [vmem:[%s1 + $0x6b8] sm:$0xff]
  %v982 = vld [vmem:[%s1 + $0x6c0] sm:$0xff]
  %v983 = vld [vmem:[%s1 + $0x6c8] sm:$0xff]
  %v984 = vld [vmem:[%s1 + $0x6d0] sm:$0xff]
  %v985 = vld [vmem:[%s1 + $0x6d8] sm:$0xff]
  %v986 = vld [vmem:[%s1 + $0x6e0] sm:$0xff]
  %v987 = vld [vmem:[%s1 + $0x6e8] sm:$0xff]
  %v988 = vld [vmem:[%s1 + $0x6f0] sm:$0xff]
  %v989 = vld [vmem:[%s1 + $0x6f8] sm:$0xff]
  %v990 = vld [vmem:[%s1 + $0x700] sm:$0xff]
  %v991 = vld [vmem:[%s1 + $0x708] sm:$0xff]
  %v992 = vld [vmem:[%s1 + $0x710] sm:$0xff]
  %v993 = vld [vmem:[%s1 + $0x718] sm:$0xff]
  %v994 = vld [vmem:[%s1 + $0x720] sm:$0xff]
  %v995 = vld [vmem:[%s1 + $0x728] sm:$0xff]
  %v996 = vld [vmem:[%s1 + $0x730] sm:$0xff]
  %v997 = vld [vmem:[%s1 + $0x738] sm:$0xff]
  %v998 = vld [vmem:[%s1 + $0x740] sm:$0xff]
  %v999 = vld [vmem:[%s1 + $0x748] sm:$0xff]
  %v1000 = vld [vmem:[%s1 + $0x750] sm:$0xff]
  %v1001 = vld [vmem:[%s1 + $0x758] sm:$0xff]
  %v1002 = vld [vmem:[%s1 + $0x760] sm:$0xff]
  %v1003 = vld [vmem:[%s1 + $0x768] sm:$0xff]
  %v1004 = vld [vmem:[%s1 + $0x770] sm:$0xff]
  %v1005 = vld [vmem:[%s1 + $0x778] sm:$0xff]
  %v1006 = vld [vmem:[%s1 + $0x780] sm:$0xff]
  %v1007 = vld [vmem:[%s1 + $0x788] sm:$0xff]
  %v1008 = vld [vmem:[%s1 + $0x790] sm:$0xff]
  %v1009 = vld [vmem:[%s1 + $0x798] sm:$0xff]
  %v1010 = vld [vmem:[%s1 + $0x7a0] sm:$0xff]
  %v1011 = vld [vmem:[%s1 + $0x7a8] sm:$0xff]
  %v1012 = vld [vmem:[%s1 + $0x7b0] sm:$0xff]
  %v1013 = vld [vmem:[%s1 + $0x7b8] sm:$0xff]
  %v1014 = vld [vmem:[%s1 + $0x7c0] sm:$0xff]
  %v1015 = vld [vmem:[%s1 + $0x7c8] sm:$0xff]
  %v1016 = vld [vmem:[%s1 + $0x7d0] sm:$0xff]
  %v1017 = vld [vmem:[%s1 + $0x7d8] sm:$0xff]
  %v1018 = vld [vmem:[%s1 + $0x7e0] sm:$0xff]
  %v1019 = vld [vmem:[%s1 + $0x7e8] sm:$0xff]
  %v1020 = vld [vmem:[%s1 + $0x7f0] sm:$0xff]
  %v1021 = vld [vmem:[%s1 + $0x7f8] sm:$0xff]
  %v1022 = vld [vmem:[%s1 + $0x800] sm:$0xff]
  %v1023 = vld [vmem:[%s1 + $0x808] sm:$0xff]
  %v1024 = vld [vmem:[%s1 + $0x810] sm:$0xff]
  %v1025 = vld [vmem:[%s1 + $0x818] sm:$0xff]
  %v1026 = vld [vmem:[%s1 + $0x820] sm:$0xff]
  %v1027 = vld [vmem:[%s1 + $0x828] sm:$0xff]
  %v1028 = vld [vmem:[%s1 + $0x830] sm:$0xff]
  %v1029 = vld [vmem:[%s1 + $0x838] sm:$0xff]
  %v1030 = vld [vmem:[%s1 + $0x840] sm:$0xff]
  %v1031 = vld [vmem:[%s1 + $0x848] sm:$0xff]
  %v1032 = vld [vmem:[%s1 + $0x850] sm:$0xff]
  %v1033 = vld [vmem:[%s1 + $0x858] sm:$0xff]
  %v1034 = vld [vmem:[%s1 + $0x860] sm:$0xff]
  %v1035 = vld [vmem:[%s1 + $0x868] sm:$0xff]
  %v1036 = vld [vmem:[%s1 + $0x870] sm:$0xff]
  %v1037 = vld [vmem:[%s1 + $0x878] sm:$0xff]
  %v1038 = vld [vmem:[%s1 + $0x880] sm:$0xff]
  %v1039 = vld [vmem:[%s1 + $0x888] sm:$0xff]
  %v1040 = vld [vmem:[%s1 + $0x890] sm:$0xff]
  %v1041 = vld [vmem:[%s1 + $0x898] sm:$0xff]
  %v1042 = vld [vmem:[%s1 + $0x8a0] sm:$0xff]
  %v1043 = vld [vmem:[%s1 + $0x8a8] sm:$0xff]
  %v1044 = vld [vmem:[%s1 + $0x8b0] sm:$0xff]
  %v1045 = vld [vmem:[%s1 + $0x8b8] sm:$0xff]
  %v1046 = vld [vmem:[%s1 + $0x8c0] sm:$0xff]
  %v1047 = vld [vmem:[%s1 + $0x8c8] sm:$0xff]
  %v1048 = vld [vmem:[%s1 + $0x8d0] sm:$0xff]
  %v1049 = vld [vmem:[%s1 + $0x8d8] sm:$0xff]
  %v1050 = vld [vmem:[%s1 + $0x8e0] sm:$0xff]
  %v1051 = vld [vmem:[%s1 + $0x8e8] sm:$0xff]
  %v1052 = vld [vmem:[%s1 + $0x8f0] sm:$0xff]
  %v1053 = vld [vmem:[%s1 + $0x8f8] sm:$0xff]
  %v1054 = vld [vmem:[%s1 + $0x900] sm:$0xff]
  %v1055 = vld [vmem:[%s1 + $0x908] sm:$0xff]
  %v1056 = vld [vmem:[%s1 + $0x910] sm:$0xff]
  %v1057 = vld [vmem:[%s1 + $0x918] sm:$0xff]
  %v1058 = vld [vmem:[%s1 + $0x920] sm:$0xff]
  %v1059 = vld [vmem:[%s1 + $0x928] sm:$0xff]
  %v1060 = vld [vmem:[%s1 + $0x930] sm:$0xff]
  %v1061 = vld [vmem:[%s1 + $0x938] sm:$0xff]
  %v1062 = vld [vmem:[%s1 + $0x940] sm:$0xff]
  %v1063 = vld [vmem:[%s1 + $0x948] sm:$0xff]
  %v1064 = vld [vmem:[%s1 + $0x950] sm:$0xff]
  %v1065 = vld [vmem:[%s1 + $0x958] sm:$0xff]
  %v1066 = vld [vmem:[%s1 + $0x960] sm:$0xff]
  %v1067 = vld [vmem:[%s1 + $0x968] sm:$0xff]
  %v1068 = vld [vmem:[%s1 + $0x970] sm:$0xff]
  %v1069 = vld [vmem:[%s1 + $0x978] sm:$0xff]
  %v1070 = vld [vmem:[%s1 + $0x980] sm:$0xff]
  %v1071 = vld [vmem:[%s1 + $0x988] sm:$0xff]
  %v1072 = vld [vmem:[%s1 + $0x990] sm:$0xff]
  %v1073 = vld [vmem:[%s1 + $0x998] sm:$0xff]
  %v1074 = vld [vmem:[%s1 + $0x9a0] sm:$0xff]
  %v1075 = vld [vmem:[%s1 + $0x9a8] sm:$0xff]
  %v1076 = vld [vmem:[%s1 + $0x9b0] sm:$0xff]
  %v1077 = vld [vmem:[%s1 + $0x9b8] sm:$0xff]
  %v1078 = vld [vmem:[%s1 + $0x9c0] sm:$0xff]
  %v1079 = vld [vmem:[%s1 + $0x9c8] sm:$0xff]
  %v1080 = vld [vmem:[%s1 + $0x9d0] sm:$0xff]
  %v1081 = vld [vmem:[%s1 + $0x9d8] sm:$0xff]
  %v1082 = vld [vmem:[%s1 + $0x9e0] sm:$0xff]
  %v1083 = vld [vmem:[%s1 + $0x9e8] sm:$0xff]
  %v1084 = vld [vmem:[%s1 + $0x9f0] sm:$0xff]
  %v1085 = vld [vmem:[%s1 + $0x9f8] sm:$0xff]
  %v1086 = vld [vmem:[%s1 + $0xa00] sm:$0xff]
  %v1087 = vld [vmem:[%s1 + $0xa08] sm:$0xff]
  %v1088 = vld [vmem:[%s1 + $0xa10] sm:$0xff]
  %v1089 = vld [vmem:[%s1 + $0xa18] sm:$0xff]
  %v1090 = vld [vmem:[%s1 + $0xa20] sm:$0xff]
  %v1091 = vld [vmem:[%s1 + $0xa28] sm:$0xff]
  %v1092 = vld [vmem:[%s1 + $0xa30] sm:$0xff]
  %v1093 = vld [vmem:[%s1 + $0xa38] sm:$0xff]
  %v1094 = vld [vmem:[%s1 + $0xa40] sm:$0xff]
  %v1095 = vld [vmem:[%s1 + $0xa48] sm:$0xff]
  %v1096 = vld [vmem:[%s1 + $0xa50] sm:$0xff]
  %v1097 = vld [vmem:[%s1 + $0xa58] sm:$0xff]
  %v1098 = vld [vmem:[%s1 + $0xa60] sm:$0xff]
  %v1099 = vld [vmem:[%s1 + $0xa68] sm:$0xff]
  %v1100 = vld [vmem:[%s1 + $0xa70] sm:$0xff]
  %v1101 = vld [vmem:[%s1 + $0xa78] sm:$0xff]
  %v1102 = vld [vmem:[%s1 + $0xa80] sm:$0xff]
  %v1103 = vld [vmem:[%s1 + $0xa88] sm:$0xff]
  %v1104 = vld [vmem:[%s1 + $0xa90] sm:$0xff]
  %v1105 = vld [vmem:[%s1 + $0xa98] sm:$0xff]
  %v1106 = vld [vmem:[%s1 + $0xaa0] sm:$0xff]
  %v1107 = vld [vmem:[%s1 + $0xaa8] sm:$0xff]
  %v1108 = vld [vmem:[%s1 + $0xab0] sm:$0xff]
  %v1109 = vld [vmem:[%s1 + $0xab8] sm:$0xff]
  %v1110 = vld [vmem:[%s1 + $0xac0] sm:$0xff]
  %v1111 = vld [vmem:[%s1 + $0xac8] sm:$0xff]
  %v1112 = vld [vmem:[%s1 + $0xad0] sm:$0xff]
  %v1113 = vld [vmem:[%s1 + $0xad8] sm:$0xff]
  %v1114 = vld [vmem:[%s1 + $0xae0] sm:$0xff]
  %v1115 = vld [vmem:[%s1 + $0xae8] sm:$0xff]
  %v1116 = vld [vmem:[%s1 + $0xaf0] sm:$0xff]
  %v1117 = vld [vmem:[%s1 + $0xaf8] sm:$0xff]
  %v1118 = vld [vmem:[%s1 + $0xb00] sm:$0xff]
  %v1119 = vld [vmem:[%s1 + $0xb08] sm:$0xff]
  %v1120 = vld [vmem:[%s1 + $0xb10] sm:$0xff]
  %v1121 = vld [vmem:[%s1 + $0xb18] sm:$0xff]
  %v1122 = vld [vmem:[%s1 + $0xb20] sm:$0xff]
  %v1123 = vld [vmem:[%s1 + $0xb28] sm:$0xff]
  %v1124 = vld [vmem:[%s1 + $0xb30] sm:$0xff]
  %v1125 = vld [vmem:[%s1 + $0xb38] sm:$0xff]
  %v1126 = vld [vmem:[%s1 + $0xb40] sm:$0xff]
  %v1127 = vld [vmem:[%s1 + $0xb48] sm:$0xff]
  %v1128 = vld [vmem:[%s1 + $0xb50] sm:$0xff]
  %v1129 = vld [vmem:[%s1 + $0xb58] sm:$0xff]
  %v1130 = vld [vmem:[%s1 + $0xb60] sm:$0xff]
  %v1131 = vld [vmem:[%s1 + $0xb68] sm:$0xff]
  %v1132 = vld [vmem:[%s1 + $0xb70] sm:$0xff]
  %v1133 = vld [vmem:[%s1 + $0xb78] sm:$0xff]
  %v1134 = vld [vmem:[%s1 + $0xb80] sm:$0xff]
  %v1135 = vld [vmem:[%s1 + $0xb88] sm:$0xff]
  %v1136 = vld [vmem:[%s1 + $0xb90] sm:$0xff]
  %v1137 = vld [vmem:[%s1 + $0xb98] sm:$0xff]
  %v1138 = vld [vmem:[%s1 + $0xba0] sm:$0xff]
  %v1139 = vld [vmem:[%s1 + $0xba8] sm:$0xff]
  %v1140 = vld [vmem:[%s1 + $0xbb0] sm:$0xff]
  %v1141 = vld [vmem:[%s1 + $0xbb8] sm:$0xff]
  %v1142 = vld [vmem:[%s1 + $0xbc0] sm:$0xff]
  %v1143 = vld [vmem:[%s1 + $0xbc8] sm:$0xff]
  %v1144 = vld [vmem:[%s1 + $0xbd0] sm:$0xff]
  %v1145 = vld [vmem:[%s1 + $0xbd8] sm:$0xff]
  %v1146 = vld [vmem:[%s1 + $0xbe0] sm:$0xff]
  %v1147 = vld [vmem:[%s1 + $0xbe8] sm:$0xff]
  %v1148 = vld [vmem:[%s1 + $0xbf0] sm:$0xff]
  %v1149 = vld [vmem:[%s1 + $0xbf8] sm:$0xff]
  %v1150 = vld [vmem:[%s1 + $0xc00] sm:$0xff]
  %v1151 = vld [vmem:[%s1 + $0xc08] sm:$0xff]
  %v1152 = vld [vmem:[%s1 + $0xc10] sm:$0xff]
  %v1153 = vld [vmem:[%s1 + $0xc18] sm:$0xff]
  %v1154 = vld [vmem:[%s1 + $0xc20] sm:$0xff]
  %v1155 = vld [vmem:[%s1 + $0xc28] sm:$0xff]
  %v1156 = vld [vmem:[%s1 + $0xc30] sm:$0xff]
  %v1157 = vld [vmem:[%s1 + $0xc38] sm:$0xff]
  %v1158 = vld [vmem:[%s1 + $0xc40] sm:$0xff]
  %v1159 = vld [vmem:[%s1 + $0xc48] sm:$0xff]
  %v1160 = vld [vmem:[%s1 + $0xc50] sm:$0xff]
  %v1161 = vld [vmem:[%s1 + $0xc58] sm:$0xff]
  %v1162 = vld [vmem:[%s1 + $0xc60] sm:$0xff]
  %v1163 = vld [vmem:[%s1 + $0xc68] sm:$0xff]
  %v1164 = vld [vmem:[%s1 + $0xc70] sm:$0xff]
  %v1165 = vld [vmem:[%s1 + $0xc78] sm:$0xff]
  %v1166 = vld [vmem:[%s1 + $0xc80] sm:$0xff]
  %v1167 = vld [vmem:[%s1 + $0xc88] sm:$0xff]
  %v1168 = vld [vmem:[%s1 + $0xc90] sm:$0xff]
  %v1169 = vld [vmem:[%s1 + $0xc98] sm:$0xff]
  %v1170 = vld [vmem:[%s1 + $0xca0] sm:$0xff]
  %v1171 = vld [vmem:[%s1 + $0xca8] sm:$0xff]
  %v1172 = vld [vmem:[%s1 + $0xcb0] sm:$0xff]
  %v1173 = vld [vmem:[%s1 + $0xcb8] sm:$0xff]
  %v1174 = vld [vmem:[%s1 + $0xcc0] sm:$0xff]
  %v1175 = vld [vmem:[%s1 + $0xcc8] sm:$0xff]
  %v1176 = vld [vmem:[%s1 + $0xcd0] sm:$0xff]
  %v1177 = vld [vmem:[%s1 + $0xcd8] sm:$0xff]
  %v1178 = vld [vmem:[%s1 + $0xce0] sm:$0xff]
  %v1179 = vld [vmem:[%s1 + $0xce8] sm:$0xff]
  %v1180 = vld [vmem:[%s1 + $0xcf0] sm:$0xff]
  %v1181 = vld [vmem:[%s1 + $0xcf8] sm:$0xff]
  %v1182 = vld [vmem:[%s1 + $0xd00] sm:$0xff]
  %v1183 = vld [vmem:[%s1 + $0xd08] sm:$0xff]
  %v1184 = vld [vmem:[%s1 + $0xd10] sm:$0xff]
  %v1185 = vld [vmem:[%s1 + $0xd18] sm:$0xff]
  %v1186 = vld [vmem:[%s1 + $0xd20] sm:$0xff]
  %v1187 = vld [vmem:[%s1 + $0xd28] sm:$0xff]
  %v1188 = vld [vmem:[%s1 + $0xd30] sm:$0xff]
  %v1189 = vld [vmem:[%s1 + $0xd38] sm:$0xff]
  %v1190 = vld [vmem:[%s1 + $0xd40] sm:$0xff]
  %v1191 = vld [vmem:[%s1 + $0xd48] sm:$0xff]
  %v1192 = vld [vmem:[%s1 + $0xd50] sm:$0xff]
  %v1193 = vld [vmem:[%s1 + $0xd58] sm:$0xff]
  %v1194 = vld [vmem:[%s1 + $0xd60] sm:$0xff]
  %v1195 = vld [vmem:[%s1 + $0xd68] sm:$0xff]
  %v1196 = vld [vmem:[%s1 + $0xd70] sm:$0xff]
  %v1197 = vld [vmem:[%s1 + $0xd78] sm:$0xff]
  %v1198 = vld [vmem:[%s1 + $0xd80] sm:$0xff]
  %v1199 = vld [vmem:[%s1 + $0xd88] sm:$0xff]
  %v1200 = vld [vmem:[%s1 + $0xd90] sm:$0xff]
  %v1201 = vld [vmem:[%s1 + $0xd98] sm:$0xff]
  %v1202 = vld [vmem:[%s1 + $0xda0] sm:$0xff]
  %v1203 = vld [vmem:[%s1 + $0xda8] sm:$0xff]
  %v1204 = vld [vmem:[%s1 + $0xdb0] sm:$0xff]
  %v1205 = vld [vmem:[%s1 + $0xdb8] sm:$0xff]
  %v1206 = vld [vmem:[%s1 + $0xdc0] sm:$0xff]
  %v1207 = vld [vmem:[%s1 + $0xdc8] sm:$0xff]
  %v1208 = vld [vmem:[%s1 + $0xdd0] sm:$0xff]
  %v1209 = vld [vmem:[%s1 + $0xdd8] sm:$0xff]
  %v1210 = vld [vmem:[%s1 + $0xde0] sm:$0xff]
  %v1211 = vld [vmem:[%s1 + $0xde8] sm:$0xff]
  %v1212 = vld [vmem:[%s1 + $0xdf0] sm:$0xff]
  %v1213 = vld [vmem:[%s1 + $0xdf8] sm:$0xff]
  %v1214 = vld [vmem:[%s1 + $0xe00] sm:$0xff]
  %v1215 = vld [vmem:[%s1 + $0xe08] sm:$0xff]
  %v1216 = vld [vmem:[%s1 + $0xe10] sm:$0xff]
  %v1217 = vld [vmem:[%s1 + $0xe18] sm:$0xff]
  %v1218 = vld [vmem:[%s1 + $0xe20] sm:$0xff]
  %v1219 = vld [vmem:[%s1 + $0xe28] sm:$0xff]
  %v1220 = vld [vmem:[%s1 + $0xe30] sm:$0xff]
  %v1221 = vld [vmem:[%s1 + $0xe38] sm:$0xff]
  %v1222 = vld [vmem:[%s1 + $0xe40] sm:$0xff]
  %v1223 = vld [vmem:[%s1 + $0xe48] sm:$0xff]
  %v1224 = vld [vmem:[%s1 + $0xe50] sm:$0xff]
  %v1225 = vld [vmem:[%s1 + $0xe58] sm:$0xff]
  %v1226 = vld [vmem:[%s1 + $0xe60] sm:$0xff]
  %v1227 = vld [vmem:[%s1 + $0xe68] sm:$0xff]
  %v1228 = vld [vmem:[%s1 + $0xe70] sm:$0xff]
  %v1229 = vld [vmem:[%s1 + $0xe78] sm:$0xff]
  %v1230 = vld [vmem:[%s1 + $0xe80] sm:$0xff]
  %v1231 = vld [vmem:[%s1 + $0xe88] sm:$0xff]
  %v1232 = vld [vmem:[%s1 + $0xe90] sm:$0xff]
  %v1233 = vld [vmem:[%s1 + $0xe98] sm:$0xff]
  %v1234 = vld [vmem:[%s1 + $0xea0] sm:$0xff]
  %v1235 = vld [vmem:[%s1 + $0xea8] sm:$0xff]
  %v1236 = vld [vmem:[%s1 + $0xeb0] sm:$0xff]
  %v1237 = vld [vmem:[%s1 + $0xeb8] sm:$0xff]
  %v1238 = vld [vmem:[%s1 + $0xec0] sm:$0xff]
  %v1239 = vld [vmem:[%s1 + $0xec8] sm:$0xff]
  %v1240 = vld [vmem:[%s1 + $0xed0] sm:$0xff]
  %v1241 = vld [vmem:[%s1 + $0xed8] sm:$0xff]
  %v1242 = vld [vmem:[%s1 + $0xee0] sm:$0xff]
  %v1243 = vld [vmem:[%s1 + $0xee8] sm:$0xff]
  %v1244 = vld [vmem:[%s1 + $0xef0] sm:$0xff]
  %v1245 = vld [vmem:[%s1 + $0xef8] sm:$0xff]
  %v1246 = vld [vmem:[%s1 + $0xf00] sm:$0xff]
  %v1247 = vld [vmem:[%s1 + $0xf08] sm:$0xff]
  %v1248 = vld [vmem:[%s1 + $0xf10] sm:$0xff]
  %v1249 = vld [vmem:[%s1 + $0xf18] sm:$0xff]
  %v1250 = vld [vmem:[%s1 + $0xf20] sm:$0xff]
  %v1251 = vld [vmem:[%s1 + $0xf28] sm:$0xff]
  %v1252 = vld [vmem:[%s1 + $0xf30] sm:$0xff]
  %v1253 = vld [vmem:[%s1 + $0xf38] sm:$0xff]
  %v1254 = vld [vmem:[%s1 + $0xf40] sm:$0xff]
  %v1255 = vld [vmem:[%s1 + $0xf48] sm:$0xff]
  %v1256 = vld [vmem:[%s1 + $0xf50] sm:$0xff]
  %v1257 = vld [vmem:[%s1 + $0xf58] sm:$0xff]
  %v1258 = vld [vmem:[%s1 + $0xf60] sm:$0xff]
  %v1259 = vld [vmem:[%s1 + $0xf68] sm:$0xff]
  %v1260 = vld [vmem:[%s1 + $0xf70] sm:$0xff]
  %v1261 = vld [vmem:[%s1 + $0xf78] sm:$0xff]
  %v1262 = vld [vmem:[%s1 + $0xf80] sm:$0xff]
  %v1263 = vld [vmem:[%s1 + $0xf88] sm:$0xff]
  %v1264 = vld [vmem:[%s1 + $0xf90] sm:$0xff]
  %v1265 = vld [vmem:[%s1 + $0xf98] sm:$0xff]
  %v1266 = vld [vmem:[%s1 + $0xfa0] sm:$0xff]
  %v1267 = vld [vmem:[%s1 + $0xfa8] sm:$0xff]
  %v1268 = vld [vmem:[%s1 + $0xfb0] sm:$0xff]
  %v1269 = vld [vmem:[%s1 + $0xfb8] sm:$0xff]
  %v1270 = vld [vmem:[%s1 + $0xfc0] sm:$0xff]
  %v1271 = vld [vmem:[%s1 + $0xfc8] sm:$0xff]
  %v1272 = vld [vmem:[%s1 + $0xfd0] sm:$0xff]
  %v1273 = vld [vmem:[%s1 + $0xfd8] sm:$0xff]
  %v1274 = vld [vmem:[%s1 + $0xfe0] sm:$0xff]
  %v1275 = vld [vmem:[%s1 + $0xfe8] sm:$0xff]
  %v1276 = vld [vmem:[%s1 + $0xff0] sm:$0xff]
  %v1277 = vld [vmem:[%s1 + $0xff8] sm:$0xff]
  %v1790 = vunpack.c.l.b16 %v766
  %v1791 = vunpack.c.h.b16 %v766
  %v1792 = vunpack.c.l.b16 %v767
  %v1793 = vunpack.c.h.b16 %v767
  %v1794 = vunpack.c.l.b16 %v768
  %v1795 = vunpack.c.h.b16 %v768
  %v1796 = vunpack.c.l.b16 %v769
  %v1797 = vunpack.c.h.b16 %v769
  %v1798 = vunpack.c.l.b16 %v770
  %v1799 = vunpack.c.h.b16 %v770
  %v1800 = vunpack.c.l.b16 %v771
  %v1801 = vunpack.c.h.b16 %v771
  %v1802 = vunpack.c.l.b16 %v772
  %v1803 = vunpack.c.h.b16 %v772
  %v1804 = vunpack.c.l.b16 %v773
  %v1805 = vunpack.c.h.b16 %v773
  %v1806 = vunpack.c.l.b16 %v774
  %v1807 = vunpack.c.h.b16 %v774
  %v1808 = vunpack.c.l.b16 %v775
  %v1809 = vunpack.c.h.b16 %v775
  %v1810 = vunpack.c.l.b16 %v776
  %v1811 = vunpack.c.h.b16 %v776
  %v1812 = vunpack.c.l.b16 %v777
  %v1813 = vunpack.c.h.b16 %v777
  %v1814 = vunpack.c.l.b16 %v778
  %v1815 = vunpack.c.h.b16 %v778
  %v1816 = vunpack.c.l.b16 %v779
  %v1817 = vunpack.c.h.b16 %v779
  %v1818 = vunpack.c.l.b16 %v780
  %v1819 = vunpack.c.h.b16 %v780
  %v1820 = vunpack.c.l.b16 %v781
  %v1821 = vunpack.c.h.b16 %v781
  %v1822 = vunpack.c.l.b16 %v782
  %v1823 = vunpack.c.h.b16 %v782
  %v1824 = vunpack.c.l.b16 %v783
  %v1825 = vunpack.c.h.b16 %v783
  %v1826 = vunpack.c.l.b16 %v784
  %v1827 = vunpack.c.h.b16 %v784
  %v1828 = vunpack.c.l.b16 %v785
  %v1829 = vunpack.c.h.b16 %v785
  %v1830 = vunpack.c.l.b16 %v786
  %v1831 = vunpack.c.h.b16 %v786
  %v1832 = vunpack.c.l.b16 %v787
  %v1833 = vunpack.c.h.b16 %v787
  %v1834 = vunpack.c.l.b16 %v788
  %v1835 = vunpack.c.h.b16 %v788
  %v1836 = vunpack.c.l.b16 %v789
  %v1837 = vunpack.c.h.b16 %v789
  %v1838 = vunpack.c.l.b16 %v790
  %v1839 = vunpack.c.h.b16 %v790
  %v1840 = vunpack.c.l.b16 %v791
  %v1841 = vunpack.c.h.b16 %v791
  %v1842 = vunpack.c.l.b16 %v792
  %v1843 = vunpack.c.h.b16 %v792
  %v1844 = vunpack.c.l.b16 %v793
  %v1845 = vunpack.c.h.b16 %v793
  %v1846 = vunpack.c.l.b16 %v794
  %v1847 = vunpack.c.h.b16 %v794
  %v1848 = vunpack.c.l.b16 %v795
  %v1849 = vunpack.c.h.b16 %v795
  %v1850 = vunpack.c.l.b16 %v796
  %v1851 = vunpack.c.h.b16 %v796
  %v1852 = vunpack.c.l.b16 %v797
  %v1853 = vunpack.c.h.b16 %v797
  %v1854 = vunpack.c.l.b16 %v798
  %v1855 = vunpack.c.h.b16 %v798
  %v1856 = vunpack.c.l.b16 %v799
  %v1857 = vunpack.c.h.b16 %v799
  %v1858 = vunpack.c.l.b16 %v800
  %v1859 = vunpack.c.h.b16 %v800
  %v1860 = vunpack.c.l.b16 %v801
  %v1861 = vunpack.c.h.b16 %v801
  %v1862 = vunpack.c.l.b16 %v802
  %v1863 = vunpack.c.h.b16 %v802
  %v1864 = vunpack.c.l.b16 %v803
  %v1865 = vunpack.c.h.b16 %v803
  %v1866 = vunpack.c.l.b16 %v804
  %v1867 = vunpack.c.h.b16 %v804
  %v1868 = vunpack.c.l.b16 %v805
  %v1869 = vunpack.c.h.b16 %v805
  %v1870 = vunpack.c.l.b16 %v806
  %v1871 = vunpack.c.h.b16 %v806
  %v1872 = vunpack.c.l.b16 %v807
  %v1873 = vunpack.c.h.b16 %v807
  %v1874 = vunpack.c.l.b16 %v808
  %v1875 = vunpack.c.h.b16 %v808
  %v1876 = vunpack.c.l.b16 %v809
  %v1877 = vunpack.c.h.b16 %v809
  %v1878 = vunpack.c.l.b16 %v810
  %v1879 = vunpack.c.h.b16 %v810
  %v1880 = vunpack.c.l.b16 %v811
  %v1881 = vunpack.c.h.b16 %v811
  %v1882 = vunpack.c.l.b16 %v812
  %v1883 = vunpack.c.h.b16 %v812
  %v1884 = vunpack.c.l.b16 %v813
  %v1885 = vunpack.c.h.b16 %v813
  %v1886 = vunpack.c.l.b16 %v814
  %v1887 = vunpack.c.h.b16 %v814
  %v1888 = vunpack.c.l.b16 %v815
  %v1889 = vunpack.c.h.b16 %v815
  %v1890 = vunpack.c.l.b16 %v816
  %v1891 = vunpack.c.h.b16 %v816
  %v1892 = vunpack.c.l.b16 %v817
  %v1893 = vunpack.c.h.b16 %v817
  %v1894 = vunpack.c.l.b16 %v818
  %v1895 = vunpack.c.h.b16 %v818
  %v1896 = vunpack.c.l.b16 %v819
  %v1897 = vunpack.c.h.b16 %v819
  %v1898 = vunpack.c.l.b16 %v820
  %v1899 = vunpack.c.h.b16 %v820
  %v1900 = vunpack.c.l.b16 %v821
  %v1901 = vunpack.c.h.b16 %v821
  %v1902 = vunpack.c.l.b16 %v822
  %v1903 = vunpack.c.h.b16 %v822
  %v1904 = vunpack.c.l.b16 %v823
  %v1905 = vunpack.c.h.b16 %v823
  %v1906 = vunpack.c.l.b16 %v824
  %v1907 = vunpack.c.h.b16 %v824
  %v1908 = vunpack.c.l.b16 %v825
  %v1909 = vunpack.c.h.b16 %v825
  %v1910 = vunpack.c.l.b16 %v826
  %v1911 = vunpack.c.h.b16 %v826
  %v1912 = vunpack.c.l.b16 %v827
  %v1913 = vunpack.c.h.b16 %v827
  %v1914 = vunpack.c.l.b16 %v828
  %v1915 = vunpack.c.h.b16 %v828
  %v1916 = vunpack.c.l.b16 %v829
  %v1917 = vunpack.c.h.b16 %v829
  %v1918 = vunpack.c.l.b16 %v830
  %v1919 = vunpack.c.h.b16 %v830
  %v1920 = vunpack.c.l.b16 %v831
  %v1921 = vunpack.c.h.b16 %v831
  %v1922 = vunpack.c.l.b16 %v832
  %v1923 = vunpack.c.h.b16 %v832
  %v1924 = vunpack.c.l.b16 %v833
  %v1925 = vunpack.c.h.b16 %v833
  %v1926 = vunpack.c.l.b16 %v834
  %v1927 = vunpack.c.h.b16 %v834
  %v1928 = vunpack.c.l.b16 %v835
  %v1929 = vunpack.c.h.b16 %v835
  %v1930 = vunpack.c.l.b16 %v836
  %v1931 = vunpack.c.h.b16 %v836
  %v1932 = vunpack.c.l.b16 %v837
  %v1933 = vunpack.c.h.b16 %v837
  %v1934 = vunpack.c.l.b16 %v838
  %v1935 = vunpack.c.h.b16 %v838
  %v1936 = vunpack.c.l.b16 %v839
  %v1937 = vunpack.c.h.b16 %v839
  %v1938 = vunpack.c.l.b16 %v840
  %v1939 = vunpack.c.h.b16 %v840
  %v1940 = vunpack.c.l.b16 %v841
  %v1941 = vunpack.c.h.b16 %v841
  %v1942 = vunpack.c.l.b16 %v842
  %v1943 = vunpack.c.h.b16 %v842
  %v1944 = vunpack.c.l.b16 %v843
  %v1945 = vunpack.c.h.b16 %v843
  %v1946 = vunpack.c.l.b16 %v844
  %v1947 = vunpack.c.h.b16 %v844
  %v1948 = vunpack.c.l.b16 %v845
  %v1949 = vunpack.c.h.b16 %v845
  %v1950 = vunpack.c.l.b16 %v846
  %v1951 = vunpack.c.h.b16 %v846
  %v1952 = vunpack.c.l.b16 %v847
  %v1953 = vunpack.c.h.b16 %v847
  %v1954 = vunpack.c.l.b16 %v848
  %v1955 = vunpack.c.h.b16 %v848
  %v1956 = vunpack.c.l.b16 %v849
  %v1957 = vunpack.c.h.b16 %v849
  %v1958 = vunpack.c.l.b16 %v850
  %v1959 = vunpack.c.h.b16 %v850
  %v1960 = vunpack.c.l.b16 %v851
  %v1961 = vunpack.c.h.b16 %v851
  %v1962 = vunpack.c.l.b16 %v852
  %v1963 = vunpack.c.h.b16 %v852
  %v1964 = vunpack.c.l.b16 %v853
  %v1965 = vunpack.c.h.b16 %v853
  %v1966 = vunpack.c.l.b16 %v854
  %v1967 = vunpack.c.h.b16 %v854
  %v1968 = vunpack.c.l.b16 %v855
  %v1969 = vunpack.c.h.b16 %v855
  %v1970 = vunpack.c.l.b16 %v856
  %v1971 = vunpack.c.h.b16 %v856
  %v1972 = vunpack.c.l.b16 %v857
  %v1973 = vunpack.c.h.b16 %v857
  %v1974 = vunpack.c.l.b16 %v858
  %v1975 = vunpack.c.h.b16 %v858
  %v1976 = vunpack.c.l.b16 %v859
  %v1977 = vunpack.c.h.b16 %v859
  %v1978 = vunpack.c.l.b16 %v860
  %v1979 = vunpack.c.h.b16 %v860
  %v1980 = vunpack.c.l.b16 %v861
  %v1981 = vunpack.c.h.b16 %v861
  %v1982 = vunpack.c.l.b16 %v862
  %v1983 = vunpack.c.h.b16 %v862
  %v1984 = vunpack.c.l.b16 %v863
  %v1985 = vunpack.c.h.b16 %v863
  %v1986 = vunpack.c.l.b16 %v864
  %v1987 = vunpack.c.h.b16 %v864
  %v1988 = vunpack.c.l.b16 %v865
  %v1989 = vunpack.c.h.b16 %v865
  %v1990 = vunpack.c.l.b16 %v866
  %v1991 = vunpack.c.h.b16 %v866
  %v1992 = vunpack.c.l.b16 %v867
  %v1993 = vunpack.c.h.b16 %v867
  %v1994 = vunpack.c.l.b16 %v868
  %v1995 = vunpack.c.h.b16 %v868
  %v1996 = vunpack.c.l.b16 %v869
  %v1997 = vunpack.c.h.b16 %v869
  %v1998 = vunpack.c.l.b16 %v870
  %v1999 = vunpack.c.h.b16 %v870
  %v2000 = vunpack.c.l.b16 %v871
  %v2001 = vunpack.c.h.b16 %v871
  %v2002 = vunpack.c.l.b16 %v872
  %v2003 = vunpack.c.h.b16 %v872
  %v2004 = vunpack.c.l.b16 %v873
  %v2005 = vunpack.c.h.b16 %v873
  %v2006 = vunpack.c.l.b16 %v874
  %v2007 = vunpack.c.h.b16 %v874
  %v2008 = vunpack.c.l.b16 %v875
  %v2009 = vunpack.c.h.b16 %v875
  %v2010 = vunpack.c.l.b16 %v876
  %v2011 = vunpack.c.h.b16 %v876
  %v2012 = vunpack.c.l.b16 %v877
  %v2013 = vunpack.c.h.b16 %v877
  %v2014 = vunpack.c.l.b16 %v878
  %v2015 = vunpack.c.h.b16 %v878
  %v2016 = vunpack.c.l.b16 %v879
  %v2017 = vunpack.c.h.b16 %v879
  %v2018 = vunpack.c.l.b16 %v880
  %v2019 = vunpack.c.h.b16 %v880
  %v2020 = vunpack.c.l.b16 %v881
  %v2021 = vunpack.c.h.b16 %v881
  %v2022 = vunpack.c.l.b16 %v882
  %v2023 = vunpack.c.h.b16 %v882
  %v2024 = vunpack.c.l.b16 %v883
  %v2025 = vunpack.c.h.b16 %v883
  %v2026 = vunpack.c.l.b16 %v884
  %v2027 = vunpack.c.h.b16 %v884
  %v2028 = vunpack.c.l.b16 %v885
  %v2029 = vunpack.c.h.b16 %v885
  %v2030 = vunpack.c.l.b16 %v886
  %v2031 = vunpack.c.h.b16 %v886
  %v2032 = vunpack.c.l.b16 %v887
  %v2033 = vunpack.c.h.b16 %v887
  %v2034 = vunpack.c.l.b16 %v888
  %v2035 = vunpack.c.h.b16 %v888
  %v2036 = vunpack.c.l.b16 %v889
  %v2037 = vunpack.c.h.b16 %v889
  %v2038 = vunpack.c.l.b16 %v890
  %v2039 = vunpack.c.h.b16 %v890
  %v2040 = vunpack.c.l.b16 %v891
  %v2041 = vunpack.c.h.b16 %v891
  %v2042 = vunpack.c.l.b16 %v892
  %v2043 = vunpack.c.h.b16 %v892
  %v2044 = vunpack.c.l.b16 %v893
  %v2045 = vunpack.c.h.b16 %v893
  %v2046 = vunpack.c.l.b16 %v894
  %v2047 = vunpack.c.h.b16 %v894
  %v2048 = vunpack.c.l.b16 %v895
  %v2049 = vunpack.c.h.b16 %v895
  %v2050 = vunpack.c.l.b16 %v896
  %v2051 = vunpack.c.h.b16 %v896
  %v2052 = vunpack.c.l.b16 %v897
  %v2053 = vunpack.c.h.b16 %v897
  %v2054 = vunpack.c.l.b16 %v898
  %v2055 = vunpack.c.h.b16 %v898
  %v2056 = vunpack.c.l.b16 %v899
  %v2057 = vunpack.c.h.b16 %v899
  %v2058 = vunpack.c.l.b16 %v900
  %v2059 = vunpack.c.h.b16 %v900
  %v2060 = vunpack.c.l.b16 %v901
  %v2061 = vunpack.c.h.b16 %v901
  %v2062 = vunpack.c.l.b16 %v902
  %v2063 = vunpack.c.h.b16 %v902
  %v2064 = vunpack.c.l.b16 %v903
  %v2065 = vunpack.c.h.b16 %v903
  %v2066 = vunpack.c.l.b16 %v904
  %v2067 = vunpack.c.h.b16 %v904
  %v2068 = vunpack.c.l.b16 %v905
  %v2069 = vunpack.c.h.b16 %v905
  %v2070 = vunpack.c.l.b16 %v906
  %v2071 = vunpack.c.h.b16 %v906
  %v2072 = vunpack.c.l.b16 %v907
  %v2073 = vunpack.c.h.b16 %v907
  %v2074 = vunpack.c.l.b16 %v908
  %v2075 = vunpack.c.h.b16 %v908
  %v2076 = vunpack.c.l.b16 %v909
  %v2077 = vunpack.c.h.b16 %v909
  %v2078 = vunpack.c.l.b16 %v910
  %v2079 = vunpack.c.h.b16 %v910
  %v2080 = vunpack.c.l.b16 %v911
  %v2081 = vunpack.c.h.b16 %v911
  %v2082 = vunpack.c.l.b16 %v912
  %v2083 = vunpack.c.h.b16 %v912
  %v2084 = vunpack.c.l.b16 %v913
  %v2085 = vunpack.c.h.b16 %v913
  %v2086 = vunpack.c.l.b16 %v914
  %v2087 = vunpack.c.h.b16 %v914
  %v2088 = vunpack.c.l.b16 %v915
  %v2089 = vunpack.c.h.b16 %v915
  %v2090 = vunpack.c.l.b16 %v916
  %v2091 = vunpack.c.h.b16 %v916
  %v2092 = vunpack.c.l.b16 %v917
  %v2093 = vunpack.c.h.b16 %v917
  %v2094 = vunpack.c.l.b16 %v918
  %v2095 = vunpack.c.h.b16 %v918
  %v2096 = vunpack.c.l.b16 %v919
  %v2097 = vunpack.c.h.b16 %v919
  %v2098 = vunpack.c.l.b16 %v920
  %v2099 = vunpack.c.h.b16 %v920
  %v2100 = vunpack.c.l.b16 %v921
  %v2101 = vunpack.c.h.b16 %v921
  %v2102 = vunpack.c.l.b16 %v922
  %v2103 = vunpack.c.h.b16 %v922
  %v2104 = vunpack.c.l.b16 %v923
  %v2105 = vunpack.c.h.b16 %v923
  %v2106 = vunpack.c.l.b16 %v924
  %v2107 = vunpack.c.h.b16 %v924
  %v2108 = vunpack.c.l.b16 %v925
  %v2109 = vunpack.c.h.b16 %v925
  %v2110 = vunpack.c.l.b16 %v926
  %v2111 = vunpack.c.h.b16 %v926
  %v2112 = vunpack.c.l.b16 %v927
  %v2113 = vunpack.c.h.b16 %v927
  %v2114 = vunpack.c.l.b16 %v928
  %v2115 = vunpack.c.h.b16 %v928
  %v2116 = vunpack.c.l.b16 %v929
  %v2117 = vunpack.c.h.b16 %v929
  %v2118 = vunpack.c.l.b16 %v930
  %v2119 = vunpack.c.h.b16 %v930
  %v2120 = vunpack.c.l.b16 %v931
  %v2121 = vunpack.c.h.b16 %v931
  %v2122 = vunpack.c.l.b16 %v932
  %v2123 = vunpack.c.h.b16 %v932
  %v2124 = vunpack.c.l.b16 %v933
  %v2125 = vunpack.c.h.b16 %v933
  %v2126 = vunpack.c.l.b16 %v934
  %v2127 = vunpack.c.h.b16 %v934
  %v2128 = vunpack.c.l.b16 %v935
  %v2129 = vunpack.c.h.b16 %v935
  %v2130 = vunpack.c.l.b16 %v936
  %v2131 = vunpack.c.h.b16 %v936
  %v2132 = vunpack.c.l.b16 %v937
  %v2133 = vunpack.c.h.b16 %v937
  %v2134 = vunpack.c.l.b16 %v938
  %v2135 = vunpack.c.h.b16 %v938
  %v2136 = vunpack.c.l.b16 %v939
  %v2137 = vunpack.c.h.b16 %v939
  %v2138 = vunpack.c.l.b16 %v940
  %v2139 = vunpack.c.h.b16 %v940
  %v2140 = vunpack.c.l.b16 %v941
  %v2141 = vunpack.c.h.b16 %v941
  %v2142 = vunpack.c.l.b16 %v942
  %v2143 = vunpack.c.h.b16 %v942
  %v2144 = vunpack.c.l.b16 %v943
  %v2145 = vunpack.c.h.b16 %v943
  %v2146 = vunpack.c.l.b16 %v944
  %v2147 = vunpack.c.h.b16 %v944
  %v2148 = vunpack.c.l.b16 %v945
  %v2149 = vunpack.c.h.b16 %v945
  %v2150 = vunpack.c.l.b16 %v946
  %v2151 = vunpack.c.h.b16 %v946
  %v2152 = vunpack.c.l.b16 %v947
  %v2153 = vunpack.c.h.b16 %v947
  %v2154 = vunpack.c.l.b16 %v948
  %v2155 = vunpack.c.h.b16 %v948
  %v2156 = vunpack.c.l.b16 %v949
  %v2157 = vunpack.c.h.b16 %v949
  %v2158 = vunpack.c.l.b16 %v950
  %v2159 = vunpack.c.h.b16 %v950
  %v2160 = vunpack.c.l.b16 %v951
  %v2161 = vunpack.c.h.b16 %v951
  %v2162 = vunpack.c.l.b16 %v952
  %v2163 = vunpack.c.h.b16 %v952
  %v2164 = vunpack.c.l.b16 %v953
  %v2165 = vunpack.c.h.b16 %v953
  %v2166 = vunpack.c.l.b16 %v954
  %v2167 = vunpack.c.h.b16 %v954
  %v2168 = vunpack.c.l.b16 %v955
  %v2169 = vunpack.c.h.b16 %v955
  %v2170 = vunpack.c.l.b16 %v956
  %v2171 = vunpack.c.h.b16 %v956
  %v2172 = vunpack.c.l.b16 %v957
  %v2173 = vunpack.c.h.b16 %v957
  %v2174 = vunpack.c.l.b16 %v958
  %v2175 = vunpack.c.h.b16 %v958
  %v2176 = vunpack.c.l.b16 %v959
  %v2177 = vunpack.c.h.b16 %v959
  %v2178 = vunpack.c.l.b16 %v960
  %v2179 = vunpack.c.h.b16 %v960
  %v2180 = vunpack.c.l.b16 %v961
  %v2181 = vunpack.c.h.b16 %v961
  %v2182 = vunpack.c.l.b16 %v962
  %v2183 = vunpack.c.h.b16 %v962
  %v2184 = vunpack.c.l.b16 %v963
  %v2185 = vunpack.c.h.b16 %v963
  %v2186 = vunpack.c.l.b16 %v964
  %v2187 = vunpack.c.h.b16 %v964
  %v2188 = vunpack.c.l.b16 %v965
  %v2189 = vunpack.c.h.b16 %v965
  %v2190 = vunpack.c.l.b16 %v966
  %v2191 = vunpack.c.h.b16 %v966
  %v2192 = vunpack.c.l.b16 %v967
  %v2193 = vunpack.c.h.b16 %v967
  %v2194 = vunpack.c.l.b16 %v968
  %v2195 = vunpack.c.h.b16 %v968
  %v2196 = vunpack.c.l.b16 %v969
  %v2197 = vunpack.c.h.b16 %v969
  %v2198 = vunpack.c.l.b16 %v970
  %v2199 = vunpack.c.h.b16 %v970
  %v2200 = vunpack.c.l.b16 %v971
  %v2201 = vunpack.c.h.b16 %v971
  %v2202 = vunpack.c.l.b16 %v972
  %v2203 = vunpack.c.h.b16 %v972
  %v2204 = vunpack.c.l.b16 %v973
  %v2205 = vunpack.c.h.b16 %v973
  %v2206 = vunpack.c.l.b16 %v974
  %v2207 = vunpack.c.h.b16 %v974
  %v2208 = vunpack.c.l.b16 %v975
  %v2209 = vunpack.c.h.b16 %v975
  %v2210 = vunpack.c.l.b16 %v976
  %v2211 = vunpack.c.h.b16 %v976
  %v2212 = vunpack.c.l.b16 %v977
  %v2213 = vunpack.c.h.b16 %v977
  %v2214 = vunpack.c.l.b16 %v978
  %v2215 = vunpack.c.h.b16 %v978
  %v2216 = vunpack.c.l.b16 %v979
  %v2217 = vunpack.c.h.b16 %v979
  %v2218 = vunpack.c.l.b16 %v980
  %v2219 = vunpack.c.h.b16 %v980
  %v2220 = vunpack.c.l.b16 %v981
  %v2221 = vunpack.c.h.b16 %v981
  %v2222 = vunpack.c.l.b16 %v982
  %v2223 = vunpack.c.h.b16 %v982
  %v2224 = vunpack.c.l.b16 %v983
  %v2225 = vunpack.c.h.b16 %v983
  %v2226 = vunpack.c.l.b16 %v984
  %v2227 = vunpack.c.h.b16 %v984
  %v2228 = vunpack.c.l.b16 %v985
  %v2229 = vunpack.c.h.b16 %v985
  %v2230 = vunpack.c.l.b16 %v986
  %v2231 = vunpack.c.h.b16 %v986
  %v2232 = vunpack.c.l.b16 %v987
  %v2233 = vunpack.c.h.b16 %v987
  %v2234 = vunpack.c.l.b16 %v988
  %v2235 = vunpack.c.h.b16 %v988
  %v2236 = vunpack.c.l.b16 %v989
  %v2237 = vunpack.c.h.b16 %v989
  %v2238 = vunpack.c.l.b16 %v990
  %v2239 = vunpack.c.h.b16 %v990
  %v2240 = vunpack.c.l.b16 %v991
  %v2241 = vunpack.c.h.b16 %v991
  %v2242 = vunpack.c.l.b16 %v992
  %v2243 = vunpack.c.h.b16 %v992
  %v2244 = vunpack.c.l.b16 %v993
  %v2245 = vunpack.c.h.b16 %v993
  %v2246 = vunpack.c.l.b16 %v994
  %v2247 = vunpack.c.h.b16 %v994
  %v2248 = vunpack.c.l.b16 %v995
  %v2249 = vunpack.c.h.b16 %v995
  %v2250 = vunpack.c.l.b16 %v996
  %v2251 = vunpack.c.h.b16 %v996
  %v2252 = vunpack.c.l.b16 %v997
  %v2253 = vunpack.c.h.b16 %v997
  %v2254 = vunpack.c.l.b16 %v998
  %v2255 = vunpack.c.h.b16 %v998
  %v2256 = vunpack.c.l.b16 %v999
  %v2257 = vunpack.c.h.b16 %v999
  %v2258 = vunpack.c.l.b16 %v1000
  %v2259 = vunpack.c.h.b16 %v1000
  %v2260 = vunpack.c.l.b16 %v1001
  %v2261 = vunpack.c.h.b16 %v1001
  %v2262 = vunpack.c.l.b16 %v1002
  %v2263 = vunpack.c.h.b16 %v1002
  %v2264 = vunpack.c.l.b16 %v1003
  %v2265 = vunpack.c.h.b16 %v1003
  %v2266 = vunpack.c.l.b16 %v1004
  %v2267 = vunpack.c.h.b16 %v1004
  %v2268 = vunpack.c.l.b16 %v1005
  %v2269 = vunpack.c.h.b16 %v1005
  %v2270 = vunpack.c.l.b16 %v1006
  %v2271 = vunpack.c.h.b16 %v1006
  %v2272 = vunpack.c.l.b16 %v1007
  %v2273 = vunpack.c.h.b16 %v1007
  %v2274 = vunpack.c.l.b16 %v1008
  %v2275 = vunpack.c.h.b16 %v1008
  %v2276 = vunpack.c.l.b16 %v1009
  %v2277 = vunpack.c.h.b16 %v1009
  %v2278 = vunpack.c.l.b16 %v1010
  %v2279 = vunpack.c.h.b16 %v1010
  %v2280 = vunpack.c.l.b16 %v1011
  %v2281 = vunpack.c.h.b16 %v1011
  %v2282 = vunpack.c.l.b16 %v1012
  %v2283 = vunpack.c.h.b16 %v1012
  %v2284 = vunpack.c.l.b16 %v1013
  %v2285 = vunpack.c.h.b16 %v1013
  %v2286 = vunpack.c.l.b16 %v1014
  %v2287 = vunpack.c.h.b16 %v1014
  %v2288 = vunpack.c.l.b16 %v1015
  %v2289 = vunpack.c.h.b16 %v1015
  %v2290 = vunpack.c.l.b16 %v1016
  %v2291 = vunpack.c.h.b16 %v1016
  %v2292 = vunpack.c.l.b16 %v1017
  %v2293 = vunpack.c.h.b16 %v1017
  %v2294 = vunpack.c.l.b16 %v1018
  %v2295 = vunpack.c.h.b16 %v1018
  %v2296 = vunpack.c.l.b16 %v1019
  %v2297 = vunpack.c.h.b16 %v1019
  %v2298 = vunpack.c.l.b16 %v1020
  %v2299 = vunpack.c.h.b16 %v1020
  %v2300 = vunpack.c.l.b16 %v1021
  %v2301 = vunpack.c.h.b16 %v1021
  %v2302 = vunpack.c.l.b16 %v1022
  %v2303 = vunpack.c.h.b16 %v1022
  %v2304 = vunpack.c.l.b16 %v1023
  %v2305 = vunpack.c.h.b16 %v1023
  %v2306 = vunpack.c.l.b16 %v1024
  %v2307 = vunpack.c.h.b16 %v1024
  %v2308 = vunpack.c.l.b16 %v1025
  %v2309 = vunpack.c.h.b16 %v1025
  %v2310 = vunpack.c.l.b16 %v1026
  %v2311 = vunpack.c.h.b16 %v1026
  %v2312 = vunpack.c.l.b16 %v1027
  %v2313 = vunpack.c.h.b16 %v1027
  %v2314 = vunpack.c.l.b16 %v1028
  %v2315 = vunpack.c.h.b16 %v1028
  %v2316 = vunpack.c.l.b16 %v1029
  %v2317 = vunpack.c.h.b16 %v1029
  %v2318 = vunpack.c.l.b16 %v1030
  %v2319 = vunpack.c.h.b16 %v1030
  %v2320 = vunpack.c.l.b16 %v1031
  %v2321 = vunpack.c.h.b16 %v1031
  %v2322 = vunpack.c.l.b16 %v1032
  %v2323 = vunpack.c.h.b16 %v1032
  %v2324 = vunpack.c.l.b16 %v1033
  %v2325 = vunpack.c.h.b16 %v1033
  %v2326 = vunpack.c.l.b16 %v1034
  %v2327 = vunpack.c.h.b16 %v1034
  %v2328 = vunpack.c.l.b16 %v1035
  %v2329 = vunpack.c.h.b16 %v1035
  %v2330 = vunpack.c.l.b16 %v1036
  %v2331 = vunpack.c.h.b16 %v1036
  %v2332 = vunpack.c.l.b16 %v1037
  %v2333 = vunpack.c.h.b16 %v1037
  %v2334 = vunpack.c.l.b16 %v1038
  %v2335 = vunpack.c.h.b16 %v1038
  %v2336 = vunpack.c.l.b16 %v1039
  %v2337 = vunpack.c.h.b16 %v1039
  %v2338 = vunpack.c.l.b16 %v1040
  %v2339 = vunpack.c.h.b16 %v1040
  %v2340 = vunpack.c.l.b16 %v1041
  %v2341 = vunpack.c.h.b16 %v1041
  %v2342 = vunpack.c.l.b16 %v1042
  %v2343 = vunpack.c.h.b16 %v1042
  %v2344 = vunpack.c.l.b16 %v1043
  %v2345 = vunpack.c.h.b16 %v1043
  %v2346 = vunpack.c.l.b16 %v1044
  %v2347 = vunpack.c.h.b16 %v1044
  %v2348 = vunpack.c.l.b16 %v1045
  %v2349 = vunpack.c.h.b16 %v1045
  %v2350 = vunpack.c.l.b16 %v1046
  %v2351 = vunpack.c.h.b16 %v1046
  %v2352 = vunpack.c.l.b16 %v1047
  %v2353 = vunpack.c.h.b16 %v1047
  %v2354 = vunpack.c.l.b16 %v1048
  %v2355 = vunpack.c.h.b16 %v1048
  %v2356 = vunpack.c.l.b16 %v1049
  %v2357 = vunpack.c.h.b16 %v1049
  %v2358 = vunpack.c.l.b16 %v1050
  %v2359 = vunpack.c.h.b16 %v1050
  %v2360 = vunpack.c.l.b16 %v1051
  %v2361 = vunpack.c.h.b16 %v1051
  %v2362 = vunpack.c.l.b16 %v1052
  %v2363 = vunpack.c.h.b16 %v1052
  %v2364 = vunpack.c.l.b16 %v1053
  %v2365 = vunpack.c.h.b16 %v1053
  %v2366 = vunpack.c.l.b16 %v1054
  %v2367 = vunpack.c.h.b16 %v1054
  %v2368 = vunpack.c.l.b16 %v1055
  %v2369 = vunpack.c.h.b16 %v1055
  %v2370 = vunpack.c.l.b16 %v1056
  %v2371 = vunpack.c.h.b16 %v1056
  %v2372 = vunpack.c.l.b16 %v1057
  %v2373 = vunpack.c.h.b16 %v1057
  %v2374 = vunpack.c.l.b16 %v1058
  %v2375 = vunpack.c.h.b16 %v1058
  %v2376 = vunpack.c.l.b16 %v1059
  %v2377 = vunpack.c.h.b16 %v1059
  %v2378 = vunpack.c.l.b16 %v1060
  %v2379 = vunpack.c.h.b16 %v1060
  %v2380 = vunpack.c.l.b16 %v1061
  %v2381 = vunpack.c.h.b16 %v1061
  %v2382 = vunpack.c.l.b16 %v1062
  %v2383 = vunpack.c.h.b16 %v1062
  %v2384 = vunpack.c.l.b16 %v1063
  %v2385 = vunpack.c.h.b16 %v1063
  %v2386 = vunpack.c.l.b16 %v1064
  %v2387 = vunpack.c.h.b16 %v1064
  %v2388 = vunpack.c.l.b16 %v1065
  %v2389 = vunpack.c.h.b16 %v1065
  %v2390 = vunpack.c.l.b16 %v1066
  %v2391 = vunpack.c.h.b16 %v1066
  %v2392 = vunpack.c.l.b16 %v1067
  %v2393 = vunpack.c.h.b16 %v1067
  %v2394 = vunpack.c.l.b16 %v1068
  %v2395 = vunpack.c.h.b16 %v1068
  %v2396 = vunpack.c.l.b16 %v1069
  %v2397 = vunpack.c.h.b16 %v1069
  %v2398 = vunpack.c.l.b16 %v1070
  %v2399 = vunpack.c.h.b16 %v1070
  %v2400 = vunpack.c.l.b16 %v1071
  %v2401 = vunpack.c.h.b16 %v1071
  %v2402 = vunpack.c.l.b16 %v1072
  %v2403 = vunpack.c.h.b16 %v1072
  %v2404 = vunpack.c.l.b16 %v1073
  %v2405 = vunpack.c.h.b16 %v1073
  %v2406 = vunpack.c.l.b16 %v1074
  %v2407 = vunpack.c.h.b16 %v1074
  %v2408 = vunpack.c.l.b16 %v1075
  %v2409 = vunpack.c.h.b16 %v1075
  %v2410 = vunpack.c.l.b16 %v1076
  %v2411 = vunpack.c.h.b16 %v1076
  %v2412 = vunpack.c.l.b16 %v1077
  %v2413 = vunpack.c.h.b16 %v1077
  %v2414 = vunpack.c.l.b16 %v1078
  %v2415 = vunpack.c.h.b16 %v1078
  %v2416 = vunpack.c.l.b16 %v1079
  %v2417 = vunpack.c.h.b16 %v1079
  %v2418 = vunpack.c.l.b16 %v1080
  %v2419 = vunpack.c.h.b16 %v1080
  %v2420 = vunpack.c.l.b16 %v1081
  %v2421 = vunpack.c.h.b16 %v1081
  %v2422 = vunpack.c.l.b16 %v1082
  %v2423 = vunpack.c.h.b16 %v1082
  %v2424 = vunpack.c.l.b16 %v1083
  %v2425 = vunpack.c.h.b16 %v1083
  %v2426 = vunpack.c.l.b16 %v1084
  %v2427 = vunpack.c.h.b16 %v1084
  %v2428 = vunpack.c.l.b16 %v1085
  %v2429 = vunpack.c.h.b16 %v1085
  %v2430 = vunpack.c.l.b16 %v1086
  %v2431 = vunpack.c.h.b16 %v1086
  %v2432 = vunpack.c.l.b16 %v1087
  %v2433 = vunpack.c.h.b16 %v1087
  %v2434 = vunpack.c.l.b16 %v1088
  %v2435 = vunpack.c.h.b16 %v1088
  %v2436 = vunpack.c.l.b16 %v1089
  %v2437 = vunpack.c.h.b16 %v1089
  %v2438 = vunpack.c.l.b16 %v1090
  %v2439 = vunpack.c.h.b16 %v1090
  %v2440 = vunpack.c.l.b16 %v1091
  %v2441 = vunpack.c.h.b16 %v1091
  %v2442 = vunpack.c.l.b16 %v1092
  %v2443 = vunpack.c.h.b16 %v1092
  %v2444 = vunpack.c.l.b16 %v1093
  %v2445 = vunpack.c.h.b16 %v1093
  %v2446 = vunpack.c.l.b16 %v1094
  %v2447 = vunpack.c.h.b16 %v1094
  %v2448 = vunpack.c.l.b16 %v1095
  %v2449 = vunpack.c.h.b16 %v1095
  %v2450 = vunpack.c.l.b16 %v1096
  %v2451 = vunpack.c.h.b16 %v1096
  %v2452 = vunpack.c.l.b16 %v1097
  %v2453 = vunpack.c.h.b16 %v1097
  %v2454 = vunpack.c.l.b16 %v1098
  %v2455 = vunpack.c.h.b16 %v1098
  %v2456 = vunpack.c.l.b16 %v1099
  %v2457 = vunpack.c.h.b16 %v1099
  %v2458 = vunpack.c.l.b16 %v1100
  %v2459 = vunpack.c.h.b16 %v1100
  %v2460 = vunpack.c.l.b16 %v1101
  %v2461 = vunpack.c.h.b16 %v1101
  %v2462 = vunpack.c.l.b16 %v1102
  %v2463 = vunpack.c.h.b16 %v1102
  %v2464 = vunpack.c.l.b16 %v1103
  %v2465 = vunpack.c.h.b16 %v1103
  %v2466 = vunpack.c.l.b16 %v1104
  %v2467 = vunpack.c.h.b16 %v1104
  %v2468 = vunpack.c.l.b16 %v1105
  %v2469 = vunpack.c.h.b16 %v1105
  %v2470 = vunpack.c.l.b16 %v1106
  %v2471 = vunpack.c.h.b16 %v1106
  %v2472 = vunpack.c.l.b16 %v1107
  %v2473 = vunpack.c.h.b16 %v1107
  %v2474 = vunpack.c.l.b16 %v1108
  %v2475 = vunpack.c.h.b16 %v1108
  %v2476 = vunpack.c.l.b16 %v1109
  %v2477 = vunpack.c.h.b16 %v1109
  %v2478 = vunpack.c.l.b16 %v1110
  %v2479 = vunpack.c.h.b16 %v1110
  %v2480 = vunpack.c.l.b16 %v1111
  %v2481 = vunpack.c.h.b16 %v1111
  %v2482 = vunpack.c.l.b16 %v1112
  %v2483 = vunpack.c.h.b16 %v1112
  %v2484 = vunpack.c.l.b16 %v1113
  %v2485 = vunpack.c.h.b16 %v1113
  %v2486 = vunpack.c.l.b16 %v1114
  %v2487 = vunpack.c.h.b16 %v1114
  %v2488 = vunpack.c.l.b16 %v1115
  %v2489 = vunpack.c.h.b16 %v1115
  %v2490 = vunpack.c.l.b16 %v1116
  %v2491 = vunpack.c.h.b16 %v1116
  %v2492 = vunpack.c.l.b16 %v1117
  %v2493 = vunpack.c.h.b16 %v1117
  %v2494 = vunpack.c.l.b16 %v1118
  %v2495 = vunpack.c.h.b16 %v1118
  %v2496 = vunpack.c.l.b16 %v1119
  %v2497 = vunpack.c.h.b16 %v1119
  %v2498 = vunpack.c.l.b16 %v1120
  %v2499 = vunpack.c.h.b16 %v1120
  %v2500 = vunpack.c.l.b16 %v1121
  %v2501 = vunpack.c.h.b16 %v1121
  %v2502 = vunpack.c.l.b16 %v1122
  %v2503 = vunpack.c.h.b16 %v1122
  %v2504 = vunpack.c.l.b16 %v1123
  %v2505 = vunpack.c.h.b16 %v1123
  %v2506 = vunpack.c.l.b16 %v1124
  %v2507 = vunpack.c.h.b16 %v1124
  %v2508 = vunpack.c.l.b16 %v1125
  %v2509 = vunpack.c.h.b16 %v1125
  %v2510 = vunpack.c.l.b16 %v1126
  %v2511 = vunpack.c.h.b16 %v1126
  %v2512 = vunpack.c.l.b16 %v1127
  %v2513 = vunpack.c.h.b16 %v1127
  %v2514 = vunpack.c.l.b16 %v1128
  %v2515 = vunpack.c.h.b16 %v1128
  %v2516 = vunpack.c.l.b16 %v1129
  %v2517 = vunpack.c.h.b16 %v1129
  %v2518 = vunpack.c.l.b16 %v1130
  %v2519 = vunpack.c.h.b16 %v1130
  %v2520 = vunpack.c.l.b16 %v1131
  %v2521 = vunpack.c.h.b16 %v1131
  %v2522 = vunpack.c.l.b16 %v1132
  %v2523 = vunpack.c.h.b16 %v1132
  %v2524 = vunpack.c.l.b16 %v1133
  %v2525 = vunpack.c.h.b16 %v1133
  %v2526 = vunpack.c.l.b16 %v1134
  %v2527 = vunpack.c.h.b16 %v1134
  %v2528 = vunpack.c.l.b16 %v1135
  %v2529 = vunpack.c.h.b16 %v1135
  %v2530 = vunpack.c.l.b16 %v1136
  %v2531 = vunpack.c.h.b16 %v1136
  %v2532 = vunpack.c.l.b16 %v1137
  %v2533 = vunpack.c.h.b16 %v1137
  %v2534 = vunpack.c.l.b16 %v1138
  %v2535 = vunpack.c.h.b16 %v1138
  %v2536 = vunpack.c.l.b16 %v1139
  %v2537 = vunpack.c.h.b16 %v1139
  %v2538 = vunpack.c.l.b16 %v1140
  %v2539 = vunpack.c.h.b16 %v1140
  %v2540 = vunpack.c.l.b16 %v1141
  %v2541 = vunpack.c.h.b16 %v1141
  %v2542 = vunpack.c.l.b16 %v1142
  %v2543 = vunpack.c.h.b16 %v1142
  %v2544 = vunpack.c.l.b16 %v1143
  %v2545 = vunpack.c.h.b16 %v1143
  %v2546 = vunpack.c.l.b16 %v1144
  %v2547 = vunpack.c.h.b16 %v1144
  %v2548 = vunpack.c.l.b16 %v1145
  %v2549 = vunpack.c.h.b16 %v1145
  %v2550 = vunpack.c.l.b16 %v1146
  %v2551 = vunpack.c.h.b16 %v1146
  %v2552 = vunpack.c.l.b16 %v1147
  %v2553 = vunpack.c.h.b16 %v1147
  %v2554 = vunpack.c.l.b16 %v1148
  %v2555 = vunpack.c.h.b16 %v1148
  %v2556 = vunpack.c.l.b16 %v1149
  %v2557 = vunpack.c.h.b16 %v1149
  %v2558 = vunpack.c.l.b16 %v1150
  %v2559 = vunpack.c.h.b16 %v1150
  %v2560 = vunpack.c.l.b16 %v1151
  %v2561 = vunpack.c.h.b16 %v1151
  %v2562 = vunpack.c.l.b16 %v1152
  %v2563 = vunpack.c.h.b16 %v1152
  %v2564 = vunpack.c.l.b16 %v1153
  %v2565 = vunpack.c.h.b16 %v1153
  %v2566 = vunpack.c.l.b16 %v1154
  %v2567 = vunpack.c.h.b16 %v1154
  %v2568 = vunpack.c.l.b16 %v1155
  %v2569 = vunpack.c.h.b16 %v1155
  %v2570 = vunpack.c.l.b16 %v1156
  %v2571 = vunpack.c.h.b16 %v1156
  %v2572 = vunpack.c.l.b16 %v1157
  %v2573 = vunpack.c.h.b16 %v1157
  %v2574 = vunpack.c.l.b16 %v1158
  %v2575 = vunpack.c.h.b16 %v1158
  %v2576 = vunpack.c.l.b16 %v1159
  %v2577 = vunpack.c.h.b16 %v1159
  %v2578 = vunpack.c.l.b16 %v1160
  %v2579 = vunpack.c.h.b16 %v1160
  %v2580 = vunpack.c.l.b16 %v1161
  %v2581 = vunpack.c.h.b16 %v1161
  %v2582 = vunpack.c.l.b16 %v1162
  %v2583 = vunpack.c.h.b16 %v1162
  %v2584 = vunpack.c.l.b16 %v1163
  %v2585 = vunpack.c.h.b16 %v1163
  %v2586 = vunpack.c.l.b16 %v1164
  %v2587 = vunpack.c.h.b16 %v1164
  %v2588 = vunpack.c.l.b16 %v1165
  %v2589 = vunpack.c.h.b16 %v1165
  %v2590 = vunpack.c.l.b16 %v1166
  %v2591 = vunpack.c.h.b16 %v1166
  %v2592 = vunpack.c.l.b16 %v1167
  %v2593 = vunpack.c.h.b16 %v1167
  %v2594 = vunpack.c.l.b16 %v1168
  %v2595 = vunpack.c.h.b16 %v1168
  %v2596 = vunpack.c.l.b16 %v1169
  %v2597 = vunpack.c.h.b16 %v1169
  %v2598 = vunpack.c.l.b16 %v1170
  %v2599 = vunpack.c.h.b16 %v1170
  %v2600 = vunpack.c.l.b16 %v1171
  %v2601 = vunpack.c.h.b16 %v1171
  %v2602 = vunpack.c.l.b16 %v1172
  %v2603 = vunpack.c.h.b16 %v1172
  %v2604 = vunpack.c.l.b16 %v1173
  %v2605 = vunpack.c.h.b16 %v1173
  %v2606 = vunpack.c.l.b16 %v1174
  %v2607 = vunpack.c.h.b16 %v1174
  %v2608 = vunpack.c.l.b16 %v1175
  %v2609 = vunpack.c.h.b16 %v1175
  %v2610 = vunpack.c.l.b16 %v1176
  %v2611 = vunpack.c.h.b16 %v1176
  %v2612 = vunpack.c.l.b16 %v1177
  %v2613 = vunpack.c.h.b16 %v1177
  %v2614 = vunpack.c.l.b16 %v1178
  %v2615 = vunpack.c.h.b16 %v1178
  %v2616 = vunpack.c.l.b16 %v1179
  %v2617 = vunpack.c.h.b16 %v1179
  %v2618 = vunpack.c.l.b16 %v1180
  %v2619 = vunpack.c.h.b16 %v1180
  %v2620 = vunpack.c.l.b16 %v1181
  %v2621 = vunpack.c.h.b16 %v1181
  %v2622 = vunpack.c.l.b16 %v1182
  %v2623 = vunpack.c.h.b16 %v1182
  %v2624 = vunpack.c.l.b16 %v1183
  %v2625 = vunpack.c.h.b16 %v1183
  %v2626 = vunpack.c.l.b16 %v1184
  %v2627 = vunpack.c.h.b16 %v1184
  %v2628 = vunpack.c.l.b16 %v1185
  %v2629 = vunpack.c.h.b16 %v1185
  %v2630 = vunpack.c.l.b16 %v1186
  %v2631 = vunpack.c.h.b16 %v1186
  %v2632 = vunpack.c.l.b16 %v1187
  %v2633 = vunpack.c.h.b16 %v1187
  %v2634 = vunpack.c.l.b16 %v1188
  %v2635 = vunpack.c.h.b16 %v1188
  %v2636 = vunpack.c.l.b16 %v1189
  %v2637 = vunpack.c.h.b16 %v1189
  %v2638 = vunpack.c.l.b16 %v1190
  %v2639 = vunpack.c.h.b16 %v1190
  %v2640 = vunpack.c.l.b16 %v1191
  %v2641 = vunpack.c.h.b16 %v1191
  %v2642 = vunpack.c.l.b16 %v1192
  %v2643 = vunpack.c.h.b16 %v1192
  %v2644 = vunpack.c.l.b16 %v1193
  %v2645 = vunpack.c.h.b16 %v1193
  %v2646 = vunpack.c.l.b16 %v1194
  %v2647 = vunpack.c.h.b16 %v1194
  %v2648 = vunpack.c.l.b16 %v1195
  %v2649 = vunpack.c.h.b16 %v1195
  %v2650 = vunpack.c.l.b16 %v1196
  %v2651 = vunpack.c.h.b16 %v1196
  %v2652 = vunpack.c.l.b16 %v1197
  %v2653 = vunpack.c.h.b16 %v1197
  %v2654 = vunpack.c.l.b16 %v1198
  %v2655 = vunpack.c.h.b16 %v1198
  %v2656 = vunpack.c.l.b16 %v1199
  %v2657 = vunpack.c.h.b16 %v1199
  %v2658 = vunpack.c.l.b16 %v1200
  %v2659 = vunpack.c.h.b16 %v1200
  %v2660 = vunpack.c.l.b16 %v1201
  %v2661 = vunpack.c.h.b16 %v1201
  %v2662 = vunpack.c.l.b16 %v1202
  %v2663 = vunpack.c.h.b16 %v1202
  %v2664 = vunpack.c.l.b16 %v1203
  %v2665 = vunpack.c.h.b16 %v1203
  %v2666 = vunpack.c.l.b16 %v1204
  %v2667 = vunpack.c.h.b16 %v1204
  %v2668 = vunpack.c.l.b16 %v1205
  %v2669 = vunpack.c.h.b16 %v1205
  %v2670 = vunpack.c.l.b16 %v1206
  %v2671 = vunpack.c.h.b16 %v1206
  %v2672 = vunpack.c.l.b16 %v1207
  %v2673 = vunpack.c.h.b16 %v1207
  %v2674 = vunpack.c.l.b16 %v1208
  %v2675 = vunpack.c.h.b16 %v1208
  %v2676 = vunpack.c.l.b16 %v1209
  %v2677 = vunpack.c.h.b16 %v1209
  %v2678 = vunpack.c.l.b16 %v1210
  %v2679 = vunpack.c.h.b16 %v1210
  %v2680 = vunpack.c.l.b16 %v1211
  %v2681 = vunpack.c.h.b16 %v1211
  %v2682 = vunpack.c.l.b16 %v1212
  %v2683 = vunpack.c.h.b16 %v1212
  %v2684 = vunpack.c.l.b16 %v1213
  %v2685 = vunpack.c.h.b16 %v1213
  %v2686 = vunpack.c.l.b16 %v1214
  %v2687 = vunpack.c.h.b16 %v1214
  %v2688 = vunpack.c.l.b16 %v1215
  %v2689 = vunpack.c.h.b16 %v1215
  %v2690 = vunpack.c.l.b16 %v1216
  %v2691 = vunpack.c.h.b16 %v1216
  %v2692 = vunpack.c.l.b16 %v1217
  %v2693 = vunpack.c.h.b16 %v1217
  %v2694 = vunpack.c.l.b16 %v1218
  %v2695 = vunpack.c.h.b16 %v1218
  %v2696 = vunpack.c.l.b16 %v1219
  %v2697 = vunpack.c.h.b16 %v1219
  %v2698 = vunpack.c.l.b16 %v1220
  %v2699 = vunpack.c.h.b16 %v1220
  %v2700 = vunpack.c.l.b16 %v1221
  %v2701 = vunpack.c.h.b16 %v1221
  %v2702 = vunpack.c.l.b16 %v1222
  %v2703 = vunpack.c.h.b16 %v1222
  %v2704 = vunpack.c.l.b16 %v1223
  %v2705 = vunpack.c.h.b16 %v1223
  %v2706 = vunpack.c.l.b16 %v1224
  %v2707 = vunpack.c.h.b16 %v1224
  %v2708 = vunpack.c.l.b16 %v1225
  %v2709 = vunpack.c.h.b16 %v1225
  %v2710 = vunpack.c.l.b16 %v1226
  %v2711 = vunpack.c.h.b16 %v1226
  %v2712 = vunpack.c.l.b16 %v1227
  %v2713 = vunpack.c.h.b16 %v1227
  %v2714 = vunpack.c.l.b16 %v1228
  %v2715 = vunpack.c.h.b16 %v1228
  %v2716 = vunpack.c.l.b16 %v1229
  %v2717 = vunpack.c.h.b16 %v1229
  %v2718 = vunpack.c.l.b16 %v1230
  %v2719 = vunpack.c.h.b16 %v1230
  %v2720 = vunpack.c.l.b16 %v1231
  %v2721 = vunpack.c.h.b16 %v1231
  %v2722 = vunpack.c.l.b16 %v1232
  %v2723 = vunpack.c.h.b16 %v1232
  %v2724 = vunpack.c.l.b16 %v1233
  %v2725 = vunpack.c.h.b16 %v1233
  %v2726 = vunpack.c.l.b16 %v1234
  %v2727 = vunpack.c.h.b16 %v1234
  %v2728 = vunpack.c.l.b16 %v1235
  %v2729 = vunpack.c.h.b16 %v1235
  %v2730 = vunpack.c.l.b16 %v1236
  %v2731 = vunpack.c.h.b16 %v1236
  %v2732 = vunpack.c.l.b16 %v1237
  %v2733 = vunpack.c.h.b16 %v1237
  %v2734 = vunpack.c.l.b16 %v1238
  %v2735 = vunpack.c.h.b16 %v1238
  %v2736 = vunpack.c.l.b16 %v1239
  %v2737 = vunpack.c.h.b16 %v1239
  %v2738 = vunpack.c.l.b16 %v1240
  %v2739 = vunpack.c.h.b16 %v1240
  %v2740 = vunpack.c.l.b16 %v1241
  %v2741 = vunpack.c.h.b16 %v1241
  %v2742 = vunpack.c.l.b16 %v1242
  %v2743 = vunpack.c.h.b16 %v1242
  %v2744 = vunpack.c.l.b16 %v1243
  %v2745 = vunpack.c.h.b16 %v1243
  %v2746 = vunpack.c.l.b16 %v1244
  %v2747 = vunpack.c.h.b16 %v1244
  %v2748 = vunpack.c.l.b16 %v1245
  %v2749 = vunpack.c.h.b16 %v1245
  %v2750 = vunpack.c.l.b16 %v1246
  %v2751 = vunpack.c.h.b16 %v1246
  %v2752 = vunpack.c.l.b16 %v1247
  %v2753 = vunpack.c.h.b16 %v1247
  %v2754 = vunpack.c.l.b16 %v1248
  %v2755 = vunpack.c.h.b16 %v1248
  %v2756 = vunpack.c.l.b16 %v1249
  %v2757 = vunpack.c.h.b16 %v1249
  %v2758 = vunpack.c.l.b16 %v1250
  %v2759 = vunpack.c.h.b16 %v1250
  %v2760 = vunpack.c.l.b16 %v1251
  %v2761 = vunpack.c.h.b16 %v1251
  %v2762 = vunpack.c.l.b16 %v1252
  %v2763 = vunpack.c.h.b16 %v1252
  %v2764 = vunpack.c.l.b16 %v1253
  %v2765 = vunpack.c.h.b16 %v1253
  %v2766 = vunpack.c.l.b16 %v1254
  %v2767 = vunpack.c.h.b16 %v1254
  %v2768 = vunpack.c.l.b16 %v1255
  %v2769 = vunpack.c.h.b16 %v1255
  %v2770 = vunpack.c.l.b16 %v1256
  %v2771 = vunpack.c.h.b16 %v1256
  %v2772 = vunpack.c.l.b16 %v1257
  %v2773 = vunpack.c.h.b16 %v1257
  %v2774 = vunpack.c.l.b16 %v1258
  %v2775 = vunpack.c.h.b16 %v1258
  %v2776 = vunpack.c.l.b16 %v1259
  %v2777 = vunpack.c.h.b16 %v1259
  %v2778 = vunpack.c.l.b16 %v1260
  %v2779 = vunpack.c.h.b16 %v1260
  %v2780 = vunpack.c.l.b16 %v1261
  %v2781 = vunpack.c.h.b16 %v1261
  %v2782 = vunpack.c.l.b16 %v1262
  %v2783 = vunpack.c.h.b16 %v1262
  %v2784 = vunpack.c.l.b16 %v1263
  %v2785 = vunpack.c.h.b16 %v1263
  %v2786 = vunpack.c.l.b16 %v1264
  %v2787 = vunpack.c.h.b16 %v1264
  %v2788 = vunpack.c.l.b16 %v1265
  %v2789 = vunpack.c.h.b16 %v1265
  %v2790 = vunpack.c.l.b16 %v1266
  %v2791 = vunpack.c.h.b16 %v1266
  %v2792 = vunpack.c.l.b16 %v1267
  %v2793 = vunpack.c.h.b16 %v1267
  %v2794 = vunpack.c.l.b16 %v1268
  %v2795 = vunpack.c.h.b16 %v1268
  %v2796 = vunpack.c.l.b16 %v1269
  %v2797 = vunpack.c.h.b16 %v1269
  %v2798 = vunpack.c.l.b16 %v1270
  %v2799 = vunpack.c.h.b16 %v1270
  %v2800 = vunpack.c.l.b16 %v1271
  %v2801 = vunpack.c.h.b16 %v1271
  %v2802 = vunpack.c.l.b16 %v1272
  %v2803 = vunpack.c.h.b16 %v1272
  %v2804 = vunpack.c.l.b16 %v1273
  %v2805 = vunpack.c.h.b16 %v1273
  %v2806 = vunpack.c.l.b16 %v1274
  %v2807 = vunpack.c.h.b16 %v1274
  %v2808 = vunpack.c.l.b16 %v1275
  %v2809 = vunpack.c.h.b16 %v1275
  %v2810 = vunpack.c.l.b16 %v1276
  %v2811 = vunpack.c.h.b16 %v1276
  %v2812 = vunpack.c.l.b16 %v1277
  %v2813 = vunpack.c.h.b16 %v1277
  %v2814 = vpack.c.b16 %v1792, %v1790
  %v2815 = vpack.c.b16 %v1793, %v1791
  %v2816 = vpack.c.b16 %v1796, %v1794
  %v2817 = vpack.c.b16 %v1797, %v1795
  %v2818 = vpack.c.b16 %v1800, %v1798
  %v2819 = vpack.c.b16 %v1801, %v1799
  %v2820 = vpack.c.b16 %v1804, %v1802
  %v2821 = vpack.c.b16 %v1805, %v1803
  %v2822 = vpack.c.b16 %v1808, %v1806
  %v2823 = vpack.c.b16 %v1809, %v1807
  %v2824 = vpack.c.b16 %v1812, %v1810
  %v2825 = vpack.c.b16 %v1813, %v1811
  %v2826 = vpack.c.b16 %v1816, %v1814
  %v2827 = vpack.c.b16 %v1817, %v1815
  %v2828 = vpack.c.b16 %v1820, %v1818
  %v2829 = vpack.c.b16 %v1821, %v1819
  %v2830 = vpack.c.b16 %v1824, %v1822
  %v2831 = vpack.c.b16 %v1825, %v1823
  %v2832 = vpack.c.b16 %v1828, %v1826
  %v2833 = vpack.c.b16 %v1829, %v1827
  %v2834 = vpack.c.b16 %v1832, %v1830
  %v2835 = vpack.c.b16 %v1833, %v1831
  %v2836 = vpack.c.b16 %v1836, %v1834
  %v2837 = vpack.c.b16 %v1837, %v1835
  %v2838 = vpack.c.b16 %v1840, %v1838
  %v2839 = vpack.c.b16 %v1841, %v1839
  %v2840 = vpack.c.b16 %v1844, %v1842
  %v2841 = vpack.c.b16 %v1845, %v1843
  %v2842 = vpack.c.b16 %v1848, %v1846
  %v2843 = vpack.c.b16 %v1849, %v1847
  %v2844 = vpack.c.b16 %v1852, %v1850
  %v2845 = vpack.c.b16 %v1853, %v1851
  %v2846 = vpack.c.b16 %v1856, %v1854
  %v2847 = vpack.c.b16 %v1857, %v1855
  %v2848 = vpack.c.b16 %v1860, %v1858
  %v2849 = vpack.c.b16 %v1861, %v1859
  %v2850 = vpack.c.b16 %v1864, %v1862
  %v2851 = vpack.c.b16 %v1865, %v1863
  %v2852 = vpack.c.b16 %v1868, %v1866
  %v2853 = vpack.c.b16 %v1869, %v1867
  %v2854 = vpack.c.b16 %v1872, %v1870
  %v2855 = vpack.c.b16 %v1873, %v1871
  %v2856 = vpack.c.b16 %v1876, %v1874
  %v2857 = vpack.c.b16 %v1877, %v1875
  %v2858 = vpack.c.b16 %v1880, %v1878
  %v2859 = vpack.c.b16 %v1881, %v1879
  %v2860 = vpack.c.b16 %v1884, %v1882
  %v2861 = vpack.c.b16 %v1885, %v1883
  %v2862 = vpack.c.b16 %v1888, %v1886
  %v2863 = vpack.c.b16 %v1889, %v1887
  %v2864 = vpack.c.b16 %v1892, %v1890
  %v2865 = vpack.c.b16 %v1893, %v1891
  %v2866 = vpack.c.b16 %v1896, %v1894
  %v2867 = vpack.c.b16 %v1897, %v1895
  %v2868 = vpack.c.b16 %v1900, %v1898
  %v2869 = vpack.c.b16 %v1901, %v1899
  %v2870 = vpack.c.b16 %v1904, %v1902
  %v2871 = vpack.c.b16 %v1905, %v1903
  %v2872 = vpack.c.b16 %v1908, %v1906
  %v2873 = vpack.c.b16 %v1909, %v1907
  %v2874 = vpack.c.b16 %v1912, %v1910
  %v2875 = vpack.c.b16 %v1913, %v1911
  %v2876 = vpack.c.b16 %v1916, %v1914
  %v2877 = vpack.c.b16 %v1917, %v1915
  %v2878 = vpack.c.b16 %v1920, %v1918
  %v2879 = vpack.c.b16 %v1921, %v1919
  %v2880 = vpack.c.b16 %v1924, %v1922
  %v2881 = vpack.c.b16 %v1925, %v1923
  %v2882 = vpack.c.b16 %v1928, %v1926
  %v2883 = vpack.c.b16 %v1929, %v1927
  %v2884 = vpack.c.b16 %v1932, %v1930
  %v2885 = vpack.c.b16 %v1933, %v1931
  %v2886 = vpack.c.b16 %v1936, %v1934
  %v2887 = vpack.c.b16 %v1937, %v1935
  %v2888 = vpack.c.b16 %v1940, %v1938
  %v2889 = vpack.c.b16 %v1941, %v1939
  %v2890 = vpack.c.b16 %v1944, %v1942
  %v2891 = vpack.c.b16 %v1945, %v1943
  %v2892 = vpack.c.b16 %v1948, %v1946
  %v2893 = vpack.c.b16 %v1949, %v1947
  %v2894 = vpack.c.b16 %v1952, %v1950
  %v2895 = vpack.c.b16 %v1953, %v1951
  %v2896 = vpack.c.b16 %v1956, %v1954
  %v2897 = vpack.c.b16 %v1957, %v1955
  %v2898 = vpack.c.b16 %v1960, %v1958
  %v2899 = vpack.c.b16 %v1961, %v1959
  %v2900 = vpack.c.b16 %v1964, %v1962
  %v2901 = vpack.c.b16 %v1965, %v1963
  %v2902 = vpack.c.b16 %v1968, %v1966
  %v2903 = vpack.c.b16 %v1969, %v1967
  %v2904 = vpack.c.b16 %v1972, %v1970
  %v2905 = vpack.c.b16 %v1973, %v1971
  %v2906 = vpack.c.b16 %v1976, %v1974
  %v2907 = vpack.c.b16 %v1977, %v1975
  %v2908 = vpack.c.b16 %v1980, %v1978
  %v2909 = vpack.c.b16 %v1981, %v1979
  %v2910 = vpack.c.b16 %v1984, %v1982
  %v2911 = vpack.c.b16 %v1985, %v1983
  %v2912 = vpack.c.b16 %v1988, %v1986
  %v2913 = vpack.c.b16 %v1989, %v1987
  %v2914 = vpack.c.b16 %v1992, %v1990
  %v2915 = vpack.c.b16 %v1993, %v1991
  %v2916 = vpack.c.b16 %v1996, %v1994
  %v2917 = vpack.c.b16 %v1997, %v1995
  %v2918 = vpack.c.b16 %v2000, %v1998
  %v2919 = vpack.c.b16 %v2001, %v1999
  %v2920 = vpack.c.b16 %v2004, %v2002
  %v2921 = vpack.c.b16 %v2005, %v2003
  %v2922 = vpack.c.b16 %v2008, %v2006
  %v2923 = vpack.c.b16 %v2009, %v2007
  %v2924 = vpack.c.b16 %v2012, %v2010
  %v2925 = vpack.c.b16 %v2013, %v2011
  %v2926 = vpack.c.b16 %v2016, %v2014
  %v2927 = vpack.c.b16 %v2017, %v2015
  %v2928 = vpack.c.b16 %v2020, %v2018
  %v2929 = vpack.c.b16 %v2021, %v2019
  %v2930 = vpack.c.b16 %v2024, %v2022
  %v2931 = vpack.c.b16 %v2025, %v2023
  %v2932 = vpack.c.b16 %v2028, %v2026
  %v2933 = vpack.c.b16 %v2029, %v2027
  %v2934 = vpack.c.b16 %v2032, %v2030
  %v2935 = vpack.c.b16 %v2033, %v2031
  %v2936 = vpack.c.b16 %v2036, %v2034
  %v2937 = vpack.c.b16 %v2037, %v2035
  %v2938 = vpack.c.b16 %v2040, %v2038
  %v2939 = vpack.c.b16 %v2041, %v2039
  %v2940 = vpack.c.b16 %v2044, %v2042
  %v2941 = vpack.c.b16 %v2045, %v2043
  %v2942 = vpack.c.b16 %v2048, %v2046
  %v2943 = vpack.c.b16 %v2049, %v2047
  %v2944 = vpack.c.b16 %v2052, %v2050
  %v2945 = vpack.c.b16 %v2053, %v2051
  %v2946 = vpack.c.b16 %v2056, %v2054
  %v2947 = vpack.c.b16 %v2057, %v2055
  %v2948 = vpack.c.b16 %v2060, %v2058
  %v2949 = vpack.c.b16 %v2061, %v2059
  %v2950 = vpack.c.b16 %v2064, %v2062
  %v2951 = vpack.c.b16 %v2065, %v2063
  %v2952 = vpack.c.b16 %v2068, %v2066
  %v2953 = vpack.c.b16 %v2069, %v2067
  %v2954 = vpack.c.b16 %v2072, %v2070
  %v2955 = vpack.c.b16 %v2073, %v2071
  %v2956 = vpack.c.b16 %v2076, %v2074
  %v2957 = vpack.c.b16 %v2077, %v2075
  %v2958 = vpack.c.b16 %v2080, %v2078
  %v2959 = vpack.c.b16 %v2081, %v2079
  %v2960 = vpack.c.b16 %v2084, %v2082
  %v2961 = vpack.c.b16 %v2085, %v2083
  %v2962 = vpack.c.b16 %v2088, %v2086
  %v2963 = vpack.c.b16 %v2089, %v2087
  %v2964 = vpack.c.b16 %v2092, %v2090
  %v2965 = vpack.c.b16 %v2093, %v2091
  %v2966 = vpack.c.b16 %v2096, %v2094
  %v2967 = vpack.c.b16 %v2097, %v2095
  %v2968 = vpack.c.b16 %v2100, %v2098
  %v2969 = vpack.c.b16 %v2101, %v2099
  %v2970 = vpack.c.b16 %v2104, %v2102
  %v2971 = vpack.c.b16 %v2105, %v2103
  %v2972 = vpack.c.b16 %v2108, %v2106
  %v2973 = vpack.c.b16 %v2109, %v2107
  %v2974 = vpack.c.b16 %v2112, %v2110
  %v2975 = vpack.c.b16 %v2113, %v2111
  %v2976 = vpack.c.b16 %v2116, %v2114
  %v2977 = vpack.c.b16 %v2117, %v2115
  %v2978 = vpack.c.b16 %v2120, %v2118
  %v2979 = vpack.c.b16 %v2121, %v2119
  %v2980 = vpack.c.b16 %v2124, %v2122
  %v2981 = vpack.c.b16 %v2125, %v2123
  %v2982 = vpack.c.b16 %v2128, %v2126
  %v2983 = vpack.c.b16 %v2129, %v2127
  %v2984 = vpack.c.b16 %v2132, %v2130
  %v2985 = vpack.c.b16 %v2133, %v2131
  %v2986 = vpack.c.b16 %v2136, %v2134
  %v2987 = vpack.c.b16 %v2137, %v2135
  %v2988 = vpack.c.b16 %v2140, %v2138
  %v2989 = vpack.c.b16 %v2141, %v2139
  %v2990 = vpack.c.b16 %v2144, %v2142
  %v2991 = vpack.c.b16 %v2145, %v2143
  %v2992 = vpack.c.b16 %v2148, %v2146
  %v2993 = vpack.c.b16 %v2149, %v2147
  %v2994 = vpack.c.b16 %v2152, %v2150
  %v2995 = vpack.c.b16 %v2153, %v2151
  %v2996 = vpack.c.b16 %v2156, %v2154
  %v2997 = vpack.c.b16 %v2157, %v2155
  %v2998 = vpack.c.b16 %v2160, %v2158
  %v2999 = vpack.c.b16 %v2161, %v2159
  %v3000 = vpack.c.b16 %v2164, %v2162
  %v3001 = vpack.c.b16 %v2165, %v2163
  %v3002 = vpack.c.b16 %v2168, %v2166
  %v3003 = vpack.c.b16 %v2169, %v2167
  %v3004 = vpack.c.b16 %v2172, %v2170
  %v3005 = vpack.c.b16 %v2173, %v2171
  %v3006 = vpack.c.b16 %v2176, %v2174
  %v3007 = vpack.c.b16 %v2177, %v2175
  %v3008 = vpack.c.b16 %v2180, %v2178
  %v3009 = vpack.c.b16 %v2181, %v2179
  %v3010 = vpack.c.b16 %v2184, %v2182
  %v3011 = vpack.c.b16 %v2185, %v2183
  %v3012 = vpack.c.b16 %v2188, %v2186
  %v3013 = vpack.c.b16 %v2189, %v2187
  %v3014 = vpack.c.b16 %v2192, %v2190
  %v3015 = vpack.c.b16 %v2193, %v2191
  %v3016 = vpack.c.b16 %v2196, %v2194
  %v3017 = vpack.c.b16 %v2197, %v2195
  %v3018 = vpack.c.b16 %v2200, %v2198
  %v3019 = vpack.c.b16 %v2201, %v2199
  %v3020 = vpack.c.b16 %v2204, %v2202
  %v3021 = vpack.c.b16 %v2205, %v2203
  %v3022 = vpack.c.b16 %v2208, %v2206
  %v3023 = vpack.c.b16 %v2209, %v2207
  %v3024 = vpack.c.b16 %v2212, %v2210
  %v3025 = vpack.c.b16 %v2213, %v2211
  %v3026 = vpack.c.b16 %v2216, %v2214
  %v3027 = vpack.c.b16 %v2217, %v2215
  %v3028 = vpack.c.b16 %v2220, %v2218
  %v3029 = vpack.c.b16 %v2221, %v2219
  %v3030 = vpack.c.b16 %v2224, %v2222
  %v3031 = vpack.c.b16 %v2225, %v2223
  %v3032 = vpack.c.b16 %v2228, %v2226
  %v3033 = vpack.c.b16 %v2229, %v2227
  %v3034 = vpack.c.b16 %v2232, %v2230
  %v3035 = vpack.c.b16 %v2233, %v2231
  %v3036 = vpack.c.b16 %v2236, %v2234
  %v3037 = vpack.c.b16 %v2237, %v2235
  %v3038 = vpack.c.b16 %v2240, %v2238
  %v3039 = vpack.c.b16 %v2241, %v2239
  %v3040 = vpack.c.b16 %v2244, %v2242
  %v3041 = vpack.c.b16 %v2245, %v2243
  %v3042 = vpack.c.b16 %v2248, %v2246
  %v3043 = vpack.c.b16 %v2249, %v2247
  %v3044 = vpack.c.b16 %v2252, %v2250
  %v3045 = vpack.c.b16 %v2253, %v2251
  %v3046 = vpack.c.b16 %v2256, %v2254
  %v3047 = vpack.c.b16 %v2257, %v2255
  %v3048 = vpack.c.b16 %v2260, %v2258
  %v3049 = vpack.c.b16 %v2261, %v2259
  %v3050 = vpack.c.b16 %v2264, %v2262
  %v3051 = vpack.c.b16 %v2265, %v2263
  %v3052 = vpack.c.b16 %v2268, %v2266
  %v3053 = vpack.c.b16 %v2269, %v2267
  %v3054 = vpack.c.b16 %v2272, %v2270
  %v3055 = vpack.c.b16 %v2273, %v2271
  %v3056 = vpack.c.b16 %v2276, %v2274
  %v3057 = vpack.c.b16 %v2277, %v2275
  %v3058 = vpack.c.b16 %v2280, %v2278
  %v3059 = vpack.c.b16 %v2281, %v2279
  %v3060 = vpack.c.b16 %v2284, %v2282
  %v3061 = vpack.c.b16 %v2285, %v2283
  %v3062 = vpack.c.b16 %v2288, %v2286
  %v3063 = vpack.c.b16 %v2289, %v2287
  %v3064 = vpack.c.b16 %v2292, %v2290
  %v3065 = vpack.c.b16 %v2293, %v2291
  %v3066 = vpack.c.b16 %v2296, %v2294
  %v3067 = vpack.c.b16 %v2297, %v2295
  %v3068 = vpack.c.b16 %v2300, %v2298
  %v3069 = vpack.c.b16 %v2301, %v2299
  %v3070 = vpack.c.b16 %v2304, %v2302
  %v3071 = vpack.c.b16 %v2305, %v2303
  %v3072 = vpack.c.b16 %v2308, %v2306
  %v3073 = vpack.c.b16 %v2309, %v2307
  %v3074 = vpack.c.b16 %v2312, %v2310
  %v3075 = vpack.c.b16 %v2313, %v2311
  %v3076 = vpack.c.b16 %v2316, %v2314
  %v3077 = vpack.c.b16 %v2317, %v2315
  %v3078 = vpack.c.b16 %v2320, %v2318
  %v3079 = vpack.c.b16 %v2321, %v2319
  %v3080 = vpack.c.b16 %v2324, %v2322
  %v3081 = vpack.c.b16 %v2325, %v2323
  %v3082 = vpack.c.b16 %v2328, %v2326
  %v3083 = vpack.c.b16 %v2329, %v2327
  %v3084 = vpack.c.b16 %v2332, %v2330
  %v3085 = vpack.c.b16 %v2333, %v2331
  %v3086 = vpack.c.b16 %v2336, %v2334
  %v3087 = vpack.c.b16 %v2337, %v2335
  %v3088 = vpack.c.b16 %v2340, %v2338
  %v3089 = vpack.c.b16 %v2341, %v2339
  %v3090 = vpack.c.b16 %v2344, %v2342
  %v3091 = vpack.c.b16 %v2345, %v2343
  %v3092 = vpack.c.b16 %v2348, %v2346
  %v3093 = vpack.c.b16 %v2349, %v2347
  %v3094 = vpack.c.b16 %v2352, %v2350
  %v3095 = vpack.c.b16 %v2353, %v2351
  %v3096 = vpack.c.b16 %v2356, %v2354
  %v3097 = vpack.c.b16 %v2357, %v2355
  %v3098 = vpack.c.b16 %v2360, %v2358
  %v3099 = vpack.c.b16 %v2361, %v2359
  %v3100 = vpack.c.b16 %v2364, %v2362
  %v3101 = vpack.c.b16 %v2365, %v2363
  %v3102 = vpack.c.b16 %v2368, %v2366
  %v3103 = vpack.c.b16 %v2369, %v2367
  %v3104 = vpack.c.b16 %v2372, %v2370
  %v3105 = vpack.c.b16 %v2373, %v2371
  %v3106 = vpack.c.b16 %v2376, %v2374
  %v3107 = vpack.c.b16 %v2377, %v2375
  %v3108 = vpack.c.b16 %v2380, %v2378
  %v3109 = vpack.c.b16 %v2381, %v2379
  %v3110 = vpack.c.b16 %v2384, %v2382
  %v3111 = vpack.c.b16 %v2385, %v2383
  %v3112 = vpack.c.b16 %v2388, %v2386
  %v3113 = vpack.c.b16 %v2389, %v2387
  %v3114 = vpack.c.b16 %v2392, %v2390
  %v3115 = vpack.c.b16 %v2393, %v2391
  %v3116 = vpack.c.b16 %v2396, %v2394
  %v3117 = vpack.c.b16 %v2397, %v2395
  %v3118 = vpack.c.b16 %v2400, %v2398
  %v3119 = vpack.c.b16 %v2401, %v2399
  %v3120 = vpack.c.b16 %v2404, %v2402
  %v3121 = vpack.c.b16 %v2405, %v2403
  %v3122 = vpack.c.b16 %v2408, %v2406
  %v3123 = vpack.c.b16 %v2409, %v2407
  %v3124 = vpack.c.b16 %v2412, %v2410
  %v3125 = vpack.c.b16 %v2413, %v2411
  %v3126 = vpack.c.b16 %v2416, %v2414
  %v3127 = vpack.c.b16 %v2417, %v2415
  %v3128 = vpack.c.b16 %v2420, %v2418
  %v3129 = vpack.c.b16 %v2421, %v2419
  %v3130 = vpack.c.b16 %v2424, %v2422
  %v3131 = vpack.c.b16 %v2425, %v2423
  %v3132 = vpack.c.b16 %v2428, %v2426
  %v3133 = vpack.c.b16 %v2429, %v2427
  %v3134 = vpack.c.b16 %v2432, %v2430
  %v3135 = vpack.c.b16 %v2433, %v2431
  %v3136 = vpack.c.b16 %v2436, %v2434
  %v3137 = vpack.c.b16 %v2437, %v2435
  %v3138 = vpack.c.b16 %v2440, %v2438
  %v3139 = vpack.c.b16 %v2441, %v2439
  %v3140 = vpack.c.b16 %v2444, %v2442
  %v3141 = vpack.c.b16 %v2445, %v2443
  %v3142 = vpack.c.b16 %v2448, %v2446
  %v3143 = vpack.c.b16 %v2449, %v2447
  %v3144 = vpack.c.b16 %v2452, %v2450
  %v3145 = vpack.c.b16 %v2453, %v2451
  %v3146 = vpack.c.b16 %v2456, %v2454
  %v3147 = vpack.c.b16 %v2457, %v2455
  %v3148 = vpack.c.b16 %v2460, %v2458
  %v3149 = vpack.c.b16 %v2461, %v2459
  %v3150 = vpack.c.b16 %v2464, %v2462
  %v3151 = vpack.c.b16 %v2465, %v2463
  %v3152 = vpack.c.b16 %v2468, %v2466
  %v3153 = vpack.c.b16 %v2469, %v2467
  %v3154 = vpack.c.b16 %v2472, %v2470
  %v3155 = vpack.c.b16 %v2473, %v2471
  %v3156 = vpack.c.b16 %v2476, %v2474
  %v3157 = vpack.c.b16 %v2477, %v2475
  %v3158 = vpack.c.b16 %v2480, %v2478
  %v3159 = vpack.c.b16 %v2481, %v2479
  %v3160 = vpack.c.b16 %v2484, %v2482
  %v3161 = vpack.c.b16 %v2485, %v2483
  %v3162 = vpack.c.b16 %v2488, %v2486
  %v3163 = vpack.c.b16 %v2489, %v2487
  %v3164 = vpack.c.b16 %v2492, %v2490
  %v3165 = vpack.c.b16 %v2493, %v2491
  %v3166 = vpack.c.b16 %v2496, %v2494
  %v3167 = vpack.c.b16 %v2497, %v2495
  %v3168 = vpack.c.b16 %v2500, %v2498
  %v3169 = vpack.c.b16 %v2501, %v2499
  %v3170 = vpack.c.b16 %v2504, %v2502
  %v3171 = vpack.c.b16 %v2505, %v2503
  %v3172 = vpack.c.b16 %v2508, %v2506
  %v3173 = vpack.c.b16 %v2509, %v2507
  %v3174 = vpack.c.b16 %v2512, %v2510
  %v3175 = vpack.c.b16 %v2513, %v2511
  %v3176 = vpack.c.b16 %v2516, %v2514
  %v3177 = vpack.c.b16 %v2517, %v2515
  %v3178 = vpack.c.b16 %v2520, %v2518
  %v3179 = vpack.c.b16 %v2521, %v2519
  %v3180 = vpack.c.b16 %v2524, %v2522
  %v3181 = vpack.c.b16 %v2525, %v2523
  %v3182 = vpack.c.b16 %v2528, %v2526
  %v3183 = vpack.c.b16 %v2529, %v2527
  %v3184 = vpack.c.b16 %v2532, %v2530
  %v3185 = vpack.c.b16 %v2533, %v2531
  %v3186 = vpack.c.b16 %v2536, %v2534
  %v3187 = vpack.c.b16 %v2537, %v2535
  %v3188 = vpack.c.b16 %v2540, %v2538
  %v3189 = vpack.c.b16 %v2541, %v2539
  %v3190 = vpack.c.b16 %v2544, %v2542
  %v3191 = vpack.c.b16 %v2545, %v2543
  %v3192 = vpack.c.b16 %v2548, %v2546
  %v3193 = vpack.c.b16 %v2549, %v2547
  %v3194 = vpack.c.b16 %v2552, %v2550
  %v3195 = vpack.c.b16 %v2553, %v2551
  %v3196 = vpack.c.b16 %v2556, %v2554
  %v3197 = vpack.c.b16 %v2557, %v2555
  %v3198 = vpack.c.b16 %v2560, %v2558
  %v3199 = vpack.c.b16 %v2561, %v2559
  %v3200 = vpack.c.b16 %v2564, %v2562
  %v3201 = vpack.c.b16 %v2565, %v2563
  %v3202 = vpack.c.b16 %v2568, %v2566
  %v3203 = vpack.c.b16 %v2569, %v2567
  %v3204 = vpack.c.b16 %v2572, %v2570
  %v3205 = vpack.c.b16 %v2573, %v2571
  %v3206 = vpack.c.b16 %v2576, %v2574
  %v3207 = vpack.c.b16 %v2577, %v2575
  %v3208 = vpack.c.b16 %v2580, %v2578
  %v3209 = vpack.c.b16 %v2581, %v2579
  %v3210 = vpack.c.b16 %v2584, %v2582
  %v3211 = vpack.c.b16 %v2585, %v2583
  %v3212 = vpack.c.b16 %v2588, %v2586
  %v3213 = vpack.c.b16 %v2589, %v2587
  %v3214 = vpack.c.b16 %v2592, %v2590
  %v3215 = vpack.c.b16 %v2593, %v2591
  %v3216 = vpack.c.b16 %v2596, %v2594
  %v3217 = vpack.c.b16 %v2597, %v2595
  %v3218 = vpack.c.b16 %v2600, %v2598
  %v3219 = vpack.c.b16 %v2601, %v2599
  %v3220 = vpack.c.b16 %v2604, %v2602
  %v3221 = vpack.c.b16 %v2605, %v2603
  %v3222 = vpack.c.b16 %v2608, %v2606
  %v3223 = vpack.c.b16 %v2609, %v2607
  %v3224 = vpack.c.b16 %v2612, %v2610
  %v3225 = vpack.c.b16 %v2613, %v2611
  %v3226 = vpack.c.b16 %v2616, %v2614
  %v3227 = vpack.c.b16 %v2617, %v2615
  %v3228 = vpack.c.b16 %v2620, %v2618
  %v3229 = vpack.c.b16 %v2621, %v2619
  %v3230 = vpack.c.b16 %v2624, %v2622
  %v3231 = vpack.c.b16 %v2625, %v2623
  %v3232 = vpack.c.b16 %v2628, %v2626
  %v3233 = vpack.c.b16 %v2629, %v2627
  %v3234 = vpack.c.b16 %v2632, %v2630
  %v3235 = vpack.c.b16 %v2633, %v2631
  %v3236 = vpack.c.b16 %v2636, %v2634
  %v3237 = vpack.c.b16 %v2637, %v2635
  %v3238 = vpack.c.b16 %v2640, %v2638
  %v3239 = vpack.c.b16 %v2641, %v2639
  %v3240 = vpack.c.b16 %v2644, %v2642
  %v3241 = vpack.c.b16 %v2645, %v2643
  %v3242 = vpack.c.b16 %v2648, %v2646
  %v3243 = vpack.c.b16 %v2649, %v2647
  %v3244 = vpack.c.b16 %v2652, %v2650
  %v3245 = vpack.c.b16 %v2653, %v2651
  %v3246 = vpack.c.b16 %v2656, %v2654
  %v3247 = vpack.c.b16 %v2657, %v2655
  %v3248 = vpack.c.b16 %v2660, %v2658
  %v3249 = vpack.c.b16 %v2661, %v2659
  %v3250 = vpack.c.b16 %v2664, %v2662
  %v3251 = vpack.c.b16 %v2665, %v2663
  %v3252 = vpack.c.b16 %v2668, %v2666
  %v3253 = vpack.c.b16 %v2669, %v2667
  %v3254 = vpack.c.b16 %v2672, %v2670
  %v3255 = vpack.c.b16 %v2673, %v2671
  %v3256 = vpack.c.b16 %v2676, %v2674
  %v3257 = vpack.c.b16 %v2677, %v2675
  %v3258 = vpack.c.b16 %v2680, %v2678
  %v3259 = vpack.c.b16 %v2681, %v2679
  %v3260 = vpack.c.b16 %v2684, %v2682
  %v3261 = vpack.c.b16 %v2685, %v2683
  %v3262 = vpack.c.b16 %v2688, %v2686
  %v3263 = vpack.c.b16 %v2689, %v2687
  %v3264 = vpack.c.b16 %v2692, %v2690
  %v3265 = vpack.c.b16 %v2693, %v2691
  %v3266 = vpack.c.b16 %v2696, %v2694
  %v3267 = vpack.c.b16 %v2697, %v2695
  %v3268 = vpack.c.b16 %v2700, %v2698
  %v3269 = vpack.c.b16 %v2701, %v2699
  %v3270 = vpack.c.b16 %v2704, %v2702
  %v3271 = vpack.c.b16 %v2705, %v2703
  %v3272 = vpack.c.b16 %v2708, %v2706
  %v3273 = vpack.c.b16 %v2709, %v2707
  %v3274 = vpack.c.b16 %v2712, %v2710
  %v3275 = vpack.c.b16 %v2713, %v2711
  %v3276 = vpack.c.b16 %v2716, %v2714
  %v3277 = vpack.c.b16 %v2717, %v2715
  %v3278 = vpack.c.b16 %v2720, %v2718
  %v3279 = vpack.c.b16 %v2721, %v2719
  %v3280 = vpack.c.b16 %v2724, %v2722
  %v3281 = vpack.c.b16 %v2725, %v2723
  %v3282 = vpack.c.b16 %v2728, %v2726
  %v3283 = vpack.c.b16 %v2729, %v2727
  %v3284 = vpack.c.b16 %v2732, %v2730
  %v3285 = vpack.c.b16 %v2733, %v2731
  %v3286 = vpack.c.b16 %v2736, %v2734
  %v3287 = vpack.c.b16 %v2737, %v2735
  %v3288 = vpack.c.b16 %v2740, %v2738
  %v3289 = vpack.c.b16 %v2741, %v2739
  %v3290 = vpack.c.b16 %v2744, %v2742
  %v3291 = vpack.c.b16 %v2745, %v2743
  %v3292 = vpack.c.b16 %v2748, %v2746
  %v3293 = vpack.c.b16 %v2749, %v2747
  %v3294 = vpack.c.b16 %v2752, %v2750
  %v3295 = vpack.c.b16 %v2753, %v2751
  %v3296 = vpack.c.b16 %v2756, %v2754
  %v3297 = vpack.c.b16 %v2757, %v2755
  %v3298 = vpack.c.b16 %v2760, %v2758
  %v3299 = vpack.c.b16 %v2761, %v2759
  %v3300 = vpack.c.b16 %v2764, %v2762
  %v3301 = vpack.c.b16 %v2765, %v2763
  %v3302 = vpack.c.b16 %v2768, %v2766
  %v3303 = vpack.c.b16 %v2769, %v2767
  %v3304 = vpack.c.b16 %v2772, %v2770
  %v3305 = vpack.c.b16 %v2773, %v2771
  %v3306 = vpack.c.b16 %v2776, %v2774
  %v3307 = vpack.c.b16 %v2777, %v2775
  %v3308 = vpack.c.b16 %v2780, %v2778
  %v3309 = vpack.c.b16 %v2781, %v2779
  %v3310 = vpack.c.b16 %v2784, %v2782
  %v3311 = vpack.c.b16 %v2785, %v2783
  %v3312 = vpack.c.b16 %v2788, %v2786
  %v3313 = vpack.c.b16 %v2789, %v2787
  %v3314 = vpack.c.b16 %v2792, %v2790
  %v3315 = vpack.c.b16 %v2793, %v2791
  %v3316 = vpack.c.b16 %v2796, %v2794
  %v3317 = vpack.c.b16 %v2797, %v2795
  %v3318 = vpack.c.b16 %v2800, %v2798
  %v3319 = vpack.c.b16 %v2801, %v2799
  %v3320 = vpack.c.b16 %v2804, %v2802
  %v3321 = vpack.c.b16 %v2805, %v2803
  %v3322 = vpack.c.b16 %v2808, %v2806
  %v3323 = vpack.c.b16 %v2809, %v2807
  %v3324 = vpack.c.b16 %v2812, %v2810
  %v3325 = vpack.c.b16 %v2813, %v2811
  %3838 = vmatprep.subr.bf16.mxu0 %v2815
  %3839 = vmatpush1.bf16.msra.mxu0 %v2814
  %3840 = vmatprep.subr.bf16.mxu0 %v2817
  %3841 = vmatpush1.bf16.msra.mxu0 %v2816
  %3842 = vmatprep.subr.bf16.mxu0 %v2819
  %3843 = vmatpush1.bf16.msra.mxu0 %v2818
  %3844 = vmatprep.subr.bf16.mxu0 %v2821
  %3845 = vmatpush1.bf16.msra.mxu0 %v2820
  %3846 = vmatprep.subr.bf16.mxu0 %v2823
  %3847 = vmatpush1.bf16.msra.mxu0 %v2822
  %3848 = vmatprep.subr.bf16.mxu0 %v2825
  %3849 = vmatpush1.bf16.msra.mxu0 %v2824
  %3850 = vmatprep.subr.bf16.mxu0 %v2827
  %3851 = vmatpush1.bf16.msra.mxu0 %v2826
  %3852 = vmatprep.subr.bf16.mxu0 %v2829
  %3853 = vmatpush1.bf16.msra.mxu0 %v2828
  %3854 = vmatprep.subr.bf16.mxu0 %v2831
  %3855 = vmatpush1.bf16.msra.mxu0 %v2830
  %3856 = vmatprep.subr.bf16.mxu0 %v2833
  %3857 = vmatpush1.bf16.msra.mxu0 %v2832
  %3858 = vmatprep.subr.bf16.mxu0 %v2835
  %3859 = vmatpush1.bf16.msra.mxu0 %v2834
  %3860 = vmatprep.subr.bf16.mxu0 %v2837
  %3861 = vmatpush1.bf16.msra.mxu0 %v2836
  %3862 = vmatprep.subr.bf16.mxu0 %v2839
  %3863 = vmatpush1.bf16.msra.mxu0 %v2838
  %3864 = vmatprep.subr.bf16.mxu0 %v2841
  %3865 = vmatpush1.bf16.msra.mxu0 %v2840
  %3866 = vmatprep.subr.bf16.mxu0 %v2843
  %3867 = vmatpush1.bf16.msra.mxu0 %v2842
  %3868 = vmatprep.subr.bf16.mxu0 %v2845
  %3869 = vmatpush1.bf16.msra.mxu0 %v2844
  %3870 = vmatprep.mubr.bf16.mxu0 %v260
  %3871 = vmatmul.mubr.bf16.gmra.mrb[0].mxu0 %v259
  %v3872 = vpop.f32.mrb[0].mxu0
  %v3873 = vadd.f32 0.0, %v3872
  %v3874 = vpop.f32.mrb[0].mxu0
  %v3875 = vadd.f32 0.0, %v3874
  %v3876 = vpop.f32.mrb[0].mxu0
  %v3877 = vadd.f32 0.0, %v3876
  %v3878 = vpop.f32.mrb[0].mxu0
  %v3879 = vadd.f32 0.0, %v3878
  %3880 = vmatprep.mubr.bf16.mxu0 %v268
  %3881 = vmatmul.mubr.bf16.gmra.mrb[0].mxu0 %v267
  %v3882 = vpop.f32.mrb[0].mxu0
  %v3883 = vadd.f32 0.0, %v3882
  %v3884 = vpop.f32.mrb[0].mxu0
  %v3885 = vadd.f32 0.0, %v3884
  %v3886 = vpop.f32.mrb[0].mxu0
  %v3887 = vadd.f32 0.0, %v3886
  %v3888 = vpop.f32.mrb[0].mxu0
  %v3889 = vadd.f32 0.0, %v3888
  %3890 = vdwg.mxu0
  %3891 = vmatprep.subr.bf16.mxu0 %v2847
  %3892 = vmatpush1.bf16.msra.mxu0 %v2846
  %3893 = vmatprep.subr.bf16.mxu0 %v2849
  %3894 = vmatpush1.bf16.msra.mxu0 %v2848
  %3895 = vmatprep.subr.bf16.mxu0 %v2851
  %3896 = vmatpush1.bf16.msra.mxu0 %v2850
  %3897 = vmatprep.subr.bf16.mxu0 %v2853
  %3898 = vmatpush1.bf16.msra.mxu0 %v2852
  %3899 = vmatprep.subr.bf16.mxu0 %v2855
  %3900 = vmatpush1.bf16.msra.mxu0 %v2854
  %3901 = vmatprep.subr.bf16.mxu0 %v2857
  %3902 = vmatpush1.bf16.msra.mxu0 %v2856
  %3903 = vmatprep.subr.bf16.mxu0 %v2859
  %3904 = vmatpush1.bf16.msra.mxu0 %v2858
  %3905 = vmatprep.subr.bf16.mxu0 %v2861
  %3906 = vmatpush1.bf16.msra.mxu0 %v2860
  %3907 = vmatprep.subr.bf16.mxu0 %v2863
  %3908 = vmatpush1.bf16.msra.mxu0 %v2862
  %3909 = vmatprep.subr.bf16.mxu0 %v2865
  %3910 = vmatpush1.bf16.msra.mxu0 %v2864
  %3911 = vmatprep.subr.bf16.mxu0 %v2867
  %3912 = vmatpush1.bf16.msra.mxu0 %v2866
  %3913 = vmatprep.subr.bf16.mxu0 %v2869
  %3914 = vmatpush1.bf16.msra.mxu0 %v2868
  %3915 = vmatprep.subr.bf16.mxu0 %v2871
  %3916 = vmatpush1.bf16.msra.mxu0 %v2870
  %3917 = vmatprep.subr.bf16.mxu0 %v2873
  %3918 = vmatpush1.bf16.msra.mxu0 %v2872
  %3919 = vmatprep.subr.bf16.mxu0 %v2875
  %3920 = vmatpush1.bf16.msra.mxu0 %v2874
  %3921 = vmatprep.subr.bf16.mxu0 %v2877
  %3922 = vmatpush1.bf16.msra.mxu0 %v2876
  %3923 = vmatprep.mubr.bf16.mxu0 %v262
  %3924 = vmatmul.mubr.bf16.gmra.mrb[0].mxu0 %v261
  %v3925 = vpop.f32.mrb[0].mxu0
  %v3926 = vadd.f32 %v3873, %v3925
  %v3927 = vpop.f32.mrb[0].mxu0
  %v3928 = vadd.f32 %v3875, %v3927
  %v3929 = vpop.f32.mrb[0].mxu0
  %v3930 = vadd.f32 %v3877, %v3929
  %v3931 = vpop.f32.mrb[0].mxu0
  %v3932 = vadd.f32 %v3879, %v3931
  %3933 = vmatprep.mubr.bf16.mxu0 %v270
  %3934 = vmatmul.mubr.bf16.gmra.mrb[0].mxu0 %v269
  %v3935 = vpop.f32.mrb[0].mxu0
  %v3936 = vadd.f32 %v3883, %v3935
  %v3937 = vpop.f32.mrb[0].mxu0
  %v3938 = vadd.f32 %v3885, %v3937
  %v3939 = vpop.f32.mrb[0].mxu0
  %v3940 = vadd.f32 %v3887, %v3939
  %v3941 = vpop.f32.mrb[0].mxu0
  %v3942 = vadd.f32 %v3889, %v3941
  %3943 = vdwg.mxu0
  %3944 = vmatprep.subr.bf16.mxu0 %v2879
  %3945 = vmatpush1.bf16.msra.mxu0 %v2878
  %3946 = vmatprep.subr.bf16.mxu0 %v2881
  %3947 = vmatpush1.bf16.msra.mxu0 %v2880
  %3948 = vmatprep.subr.bf16.mxu0 %v2883
  %3949 = vmatpush1.bf16.msra.mxu0 %v2882
  %3950 = vmatprep.subr.bf16.mxu0 %v2885
  %3951 = vmatpush1.bf16.msra.mxu0 %v2884
  %3952 = vmatprep.subr.bf16.mxu0 %v2887
  %3953 = vmatpush1.bf16.msra.mxu0 %v2886
  %3954 = vmatprep.subr.bf16.mxu0 %v2889
  %3955 = vmatpush1.bf16.msra.mxu0 %v2888
  %3956 = vmatprep.subr.bf16.mxu0 %v2891
  %3957 = vmatpush1.bf16.msra.mxu0 %v2890
  %3958 = vmatprep.subr.bf16.mxu0 %v2893
  %3959 = vmatpush1.bf16.msra.mxu0 %v2892
  %3960 = vmatprep.subr.bf16.mxu0 %v2895
  %3961 = vmatpush1.bf16.msra.mxu0 %v2894
  %3962 = vmatprep.subr.bf16.mxu0 %v2897
  %3963 = vmatpush1.bf16.msra.mxu0 %v2896
  %3964 = vmatprep.subr.bf16.mxu0 %v2899
  %3965 = vmatpush1.bf16.msra.mxu0 %v2898
  %3966 = vmatprep.subr.bf16.mxu0 %v2901
  %3967 = vmatpush1.bf16.msra.mxu0 %v2900
  %3968 = vmatprep.subr.bf16.mxu0 %v2903
  %3969 = vmatpush1.bf16.msra.mxu0 %v2902
  %3970 = vmatprep.subr.bf16.mxu0 %v2905
  %3971 = vmatpush1.bf16.msra.mxu0 %v2904
  %3972 = vmatprep.subr.bf16.mxu0 %v2907
  %3973 = vmatpush1.bf16.msra.mxu0 %v2906
  %3974 = vmatprep.subr.bf16.mxu0 %v2909
  %3975 = vmatpush1.bf16.msra.mxu0 %v2908
  %3976 = vmatprep.mubr.bf16.mxu0 %v264
  %3977 = vmatmul.mubr.bf16.gmra.mrb[0].mxu0 %v263
  %v3978 = vpop.f32.mrb[0].mxu0
  %v3979 = vadd.f32 %v3926, %v3978
  %v3980 = vpop.f32.mrb[0].mxu0
  %v3981 = vadd.f32 %v3928, %v3980
  %v3982 = vpop.f32.mrb[0].mxu0
  %v3983 = vadd.f32 %v3930, %v3982
  %v3984 = vpop.f32.mrb[0].mxu0
  %v3985 = vadd.f32 %v3932, %v3984
  %3986 = vmatprep.mubr.bf16.mxu0 %v272
  %3987 = vmatmul.mubr.bf16.gmra.mrb[0].mxu0 %v271
  %v3988 = vpop.f32.mrb[0].mxu0
  %v3989 = vadd.f32 %v3936, %v3988
  %v3990 = vpop.f32.mrb[0].mxu0
  %v3991 = vadd.f32 %v3938, %v3990
  %v3992 = vpop.f32.mrb[0].mxu0
  %v3993 = vadd.f32 %v3940, %v3992
  %v3994 = vpop.f32.mrb[0].mxu0
  %v3995 = vadd.f32 %v3942, %v3994
  %3996 = vdwg.mxu0
  %3997 = vmatprep.subr.bf16.mxu0 %v2911
  %3998 = vmatpush1.bf16.msra.mxu0 %v2910
  %3999 = vmatprep.subr.bf16.mxu0 %v2913
  %4000 = vmatpush1.bf16.msra.mxu0 %v2912
  %4001 = vmatprep.subr.bf16.mxu0 %v2915
  %4002 = vmatpush1.bf16.msra.mxu0 %v2914
  %4003 = vmatprep.subr.bf16.mxu0 %v2917
  %4004 = vmatpush1.bf16.msra.mxu0 %v2916
  %4005 = vmatprep.subr.bf16.mxu0 %v2919
  %4006 = vmatpush1.bf16.msra.mxu0 %v2918
  %4007 = vmatprep.subr.bf16.mxu0 %v2921
  %4008 = vmatpush1.bf16.msra.mxu0 %v2920
  %4009 = vmatprep.subr.bf16.mxu0 %v2923
  %4010 = vmatpush1.bf16.msra.mxu0 %v2922
  %4011 = vmatprep.subr.bf16.mxu0 %v2925
  %4012 = vmatpush1.bf16.msra.mxu0 %v2924
  %4013 = vmatprep.subr.bf16.mxu0 %v2927
  %4014 = vmatpush1.bf16.msra.mxu0 %v2926
  %4015 = vmatprep.subr.bf16.mxu0 %v2929
  %4016 = vmatpush1.bf16.msra.mxu0 %v2928
  %4017 = vmatprep.subr.bf16.mxu0 %v2931
  %4018 = vmatpush1.bf16.msra.mxu0 %v2930
  %4019 = vmatprep.subr.bf16.mxu0 %v2933
  %4020 = vmatpush1.bf16.msra.mxu0 %v2932
  %4021 = vmatprep.subr.bf16.mxu0 %v2935
  %4022 = vmatpush1.bf16.msra.mxu0 %v2934
  %4023 = vmatprep.subr.bf16.mxu0 %v2937
  %4024 = vmatpush1.bf16.msra.mxu0 %v2936
  %4025 = vmatprep.subr.bf16.mxu0 %v2939
  %4026 = vmatpush1.bf16.msra.mxu0 %v2938
  %4027 = vmatprep.subr.bf16.mxu0 %v2941
  %4028 = vmatpush1.bf16.msra.mxu0 %v2940
  %4029 = vmatprep.mubr.bf16.mxu0 %v266
  %4030 = vmatmul.mubr.bf16.gmra.mrb[0].mxu0 %v265
  %v4031 = vpop.f32.mrb[0].mxu0
  %v4032 = vadd.f32 %v3979, %v4031
  %v4033 = vpop.f32.mrb[0].mxu0
  %v4034 = vadd.f32 %v3981, %v4033
  %v4035 = vpop.f32.mrb[0].mxu0
  %v4036 = vadd.f32 %v3983, %v4035
  %v4037 = vpop.f32.mrb[0].mxu0
  %v4038 = vadd.f32 %v3985, %v4037
  %4039 = vmatprep.mubr.bf16.mxu0 %v274
  %4040 = vmatmul.mubr.bf16.gmra.mrb[0].mxu0 %v273
  %v4041 = vpop.f32.mrb[0].mxu0
  %v4042 = vadd.f32 %v3989, %v4041
  %v4043 = vpop.f32.mrb[0].mxu0
  %v4044 = vadd.f32 %v3991, %v4043
  %v4045 = vpop.f32.mrb[0].mxu0
  %v4046 = vadd.f32 %v3993, %v4045
  %v4047 = vpop.f32.mrb[0].mxu0
  %v4048 = vadd.f32 %v3995, %v4047
  %4049 = vdwg.mxu0
  %4050 = vmatprep.subr.bf16.mxu0 %v2943
  %4051 = vmatpush1.bf16.msra.mxu0 %v2942
  %4052 = vmatprep.subr.bf16.mxu0 %v2945
  %4053 = vmatpush1.bf16.msra.mxu0 %v2944
  %4054 = vmatprep.subr.bf16.mxu0 %v2947
  %4055 = vmatpush1.bf16.msra.mxu0 %v2946
  %4056 = vmatprep.subr.bf16.mxu0 %v2949
  %4057 = vmatpush1.bf16.msra.mxu0 %v2948
  %4058 = vmatprep.subr.bf16.mxu0 %v2951
  %4059 = vmatpush1.bf16.msra.mxu0 %v2950
  %4060 = vmatprep.subr.bf16.mxu0 %v2953
  %4061 = vmatpush1.bf16.msra.mxu0 %v2952
  %4062 = vmatprep.subr.bf16.mxu0 %v2955
  %4063 = vmatpush1.bf16.msra.mxu0 %v2954
  %4064 = vmatprep.subr.bf16.mxu0 %v2957
  %4065 = vmatpush1.bf16.msra.mxu0 %v2956
  %4066 = vmatprep.subr.bf16.mxu0 %v2959
  %4067 = vmatpush1.bf16.msra.mxu0 %v2958
  %4068 = vmatprep.subr.bf16.mxu0 %v2961
  %4069 = vmatpush1.bf16.msra.mxu0 %v2960
  %4070 = vmatprep.subr.bf16.mxu0 %v2963
  %4071 = vmatpush1.bf16.msra.mxu0 %v2962
  %4072 = vmatprep.subr.bf16.mxu0 %v2965
  %4073 = vmatpush1.bf16.msra.mxu0 %v2964
  %4074 = vmatprep.subr.bf16.mxu0 %v2967
  %4075 = vmatpush1.bf16.msra.mxu0 %v2966
  %4076 = vmatprep.subr.bf16.mxu0 %v2969
  %4077 = vmatpush1.bf16.msra.mxu0 %v2968
  %4078 = vmatprep.subr.bf16.mxu0 %v2971
  %4079 = vmatpush1.bf16.msra.mxu0 %v2970
  %4080 = vmatprep.subr.bf16.mxu0 %v2973
  %4081 = vmatpush1.bf16.msra.mxu0 %v2972
  %4082 = vmatprep.mubr.bf16.mxu0 %v347
  %4083 = vmatmul.mubr.bf16.gmra.mrb[0].mxu0 %v335
  %v4084 = vpop.f32.mrb[0].mxu0
  %v4085 = vadd.f32 %v4032, %v4084
  %v4086 = vpop.f32.mrb[0].mxu0
  %v4087 = vadd.f32 %v4034, %v4086
  %v4088 = vpop.f32.mrb[0].mxu0
  %v4089 = vadd.f32 %v4036, %v4088
  %v4090 = vpop.f32.mrb[0].mxu0
  %v4091 = vadd.f32 %v4038, %v4090
  %4092 = vmatprep.mubr.bf16.mxu0 %v435
  %4093 = vmatmul.mubr.bf16.gmra.mrb[0].mxu0 %v427
  %v4094 = vpop.f32.mrb[0].mxu0
  %v4095 = vadd.f32 %v4042, %v4094
  %v4096 = vpop.f32.mrb[0].mxu0
  %v4097 = vadd.f32 %v4044, %v4096
  %v4098 = vpop.f32.mrb[0].mxu0
  %v4099 = vadd.f32 %v4046, %v4098
  %v4100 = vpop.f32.mrb[0].mxu0
  %v4101 = vadd.f32 %v4048, %v4100
  %4102 = vdwg.mxu0
  %4103 = vmatprep.subr.bf16.mxu0 %v2975
  %4104 = vmatpush1.bf16.msra.mxu0 %v2974
  %4105 = vmatprep.subr.bf16.mxu0 %v2977
  %4106 = vmatpush1.bf16.msra.mxu0 %v2976
  %4107 = vmatprep.subr.bf16.mxu0 %v2979
  %4108 = vmatpush1.bf16.msra.mxu0 %v2978
  %4109 = vmatprep.subr.bf16.mxu0 %v2981
  %4110 = vmatpush1.bf16.msra.mxu0 %v2980
  %4111 = vmatprep.subr.bf16.mxu0 %v2983
  %4112 = vmatpush1.bf16.msra.mxu0 %v2982
  %4113 = vmatprep.subr.bf16.mxu0 %v2985
  %4114 = vmatpush1.bf16.msra.mxu0 %v2984
  %4115 = vmatprep.subr.bf16.mxu0 %v2987
  %4116 = vmatpush1.bf16.msra.mxu0 %v2986
  %4117 = vmatprep.subr.bf16.mxu0 %v2989
  %4118 = vmatpush1.bf16.msra.mxu0 %v2988
  %4119 = vmatprep.subr.bf16.mxu0 %v2991
  %4120 = vmatpush1.bf16.msra.mxu0 %v2990
  %4121 = vmatprep.subr.bf16.mxu0 %v2993
  %4122 = vmatpush1.bf16.msra.mxu0 %v2992
  %4123 = vmatprep.subr.bf16.mxu0 %v2995
  %4124 = vmatpush1.bf16.msra.mxu0 %v2994
  %4125 = vmatprep.subr.bf16.mxu0 %v2997
  %4126 = vmatpush1.bf16.msra.mxu0 %v2996
  %4127 = vmatprep.subr.bf16.mxu0 %v2999
  %4128 = vmatpush1.bf16.msra.mxu0 %v2998
  %4129 = vmatprep.subr.bf16.mxu0 %v3001
  %4130 = vmatpush1.bf16.msra.mxu0 %v3000
  %4131 = vmatprep.subr.bf16.mxu0 %v3003
  %4132 = vmatpush1.bf16.msra.mxu0 %v3002
  %4133 = vmatprep.subr.bf16.mxu0 %v3005
  %4134 = vmatpush1.bf16.msra.mxu0 %v3004
  %4135 = vmatprep.mubr.bf16.mxu0 %v371
  %4136 = vmatmul.mubr.bf16.gmra.mrb[0].mxu0 %v359
  %v4137 = vpop.f32.mrb[0].mxu0
  %v4138 = vadd.f32 %v4085, %v4137
  %v4139 = vpop.f32.mrb[0].mxu0
  %v4140 = vadd.f32 %v4087, %v4139
  %v4141 = vpop.f32.mrb[0].mxu0
  %v4142 = vadd.f32 %v4089, %v4141
  %v4143 = vpop.f32.mrb[0].mxu0
  %v4144 = vadd.f32 %v4091, %v4143
  %4145 = vmatprep.mubr.bf16.mxu0 %v451
  %4146 = vmatmul.mubr.bf16.gmra.mrb[0].mxu0 %v443
  %v4147 = vpop.f32.mrb[0].mxu0
  %v4148 = vadd.f32 %v4095, %v4147
  %v4149 = vpop.f32.mrb[0].mxu0
  %v4150 = vadd.f32 %v4097, %v4149
  %v4151 = vpop.f32.mrb[0].mxu0
  %v4152 = vadd.f32 %v4099, %v4151
  %v4153 = vpop.f32.mrb[0].mxu0
  %v4154 = vadd.f32 %v4101, %v4153
  %4155 = vdwg.mxu0
  %4156 = vmatprep.subr.bf16.mxu0 %v3007
  %4157 = vmatpush1.bf16.msra.mxu0 %v3006
  %4158 = vmatprep.subr.bf16.mxu0 %v3009
  %4159 = vmatpush1.bf16.msra.mxu0 %v3008
  %4160 = vmatprep.subr.bf16.mxu0 %v3011
  %4161 = vmatpush1.bf16.msra.mxu0 %v3010
  %4162 = vmatprep.subr.bf16.mxu0 %v3013
  %4163 = vmatpush1.bf16.msra.mxu0 %v3012
  %4164 = vmatprep.subr.bf16.mxu0 %v3015
  %4165 = vmatpush1.bf16.msra.mxu0 %v3014
  %4166 = vmatprep.subr.bf16.mxu0 %v3017
  %4167 = vmatpush1.bf16.msra.mxu0 %v3016
  %4168 = vmatprep.subr.bf16.mxu0 %v3019
  %4169 = vmatpush1.bf16.msra.mxu0 %v3018
  %4170 = vmatprep.subr.bf16.mxu0 %v3021
  %4171 = vmatpush1.bf16.msra.mxu0 %v3020
  %4172 = vmatprep.subr.bf16.mxu0 %v3023
  %4173 = vmatpush1.bf16.msra.mxu0 %v3022
  %4174 = vmatprep.subr.bf16.mxu0 %v3025
  %4175 = vmatpush1.bf16.msra.mxu0 %v3024
  %4176 = vmatprep.subr.bf16.mxu0 %v3027
  %4177 = vmatpush1.bf16.msra.mxu0 %v3026
  %4178 = vmatprep.subr.bf16.mxu0 %v3029
  %4179 = vmatpush1.bf16.msra.mxu0 %v3028
  %4180 = vmatprep.subr.bf16.mxu0 %v3031
  %4181 = vmatpush1.bf16.msra.mxu0 %v3030
  %4182 = vmatprep.subr.bf16.mxu0 %v3033
  %4183 = vmatpush1.bf16.msra.mxu0 %v3032
  %4184 = vmatprep.subr.bf16.mxu0 %v3035
  %4185 = vmatpush1.bf16.msra.mxu0 %v3034
  %4186 = vmatprep.subr.bf16.mxu0 %v3037
  %4187 = vmatpush1.bf16.msra.mxu0 %v3036
  %4188 = vmatprep.mubr.bf16.mxu0 %v395
  %4189 = vmatmul.mubr.bf16.gmra.mrb[0].mxu0 %v383
  %v4190 = vpop.f32.mrb[0].mxu0
  %v4191 = vadd.f32 %v4138, %v4190
  %v4192 = vpop.f32.mrb[0].mxu0
  %v4193 = vadd.f32 %v4140, %v4192
  %v4194 = vpop.f32.mrb[0].mxu0
  %v4195 = vadd.f32 %v4142, %v4194
  %v4196 = vpop.f32.mrb[0].mxu0
  %v4197 = vadd.f32 %v4144, %v4196
  %4198 = vmatprep.mubr.bf16.mxu0 %v467
  %4199 = vmatmul.mubr.bf16.gmra.mrb[0].mxu0 %v459
  %v4200 = vpop.f32.mrb[0].mxu0
  %v4201 = vadd.f32 %v4148, %v4200
  %v4202 = vpop.f32.mrb[0].mxu0
  %v4203 = vadd.f32 %v4150, %v4202
  %v4204 = vpop.f32.mrb[0].mxu0
  %v4205 = vadd.f32 %v4152, %v4204
  %v4206 = vpop.f32.mrb[0].mxu0
  %v4207 = vadd.f32 %v4154, %v4206
  %4208 = vdwg.mxu0
  %4209 = vmatprep.subr.bf16.mxu0 %v3039
  %4210 = vmatpush1.bf16.msra.mxu0 %v3038
  %4211 = vmatprep.subr.bf16.mxu0 %v3041
  %4212 = vmatpush1.bf16.msra.mxu0 %v3040
  %4213 = vmatprep.subr.bf16.mxu0 %v3043
  %4214 = vmatpush1.bf16.msra.mxu0 %v3042
  %4215 = vmatprep.subr.bf16.mxu0 %v3045
  %4216 = vmatpush1.bf16.msra.mxu0 %v3044
  %4217 = vmatprep.subr.bf16.mxu0 %v3047
  %4218 = vmatpush1.bf16.msra.mxu0 %v3046
  %4219 = vmatprep.subr.bf16.mxu0 %v3049
  %4220 = vmatpush1.bf16.msra.mxu0 %v3048
  %4221 = vmatprep.subr.bf16.mxu0 %v3051
  %4222 = vmatpush1.bf16.msra.mxu0 %v3050
  %4223 = vmatprep.subr.bf16.mxu0 %v3053
  %4224 = vmatpush1.bf16.msra.mxu0 %v3052
  %4225 = vmatprep.subr.bf16.mxu0 %v3055
  %4226 = vmatpush1.bf16.msra.mxu0 %v3054
  %4227 = vmatprep.subr.bf16.mxu0 %v3057
  %4228 = vmatpush1.bf16.msra.mxu0 %v3056
  %4229 = vmatprep.subr.bf16.mxu0 %v3059
  %4230 = vmatpush1.bf16.msra.mxu0 %v3058
  %4231 = vmatprep.subr.bf16.mxu0 %v3061
  %4232 = vmatpush1.bf16.msra.mxu0 %v3060
  %4233 = vmatprep.subr.bf16.mxu0 %v3063
  %4234 = vmatpush1.bf16.msra.mxu0 %v3062
  %4235 = vmatprep.subr.bf16.mxu0 %v3065
  %4236 = vmatpush1.bf16.msra.mxu0 %v3064
  %4237 = vmatprep.subr.bf16.mxu0 %v3067
  %4238 = vmatpush1.bf16.msra.mxu0 %v3066
  %4239 = vmatprep.subr.bf16.mxu0 %v3069
  %4240 = vmatpush1.bf16.msra.mxu0 %v3068
  %4241 = vmatprep.mubr.bf16.mxu0 %v419
  %4242 = vmatmul.mubr.bf16.gmra.mrb[0].mxu0 %v407
  %v4243 = vpop.f32.mrb[0].mxu0
  %v4244 = vadd.f32 %v4191, %v4243
  %v4245 = vpop.f32.mrb[0].mxu0
  %v4246 = vadd.f32 %v4193, %v4245
  %v4247 = vpop.f32.mrb[0].mxu0
  %v4248 = vadd.f32 %v4195, %v4247
  %v4249 = vpop.f32.mrb[0].mxu0
  %v4250 = vadd.f32 %v4197, %v4249
  %4251 = vmatprep.mubr.bf16.mxu0 %v483
  %4252 = vmatmul.mubr.bf16.gmra.mrb[0].mxu0 %v475
  %v4253 = vpop.f32.mrb[0].mxu0
  %v4254 = vadd.f32 %v4201, %v4253
  %v4255 = vpop.f32.mrb[0].mxu0
  %v4256 = vadd.f32 %v4203, %v4255
  %v4257 = vpop.f32.mrb[0].mxu0
  %v4258 = vadd.f32 %v4205, %v4257
  %v4259 = vpop.f32.mrb[0].mxu0
  %v4260 = vadd.f32 %v4207, %v4259
  %4261 = vdwg.mxu0
  %4262 = vmatprep.subr.bf16.mxu0 %v3071
  %4263 = vmatpush1.bf16.msra.mxu0 %v3070
  %4264 = vmatprep.subr.bf16.mxu0 %v3073
  %4265 = vmatpush1.bf16.msra.mxu0 %v3072
  %4266 = vmatprep.subr.bf16.mxu0 %v3075
  %4267 = vmatpush1.bf16.msra.mxu0 %v3074
  %4268 = vmatprep.subr.bf16.mxu0 %v3077
  %4269 = vmatpush1.bf16.msra.mxu0 %v3076
  %4270 = vmatprep.subr.bf16.mxu0 %v3079
  %4271 = vmatpush1.bf16.msra.mxu0 %v3078
  %4272 = vmatprep.subr.bf16.mxu0 %v3081
  %4273 = vmatpush1.bf16.msra.mxu0 %v3080
  %4274 = vmatprep.subr.bf16.mxu0 %v3083
  %4275 = vmatpush1.bf16.msra.mxu0 %v3082
  %4276 = vmatprep.subr.bf16.mxu0 %v3085
  %4277 = vmatpush1.bf16.msra.mxu0 %v3084
  %4278 = vmatprep.subr.bf16.mxu0 %v3087
  %4279 = vmatpush1.bf16.msra.mxu0 %v3086
  %4280 = vmatprep.subr.bf16.mxu0 %v3089
  %4281 = vmatpush1.bf16.msra.mxu0 %v3088
  %4282 = vmatprep.subr.bf16.mxu0 %v3091
  %4283 = vmatpush1.bf16.msra.mxu0 %v3090
  %4284 = vmatprep.subr.bf16.mxu0 %v3093
  %4285 = vmatpush1.bf16.msra.mxu0 %v3092
  %4286 = vmatprep.subr.bf16.mxu0 %v3095
  %4287 = vmatpush1.bf16.msra.mxu0 %v3094
  %4288 = vmatprep.subr.bf16.mxu0 %v3097
  %4289 = vmatpush1.bf16.msra.mxu0 %v3096
  %4290 = vmatprep.subr.bf16.mxu0 %v3099
  %4291 = vmatpush1.bf16.msra.mxu0 %v3098
  %4292 = vmatprep.subr.bf16.mxu0 %v3101
  %4293 = vmatpush1.bf16.msra.mxu0 %v3100
  %4294 = vmatprep.mubr.bf16.mxu0 %v530
  %4295 = vmatmul.mubr.bf16.gmra.mrb[0].mxu0 %v527
  %v4296 = vpop.f32.mrb[0].mxu0
  %v4297 = vadd.f32 %v4244, %v4296
  %v4298 = vpop.f32.mrb[0].mxu0
  %v4299 = vadd.f32 %v4246, %v4298
  %v4300 = vpop.f32.mrb[0].mxu0
  %v4301 = vadd.f32 %v4248, %v4300
  %v4302 = vpop.f32.mrb[0].mxu0
  %v4303 = vadd.f32 %v4250, %v4302
  %4304 = vmatprep.mubr.bf16.mxu0 %v552
  %4305 = vmatmul.mubr.bf16.gmra.mrb[0].mxu0 %v550
  %v4306 = vpop.f32.mrb[0].mxu0
  %v4307 = vadd.f32 %v4254, %v4306
  %v4308 = vpop.f32.mrb[0].mxu0
  %v4309 = vadd.f32 %v4256, %v4308
  %v4310 = vpop.f32.mrb[0].mxu0
  %v4311 = vadd.f32 %v4258, %v4310
  %v4312 = vpop.f32.mrb[0].mxu0
  %v4313 = vadd.f32 %v4260, %v4312
  %4314 = vdwg.mxu0
  %4315 = vmatprep.subr.bf16.mxu0 %v3103
  %4316 = vmatpush1.bf16.msra.mxu0 %v3102
  %4317 = vmatprep.subr.bf16.mxu0 %v3105
  %4318 = vmatpush1.bf16.msra.mxu0 %v3104
  %4319 = vmatprep.subr.bf16.mxu0 %v3107
  %4320 = vmatpush1.bf16.msra.mxu0 %v3106
  %4321 = vmatprep.subr.bf16.mxu0 %v3109
  %4322 = vmatpush1.bf16.msra.mxu0 %v3108
  %4323 = vmatprep.subr.bf16.mxu0 %v3111
  %4324 = vmatpush1.bf16.msra.mxu0 %v3110
  %4325 = vmatprep.subr.bf16.mxu0 %v3113
  %4326 = vmatpush1.bf16.msra.mxu0 %v3112
  %4327 = vmatprep.subr.bf16.mxu0 %v3115
  %4328 = vmatpush1.bf16.msra.mxu0 %v3114
  %4329 = vmatprep.subr.bf16.mxu0 %v3117
  %4330 = vmatpush1.bf16.msra.mxu0 %v3116
  %4331 = vmatprep.subr.bf16.mxu0 %v3119
  %4332 = vmatpush1.bf16.msra.mxu0 %v3118
  %4333 = vmatprep.subr.bf16.mxu0 %v3121
  %4334 = vmatpush1.bf16.msra.mxu0 %v3120
  %4335 = vmatprep.subr.bf16.mxu0 %v3123
  %4336 = vmatpush1.bf16.msra.mxu0 %v3122
  %4337 = vmatprep.subr.bf16.mxu0 %v3125
  %4338 = vmatpush1.bf16.msra.mxu0 %v3124
  %4339 = vmatprep.subr.bf16.mxu0 %v3127
  %4340 = vmatpush1.bf16.msra.mxu0 %v3126
  %4341 = vmatprep.subr.bf16.mxu0 %v3129
  %4342 = vmatpush1.bf16.msra.mxu0 %v3128
  %4343 = vmatprep.subr.bf16.mxu0 %v3131
  %4344 = vmatpush1.bf16.msra.mxu0 %v3130
  %4345 = vmatprep.subr.bf16.mxu0 %v3133
  %4346 = vmatpush1.bf16.msra.mxu0 %v3132
  %4347 = vmatprep.mubr.bf16.mxu0 %v536
  %4348 = vmatmul.mubr.bf16.gmra.mrb[0].mxu0 %v533
  %v4349 = vpop.f32.mrb[0].mxu0
  %v4350 = vadd.f32 %v4297, %v4349
  %v4351 = vpop.f32.mrb[0].mxu0
  %v4352 = vadd.f32 %v4299, %v4351
  %v4353 = vpop.f32.mrb[0].mxu0
  %v4354 = vadd.f32 %v4301, %v4353
  %v4355 = vpop.f32.mrb[0].mxu0
  %v4356 = vadd.f32 %v4303, %v4355
  %4357 = vmatprep.mubr.bf16.mxu0 %v556
  %4358 = vmatmul.mubr.bf16.gmra.mrb[0].mxu0 %v554
  %v4359 = vpop.f32.mrb[0].mxu0
  %v4360 = vadd.f32 %v4307, %v4359
  %v4361 = vpop.f32.mrb[0].mxu0
  %v4362 = vadd.f32 %v4309, %v4361
  %v4363 = vpop.f32.mrb[0].mxu0
  %v4364 = vadd.f32 %v4311, %v4363
  %v4365 = vpop.f32.mrb[0].mxu0
  %v4366 = vadd.f32 %v4313, %v4365
  %4367 = vdwg.mxu0
  %4368 = vmatprep.subr.bf16.mxu0 %v3135
  %4369 = vmatpush1.bf16.msra.mxu0 %v3134
  %4370 = vmatprep.subr.bf16.mxu0 %v3137
  %4371 = vmatpush1.bf16.msra.mxu0 %v3136
  %4372 = vmatprep.subr.bf16.mxu0 %v3139
  %4373 = vmatpush1.bf16.msra.mxu0 %v3138
  %4374 = vmatprep.subr.bf16.mxu0 %v3141
  %4375 = vmatpush1.bf16.msra.mxu0 %v3140
  %4376 = vmatprep.subr.bf16.mxu0 %v3143
  %4377 = vmatpush1.bf16.msra.mxu0 %v3142
  %4378 = vmatprep.subr.bf16.mxu0 %v3145
  %4379 = vmatpush1.bf16.msra.mxu0 %v3144
  %4380 = vmatprep.subr.bf16.mxu0 %v3147
  %4381 = vmatpush1.bf16.msra.mxu0 %v3146
  %4382 = vmatprep.subr.bf16.mxu0 %v3149
  %4383 = vmatpush1.bf16.msra.mxu0 %v3148
  %4384 = vmatprep.subr.bf16.mxu0 %v3151
  %4385 = vmatpush1.bf16.msra.mxu0 %v3150
  %4386 = vmatprep.subr.bf16.mxu0 %v3153
  %4387 = vmatpush1.bf16.msra.mxu0 %v3152
  %4388 = vmatprep.subr.bf16.mxu0 %v3155
  %4389 = vmatpush1.bf16.msra.mxu0 %v3154
  %4390 = vmatprep.subr.bf16.mxu0 %v3157
  %4391 = vmatpush1.bf16.msra.mxu0 %v3156
  %4392 = vmatprep.subr.bf16.mxu0 %v3159
  %4393 = vmatpush1.bf16.msra.mxu0 %v3158
  %4394 = vmatprep.subr.bf16.mxu0 %v3161
  %4395 = vmatpush1.bf16.msra.mxu0 %v3160
  %4396 = vmatprep.subr.bf16.mxu0 %v3163
  %4397 = vmatpush1.bf16.msra.mxu0 %v3162
  %4398 = vmatprep.subr.bf16.mxu0 %v3165
  %4399 = vmatpush1.bf16.msra.mxu0 %v3164
  %4400 = vmatprep.mubr.bf16.mxu0 %v542
  %4401 = vmatmul.mubr.bf16.gmra.mrb[0].mxu0 %v539
  %v4402 = vpop.f32.mrb[0].mxu0
  %v4403 = vadd.f32 %v4350, %v4402
  %v4404 = vpop.f32.mrb[0].mxu0
  %v4405 = vadd.f32 %v4352, %v4404
  %v4406 = vpop.f32.mrb[0].mxu0
  %v4407 = vadd.f32 %v4354, %v4406
  %v4408 = vpop.f32.mrb[0].mxu0
  %v4409 = vadd.f32 %v4356, %v4408
  %4410 = vmatprep.mubr.bf16.mxu0 %v560
  %4411 = vmatmul.mubr.bf16.gmra.mrb[0].mxu0 %v558
  %v4412 = vpop.f32.mrb[0].mxu0
  %v4413 = vadd.f32 %v4360, %v4412
  %v4414 = vpop.f32.mrb[0].mxu0
  %v4415 = vadd.f32 %v4362, %v4414
  %v4416 = vpop.f32.mrb[0].mxu0
  %v4417 = vadd.f32 %v4364, %v4416
  %v4418 = vpop.f32.mrb[0].mxu0
  %v4419 = vadd.f32 %v4366, %v4418
  %4420 = vdwg.mxu0
  %4421 = vmatprep.subr.bf16.mxu0 %v3167
  %4422 = vmatpush1.bf16.msra.mxu0 %v3166
  %4423 = vmatprep.subr.bf16.mxu0 %v3169
  %4424 = vmatpush1.bf16.msra.mxu0 %v3168
  %4425 = vmatprep.subr.bf16.mxu0 %v3171
  %4426 = vmatpush1.bf16.msra.mxu0 %v3170
  %4427 = vmatprep.subr.bf16.mxu0 %v3173
  %4428 = vmatpush1.bf16.msra.mxu0 %v3172
  %4429 = vmatprep.subr.bf16.mxu0 %v3175
  %4430 = vmatpush1.bf16.msra.mxu0 %v3174
  %4431 = vmatprep.subr.bf16.mxu0 %v3177
  %4432 = vmatpush1.bf16.msra.mxu0 %v3176
  %4433 = vmatprep.subr.bf16.mxu0 %v3179
  %4434 = vmatpush1.bf16.msra.mxu0 %v3178
  %4435 = vmatprep.subr.bf16.mxu0 %v3181
  %4436 = vmatpush1.bf16.msra.mxu0 %v3180
  %4437 = vmatprep.subr.bf16.mxu0 %v3183
  %4438 = vmatpush1.bf16.msra.mxu0 %v3182
  %4439 = vmatprep.subr.bf16.mxu0 %v3185
  %4440 = vmatpush1.bf16.msra.mxu0 %v3184
  %4441 = vmatprep.subr.bf16.mxu0 %v3187
  %4442 = vmatpush1.bf16.msra.mxu0 %v3186
  %4443 = vmatprep.subr.bf16.mxu0 %v3189
  %4444 = vmatpush1.bf16.msra.mxu0 %v3188
  %4445 = vmatprep.subr.bf16.mxu0 %v3191
  %4446 = vmatpush1.bf16.msra.mxu0 %v3190
  %4447 = vmatprep.subr.bf16.mxu0 %v3193
  %4448 = vmatpush1.bf16.msra.mxu0 %v3192
  %4449 = vmatprep.subr.bf16.mxu0 %v3195
  %4450 = vmatpush1.bf16.msra.mxu0 %v3194
  %4451 = vmatprep.subr.bf16.mxu0 %v3197
  %4452 = vmatpush1.bf16.msra.mxu0 %v3196
  %4453 = vmatprep.mubr.bf16.mxu0 %v548
  %4454 = vmatmul.mubr.bf16.gmra.mrb[0].mxu0 %v545
  %v4455 = vpop.f32.mrb[0].mxu0
  %v4456 = vadd.f32 %v4403, %v4455
  %v4457 = vpop.f32.mrb[0].mxu0
  %v4458 = vadd.f32 %v4405, %v4457
  %v4459 = vpop.f32.mrb[0].mxu0
  %v4460 = vadd.f32 %v4407, %v4459
  %v4461 = vpop.f32.mrb[0].mxu0
  %v4462 = vadd.f32 %v4409, %v4461
  %4463 = vmatprep.mubr.bf16.mxu0 %v564
  %4464 = vmatmul.mubr.bf16.gmra.mrb[0].mxu0 %v562
  %v4465 = vpop.f32.mrb[0].mxu0
  %v4466 = vadd.f32 %v4413, %v4465
  %v4467 = vpop.f32.mrb[0].mxu0
  %v4468 = vadd.f32 %v4415, %v4467
  %v4469 = vpop.f32.mrb[0].mxu0
  %v4470 = vadd.f32 %v4417, %v4469
  %v4471 = vpop.f32.mrb[0].mxu0
  %v4472 = vadd.f32 %v4419, %v4471
  %4473 = vdwg.mxu0
  %4474 = vmatprep.subr.bf16.mxu0 %v3199
  %4475 = vmatpush1.bf16.msra.mxu0 %v3198
  %4476 = vmatprep.subr.bf16.mxu0 %v3201
  %4477 = vmatpush1.bf16.msra.mxu0 %v3200
  %4478 = vmatprep.subr.bf16.mxu0 %v3203
  %4479 = vmatpush1.bf16.msra.mxu0 %v3202
  %4480 = vmatprep.subr.bf16.mxu0 %v3205
  %4481 = vmatpush1.bf16.msra.mxu0 %v3204
  %4482 = vmatprep.subr.bf16.mxu0 %v3207
  %4483 = vmatpush1.bf16.msra.mxu0 %v3206
  %4484 = vmatprep.subr.bf16.mxu0 %v3209
  %4485 = vmatpush1.bf16.msra.mxu0 %v3208
  %4486 = vmatprep.subr.bf16.mxu0 %v3211
  %4487 = vmatpush1.bf16.msra.mxu0 %v3210
  %4488 = vmatprep.subr.bf16.mxu0 %v3213
  %4489 = vmatpush1.bf16.msra.mxu0 %v3212
  %4490 = vmatprep.subr.bf16.mxu0 %v3215
  %4491 = vmatpush1.bf16.msra.mxu0 %v3214
  %4492 = vmatprep.subr.bf16.mxu0 %v3217
  %4493 = vmatpush1.bf16.msra.mxu0 %v3216
  %4494 = vmatprep.subr.bf16.mxu0 %v3219
  %4495 = vmatpush1.bf16.msra.mxu0 %v3218
  %4496 = vmatprep.subr.bf16.mxu0 %v3221
  %4497 = vmatpush1.bf16.msra.mxu0 %v3220
  %4498 = vmatprep.subr.bf16.mxu0 %v3223
  %4499 = vmatpush1.bf16.msra.mxu0 %v3222
  %4500 = vmatprep.subr.bf16.mxu0 %v3225
  %4501 = vmatpush1.bf16.msra.mxu0 %v3224
  %4502 = vmatprep.subr.bf16.mxu0 %v3227
  %4503 = vmatpush1.bf16.msra.mxu0 %v3226
  %4504 = vmatprep.subr.bf16.mxu0 %v3229
  %4505 = vmatpush1.bf16.msra.mxu0 %v3228
  %4506 = vmatprep.mubr.bf16.mxu0 %v605
  %4507 = vmatmul.mubr.bf16.gmra.mrb[0].mxu0 %v593
  %v4508 = vpop.f32.mrb[0].mxu0
  %v4509 = vadd.f32 %v4456, %v4508
  %v4510 = vpop.f32.mrb[0].mxu0
  %v4511 = vadd.f32 %v4458, %v4510
  %v4512 = vpop.f32.mrb[0].mxu0
  %v4513 = vadd.f32 %v4460, %v4512
  %v4514 = vpop.f32.mrb[0].mxu0
  %v4515 = vadd.f32 %v4462, %v4514
  %4516 = vmatprep.mubr.bf16.mxu0 %v695
  %4517 = vmatmul.mubr.bf16.gmra.mrb[0].mxu0 %v686
  %v4518 = vpop.f32.mrb[0].mxu0
  %v4519 = vadd.f32 %v4466, %v4518
  %v4520 = vpop.f32.mrb[0].mxu0
  %v4521 = vadd.f32 %v4468, %v4520
  %v4522 = vpop.f32.mrb[0].mxu0
  %v4523 = vadd.f32 %v4470, %v4522
  %v4524 = vpop.f32.mrb[0].mxu0
  %v4525 = vadd.f32 %v4472, %v4524
  %4526 = vdwg.mxu0
  %4527 = vmatprep.subr.bf16.mxu0 %v3231
  %4528 = vmatpush1.bf16.msra.mxu0 %v3230
  %4529 = vmatprep.subr.bf16.mxu0 %v3233
  %4530 = vmatpush1.bf16.msra.mxu0 %v3232
  %4531 = vmatprep.subr.bf16.mxu0 %v3235
  %4532 = vmatpush1.bf16.msra.mxu0 %v3234
  %4533 = vmatprep.subr.bf16.mxu0 %v3237
  %4534 = vmatpush1.bf16.msra.mxu0 %v3236
  %4535 = vmatprep.subr.bf16.mxu0 %v3239
  %4536 = vmatpush1.bf16.msra.mxu0 %v3238
  %4537 = vmatprep.subr.bf16.mxu0 %v3241
  %4538 = vmatpush1.bf16.msra.mxu0 %v3240
  %4539 = vmatprep.subr.bf16.mxu0 %v3243
  %4540 = vmatpush1.bf16.msra.mxu0 %v3242
  %4541 = vmatprep.subr.bf16.mxu0 %v3245
  %4542 = vmatpush1.bf16.msra.mxu0 %v3244
  %4543 = vmatprep.subr.bf16.mxu0 %v3247
  %4544 = vmatpush1.bf16.msra.mxu0 %v3246
  %4545 = vmatprep.subr.bf16.mxu0 %v3249
  %4546 = vmatpush1.bf16.msra.mxu0 %v3248
  %4547 = vmatprep.subr.bf16.mxu0 %v3251
  %4548 = vmatpush1.bf16.msra.mxu0 %v3250
  %4549 = vmatprep.subr.bf16.mxu0 %v3253
  %4550 = vmatpush1.bf16.msra.mxu0 %v3252
  %4551 = vmatprep.subr.bf16.mxu0 %v3255
  %4552 = vmatpush1.bf16.msra.mxu0 %v3254
  %4553 = vmatprep.subr.bf16.mxu0 %v3257
  %4554 = vmatpush1.bf16.msra.mxu0 %v3256
  %4555 = vmatprep.subr.bf16.mxu0 %v3259
  %4556 = vmatpush1.bf16.msra.mxu0 %v3258
  %4557 = vmatprep.subr.bf16.mxu0 %v3261
  %4558 = vmatpush1.bf16.msra.mxu0 %v3260
  %4559 = vmatprep.mubr.bf16.mxu0 %v629
  %4560 = vmatmul.mubr.bf16.gmra.mrb[0].mxu0 %v617
  %v4561 = vpop.f32.mrb[0].mxu0
  %v4562 = vadd.f32 %v4509, %v4561
  %v4563 = vpop.f32.mrb[0].mxu0
  %v4564 = vadd.f32 %v4511, %v4563
  %v4565 = vpop.f32.mrb[0].mxu0
  %v4566 = vadd.f32 %v4513, %v4565
  %v4567 = vpop.f32.mrb[0].mxu0
  %v4568 = vadd.f32 %v4515, %v4567
  %4569 = vmatprep.mubr.bf16.mxu0 %v713
  %4570 = vmatmul.mubr.bf16.gmra.mrb[0].mxu0 %v704
  %v4571 = vpop.f32.mrb[0].mxu0
  %v4572 = vadd.f32 %v4519, %v4571
  %v4573 = vpop.f32.mrb[0].mxu0
  %v4574 = vadd.f32 %v4521, %v4573
  %v4575 = vpop.f32.mrb[0].mxu0
  %v4576 = vadd.f32 %v4523, %v4575
  %v4577 = vpop.f32.mrb[0].mxu0
  %v4578 = vadd.f32 %v4525, %v4577
  %4579 = vdwg.mxu0
  %4580 = vmatprep.subr.bf16.mxu0 %v3263
  %4581 = vmatpush1.bf16.msra.mxu0 %v3262
  %4582 = vmatprep.subr.bf16.mxu0 %v3265
  %4583 = vmatpush1.bf16.msra.mxu0 %v3264
  %4584 = vmatprep.subr.bf16.mxu0 %v3267
  %4585 = vmatpush1.bf16.msra.mxu0 %v3266
  %4586 = vmatprep.subr.bf16.mxu0 %v3269
  %4587 = vmatpush1.bf16.msra.mxu0 %v3268
  %4588 = vmatprep.subr.bf16.mxu0 %v3271
  %4589 = vmatpush1.bf16.msra.mxu0 %v3270
  %4590 = vmatprep.subr.bf16.mxu0 %v3273
  %4591 = vmatpush1.bf16.msra.mxu0 %v3272
  %4592 = vmatprep.subr.bf16.mxu0 %v3275
  %4593 = vmatpush1.bf16.msra.mxu0 %v3274
  %4594 = vmatprep.subr.bf16.mxu0 %v3277
  %4595 = vmatpush1.bf16.msra.mxu0 %v3276
  %4596 = vmatprep.subr.bf16.mxu0 %v3279
  %4597 = vmatpush1.bf16.msra.mxu0 %v3278
  %4598 = vmatprep.subr.bf16.mxu0 %v3281
  %4599 = vmatpush1.bf16.msra.mxu0 %v3280
  %4600 = vmatprep.subr.bf16.mxu0 %v3283
  %4601 = vmatpush1.bf16.msra.mxu0 %v3282
  %4602 = vmatprep.subr.bf16.mxu0 %v3285
  %4603 = vmatpush1.bf16.msra.mxu0 %v3284
  %4604 = vmatprep.subr.bf16.mxu0 %v3287
  %4605 = vmatpush1.bf16.msra.mxu0 %v3286
  %4606 = vmatprep.subr.bf16.mxu0 %v3289
  %4607 = vmatpush1.bf16.msra.mxu0 %v3288
  %4608 = vmatprep.subr.bf16.mxu0 %v3291
  %4609 = vmatpush1.bf16.msra.mxu0 %v3290
  %4610 = vmatprep.subr.bf16.mxu0 %v3293
  %4611 = vmatpush1.bf16.msra.mxu0 %v3292
  %4612 = vmatprep.mubr.bf16.mxu0 %v653
  %4613 = vmatmul.mubr.bf16.gmra.mrb[0].mxu0 %v641
  %v4614 = vpop.f32.mrb[0].mxu0
  %v4615 = vadd.f32 %v4562, %v4614
  %v4616 = vpop.f32.mrb[0].mxu0
  %v4617 = vadd.f32 %v4564, %v4616
  %v4618 = vpop.f32.mrb[0].mxu0
  %v4619 = vadd.f32 %v4566, %v4618
  %v4620 = vpop.f32.mrb[0].mxu0
  %v4621 = vadd.f32 %v4568, %v4620
  %4622 = vmatprep.mubr.bf16.mxu0 %v731
  %4623 = vmatmul.mubr.bf16.gmra.mrb[0].mxu0 %v722
  %v4624 = vpop.f32.mrb[0].mxu0
  %v4625 = vadd.f32 %v4572, %v4624
  %v4626 = vpop.f32.mrb[0].mxu0
  %v4627 = vadd.f32 %v4574, %v4626
  %v4628 = vpop.f32.mrb[0].mxu0
  %v4629 = vadd.f32 %v4576, %v4628
  %v4630 = vpop.f32.mrb[0].mxu0
  %v4631 = vadd.f32 %v4578, %v4630
  %4632 = vdwg.mxu0
  %4633 = vmatprep.subr.bf16.mxu0 %v3295
  %4634 = vmatpush1.bf16.msra.mxu0 %v3294
  %4635 = vmatprep.subr.bf16.mxu0 %v3297
  %4636 = vmatpush1.bf16.msra.mxu0 %v3296
  %4637 = vmatprep.subr.bf16.mxu0 %v3299
  %4638 = vmatpush1.bf16.msra.mxu0 %v3298
  %4639 = vmatprep.subr.bf16.mxu0 %v3301
  %4640 = vmatpush1.bf16.msra.mxu0 %v3300
  %4641 = vmatprep.subr.bf16.mxu0 %v3303
  %4642 = vmatpush1.bf16.msra.mxu0 %v3302
  %4643 = vmatprep.subr.bf16.mxu0 %v3305
  %4644 = vmatpush1.bf16.msra.mxu0 %v3304
  %4645 = vmatprep.subr.bf16.mxu0 %v3307
  %4646 = vmatpush1.bf16.msra.mxu0 %v3306
  %4647 = vmatprep.subr.bf16.mxu0 %v3309
  %4648 = vmatpush1.bf16.msra.mxu0 %v3308
  %4649 = vmatprep.subr.bf16.mxu0 %v3311
  %4650 = vmatpush1.bf16.msra.mxu0 %v3310
  %4651 = vmatprep.subr.bf16.mxu0 %v3313
  %4652 = vmatpush1.bf16.msra.mxu0 %v3312
  %4653 = vmatprep.subr.bf16.mxu0 %v3315
  %4654 = vmatpush1.bf16.msra.mxu0 %v3314
  %4655 = vmatprep.subr.bf16.mxu0 %v3317
  %4656 = vmatpush1.bf16.msra.mxu0 %v3316
  %4657 = vmatprep.subr.bf16.mxu0 %v3319
  %4658 = vmatpush1.bf16.msra.mxu0 %v3318
  %4659 = vmatprep.subr.bf16.mxu0 %v3321
  %4660 = vmatpush1.bf16.msra.mxu0 %v3320
  %4661 = vmatprep.subr.bf16.mxu0 %v3323
  %4662 = vmatpush1.bf16.msra.mxu0 %v3322
  %4663 = vmatprep.subr.bf16.mxu0 %v3325
  %4664 = vmatpush1.bf16.msra.mxu0 %v3324
  %4665 = vmatprep.mubr.bf16.mxu0 %v677
  %4666 = vmatmul.mubr.bf16.gmra.mrb[0].mxu0 %v665
  %v4667 = vpop.f32.mrb[0].mxu0
  %v4668 = vadd.f32 %v4615, %v4667
  %v4669 = vpop.f32.mrb[0].mxu0
  %v4670 = vadd.f32 %v4617, %v4669
  %v4671 = vpop.f32.mrb[0].mxu0
  %v4672 = vadd.f32 %v4619, %v4671
  %v4673 = vpop.f32.mrb[0].mxu0
  %v4674 = vadd.f32 %v4621, %v4673
  %4675 = vmatprep.mubr.bf16.mxu0 %v749
  %4676 = vmatmul.mubr.bf16.gmra.mrb[0].mxu0 %v740
  %v4677 = vpop.f32.mrb[0].mxu0
  %v4678 = vadd.f32 %v4625, %v4677
  %v4679 = vpop.f32.mrb[0].mxu0
  %v4680 = vadd.f32 %v4627, %v4679
  %v4681 = vpop.f32.mrb[0].mxu0
  %v4682 = vadd.f32 %v4629, %v4681
  %v4683 = vpop.f32.mrb[0].mxu0
  %v4684 = vadd.f32 %v4631, %v4683
  %4685 = vdwg.mxu0
  %vm4686 = vcmp.ge.f32.partialorder %v4668, 0.0
  %vm4687 = vcmp.ge.f32.partialorder %v4670, 0.0
  %vm4688 = vcmp.ge.f32.partialorder %v4672, 0.0
  %vm4689 = vcmp.ge.f32.partialorder %v4674, 0.0
  %vm4690 = vcmp.ge.f32.partialorder %v4678, 0.0
  %vm4691 = vcmp.ge.f32.partialorder %v4680, 0.0
  %vm4692 = vcmp.ge.f32.partialorder %v4682, 0.0
  %vm4693 = vcmp.ge.f32.partialorder %v4684, 0.0
  %v4694 = vmul.f32 %v4668, 0.2
  %v4695 = vmul.f32 %v4670, 0.2
  %v4696 = vmul.f32 %v4672, 0.2
  %v4697 = vmul.f32 %v4674, 0.2
  %v4698 = vmul.f32 %v4678, 0.2
  %v4699 = vmul.f32 %v4680, 0.2
  %v4700 = vmul.f32 %v4682, 0.2
  %v4701 = vmul.f32 %v4684, 0.2
  %v4702 = vsel %vm4686, %v4668, %v4694
  %v4703 = vsel %vm4687, %v4670, %v4695
  %v4704 = vsel %vm4688, %v4672, %v4696
  %v4705 = vsel %vm4689, %v4674, %v4697
  %v4706 = vsel %vm4690, %v4678, %v4698
  %v4707 = vsel %vm4691, %v4680, %v4699
  %v4708 = vsel %vm4692, %v4682, %v4700
  %v4709 = vsel %vm4693, %v4684, %v4701
  %v4710 = vpack.c.bf16 %v4704, %v4702
  %v4711 = vpack.c.bf16 %v4705, %v4703
  %v4712 = vpack.c.bf16 %v4708, %v4706
  %v4713 = vpack.c.bf16 %v4709, %v4707
  %v4718 = vunpack.c.l.b16 %v4710
  %v4719 = vunpack.c.l.b16 %v4711
  %v4720 = vunpack.c.h.b16 %v4710
  %v4721 = vunpack.c.h.b16 %v4711
  %v4722 = vunpack.c.l.b16 %v4712
  %v4723 = vunpack.c.l.b16 %v4713
  %v4724 = vunpack.c.h.b16 %v4712
  %v4725 = vunpack.c.h.b16 %v4713
  %v4726 = vpack.c.b16 %v4719, %v4718
  %v4727 = vpack.c.b16 %v4721, %v4720
  %v4728 = vpack.c.b16 %v4723, %v4722
  %v4729 = vpack.c.b16 %v4725, %v4724
  %4734 = vst [vmem:[%s2] sm:$0xff] %v4726
  %4735 = vst [vmem:[%s2 + $0x8] sm:$0xff] %v4727
  %4736 = vst [vmem:[%s2 + $0x10] sm:$0xff] %v4728
  %4737 = vst [vmem:[%s2 + $0x18] sm:$0xff] %v4729
  // Predicated region
  $region43: #{pose_encoder_forward.12} parent=0 // pred_check
    _
  $region44: #{pose_encoder_forward.12} parent=0 // pred_check_branch
    %4739 = sbr.rel (0) target = $region46
  $region45: #{pose_encoder_forward.12} parent=0 // pred_region
    _
  $region46: #{pose_encoder_forward.12} parent=0 // pred_fallthru
    _
  // Predicated region
  $region47: #{pose_encoder_forward.12} parent=0 // pred_check
    _
  $region48: #{pose_encoder_forward.12} parent=0 // pred_check_branch
    %4741 = sbr.rel (0) target = $region50
  $region49: #{pose_encoder_forward.12} parent=0 // pred_region
    _
  $region50: #{pose_encoder_forward.12} parent=0 // pred_fallthru
    _
  %4742 = vsyncmov [#allocation3]
  %s4743 = vpop.sfrf %4742
  %p4744 = scmp.eq.s32.totalorder %s4743, 0
  %p4745 = pneg %p4744
  %4747 = shalt.err (%p4745)

</llo_original>
